<compile_context>
chip_gen: v5e
topology: v5e:2x2
jax: 0.10.0
libtpu: 0.0.40
codegen_flags: <defaults>
</compile_context>

<pallas_src>
import functools

import jax
import jax.numpy as jnp
from jax.experimental import pallas as pl
from jax.experimental.pallas import tpu as pltpu


# ----------------------------------------------------------------------------
# Epilogue helpers
# ----------------------------------------------------------------------------
def _apply_act(x, act):
    if act == "leaky":                      # LeakyReLU(negative_slope=0.01)
        return jnp.maximum(x, 0.01 * x)
    if act == "sigmoid":                    # overflow-safe sigmoid on the EUP
        return 0.5 * (jnp.tanh(0.5 * x) + 1.0)
    return x                                # "none"


def _pick_tm(M, target=512):
    """Largest M-tile that divides M, is a multiple of 8 and <= target, so no
    padding / partial blocks are ever needed; whole-M block otherwise."""
    if M <= target:
        return M
    best = None
    for d in range(8, target + 1, 8):
        if M % d == 0:
            best = d
    return best if best is not None else M


# ----------------------------------------------------------------------------
# Kernel 1: single fused matmul  Y = act(X @ W + b)
# ----------------------------------------------------------------------------
def _matmul_act_kernel(x_ref, w_ref, b_ref, o_ref, *, act):
    acc = jnp.dot(x_ref[...].astype(jnp.bfloat16), w_ref[...],
                  preferred_element_type=jnp.float32)
    acc = acc + b_ref[...]
    o_ref[...] = _apply_act(acc, act).astype(o_ref.dtype)


def fused_matmul(X, W_bf16, b_row, act):
    """X: (M,K) f32, W: (K,C) bf16, b: (1,C) f32 -> (M,C) f32.  No padding."""
    M, K = X.shape
    Kw, C = W_bf16.shape
    tm = _pick_tm(M)
    grid = (M // tm,)
    return pl.pallas_call(
        functools.partial(_matmul_act_kernel, act=act),
        out_shape=jax.ShapeDtypeStruct((M, C), jnp.float32),
        grid_spec=pltpu.PrefetchScalarGridSpec(
            num_scalar_prefetch=0,
            grid=grid,
            in_specs=[
                pl.BlockSpec((tm, K), lambda i: (i, 0)),
                pl.BlockSpec((Kw, C), lambda i: (0, 0)),
                pl.BlockSpec((1, C), lambda i: (0, 0)),
            ],
            out_specs=pl.BlockSpec((tm, C), lambda i: (i, 0)),
        ),
        compiler_params=pltpu.CompilerParams(
            dimension_semantics=("parallel",)),
    )(X, W_bf16, b_row)


# ----------------------------------------------------------------------------
# Kernel 2: two independent fused matmuls (sibling r_k / z_k layers) in one call
# ----------------------------------------------------------------------------
def _pair_matmul_kernel(xr_ref, wr_ref, br_ref, xz_ref, wz_ref, bz_ref,
                        or_ref, oz_ref, *, act_r, act_z):
    ar = jnp.dot(xr_ref[...].astype(jnp.bfloat16), wr_ref[...],
                 preferred_element_type=jnp.float32) + br_ref[...]
    or_ref[...] = _apply_act(ar, act_r).astype(or_ref.dtype)
    az = jnp.dot(xz_ref[...].astype(jnp.bfloat16), wz_ref[...],
                 preferred_element_type=jnp.float32) + bz_ref[...]
    oz_ref[...] = _apply_act(az, act_z).astype(oz_ref.dtype)


def pair_matmul(Xr, Wr, br, Xz, Wz, bz, act_r="leaky", act_z="leaky"):
    Mr, Kr = Xr.shape
    Mz, Kz = Xz.shape
    Cr = Wr.shape[1]
    Cz = Wz.shape[1]
    full = lambda a: pl.BlockSpec(a.shape, lambda i: (0, 0))
    ins = (Xr, Wr, br, Xz, Wz, bz)
    return pl.pallas_call(
        functools.partial(_pair_matmul_kernel, act_r=act_r, act_z=act_z),
        out_shape=(jax.ShapeDtypeStruct((Mr, Cr), jnp.float32),
                   jax.ShapeDtypeStruct((Mz, Cz), jnp.float32)),
        grid_spec=pltpu.PrefetchScalarGridSpec(
            num_scalar_prefetch=0,
            grid=(1,),
            in_specs=[full(a) for a in ins],
            out_specs=(pl.BlockSpec((Mr, Cr), lambda i: (0, 0)),
                       pl.BlockSpec((Mz, Cz), lambda i: (0, 0))),
        ),
        compiler_params=pltpu.CompilerParams(
            dimension_semantics=("arbitrary",)),
    )(*ins)


# ----------------------------------------------------------------------------
# Kernel 3: both branch heads, each a chained double matmul, in one call
#   reward = sigmoid((leaky(Xr @ Wr6 + br6)) @ Wr_last + br_last)
#   z      =        (leaky(Xz @ Wz6 + bz6)) @ Wz_last + bz_last
# ----------------------------------------------------------------------------
def _heads_kernel(xr_ref, wr6_ref, br6_ref, wrl_ref, brl_ref,
                  xz_ref, wz6_ref, bz6_ref, wzl_ref, bzl_ref,
                  reward_ref, z_ref):
    hr = jnp.dot(xr_ref[...].astype(jnp.bfloat16), wr6_ref[...],
                 preferred_element_type=jnp.float32) + br6_ref[...]
    hr = _apply_act(hr, "leaky")
    rr = jnp.dot(hr.astype(jnp.bfloat16), wrl_ref[...],
                 preferred_element_type=jnp.float32) + brl_ref[...]
    reward_ref[...] = _apply_act(rr, "sigmoid").astype(reward_ref.dtype)

    hz = jnp.dot(xz_ref[...].astype(jnp.bfloat16), wz6_ref[...],
                 preferred_element_type=jnp.float32) + bz6_ref[...]
    hz = _apply_act(hz, "leaky")
    zz = jnp.dot(hz.astype(jnp.bfloat16), wzl_ref[...],
                 preferred_element_type=jnp.float32) + bzl_ref[...]
    z_ref[...] = zz.astype(z_ref.dtype)


def fused_heads(Xr, pr6, prl, Xz, pz6, pzl):
    Mr = Xr.shape[0]
    Mz = Xz.shape[0]
    Clr = prl["w"].shape[1]
    Clz = pzl["w"].shape[1]
    full = lambda a: pl.BlockSpec(a.shape, lambda i: (0, 0))
    ins = (Xr, pr6["w"], pr6["b"], prl["w"], prl["b"],
           Xz, pz6["w"], pz6["b"], pzl["w"], pzl["b"])
    return pl.pallas_call(
        _heads_kernel,
        out_shape=(jax.ShapeDtypeStruct((Mr, Clr), jnp.float32),
                   jax.ShapeDtypeStruct((Mz, Clz), jnp.float32)),
        grid_spec=pltpu.PrefetchScalarGridSpec(
            num_scalar_prefetch=0,
            grid=(1,),
            in_specs=[full(a) for a in ins],
            out_specs=(pl.BlockSpec((Mr, Clr), lambda i: (0, 0)),
                       pl.BlockSpec((Mz, Clz), lambda i: (0, 0))),
        ),
        compiler_params=pltpu.CompilerParams(
            dimension_semantics=("arbitrary",)),
    )(*ins)


# ----------------------------------------------------------------------------
# im2col glue (VALID conv, channel ordering (ki, kj, c) matches HWIO reshape)
# ----------------------------------------------------------------------------
def _im2col(x_nhwc, k, stride):
    N, H, W, C = x_nhwc.shape
    Ho = (H - k) // stride + 1
    Wo = (W - k) // stride + 1
    cols = []
    for i in range(k):
        for j in range(k):
            cols.append(x_nhwc[:, i:i + (Ho - 1) * stride + 1:stride,
                                  j:j + (Wo - 1) * stride + 1:stride, :])
    patches = jnp.concatenate(cols, axis=-1)          # (N, Ho, Wo, k*k*C)
    return patches.reshape(N * Ho * Wo, k * k * C), (N, Ho, Wo)


# ----------------------------------------------------------------------------
# Parameters (deterministic, synthetic), BN folded + matmul-ready at init time
# ----------------------------------------------------------------------------
# (name, cin, cout, kernel, stride, has_bn, activation)
def _layer_defs(in_channels):
    return [
        ("conv_block1",       in_channels, 32, 3, 1, True,  "leaky"),
        ("conv_block2",       32,          32, 3, 2, True,  "leaky"),
        ("conv_block3",       32,          32, 3, 1, True,  "leaky"),
        ("conv_block_r1",     32,          48, 3, 1, True,  "leaky"),
        ("conv_block_r2",     48,          48, 3, 1, True,  "leaky"),
        ("conv_block_r3",     48,          64, 3, 1, True,  "leaky"),
        ("conv_block_r4",     64,          64, 3, 1, True,  "leaky"),
        ("conv_block_r5",     64,          64, 3, 1, True,  "leaky"),
        ("conv_block_r6",     64,          48, 2, 1, True,  "leaky"),
        ("conv_block_r_last", 48,           3, 1, 1, False, "sigmoid"),
        ("conv_block_z1",     32,          64, 3, 1, True,  "leaky"),
        ("conv_block_z2",     64,          64, 3, 1, True,  "leaky"),
        ("conv_block_z3",     64,          96, 3, 1, True,  "leaky"),
        ("conv_block_z4",     96,          96, 3, 1, True,  "leaky"),
        ("conv_block_z5",     96,         128, 3, 1, True,  "leaky"),
        ("conv_block_z6",     128,        128, 2, 1, True,  "leaky"),
        ("conv_block_z_last", 128,         48, 1, 1, False, "none"),
    ]


def init_params(key, in_channels):
    """Deterministic synthetic params.  Eval-mode BatchNorm (gamma=1, beta=0,
    mean=0, var=1, eps=1e-5) is folded into the conv weight/bias; weights are
    stored MXU-ready as (K, Cout) bf16, biases as (1, Cout) f32."""
    eps = 1e-5
    params = {}
    for name, cin, cout, k, stride, has_bn, act in _layer_defs(in_channels):
        key, kw_key, kb_key = jax.random.split(key, 3)
        w = 0.05 * jax.random.normal(kw_key, (k, k, cin, cout), jnp.float32)   # HWIO
        b = 0.05 * jax.random.normal(kb_key, (cout,), jnp.float32)
        if has_bn:
            gamma = jnp.ones((cout,), jnp.float32)
            beta = jnp.zeros((cout,), jnp.float32)
            run_mean = jnp.zeros((cout,), jnp.float32)
            run_var = jnp.ones((cout,), jnp.float32)
            scale = gamma / jnp.sqrt(run_var + eps)
            w = w * scale[None, None, None, :]
            b = b * scale + (beta - run_mean * scale)
        params[name] = {
            "w": w.reshape(k * k * cin, cout).astype(jnp.bfloat16),
            "b": b.reshape(1, cout).astype(jnp.float32),
            "k": k, "stride": stride, "act": act, "cout": cout,
        }
    # Fuse r1/z1 (same input, identical 3x3/s1 im2col) into one matmul along Cout.
    pr1 = params.pop("conv_block_r1")
    pz1 = params.pop("conv_block_z1")
    params["conv_block_rz1"] = {
        "w": jnp.concatenate([pr1["w"], pz1["w"]], axis=1),
        "b": jnp.concatenate([pr1["b"], pz1["b"]], axis=1),
        "k": 3, "stride": 1, "act": "leaky",
        "cout": pr1["cout"] + pz1["cout"], "split": pr1["cout"],
    }
    return params


# ----------------------------------------------------------------------------
# Forward pass (mirrors GraspModel.forward; input/output NCHW)
# ----------------------------------------------------------------------------
def grasp_model_forward(x_nchw, params):
    x = jnp.transpose(x_nchw, (0, 2, 3, 1))    # NCHW -> NHWC

    def conv(name, t):
        p = params[name]
        Xm, (n, ho, wo) = _im2col(t, p["k"], p["stride"])
        y = fused_matmul(Xm, p["w"], p["b"], p["act"])
        return y.reshape(n, ho, wo, p["cout"])

    # stem
    x = conv("conv_block1", x)
    x = conv("conv_block2", x)
    x = conv("conv_block3", x)

    # r1 + z1 fused into a single matmul, then split the channels
    p = params["conv_block_rz1"]
    Xm, (n, ho, wo) = _im2col(x, p["k"], p["stride"])
    y = fused_matmul(Xm, p["w"], p["b"], p["act"]).reshape(n, ho, wo, p["cout"])
    x_r = y[..., :p["split"]]
    x_z = y[..., p["split"]:]

    # paired tails (r_k, z_k share spatial size, so one kernel per depth)
    for rname, zname in (("conv_block_r2", "conv_block_z2"),
                         ("conv_block_r3", "conv_block_z3"),
                         ("conv_block_r4", "conv_block_z4"),
                         ("conv_block_r5", "conv_block_z5")):
        pr, pz = params[rname], params[zname]
        Xr, (n, ho, wo) = _im2col(x_r, pr["k"], pr["stride"])
        Xz, _ = _im2col(x_z, pz["k"], pz["stride"])
        yr, yz = pair_matmul(Xr, pr["w"], pr["b"], Xz, pz["w"], pz["b"])
        x_r = yr.reshape(n, ho, wo, pr["cout"])
        x_z = yz.reshape(n, ho, wo, pz["cout"])

    # heads: (r6 -> r_last -> sigmoid) and (z6 -> z_last), all in one kernel
    pr6, prl = params["conv_block_r6"], params["conv_block_r_last"]
    pz6, pzl = params["conv_block_z6"], params["conv_block_z_last"]
    Xr6, (n, hr, wr) = _im2col(x_r, pr6["k"], pr6["stride"])
    Xz6, (_, hz, wz) = _im2col(x_z, pz6["k"], pz6["stride"])
    reward_m, z_m = fused_heads(Xr6, pr6, prl, Xz6, pz6, pzl)
    reward = reward_m.reshape(n, hr, wr, prl["cout"])
    z = z_m.reshape(n, hz, wz, pzl["cout"])

    # back to NCHW to match the PyTorch output convention
    z = jnp.transpose(z, (0, 3, 1, 2))
    reward = jnp.transpose(reward, (0, 3, 1, 2))
    return z, reward


if __name__ == "__main__":
    key = jax.random.PRNGKey(0)
    k_in, k_par = jax.random.split(key)

    # Input spatial must be >= 31 to survive the chain of VALID convs.
    N, IN_CHANNELS, H, W = 2, 4, 32, 32
    x = jax.random.normal(k_in, (N, IN_CHANNELS, H, W), jnp.float32)

    params = init_params(k_par, IN_CHANNELS)

    fwd = jax.jit(functools.partial(grasp_model_forward, params=params))
    z, reward = fwd(x)
    jax.block_until_ready((z, reward))

    assert z.shape == (N, 48, 1, 1), z.shape
    assert reward.shape == (N, 3, 1, 1), reward.shape
    assert bool(jnp.all((reward >= 0.0) & (reward <= 1.0)))
    print("KERNEL_OK")
</pallas_src>

<mosaic_0001>
module attributes {stable_mosaic.version = 11 : i64} {
  func.func @_matmul_act_kernel(%arg0: i32, %arg1: memref<360x36xf32, #tpu.memory_space<vmem>>, %arg2: memref<36x32xbf16, #tpu.memory_space<vmem>>, %arg3: memref<1x32xf32, #tpu.memory_space<vmem>>, %arg4: memref<360x32xf32, #tpu.memory_space<vmem>>) attributes {dimension_semantics = [#tpu.dimension_semantics<parallel>], iteration_bounds = array<i64: 5>, scalar_prefetch = 0 : i64, scratch_operands = 0 : i64, tpu.core_type = #tpu.core_type<tc>, window_params = [{transform_indices = @transform_0, window_bounds = array<i64: 360, 36>}, {pipeline_mode = #tpu.pipeline_mode<synchronous>, transform_indices = @transform_1, window_bounds = array<i64: 36, 32>}, {pipeline_mode = #tpu.pipeline_mode<synchronous>, transform_indices = @transform_2, window_bounds = array<i64: 1, 32>}, {transform_indices = @transform_3, window_bounds = array<i64: 360, 32>}]} {
    %c0 = arith.constant 0 : index
    %c0_0 = arith.constant 0 : index
    %0 = vector.load %arg1[%c0, %c0_0] : memref<360x36xf32, #tpu.memory_space<vmem>>, vector<360x36xf32>
    %1 = arith.truncf %0 : vector<360x36xf32> to vector<360x36xbf16>
    %c0_1 = arith.constant 0 : index
    %c0_2 = arith.constant 0 : index
    %2 = vector.load %arg2[%c0_1, %c0_2] : memref<36x32xbf16, #tpu.memory_space<vmem>>, vector<36x32xbf16>
    %cst = arith.constant dense<0.000000e+00> : vector<360x32xf32>
    %3 = tpu.matmul %1, %2, %cst {dimension_numbers = #tpu.dot_dimension_numbers<[1], [0], [0], [1], [0, 0, 1, 1], [], []>} : vector<360x36xbf16>, vector<36x32xbf16>, vector<360x32xf32> -> vector<360x32xf32>
    %c0_3 = arith.constant 0 : index
    %c0_4 = arith.constant 0 : index
    %4 = vector.load %arg3[%c0_3, %c0_4] : memref<1x32xf32, #tpu.memory_space<vmem>>, vector<1x32xf32>
    %5 = vector.broadcast %4 : vector<1x32xf32> to vector<360x32xf32>
    %6 = arith.addf %3, %5 : vector<360x32xf32>
    %cst_5 = arith.constant 0.00999999977 : f32
    %7 = vector.broadcast %cst_5 : f32 to vector<360x32xf32>
    %8 = arith.mulf %7, %6 : vector<360x32xf32>
    %9 = arith.maximumf %6, %8 : vector<360x32xf32>
    %c0_6 = arith.constant 0 : index
    %c0_7 = arith.constant 0 : index
    %10 = vector.load %arg4[%c0_6, %c0_7] : memref<360x32xf32, #tpu.memory_space<vmem>>, vector<360x32xf32>
    tpu.vector_store %arg4[%c0_6, %c0_7], %9 {strides = array<i32>} : memref<360x32xf32, #tpu.memory_space<vmem>>, vector<360x32xf32>,
    return
  }
  func.func @transform_0(%arg0: i32) -> (i32, i32) {
    %c0_i32 = arith.constant 0 : i32
    %c0_i32_0 = arith.constant 0 : i32
    return %arg0, %c0_i32 : i32, i32
  }
  func.func @transform_1(%arg0: i32) -> (i32, i32) {
    %c0_i32 = arith.constant 0 : i32
    %c0_i32_0 = arith.constant 0 : i32
    %c0_i32_1 = arith.constant 0 : i32
    return %c0_i32, %c0_i32_0 : i32, i32
  }
  func.func @transform_2(%arg0: i32) -> (i32, i32) {
    %c0_i32 = arith.constant 0 : i32
    %c0_i32_0 = arith.constant 0 : i32
    %c0_i32_1 = arith.constant 0 : i32
    return %c0_i32, %c0_i32_0 : i32, i32
  }
  func.func @transform_3(%arg0: i32) -> (i32, i32) {
    %c0_i32 = arith.constant 0 : i32
    %c0_i32_0 = arith.constant 0 : i32
    return %arg0, %c0_i32 : i32, i32
  }
}

module attributes {stable_mosaic.version = 11 : i64} {
  func.func @_matmul_act_kernel(%arg0: i32, %arg1: memref<392x288xf32, #tpu.memory_space<vmem>>, %arg2: memref<288x32xbf16, #tpu.memory_space<vmem>>, %arg3: memref<1x32xf32, #tpu.memory_space<vmem>>, %arg4: memref<392x32xf32, #tpu.memory_space<vmem>>) attributes {dimension_semantics = [#tpu.dimension_semantics<parallel>], iteration_bounds = array<i64: 1>, scalar_prefetch = 0 : i64, scratch_operands = 0 : i64, tpu.core_type = #tpu.core_type<tc>, window_params = [{transform_indices = @transform_0, window_bounds = array<i64: 392, 288>}, {pipeline_mode = #tpu.pipeline_mode<synchronous>, transform_indices = @transform_1, window_bounds = array<i64: 288, 32>}, {pipeline_mode = #tpu.pipeline_mode<synchronous>, transform_indices = @transform_2, window_bounds = array<i64: 1, 32>}, {transform_indices = @transform_3, window_bounds = array<i64: 392, 32>}]} {
    %c0 = arith.constant 0 : index
    %c0_0 = arith.constant 0 : index
    %0 = vector.load %arg1[%c0, %c0_0] : memref<392x288xf32, #tpu.memory_space<vmem>>, vector<392x288xf32>
    %1 = arith.truncf %0 : vector<392x288xf32> to vector<392x288xbf16>
    %c0_1 = arith.constant 0 : index
    %c0_2 = arith.constant 0 : index
    %2 = vector.load %arg2[%c0_1, %c0_2] : memref<288x32xbf16, #tpu.memory_space<vmem>>, vector<288x32xbf16>
    %cst = arith.constant dense<0.000000e+00> : vector<392x32xf32>
    %3 = tpu.matmul %1, %2, %cst {dimension_numbers = #tpu.dot_dimension_numbers<[1], [0], [0], [1], [0, 0, 1, 1], [], []>} : vector<392x288xbf16>, vector<288x32xbf16>, vector<392x32xf32> -> vector<392x32xf32>
    %c0_3 = arith.constant 0 : index
    %c0_4 = arith.constant 0 : index
    %4 = vector.load %arg3[%c0_3, %c0_4] : memref<1x32xf32, #tpu.memory_space<vmem>>, vector<1x32xf32>
    %5 = vector.broadcast %4 : vector<1x32xf32> to vector<392x32xf32>
    %6 = arith.addf %3, %5 : vector<392x32xf32>
    %cst_5 = arith.constant 0.00999999977 : f32
    %7 = vector.broadcast %cst_5 : f32 to vector<392x32xf32>
    %8 = arith.mulf %7, %6 : vector<392x32xf32>
    %9 = arith.maximumf %6, %8 : vector<392x32xf32>
    %c0_6 = arith.constant 0 : index
    %c0_7 = arith.constant 0 : index
    %10 = vector.load %arg4[%c0_6, %c0_7] : memref<392x32xf32, #tpu.memory_space<vmem>>, vector<392x32xf32>
    tpu.vector_store %arg4[%c0_6, %c0_7], %9 {strides = array<i32>} : memref<392x32xf32, #tpu.memory_space<vmem>>, vector<392x32xf32>,
    return
  }
  func.func @transform_0(%arg0: i32) -> (i32, i32) {
    %c0_i32 = arith.constant 0 : i32
    %c0_i32_0 = arith.constant 0 : i32
    return %arg0, %c0_i32 : i32, i32
  }
  func.func @transform_1(%arg0: i32) -> (i32, i32) {
    %c0_i32 = arith.constant 0 : i32
    %c0_i32_0 = arith.constant 0 : i32
    %c0_i32_1 = arith.constant 0 : i32
    return %c0_i32, %c0_i32_0 : i32, i32
  }
  func.func @transform_2(%arg0: i32) -> (i32, i32) {
    %c0_i32 = arith.constant 0 : i32
    %c0_i32_0 = arith.constant 0 : i32
    %c0_i32_1 = arith.constant 0 : i32
    return %c0_i32, %c0_i32_0 : i32, i32
  }
  func.func @transform_3(%arg0: i32) -> (i32, i32) {
    %c0_i32 = arith.constant 0 : i32
    %c0_i32_0 = arith.constant 0 : i32
    return %arg0, %c0_i32 : i32, i32
  }
}

module attributes {stable_mosaic.version = 11 : i64} {
  func.func @_matmul_act_kernel(%arg0: i32, %arg1: memref<288x288xf32, #tpu.memory_space<vmem>>, %arg2: memref<288x32xbf16, #tpu.memory_space<vmem>>, %arg3: memref<1x32xf32, #tpu.memory_space<vmem>>, %arg4: memref<288x32xf32, #tpu.memory_space<vmem>>) attributes {dimension_semantics = [#tpu.dimension_semantics<parallel>], iteration_bounds = array<i64: 1>, scalar_prefetch = 0 : i64, scratch_operands = 0 : i64, tpu.core_type = #tpu.core_type<tc>, window_params = [{transform_indices = @transform_0, window_bounds = array<i64: 288, 288>}, {pipeline_mode = #tpu.pipeline_mode<synchronous>, transform_indices = @transform_1, window_bounds = array<i64: 288, 32>}, {pipeline_mode = #tpu.pipeline_mode<synchronous>, transform_indices = @transform_2, window_bounds = array<i64: 1, 32>}, {transform_indices = @transform_3, window_bounds = array<i64: 288, 32>}]} {
    %c0 = arith.constant 0 : index
    %c0_0 = arith.constant 0 : index
    %0 = vector.load %arg1[%c0, %c0_0] : memref<288x288xf32, #tpu.memory_space<vmem>>, vector<288x288xf32>
    %1 = arith.truncf %0 : vector<288x288xf32> to vector<288x288xbf16>
    %c0_1 = arith.constant 0 : index
    %c0_2 = arith.constant 0 : index
    %2 = vector.load %arg2[%c0_1, %c0_2] : memref<288x32xbf16, #tpu.memory_space<vmem>>, vector<288x32xbf16>
    %cst = arith.constant dense<0.000000e+00> : vector<288x32xf32>
    %3 = tpu.matmul %1, %2, %cst {dimension_numbers = #tpu.dot_dimension_numbers<[1], [0], [0], [1], [0, 0, 1, 1], [], []>} : vector<288x288xbf16>, vector<288x32xbf16>, vector<288x32xf32> -> vector<288x32xf32>
    %c0_3 = arith.constant 0 : index
    %c0_4 = arith.constant 0 : index
    %4 = vector.load %arg3[%c0_3, %c0_4] : memref<1x32xf32, #tpu.memory_space<vmem>>, vector<1x32xf32>
    %5 = vector.broadcast %4 : vector<1x32xf32> to vector<288x32xf32>
    %6 = arith.addf %3, %5 : vector<288x32xf32>
    %cst_5 = arith.constant 0.00999999977 : f32
    %7 = vector.broadcast %cst_5 : f32 to vector<288x32xf32>
    %8 = arith.mulf %7, %6 : vector<288x32xf32>
    %9 = arith.maximumf %6, %8 : vector<288x32xf32>
    %c0_6 = arith.constant 0 : index
    %c0_7 = arith.constant 0 : index
    %10 = vector.load %arg4[%c0_6, %c0_7] : memref<288x32xf32, #tpu.memory_space<vmem>>, vector<288x32xf32>
    tpu.vector_store %arg4[%c0_6, %c0_7], %9 {strides = array<i32>} : memref<288x32xf32, #tpu.memory_space<vmem>>, vector<288x32xf32>,
    return
  }
  func.func @transform_0(%arg0: i32) -> (i32, i32) {
    %c0_i32 = arith.constant 0 : i32
    %c0_i32_0 = arith.constant 0 : i32
    return %arg0, %c0_i32 : i32, i32
  }
  func.func @transform_1(%arg0: i32) -> (i32, i32) {
    %c0_i32 = arith.constant 0 : i32
    %c0_i32_0 = arith.constant 0 : i32
    %c0_i32_1 = arith.constant 0 : i32
    return %c0_i32, %c0_i32_0 : i32, i32
  }
  func.func @transform_2(%arg0: i32) -> (i32, i32) {
    %c0_i32 = arith.constant 0 : i32
    %c0_i32_0 = arith.constant 0 : i32
    %c0_i32_1 = arith.constant 0 : i32
    return %c0_i32, %c0_i32_0 : i32, i32
  }
  func.func @transform_3(%arg0: i32) -> (i32, i32) {
    %c0_i32 = arith.constant 0 : i32
    %c0_i32_0 = arith.constant 0 : i32
    return %arg0, %c0_i32 : i32, i32
  }
}

module attributes {stable_mosaic.version = 11 : i64} {
  func.func @_matmul_act_kernel(%arg0: i32, %arg1: memref<200x288xf32, #tpu.memory_space<vmem>>, %arg2: memref<288x112xbf16, #tpu.memory_space<vmem>>, %arg3: memref<1x112xf32, #tpu.memory_space<vmem>>, %arg4: memref<200x112xf32, #tpu.memory_space<vmem>>) attributes {dimension_semantics = [#tpu.dimension_semantics<parallel>], iteration_bounds = array<i64: 1>, scalar_prefetch = 0 : i64, scratch_operands = 0 : i64, tpu.core_type = #tpu.core_type<tc>, window_params = [{transform_indices = @transform_0, window_bounds = array<i64: 200, 288>}, {pipeline_mode = #tpu.pipeline_mode<synchronous>, transform_indices = @transform_1, window_bounds = array<i64: 288, 112>}, {pipeline_mode = #tpu.pipeline_mode<synchronous>, transform_indices = @transform_2, window_bounds = array<i64: 1, 112>}, {transform_indices = @transform_3, window_bounds = array<i64: 200, 112>}]} {
    %c0 = arith.constant 0 : index
    %c0_0 = arith.constant 0 : index
    %0 = vector.load %arg1[%c0, %c0_0] : memref<200x288xf32, #tpu.memory_space<vmem>>, vector<200x288xf32>
    %1 = arith.truncf %0 : vector<200x288xf32> to vector<200x288xbf16>
    %c0_1 = arith.constant 0 : index
    %c0_2 = arith.constant 0 : index
    %2 = vector.load %arg2[%c0_1, %c0_2] : memref<288x112xbf16, #tpu.memory_space<vmem>>, vector<288x112xbf16>
    %cst = arith.constant dense<0.000000e+00> : vector<200x112xf32>
    %3 = tpu.matmul %1, %2, %cst {dimension_numbers = #tpu.dot_dimension_numbers<[1], [0], [0], [1], [0, 0, 1, 1], [], []>} : vector<200x288xbf16>, vector<288x112xbf16>, vector<200x112xf32> -> vector<200x112xf32>
    %c0_3 = arith.constant 0 : index
    %c0_4 = arith.constant 0 : index
    %4 = vector.load %arg3[%c0_3, %c0_4] : memref<1x112xf32, #tpu.memory_space<vmem>>, vector<1x112xf32>
    %5 = vector.broadcast %4 : vector<1x112xf32> to vector<200x112xf32>
    %6 = arith.addf %3, %5 : vector<200x112xf32>
    %cst_5 = arith.constant 0.00999999977 : f32
    %7 = vector.broadcast %cst_5 : f32 to vector<200x112xf32>
    %8 = arith.mulf %7, %6 : vector<200x112xf32>
    %9 = arith.maximumf %6, %8 : vector<200x112xf32>
    %c0_6 = arith.constant 0 : index
    %c0_7 = arith.constant 0 : index
    %10 = vector.load %arg4[%c0_6, %c0_7] : memref<200x112xf32, #tpu.memory_space<vmem>>, vector<200x112xf32>
    tpu.vector_store %arg4[%c0_6, %c0_7], %9 {strides = array<i32>} : memref<200x112xf32, #tpu.memory_space<vmem>>, vector<200x112xf32>,
    return
  }
  func.func @transform_0(%arg0: i32) -> (i32, i32) {
    %c0_i32 = arith.constant 0 : i32
    %c0_i32_0 = arith.constant 0 : i32
    return %arg0, %c0_i32 : i32, i32
  }
  func.func @transform_1(%arg0: i32) -> (i32, i32) {
    %c0_i32 = arith.constant 0 : i32
    %c0_i32_0 = arith.constant 0 : i32
    %c0_i32_1 = arith.constant 0 : i32
    return %c0_i32, %c0_i32_0 : i32, i32
  }
  func.func @transform_2(%arg0: i32) -> (i32, i32) {
    %c0_i32 = arith.constant 0 : i32
    %c0_i32_0 = arith.constant 0 : i32
    %c0_i32_1 = arith.constant 0 : i32
    return %c0_i32, %c0_i32_0 : i32, i32
  }
  func.func @transform_3(%arg0: i32) -> (i32, i32) {
    %c0_i32 = arith.constant 0 : i32
    %c0_i32_0 = arith.constant 0 : i32
    return %arg0, %c0_i32 : i32, i32
  }
}

module attributes {stable_mosaic.version = 11 : i64} {
  func.func @_pair_matmul_kernel(%arg0: i32, %arg1: memref<128x432xf32, #tpu.memory_space<vmem>>, %arg2: memref<432x48xbf16, #tpu.memory_space<vmem>>, %arg3: memref<1x48xf32, #tpu.memory_space<vmem>>, %arg4: memref<128x576xf32, #tpu.memory_space<vmem>>, %arg5: memref<576x64xbf16, #tpu.memory_space<vmem>>, %arg6: memref<1x64xf32, #tpu.memory_space<vmem>>, %arg7: memref<128x48xf32, #tpu.memory_space<vmem>>, %arg8: memref<128x64xf32, #tpu.memory_space<vmem>>) attributes {dimension_semantics = [#tpu.dimension_semantics<arbitrary>], iteration_bounds = array<i64: 1>, scalar_prefetch = 0 : i64, scratch_operands = 0 : i64, tpu.core_type = #tpu.core_type<tc>, window_params = [{pipeline_mode = #tpu.pipeline_mode<synchronous>, transform_indices = @transform_0, window_bounds = array<i64: 128, 432>}, {pipeline_mode = #tpu.pipeline_mode<synchronous>, transform_indices = @transform_1, window_bounds = array<i64: 432, 48>}, {pipeline_mode = #tpu.pipeline_mode<synchronous>, transform_indices = @transform_2, window_bounds = array<i64: 1, 48>}, {pipeline_mode = #tpu.pipeline_mode<synchronous>, transform_indices = @transform_3, window_bounds = array<i64: 128, 576>}, {pipeline_mode = #tpu.pipeline_mode<synchronous>, transform_indices = @transform_4, window_bounds = array<i64: 576, 64>}, {pipeline_mode = #tpu.pipeline_mode<synchronous>, transform_indices = @transform_5, window_bounds = array<i64: 1, 64>}, {pipeline_mode = #tpu.pipeline_mode<synchronous>, transform_indices = @transform_6, window_bounds = array<i64: 128, 48>}, {pipeline_mode = #tpu.pipeline_mode<synchronous>, transform_indices = @transform_7, window_bounds = array<i64: 128, 64>}]} {
    %c0 = arith.constant 0 : index
    %c0_0 = arith.constant 0 : index
    %0 = vector.load %arg1[%c0, %c0_0] : memref<128x432xf32, #tpu.memory_space<vmem>>, vector<128x432xf32>
    %1 = arith.truncf %0 : vector<128x432xf32> to vector<128x432xbf16>
    %c0_1 = arith.constant 0 : index
    %c0_2 = arith.constant 0 : index
    %2 = vector.load %arg2[%c0_1, %c0_2] : memref<432x48xbf16, #tpu.memory_space<vmem>>, vector<432x48xbf16>
    %cst = arith.constant dense<0.000000e+00> : vector<128x48xf32>
    %3 = tpu.matmul %1, %2, %cst {dimension_numbers = #tpu.dot_dimension_numbers<[1], [0], [0], [1], [0, 0, 1, 1], [], []>} : vector<128x432xbf16>, vector<432x48xbf16>, vector<128x48xf32> -> vector<128x48xf32>
    %c0_3 = arith.constant 0 : index
    %c0_4 = arith.constant 0 : index
    %4 = vector.load %arg3[%c0_3, %c0_4] : memref<1x48xf32, #tpu.memory_space<vmem>>, vector<1x48xf32>
    %5 = vector.broadcast %4 : vector<1x48xf32> to vector<128x48xf32>
    %6 = arith.addf %3, %5 : vector<128x48xf32>
    %cst_5 = arith.constant 0.00999999977 : f32
    %7 = vector.broadcast %cst_5 : f32 to vector<128x48xf32>
    %8 = arith.mulf %7, %6 : vector<128x48xf32>
    %9 = arith.maximumf %6, %8 : vector<128x48xf32>
    %c0_6 = arith.constant 0 : index
    %c0_7 = arith.constant 0 : index
    %10 = vector.load %arg7[%c0_6, %c0_7] : memref<128x48xf32, #tpu.memory_space<vmem>>, vector<128x48xf32>
    tpu.vector_store %arg7[%c0_6, %c0_7], %9 {strides = array<i32>} : memref<128x48xf32, #tpu.memory_space<vmem>>, vector<128x48xf32>,
    %c0_8 = arith.constant 0 : index
    %c0_9 = arith.constant 0 : index
    %11 = vector.load %arg4[%c0_8, %c0_9] : memref<128x576xf32, #tpu.memory_space<vmem>>, vector<128x576xf32>
    %12 = arith.truncf %11 : vector<128x576xf32> to vector<128x576xbf16>
    %c0_10 = arith.constant 0 : index
    %c0_11 = arith.constant 0 : index
    %13 = vector.load %arg5[%c0_10, %c0_11] : memref<576x64xbf16, #tpu.memory_space<vmem>>, vector<576x64xbf16>
    %cst_12 = arith.constant dense<0.000000e+00> : vector<128x64xf32>
    %14 = tpu.matmul %12, %13, %cst_12 {dimension_numbers = #tpu.dot_dimension_numbers<[1], [0], [0], [1], [0, 0, 1, 1], [], []>} : vector<128x576xbf16>, vector<576x64xbf16>, vector<128x64xf32> -> vector<128x64xf32>
    %c0_13 = arith.constant 0 : index
    %c0_14 = arith.constant 0 : index
    %15 = vector.load %arg6[%c0_13, %c0_14] : memref<1x64xf32, #tpu.memory_space<vmem>>, vector<1x64xf32>
    %16 = vector.broadcast %15 : vector<1x64xf32> to vector<128x64xf32>
    %17 = arith.addf %14, %16 : vector<128x64xf32>
    %cst_15 = arith.constant 0.00999999977 : f32
    %18 = vector.broadcast %cst_15 : f32 to vector<128x64xf32>
    %19 = arith.mulf %18, %17 : vector<128x64xf32>
    %20 = arith.maximumf %17, %19 : vector<128x64xf32>
    %c0_16 = arith.constant 0 : index
    %c0_17 = arith.constant 0 : index
    %21 = vector.load %arg8[%c0_16, %c0_17] : memref<128x64xf32, #tpu.memory_space<vmem>>, vector<128x64xf32>
    tpu.vector_store %arg8[%c0_16, %c0_17], %20 {strides = array<i32>} : memref<128x64xf32, #tpu.memory_space<vmem>>, vector<128x64xf32>,
    return
  }
  func.func @transform_0(%arg0: i32) -> (i32, i32) {
    %c0_i32 = arith.constant 0 : i32
    %c0_i32_0 = arith.constant 0 : i32
    %c0_i32_1 = arith.constant 0 : i32
    return %c0_i32, %c0_i32_0 : i32, i32
  }
  func.func @transform_1(%arg0: i32) -> (i32, i32) {
    %c0_i32 = arith.constant 0 : i32
    %c0_i32_0 = arith.constant 0 : i32
    %c0_i32_1 = arith.constant 0 : i32
    return %c0_i32, %c0_i32_0 : i32, i32
  }
  func.func @transform_2(%arg0: i32) -> (i32, i32) {
    %c0_i32 = arith.constant 0 : i32
    %c0_i32_0 = arith.constant 0 : i32
    %c0_i32_1 = arith.constant 0 : i32
    return %c0_i32, %c0_i32_0 : i32, i32
  }
  func.func @transform_3(%arg0: i32) -> (i32, i32) {
    %c0_i32 = arith.constant 0 : i32
    %c0_i32_0 = arith.constant 0 : i32
    %c0_i32_1 = arith.constant 0 : i32
    return %c0_i32, %c0_i32_0 : i32, i32
  }
  func.func @transform_4(%arg0: i32) -> (i32, i32) {
    %c0_i32 = arith.constant 0 : i32
    %c0_i32_0 = arith.constant 0 : i32
    %c0_i32_1 = arith.constant 0 : i32
    return %c0_i32, %c0_i32_0 : i32, i32
  }
  func.func @transform_5(%arg0: i32) -> (i32, i32) {
    %c0_i32 = arith.constant 0 : i32
    %c0_i32_0 = arith.constant 0 : i32
    %c0_i32_1 = arith.constant 0 : i32
    return %c0_i32, %c0_i32_0 : i32, i32
  }
  func.func @transform_6(%arg0: i32) -> (i32, i32) {
    %c0_i32 = arith.constant 0 : i32
    %c0_i32_0 = arith.constant 0 : i32
    %c0_i32_1 = arith.constant 0 : i32
    return %c0_i32, %c0_i32_0 : i32, i32
  }
  func.func @transform_7(%arg0: i32) -> (i32, i32) {
    %c0_i32 = arith.constant 0 : i32
    %c0_i32_0 = arith.constant 0 : i32
    %c0_i32_1 = arith.constant 0 : i32
    return %c0_i32, %c0_i32_0 : i32, i32
  }
}

module attributes {stable_mosaic.version = 11 : i64} {
  func.func @_pair_matmul_kernel(%arg0: i32, %arg1: memref<72x432xf32, #tpu.memory_space<vmem>>, %arg2: memref<432x64xbf16, #tpu.memory_space<vmem>>, %arg3: memref<1x64xf32, #tpu.memory_space<vmem>>, %arg4: memref<72x576xf32, #tpu.memory_space<vmem>>, %arg5: memref<576x96xbf16, #tpu.memory_space<vmem>>, %arg6: memref<1x96xf32, #tpu.memory_space<vmem>>, %arg7: memref<72x64xf32, #tpu.memory_space<vmem>>, %arg8: memref<72x96xf32, #tpu.memory_space<vmem>>) attributes {dimension_semantics = [#tpu.dimension_semantics<arbitrary>], iteration_bounds = array<i64: 1>, scalar_prefetch = 0 : i64, scratch_operands = 0 : i64, tpu.core_type = #tpu.core_type<tc>, window_params = [{pipeline_mode = #tpu.pipeline_mode<synchronous>, transform_indices = @transform_0, window_bounds = array<i64: 72, 432>}, {pipeline_mode = #tpu.pipeline_mode<synchronous>, transform_indices = @transform_1, window_bounds = array<i64: 432, 64>}, {pipeline_mode = #tpu.pipeline_mode<synchronous>, transform_indices = @transform_2, window_bounds = array<i64: 1, 64>}, {pipeline_mode = #tpu.pipeline_mode<synchronous>, transform_indices = @transform_3, window_bounds = array<i64: 72, 576>}, {pipeline_mode = #tpu.pipeline_mode<synchronous>, transform_indices = @transform_4, window_bounds = array<i64: 576, 96>}, {pipeline_mode = #tpu.pipeline_mode<synchronous>, transform_indices = @transform_5, window_bounds = array<i64: 1, 96>}, {pipeline_mode = #tpu.pipeline_mode<synchronous>, transform_indices = @transform_6, window_bounds = array<i64: 72, 64>}, {pipeline_mode = #tpu.pipeline_mode<synchronous>, transform_indices = @transform_7, window_bounds = array<i64: 72, 96>}]} {
    %c0 = arith.constant 0 : index
    %c0_0 = arith.constant 0 : index
    %0 = vector.load %arg1[%c0, %c0_0] : memref<72x432xf32, #tpu.memory_space<vmem>>, vector<72x432xf32>
    %1 = arith.truncf %0 : vector<72x432xf32> to vector<72x432xbf16>
    %c0_1 = arith.constant 0 : index
    %c0_2 = arith.constant 0 : index
    %2 = vector.load %arg2[%c0_1, %c0_2] : memref<432x64xbf16, #tpu.memory_space<vmem>>, vector<432x64xbf16>
    %cst = arith.constant dense<0.000000e+00> : vector<72x64xf32>
    %3 = tpu.matmul %1, %2, %cst {dimension_numbers = #tpu.dot_dimension_numbers<[1], [0], [0], [1], [0, 0, 1, 1], [], []>} : vector<72x432xbf16>, vector<432x64xbf16>, vector<72x64xf32> -> vector<72x64xf32>
    %c0_3 = arith.constant 0 : index
    %c0_4 = arith.constant 0 : index
    %4 = vector.load %arg3[%c0_3, %c0_4] : memref<1x64xf32, #tpu.memory_space<vmem>>, vector<1x64xf32>
    %5 = vector.broadcast %4 : vector<1x64xf32> to vector<72x64xf32>
    %6 = arith.addf %3, %5 : vector<72x64xf32>
    %cst_5 = arith.constant 0.00999999977 : f32
    %7 = vector.broadcast %cst_5 : f32 to vector<72x64xf32>
    %8 = arith.mulf %7, %6 : vector<72x64xf32>
    %9 = arith.maximumf %6, %8 : vector<72x64xf32>
    %c0_6 = arith.constant 0 : index
    %c0_7 = arith.constant 0 : index
    %10 = vector.load %arg7[%c0_6, %c0_7] : memref<72x64xf32, #tpu.memory_space<vmem>>, vector<72x64xf32>
    tpu.vector_store %arg7[%c0_6, %c0_7], %9 {strides = array<i32>} : memref<72x64xf32, #tpu.memory_space<vmem>>, vector<72x64xf32>,
    %c0_8 = arith.constant 0 : index
    %c0_9 = arith.constant 0 : index
    %11 = vector.load %arg4[%c0_8, %c0_9] : memref<72x576xf32, #tpu.memory_space<vmem>>, vector<72x576xf32>
    %12 = arith.truncf %11 : vector<72x576xf32> to vector<72x576xbf16>
    %c0_10 = arith.constant 0 : index
    %c0_11 = arith.constant 0 : index
    %13 = vector.load %arg5[%c0_10, %c0_11] : memref<576x96xbf16, #tpu.memory_space<vmem>>, vector<576x96xbf16>
    %cst_12 = arith.constant dense<0.000000e+00> : vector<72x96xf32>
    %14 = tpu.matmul %12, %13, %cst_12 {dimension_numbers = #tpu.dot_dimension_numbers<[1], [0], [0], [1], [0, 0, 1, 1], [], []>} : vector<72x576xbf16>, vector<576x96xbf16>, vector<72x96xf32> -> vector<72x96xf32>
    %c0_13 = arith.constant 0 : index
    %c0_14 = arith.constant 0 : index
    %15 = vector.load %arg6[%c0_13, %c0_14] : memref<1x96xf32, #tpu.memory_space<vmem>>, vector<1x96xf32>
    %16 = vector.broadcast %15 : vector<1x96xf32> to vector<72x96xf32>
    %17 = arith.addf %14, %16 : vector<72x96xf32>
    %cst_15 = arith.constant 0.00999999977 : f32
    %18 = vector.broadcast %cst_15 : f32 to vector<72x96xf32>
    %19 = arith.mulf %18, %17 : vector<72x96xf32>
    %20 = arith.maximumf %17, %19 : vector<72x96xf32>
    %c0_16 = arith.constant 0 : index
    %c0_17 = arith.constant 0 : index
    %21 = vector.load %arg8[%c0_16, %c0_17] : memref<72x96xf32, #tpu.memory_space<vmem>>, vector<72x96xf32>
    tpu.vector_store %arg8[%c0_16, %c0_17], %20 {strides = array<i32>} : memref<72x96xf32, #tpu.memory_space<vmem>>, vector<72x96xf32>,
    return
  }
  func.func @transform_0(%arg0: i32) -> (i32, i32) {
    %c0_i32 = arith.constant 0 : i32
    %c0_i32_0 = arith.constant 0 : i32
    %c0_i32_1 = arith.constant 0 : i32
    return %c0_i32, %c0_i32_0 : i32, i32
  }
  func.func @transform_1(%arg0: i32) -> (i32, i32) {
    %c0_i32 = arith.constant 0 : i32
    %c0_i32_0 = arith.constant 0 : i32
    %c0_i32_1 = arith.constant 0 : i32
    return %c0_i32, %c0_i32_0 : i32, i32
  }
  func.func @transform_2(%arg0: i32) -> (i32, i32) {
    %c0_i32 = arith.constant 0 : i32
    %c0_i32_0 = arith.constant 0 : i32
    %c0_i32_1 = arith.constant 0 : i32
    return %c0_i32, %c0_i32_0 : i32, i32
  }
  func.func @transform_3(%arg0: i32) -> (i32, i32) {
    %c0_i32 = arith.constant 0 : i32
    %c0_i32_0 = arith.constant 0 : i32
    %c0_i32_1 = arith.constant 0 : i32
    return %c0_i32, %c0_i32_0 : i32, i32
  }
  func.func @transform_4(%arg0: i32) -> (i32, i32) {
    %c0_i32 = arith.constant 0 : i32
    %c0_i32_0 = arith.constant 0 : i32
    %c0_i32_1 = arith.constant 0 : i32
    return %c0_i32, %c0_i32_0 : i32, i32
  }
  func.func @transform_5(%arg0: i32) -> (i32, i32) {
    %c0_i32 = arith.constant 0 : i32
    %c0_i32_0 = arith.constant 0 : i32
    %c0_i32_1 = arith.constant 0 : i32
    return %c0_i32, %c0_i32_0 : i32, i32
  }
  func.func @transform_6(%arg0: i32) -> (i32, i32) {
    %c0_i32 = arith.constant 0 : i32
    %c0_i32_0 = arith.constant 0 : i32
    %c0_i32_1 = arith.constant 0 : i32
    return %c0_i32, %c0_i32_0 : i32, i32
  }
  func.func @transform_7(%arg0: i32) -> (i32, i32) {
    %c0_i32 = arith.constant 0 : i32
    %c0_i32_0 = arith.constant 0 : i32
    %c0_i32_1 = arith.constant 0 : i32
    return %c0_i32, %c0_i32_0 : i32, i32
  }
}

module attributes {stable_mosaic.version = 11 : i64} {
  func.func @_pair_matmul_kernel(%arg0: i32, %arg1: memref<32x576xf32, #tpu.memory_space<vmem>>, %arg2: memref<576x64xbf16, #tpu.memory_space<vmem>>, %arg3: memref<1x64xf32, #tpu.memory_space<vmem>>, %arg4: memref<32x864xf32, #tpu.memory_space<vmem>>, %arg5: memref<864x96xbf16, #tpu.memory_space<vmem>>, %arg6: memref<1x96xf32, #tpu.memory_space<vmem>>, %arg7: memref<32x64xf32, #tpu.memory_space<vmem>>, %arg8: memref<32x96xf32, #tpu.memory_space<vmem>>) attributes {dimension_semantics = [#tpu.dimension_semantics<arbitrary>], iteration_bounds = array<i64: 1>, scalar_prefetch = 0 : i64, scratch_operands = 0 : i64, tpu.core_type = #tpu.core_type<tc>, window_params = [{pipeline_mode = #tpu.pipeline_mode<synchronous>, transform_indices = @transform_0, window_bounds = array<i64: 32, 576>}, {pipeline_mode = #tpu.pipeline_mode<synchronous>, transform_indices = @transform_1, window_bounds = array<i64: 576, 64>}, {pipeline_mode = #tpu.pipeline_mode<synchronous>, transform_indices = @transform_2, window_bounds = array<i64: 1, 64>}, {pipeline_mode = #tpu.pipeline_mode<synchronous>, transform_indices = @transform_3, window_bounds = array<i64: 32, 864>}, {pipeline_mode = #tpu.pipeline_mode<synchronous>, transform_indices = @transform_4, window_bounds = array<i64: 864, 96>}, {pipeline_mode = #tpu.pipeline_mode<synchronous>, transform_indices = @transform_5, window_bounds = array<i64: 1, 96>}, {pipeline_mode = #tpu.pipeline_mode<synchronous>, transform_indices = @transform_6, window_bounds = array<i64: 32, 64>}, {pipeline_mode = #tpu.pipeline_mode<synchronous>, transform_indices = @transform_7, window_bounds = array<i64: 32, 96>}]} {
    %c0 = arith.constant 0 : index
    %c0_0 = arith.constant 0 : index
    %0 = vector.load %arg1[%c0, %c0_0] : memref<32x576xf32, #tpu.memory_space<vmem>>, vector<32x576xf32>
    %1 = arith.truncf %0 : vector<32x576xf32> to vector<32x576xbf16>
    %c0_1 = arith.constant 0 : index
    %c0_2 = arith.constant 0 : index
    %2 = vector.load %arg2[%c0_1, %c0_2] : memref<576x64xbf16, #tpu.memory_space<vmem>>, vector<576x64xbf16>
    %cst = arith.constant dense<0.000000e+00> : vector<32x64xf32>
    %3 = tpu.matmul %1, %2, %cst {dimension_numbers = #tpu.dot_dimension_numbers<[1], [0], [0], [1], [0, 0, 1, 1], [], []>} : vector<32x576xbf16>, vector<576x64xbf16>, vector<32x64xf32> -> vector<32x64xf32>
    %c0_3 = arith.constant 0 : index
    %c0_4 = arith.constant 0 : index
    %4 = vector.load %arg3[%c0_3, %c0_4] : memref<1x64xf32, #tpu.memory_space<vmem>>, vector<1x64xf32>
    %5 = vector.broadcast %4 : vector<1x64xf32> to vector<32x64xf32>
    %6 = arith.addf %3, %5 : vector<32x64xf32>
    %cst_5 = arith.constant 0.00999999977 : f32
    %7 = vector.broadcast %cst_5 : f32 to vector<32x64xf32>
    %8 = arith.mulf %7, %6 : vector<32x64xf32>
    %9 = arith.maximumf %6, %8 : vector<32x64xf32>
    %c0_6 = arith.constant 0 : index
    %c0_7 = arith.constant 0 : index
    %10 = vector.load %arg7[%c0_6, %c0_7] : memref<32x64xf32, #tpu.memory_space<vmem>>, vector<32x64xf32>
    tpu.vector_store %arg7[%c0_6, %c0_7], %9 {strides = array<i32>} : memref<32x64xf32, #tpu.memory_space<vmem>>, vector<32x64xf32>,
    %c0_8 = arith.constant 0 : index
    %c0_9 = arith.constant 0 : index
    %11 = vector.load %arg4[%c0_8, %c0_9] : memref<32x864xf32, #tpu.memory_space<vmem>>, vector<32x864xf32>
    %12 = arith.truncf %11 : vector<32x864xf32> to vector<32x864xbf16>
    %c0_10 = arith.constant 0 : index
    %c0_11 = arith.constant 0 : index
    %13 = vector.load %arg5[%c0_10, %c0_11] : memref<864x96xbf16, #tpu.memory_space<vmem>>, vector<864x96xbf16>
    %cst_12 = arith.constant dense<0.000000e+00> : vector<32x96xf32>
    %14 = tpu.matmul %12, %13, %cst_12 {dimension_numbers = #tpu.dot_dimension_numbers<[1], [0], [0], [1], [0, 0, 1, 1], [], []>} : vector<32x864xbf16>, vector<864x96xbf16>, vector<32x96xf32> -> vector<32x96xf32>
    %c0_13 = arith.constant 0 : index
    %c0_14 = arith.constant 0 : index
    %15 = vector.load %arg6[%c0_13, %c0_14] : memref<1x96xf32, #tpu.memory_space<vmem>>, vector<1x96xf32>
    %16 = vector.broadcast %15 : vector<1x96xf32> to vector<32x96xf32>
    %17 = arith.addf %14, %16 : vector<32x96xf32>
    %cst_15 = arith.constant 0.00999999977 : f32
    %18 = vector.broadcast %cst_15 : f32 to vector<32x96xf32>
    %19 = arith.mulf %18, %17 : vector<32x96xf32>
    %20 = arith.maximumf %17, %19 : vector<32x96xf32>
    %c0_16 = arith.constant 0 : index
    %c0_17 = arith.constant 0 : index
    %21 = vector.load %arg8[%c0_16, %c0_17] : memref<32x96xf32, #tpu.memory_space<vmem>>, vector<32x96xf32>
    tpu.vector_store %arg8[%c0_16, %c0_17], %20 {strides = array<i32>} : memref<32x96xf32, #tpu.memory_space<vmem>>, vector<32x96xf32>,
    return
  }
  func.func @transform_0(%arg0: i32) -> (i32, i32) {
    %c0_i32 = arith.constant 0 : i32
    %c0_i32_0 = arith.constant 0 : i32
    %c0_i32_1 = arith.constant 0 : i32
    return %c0_i32, %c0_i32_0 : i32, i32
  }
  func.func @transform_1(%arg0: i32) -> (i32, i32) {
    %c0_i32 = arith.constant 0 : i32
    %c0_i32_0 = arith.constant 0 : i32
    %c0_i32_1 = arith.constant 0 : i32
    return %c0_i32, %c0_i32_0 : i32, i32
  }
  func.func @transform_2(%arg0: i32) -> (i32, i32) {
    %c0_i32 = arith.constant 0 : i32
    %c0_i32_0 = arith.constant 0 : i32
    %c0_i32_1 = arith.constant 0 : i32
    return %c0_i32, %c0_i32_0 : i32, i32
  }
  func.func @transform_3(%arg0: i32) -> (i32, i32) {
    %c0_i32 = arith.constant 0 : i32
    %c0_i32_0 = arith.constant 0 : i32
    %c0_i32_1 = arith.constant 0 : i32
    return %c0_i32, %c0_i32_0 : i32, i32
  }
  func.func @transform_4(%arg0: i32) -> (i32, i32) {
    %c0_i32 = arith.constant 0 : i32
    %c0_i32_0 = arith.constant 0 : i32
    %c0_i32_1 = arith.constant 0 : i32
    return %c0_i32, %c0_i32_0 : i32, i32
  }
  func.func @transform_5(%arg0: i32) -> (i32, i32) {
    %c0_i32 = arith.constant 0 : i32
    %c0_i32_0 = arith.constant 0 : i32
    %c0_i32_1 = arith.constant 0 : i32
    return %c0_i32, %c0_i32_0 : i32, i32
  }
  func.func @transform_6(%arg0: i32) -> (i32, i32) {
    %c0_i32 = arith.constant 0 : i32
    %c0_i32_0 = arith.constant 0 : i32
    %c0_i32_1 = arith.constant 0 : i32
    return %c0_i32, %c0_i32_0 : i32, i32
  }
  func.func @transform_7(%arg0: i32) -> (i32, i32) {
    %c0_i32 = arith.constant 0 : i32
    %c0_i32_0 = arith.constant 0 : i32
    %c0_i32_1 = arith.constant 0 : i32
    return %c0_i32, %c0_i32_0 : i32, i32
  }
}

module attributes {stable_mosaic.version = 11 : i64} {
  func.func @_pair_matmul_kernel(%arg0: i32, %arg1: memref<8x576xf32, #tpu.memory_space<vmem>>, %arg2: memref<576x64xbf16, #tpu.memory_space<vmem>>, %arg3: memref<1x64xf32, #tpu.memory_space<vmem>>, %arg4: memref<8x864xf32, #tpu.memory_space<vmem>>, %arg5: memref<864x128xbf16, #tpu.memory_space<vmem>>, %arg6: memref<1x128xf32, #tpu.memory_space<vmem>>, %arg7: memref<8x64xf32, #tpu.memory_space<vmem>>, %arg8: memref<8x128xf32, #tpu.memory_space<vmem>>) attributes {dimension_semantics = [#tpu.dimension_semantics<arbitrary>], iteration_bounds = array<i64: 1>, scalar_prefetch = 0 : i64, scratch_operands = 0 : i64, tpu.core_type = #tpu.core_type<tc>, window_params = [{pipeline_mode = #tpu.pipeline_mode<synchronous>, transform_indices = @transform_0, window_bounds = array<i64: 8, 576>}, {pipeline_mode = #tpu.pipeline_mode<synchronous>, transform_indices = @transform_1, window_bounds = array<i64: 576, 64>}, {pipeline_mode = #tpu.pipeline_mode<synchronous>, transform_indices = @transform_2, window_bounds = array<i64: 1, 64>}, {pipeline_mode = #tpu.pipeline_mode<synchronous>, transform_indices = @transform_3, window_bounds = array<i64: 8, 864>}, {pipeline_mode = #tpu.pipeline_mode<synchronous>, transform_indices = @transform_4, window_bounds = array<i64: 864, 128>}, {pipeline_mode = #tpu.pipeline_mode<synchronous>, transform_indices = @transform_5, window_bounds = array<i64: 1, 128>}, {pipeline_mode = #tpu.pipeline_mode<synchronous>, transform_indices = @transform_6, window_bounds = array<i64: 8, 64>}, {pipeline_mode = #tpu.pipeline_mode<synchronous>, transform_indices = @transform_7, window_bounds = array<i64: 8, 128>}]} {
    %c0 = arith.constant 0 : index
    %c0_0 = arith.constant 0 : index
    %0 = vector.load %arg1[%c0, %c0_0] : memref<8x576xf32, #tpu.memory_space<vmem>>, vector<8x576xf32>
    %1 = arith.truncf %0 : vector<8x576xf32> to vector<8x576xbf16>
    %c0_1 = arith.constant 0 : index
    %c0_2 = arith.constant 0 : index
    %2 = vector.load %arg2[%c0_1, %c0_2] : memref<576x64xbf16, #tpu.memory_space<vmem>>, vector<576x64xbf16>
    %cst = arith.constant dense<0.000000e+00> : vector<8x64xf32>
    %3 = tpu.matmul %1, %2, %cst {dimension_numbers = #tpu.dot_dimension_numbers<[1], [0], [0], [1], [0, 0, 1, 1], [], []>} : vector<8x576xbf16>, vector<576x64xbf16>, vector<8x64xf32> -> vector<8x64xf32>
    %c0_3 = arith.constant 0 : index
    %c0_4 = arith.constant 0 : index
    %4 = vector.load %arg3[%c0_3, %c0_4] : memref<1x64xf32, #tpu.memory_space<vmem>>, vector<1x64xf32>
    %5 = vector.broadcast %4 : vector<1x64xf32> to vector<8x64xf32>
    %6 = arith.addf %3, %5 : vector<8x64xf32>
    %cst_5 = arith.constant 0.00999999977 : f32
    %7 = vector.broadcast %cst_5 : f32 to vector<8x64xf32>
    %8 = arith.mulf %7, %6 : vector<8x64xf32>
    %9 = arith.maximumf %6, %8 : vector<8x64xf32>
    %c0_6 = arith.constant 0 : index
    %c0_7 = arith.constant 0 : index
    %10 = vector.load %arg7[%c0_6, %c0_7] : memref<8x64xf32, #tpu.memory_space<vmem>>, vector<8x64xf32>
    tpu.vector_store %arg7[%c0_6, %c0_7], %9 {strides = array<i32>} : memref<8x64xf32, #tpu.memory_space<vmem>>, vector<8x64xf32>,
    %c0_8 = arith.constant 0 : index
    %c0_9 = arith.constant 0 : index
    %11 = vector.load %arg4[%c0_8, %c0_9] : memref<8x864xf32, #tpu.memory_space<vmem>>, vector<8x864xf32>
    %12 = arith.truncf %11 : vector<8x864xf32> to vector<8x864xbf16>
    %c0_10 = arith.constant 0 : index
    %c0_11 = arith.constant 0 : index
    %13 = vector.load %arg5[%c0_10, %c0_11] : memref<864x128xbf16, #tpu.memory_space<vmem>>, vector<864x128xbf16>
    %cst_12 = arith.constant dense<0.000000e+00> : vector<8x128xf32>
    %14 = tpu.matmul %12, %13, %cst_12 {dimension_numbers = #tpu.dot_dimension_numbers<[1], [0], [0], [1], [0, 0, 1, 1], [], []>} : vector<8x864xbf16>, vector<864x128xbf16>, vector<8x128xf32> -> vector<8x128xf32>
    %c0_13 = arith.constant 0 : index
    %c0_14 = arith.constant 0 : index
    %15 = vector.load %arg6[%c0_13, %c0_14] : memref<1x128xf32, #tpu.memory_space<vmem>>, vector<1x128xf32>
    %16 = vector.broadcast %15 : vector<1x128xf32> to vector<8x128xf32>
    %17 = arith.addf %14, %16 : vector<8x128xf32>
    %cst_15 = arith.constant 0.00999999977 : f32
    %18 = vector.broadcast %cst_15 : f32 to vector<8x128xf32>
    %19 = arith.mulf %18, %17 : vector<8x128xf32>
    %20 = arith.maximumf %17, %19 : vector<8x128xf32>
    %c0_16 = arith.constant 0 : index
    %c0_17 = arith.constant 0 : index
    %21 = vector.load %arg8[%c0_16, %c0_17] : memref<8x128xf32, #tpu.memory_space<vmem>>, vector<8x128xf32>
    tpu.vector_store %arg8[%c0_16, %c0_17], %20 {strides = array<i32>} : memref<8x128xf32, #tpu.memory_space<vmem>>, vector<8x128xf32>,
    return
  }
  func.func @transform_0(%arg0: i32) -> (i32, i32) {
    %c0_i32 = arith.constant 0 : i32
    %c0_i32_0 = arith.constant 0 : i32
    %c0_i32_1 = arith.constant 0 : i32
    return %c0_i32, %c0_i32_0 : i32, i32
  }
  func.func @transform_1(%arg0: i32) -> (i32, i32) {
    %c0_i32 = arith.constant 0 : i32
    %c0_i32_0 = arith.constant 0 : i32
    %c0_i32_1 = arith.constant 0 : i32
    return %c0_i32, %c0_i32_0 : i32, i32
  }
  func.func @transform_2(%arg0: i32) -> (i32, i32) {
    %c0_i32 = arith.constant 0 : i32
    %c0_i32_0 = arith.constant 0 : i32
    %c0_i32_1 = arith.constant 0 : i32
    return %c0_i32, %c0_i32_0 : i32, i32
  }
  func.func @transform_3(%arg0: i32) -> (i32, i32) {
    %c0_i32 = arith.constant 0 : i32
    %c0_i32_0 = arith.constant 0 : i32
    %c0_i32_1 = arith.constant 0 : i32
    return %c0_i32, %c0_i32_0 : i32, i32
  }
  func.func @transform_4(%arg0: i32) -> (i32, i32) {
    %c0_i32 = arith.constant 0 : i32
    %c0_i32_0 = arith.constant 0 : i32
    %c0_i32_1 = arith.constant 0 : i32
    return %c0_i32, %c0_i32_0 : i32, i32
  }
  func.func @transform_5(%arg0: i32) -> (i32, i32) {
    %c0_i32 = arith.constant 0 : i32
    %c0_i32_0 = arith.constant 0 : i32
    %c0_i32_1 = arith.constant 0 : i32
    return %c0_i32, %c0_i32_0 : i32, i32
  }
  func.func @transform_6(%arg0: i32) -> (i32, i32) {
    %c0_i32 = arith.constant 0 : i32
    %c0_i32_0 = arith.constant 0 : i32
    %c0_i32_1 = arith.constant 0 : i32
    return %c0_i32, %c0_i32_0 : i32, i32
  }
  func.func @transform_7(%arg0: i32) -> (i32, i32) {
    %c0_i32 = arith.constant 0 : i32
    %c0_i32_0 = arith.constant 0 : i32
    %c0_i32_1 = arith.constant 0 : i32
    return %c0_i32, %c0_i32_0 : i32, i32
  }
}

module attributes {stable_mosaic.version = 11 : i64} {
  func.func @_heads_kernel(%arg0: i32, %arg1: memref<2x256xf32, #tpu.memory_space<vmem>>, %arg2: memref<256x48xbf16, #tpu.memory_space<vmem>>, %arg3: memref<1x48xf32, #tpu.memory_space<vmem>>, %arg4: memref<48x3xbf16, #tpu.memory_space<vmem>>, %arg5: memref<1x3xf32, #tpu.memory_space<vmem>>, %arg6: memref<2x512xf32, #tpu.memory_space<vmem>>, %arg7: memref<512x128xbf16, #tpu.memory_space<vmem>>, %arg8: memref<1x128xf32, #tpu.memory_space<vmem>>, %arg9: memref<128x48xbf16, #tpu.memory_space<vmem>>, %arg10: memref<1x48xf32, #tpu.memory_space<vmem>>, %arg11: memref<2x3xf32, #tpu.memory_space<vmem>>, %arg12: memref<2x48xf32, #tpu.memory_space<vmem>>) attributes {dimension_semantics = [#tpu.dimension_semantics<arbitrary>], iteration_bounds = array<i64: 1>, scalar_prefetch = 0 : i64, scratch_operands = 0 : i64, tpu.core_type = #tpu.core_type<tc>, window_params = [{pipeline_mode = #tpu.pipeline_mode<synchronous>, transform_indices = @transform_0, window_bounds = array<i64: 2, 256>}, {pipeline_mode = #tpu.pipeline_mode<synchronous>, transform_indices = @transform_1, window_bounds = array<i64: 256, 48>}, {pipeline_mode = #tpu.pipeline_mode<synchronous>, transform_indices = @transform_2, window_bounds = array<i64: 1, 48>}, {pipeline_mode = #tpu.pipeline_mode<synchronous>, transform_indices = @transform_3, window_bounds = array<i64: 48, 3>}, {pipeline_mode = #tpu.pipeline_mode<synchronous>, transform_indices = @transform_4, window_bounds = array<i64: 1, 3>}, {pipeline_mode = #tpu.pipeline_mode<synchronous>, transform_indices = @transform_5, window_bounds = array<i64: 2, 512>}, {pipeline_mode = #tpu.pipeline_mode<synchronous>, transform_indices = @transform_6, window_bounds = array<i64: 512, 128>}, {pipeline_mode = #tpu.pipeline_mode<synchronous>, transform_indices = @transform_7, window_bounds = array<i64: 1, 128>}, {pipeline_mode = #tpu.pipeline_mode<synchronous>, transform_indices = @transform_8, window_bounds = array<i64: 128, 48>}, {pipeline_mode = #tpu.pipeline_mode<synchronous>, transform_indices = @transform_9, window_bounds = array<i64: 1, 48>}, {pipeline_mode = #tpu.pipeline_mode<synchronous>, transform_indices = @transform_10, window_bounds = array<i64: 2, 3>}, {pipeline_mode = #tpu.pipeline_mode<synchronous>, transform_indices = @transform_11, window_bounds = array<i64: 2, 48>}]} {
    %c0 = arith.constant 0 : index
    %c0_0 = arith.constant 0 : index
    %0 = vector.load %arg1[%c0, %c0_0] : memref<2x256xf32, #tpu.memory_space<vmem>>, vector<2x256xf32>
    %1 = arith.truncf %0 : vector<2x256xf32> to vector<2x256xbf16>
    %c0_1 = arith.constant 0 : index
    %c0_2 = arith.constant 0 : index
    %2 = vector.load %arg2[%c0_1, %c0_2] : memref<256x48xbf16, #tpu.memory_space<vmem>>, vector<256x48xbf16>
    %cst = arith.constant dense<0.000000e+00> : vector<2x48xf32>
    %3 = tpu.matmul %1, %2, %cst {dimension_numbers = #tpu.dot_dimension_numbers<[1], [0], [0], [1], [0, 0, 1, 1], [], []>} : vector<2x256xbf16>, vector<256x48xbf16>, vector<2x48xf32> -> vector<2x48xf32>
    %c0_3 = arith.constant 0 : index
    %c0_4 = arith.constant 0 : index
    %4 = vector.load %arg3[%c0_3, %c0_4] : memref<1x48xf32, #tpu.memory_space<vmem>>, vector<1x48xf32>
    %5 = vector.broadcast %4 : vector<1x48xf32> to vector<2x48xf32>
    %6 = arith.addf %3, %5 : vector<2x48xf32>
    %cst_5 = arith.constant 0.00999999977 : f32
    %7 = vector.broadcast %cst_5 : f32 to vector<2x48xf32>
    %8 = arith.mulf %7, %6 : vector<2x48xf32>
    %9 = arith.maximumf %6, %8 : vector<2x48xf32>
    %10 = arith.truncf %9 : vector<2x48xf32> to vector<2x48xbf16>
    %c0_6 = arith.constant 0 : index
    %c0_7 = arith.constant 0 : index
    %11 = vector.load %arg4[%c0_6, %c0_7] : memref<48x3xbf16, #tpu.memory_space<vmem>>, vector<48x3xbf16>
    %cst_8 = arith.constant dense<0.000000e+00> : vector<2x3xf32>
    %12 = tpu.matmul %10, %11, %cst_8 {dimension_numbers = #tpu.dot_dimension_numbers<[1], [0], [0], [1], [0, 0, 1, 1], [], []>} : vector<2x48xbf16>, vector<48x3xbf16>, vector<2x3xf32> -> vector<2x3xf32>
    %c0_9 = arith.constant 0 : index
    %c0_10 = arith.constant 0 : index
    %13 = vector.load %arg5[%c0_9, %c0_10] : memref<1x3xf32, #tpu.memory_space<vmem>>, vector<1x3xf32>
    %14 = vector.broadcast %13 : vector<1x3xf32> to vector<2x3xf32>
    %15 = arith.addf %12, %14 : vector<2x3xf32>
    %cst_11 = arith.constant 5.000000e-01 : f32
    %16 = vector.broadcast %cst_11 : f32 to vector<2x3xf32>
    %17 = arith.mulf %16, %15 : vector<2x3xf32>
    %18 = math.tanh %17 : vector<2x3xf32>
    %cst_12 = arith.constant 1.000000e+00 : f32
    %19 = vector.broadcast %cst_12 : f32 to vector<2x3xf32>
    %20 = arith.addf %18, %19 : vector<2x3xf32>
    %cst_13 = arith.constant 5.000000e-01 : f32
    %21 = vector.broadcast %cst_13 : f32 to vector<2x3xf32>
    %22 = arith.mulf %21, %20 : vector<2x3xf32>
    %c0_14 = arith.constant 0 : index
    %c0_15 = arith.constant 0 : index
    %23 = vector.load %arg11[%c0_14, %c0_15] : memref<2x3xf32, #tpu.memory_space<vmem>>, vector<2x3xf32>
    tpu.vector_store %arg11[%c0_14, %c0_15], %22 {strides = array<i32>} : memref<2x3xf32, #tpu.memory_space<vmem>>, vector<2x3xf32>,
    %c0_16 = arith.constant 0 : index
    %c0_17 = arith.constant 0 : index
    %24 = vector.load %arg6[%c0_16, %c0_17] : memref<2x512xf32, #tpu.memory_space<vmem>>, vector<2x512xf32>
    %25 = arith.truncf %24 : vector<2x512xf32> to vector<2x512xbf16>
    %c0_18 = arith.constant 0 : index
    %c0_19 = arith.constant 0 : index
    %26 = vector.load %arg7[%c0_18, %c0_19] : memref<512x128xbf16, #tpu.memory_space<vmem>>, vector<512x128xbf16>
    %cst_20 = arith.constant dense<0.000000e+00> : vector<2x128xf32>
    %27 = tpu.matmul %25, %26, %cst_20 {dimension_numbers = #tpu.dot_dimension_numbers<[1], [0], [0], [1], [0, 0, 1, 1], [], []>} : vector<2x512xbf16>, vector<512x128xbf16>, vector<2x128xf32> -> vector<2x128xf32>
    %c0_21 = arith.constant 0 : index
    %c0_22 = arith.constant 0 : index
    %28 = vector.load %arg8[%c0_21, %c0_22] : memref<1x128xf32, #tpu.memory_space<vmem>>, vector<1x128xf32>
    %29 = vector.broadcast %28 : vector<1x128xf32> to vector<2x128xf32>
    %30 = arith.addf %27, %29 : vector<2x128xf32>
    %cst_23 = arith.constant 0.00999999977 : f32
    %31 = vector.broadcast %cst_23 : f32 to vector<2x128xf32>
    %32 = arith.mulf %31, %30 : vector<2x128xf32>
    %33 = arith.maximumf %30, %32 : vector<2x128xf32>
    %34 = arith.truncf %33 : vector<2x128xf32> to vector<2x128xbf16>
    %c0_24 = arith.constant 0 : index
    %c0_25 = arith.constant 0 : index
    %35 = vector.load %arg9[%c0_24, %c0_25] : memref<128x48xbf16, #tpu.memory_space<vmem>>, vector<128x48xbf16>
    %cst_26 = arith.constant dense<0.000000e+00> : vector<2x48xf32>
    %36 = tpu.matmul %34, %35, %cst_26 {dimension_numbers = #tpu.dot_dimension_numbers<[1], [0], [0], [1], [0, 0, 1, 1], [], []>} : vector<2x128xbf16>, vector<128x48xbf16>, vector<2x48xf32> -> vector<2x48xf32>
    %c0_27 = arith.constant 0 : index
    %c0_28 = arith.constant 0 : index
    %37 = vector.load %arg10[%c0_27, %c0_28] : memref<1x48xf32, #tpu.memory_space<vmem>>, vector<1x48xf32>
    %38 = vector.broadcast %37 : vector<1x48xf32> to vector<2x48xf32>
    %39 = arith.addf %36, %38 : vector<2x48xf32>
    %c0_29 = arith.constant 0 : index
    %c0_30 = arith.constant 0 : index
    %40 = vector.load %arg12[%c0_29, %c0_30] : memref<2x48xf32, #tpu.memory_space<vmem>>, vector<2x48xf32>
    tpu.vector_store %arg12[%c0_29, %c0_30], %39 {strides = array<i32>} : memref<2x48xf32, #tpu.memory_space<vmem>>, vector<2x48xf32>,
    return
  }
  func.func @transform_0(%arg0: i32) -> (i32, i32) {
    %c0_i32 = arith.constant 0 : i32
    %c0_i32_0 = arith.constant 0 : i32
    %c0_i32_1 = arith.constant 0 : i32
    return %c0_i32, %c0_i32_0 : i32, i32
  }
  func.func @transform_1(%arg0: i32) -> (i32, i32) {
    %c0_i32 = arith.constant 0 : i32
    %c0_i32_0 = arith.constant 0 : i32
    %c0_i32_1 = arith.constant 0 : i32
    return %c0_i32, %c0_i32_0 : i32, i32
  }
  func.func @transform_2(%arg0: i32) -> (i32, i32) {
    %c0_i32 = arith.constant 0 : i32
    %c0_i32_0 = arith.constant 0 : i32
    %c0_i32_1 = arith.constant 0 : i32
    return %c0_i32, %c0_i32_0 : i32, i32
  }
  func.func @transform_3(%arg0: i32) -> (i32, i32) {
    %c0_i32 = arith.constant 0 : i32
    %c0_i32_0 = arith.constant 0 : i32
    %c0_i32_1 = arith.constant 0 : i32
    return %c0_i32, %c0_i32_0 : i32, i32
  }
  func.func @transform_4(%arg0: i32) -> (i32, i32) {
    %c0_i32 = arith.constant 0 : i32
    %c0_i32_0 = arith.constant 0 : i32
    %c0_i32_1 = arith.constant 0 : i32
    return %c0_i32, %c0_i32_0 : i32, i32
  }
  func.func @transform_5(%arg0: i32) -> (i32, i32) {
    %c0_i32 = arith.constant 0 : i32
    %c0_i32_0 = arith.constant 0 : i32
    %c0_i32_1 = arith.constant 0 : i32
    return %c0_i32, %c0_i32_0 : i32, i32
  }
  func.func @transform_6(%arg0: i32) -> (i32, i32) {
    %c0_i32 = arith.constant 0 : i32
    %c0_i32_0 = arith.constant 0 : i32
    %c0_i32_1 = arith.constant 0 : i32
    return %c0_i32, %c0_i32_0 : i32, i32
  }
  func.func @transform_7(%arg0: i32) -> (i32, i32) {
    %c0_i32 = arith.constant 0 : i32
    %c0_i32_0 = arith.constant 0 : i32
    %c0_i32_1 = arith.constant 0 : i32
    return %c0_i32, %c0_i32_0 : i32, i32
  }
  func.func @transform_8(%arg0: i32) -> (i32, i32) {
    %c0_i32 = arith.constant 0 : i32
    %c0_i32_0 = arith.constant 0 : i32
    %c0_i32_1 = arith.constant 0 : i32
    return %c0_i32, %c0_i32_0 : i32, i32
  }
  func.func @transform_9(%arg0: i32) -> (i32, i32) {
    %c0_i32 = arith.constant 0 : i32
    %c0_i32_0 = arith.constant 0 : i32
    %c0_i32_1 = arith.constant 0 : i32
    return %c0_i32, %c0_i32_0 : i32, i32
  }
  func.func @transform_10(%arg0: i32) -> (i32, i32) {
    %c0_i32 = arith.constant 0 : i32
    %c0_i32_0 = arith.constant 0 : i32
    %c0_i32_1 = arith.constant 0 : i32
    return %c0_i32, %c0_i32_0 : i32, i32
  }
  func.func @transform_11(%arg0: i32) -> (i32, i32) {
    %c0_i32 = arith.constant 0 : i32
    %c0_i32_0 = arith.constant 0 : i32
    %c0_i32_1 = arith.constant 0 : i32
    return %c0_i32, %c0_i32_0 : i32, i32
  }
}

</mosaic_0001>

<llo_original>
// kernel: grasp_model_forward.9
$region0: #{grasp_model_forward.9}
  #allocation0 [shape = 'u32[]', space=smem, size = 0x4, offset = 0x4, fixed_abs, tag = 'smem constant byte address 0x4 - core index']
  #allocation1 [shape = 'u32[72,128]{1,0:T(1,128)}', space=vmem, size = 0x9000, scoped, tag = 'internal scratch']
  %s0 = inlined_call_operand.vmem [shape: f32[1800,36], index: 0, kind: input, shape index: {}]
  %s1 = inlined_call_operand.vmem [shape: bf16[36,32], index: 1, kind: input, shape index: {}]
  %s2 = inlined_call_operand.vmem [shape: f32[1,32], index: 2, kind: input, shape index: {}]
  %s3 = inlined_call_operand.vmem [shape: f32[1800,32], index: 3, kind: output, shape index: {}]
  %s4 = sld [smem:[#allocation0]]
  $region45: #{grasp_model_forward.9} parent=0
    _
  %s6 = ssub.s32 1, %s4
  %s7 = scalar_select 0, %s6, %s4
  loop: start=0, step=1, limit=7
  $region2: #{grasp_model_forward.9} parent=0 // loop_pre_header
    _
  $region3: #{grasp_model_forward.9} parent=0 // loop_header
    %s9 = sphi 0, %s13
    %p10 = scmp.ge.s32.totalorder %s9, 7
    %s19 = sphi 0, %s21
    %s22 = sphi 0, %s19
    %s23 = sphi 0, %s22
    %s39 = sphi 0, %s23
    %s43 = sphi 0, %s43
    %s45 = sphi 0, %s43
    %s46 = sphi 0, %s45
    %s60 = sphi 0, %s46
    %s64 = sphi 0, %s64
    %s66 = sphi 0, %s64
    %s67 = sphi 0, %s66
    %s81 = sphi 0, %s67
    %s87 = sphi 0, %s89
    %s90 = sphi 0, %s87
    %s91 = sphi 0, %s90
    %s107 = sphi 0, %s91
  $region4: #{grasp_model_forward.9} parent=0 // loop_header_branch
    %12 = sbr.rel (%p10) target = $region8
  $region5: #{grasp_model_forward.9} parent=0 // loop_body
    %s14 = ssub.s32 %s9, 1
    %s15 = ssub.s32 %s9, 2
    %s16 = sadd.s32 %s9, 1
    %s17 = ssub.s32 %s9, %s16
    %p18 = scmp.eq.s32.totalorder %s17, 0
    %s20 = sadd.s32 %s19, 1
    %s21 = scalar_select %p18, %s19, %s20
    %p24 = pneg %p18
    %p25 = scmp.eq.s32.totalorder %s9, 4
    %p26 = por %p24, %p25
    %p27 = scmp.ne.s32.totalorder %s19, %s22
    %p28 = scmp.eq.s32.totalorder %s9, 0
    %p29 = por %p27, %p28
    %p30 = scmp.ne.s32.totalorder %s19, %s22
    %p31 = scmp.eq.s32.totalorder %s14, 4
    %p32 = por %p30, %p31
    %p33 = scmp.ne.s32.totalorder %s22, %s23
    %p34 = scmp.eq.s32.totalorder %s14, 0
    %p35 = por %p33, %p34
    %p36 = scmp.ne.s32.totalorder %s22, %s23
    %p37 = scmp.eq.s32.totalorder %s15, 4
    %p38 = por %p36, %p37
    %p40 = scmp.ne.s32.totalorder %s23, %s39
    %p41 = scmp.eq.s32.totalorder %s15, 0
    %p42 = por %p40, %p41
    %s44 = sadd.s32 %s43, 1
    %p47 = scmp.eq.s32.totalorder %s9, 4
    %p48 = scmp.ne.s32.totalorder %s43, %s45
    %p49 = scmp.eq.s32.totalorder %s9, 0
    %p50 = por %p48, %p49
    %p51 = scmp.ne.s32.totalorder %s43, %s45
    %p52 = scmp.eq.s32.totalorder %s14, 4
    %p53 = por %p51, %p52
    %p54 = scmp.ne.s32.totalorder %s45, %s46
    %p55 = scmp.eq.s32.totalorder %s14, 0
    %p56 = por %p54, %p55
    %p57 = scmp.ne.s32.totalorder %s45, %s46
    %p58 = scmp.eq.s32.totalorder %s15, 4
    %p59 = por %p57, %p58
    %p61 = scmp.ne.s32.totalorder %s46, %s60
    %p62 = scmp.eq.s32.totalorder %s15, 0
    %p63 = por %p61, %p62
    %s65 = sadd.s32 %s64, 1
    %p68 = scmp.eq.s32.totalorder %s9, 4
    %p69 = scmp.ne.s32.totalorder %s64, %s66
    %p70 = scmp.eq.s32.totalorder %s9, 0
    %p71 = por %p69, %p70
    %p72 = scmp.ne.s32.totalorder %s64, %s66
    %p73 = scmp.eq.s32.totalorder %s14, 4
    %p74 = por %p72, %p73
    %p75 = scmp.ne.s32.totalorder %s66, %s67
    %p76 = scmp.eq.s32.totalorder %s14, 0
    %p77 = por %p75, %p76
    %p78 = scmp.ne.s32.totalorder %s66, %s67
    %p79 = scmp.eq.s32.totalorder %s15, 4
    %p80 = por %p78, %p79
    %p82 = scmp.ne.s32.totalorder %s67, %s81
    %p83 = scmp.eq.s32.totalorder %s15, 0
    %p84 = por %p82, %p83
    %s85 = ssub.s32 %s9, %s16
    %p86 = scmp.eq.s32.totalorder %s85, 0
    %s88 = sadd.s32 %s87, 1
    %s89 = scalar_select %p86, %s87, %s88
    %p92 = pneg %p86
    %p93 = scmp.eq.s32.totalorder %s9, 4
    %p94 = por %p92, %p93
    %p95 = scmp.ne.s32.totalorder %s87, %s90
    %p96 = scmp.eq.s32.totalorder %s9, 0
    %p97 = por %p95, %p96
    %p98 = scmp.ne.s32.totalorder %s87, %s90
    %p99 = scmp.eq.s32.totalorder %s14, 4
    %p100 = por %p98, %p99
    %p101 = scmp.ne.s32.totalorder %s90, %s91
    %p102 = scmp.eq.s32.totalorder %s14, 0
    %p103 = por %p101, %p102
    %p104 = scmp.ne.s32.totalorder %s90, %s91
    %p105 = scmp.eq.s32.totalorder %s15, 4
    %p106 = por %p104, %p105
    %p108 = scmp.ne.s32.totalorder %s91, %s107
    %p109 = scmp.eq.s32.totalorder %s15, 0
    %p110 = por %p108, %p109
    %p111 = scmp.le.s32.totalorder 1, %s9
    %p112 = scmp.lt.s32.totalorder %s9, 6
    %p113 = pnand %p111, %p112
    %p114 = pneg %p113
    // Predicated region
    $region9: #{grasp_model_forward.9} parent=5 // pred_check
      _
    $region10: #{grasp_model_forward.9} parent=5 // pred_check_branch
      %116 = sbr.rel (%p113) target = $region12
    $region11: #{grasp_model_forward.9} parent=5 // pred_region
      %s117 = ssub.s32 %s9, 1
      // Predicated region
      $region13: #{grasp_model_forward.9} parent=11 // pred_check
        %p118 = pneg %p56
      $region14: #{grasp_model_forward.9} parent=11 // pred_check_branch
        %120 = sbr.rel (%p118) target = $region16
      $region15: #{grasp_model_forward.9} parent=11 // pred_region
        _
      $region16: #{grasp_model_forward.9} parent=11 // pred_fallthru
        _
      // Predicated region
      $region17: #{grasp_model_forward.9} parent=11 // pred_check
        %p121 = pneg %p77
      $region18: #{grasp_model_forward.9} parent=11 // pred_check_branch
        %123 = sbr.rel (%p121) target = $region20
      $region19: #{grasp_model_forward.9} parent=11 // pred_region
        _
      $region20: #{grasp_model_forward.9} parent=11 // pred_fallthru
        _
    $region12: #{grasp_model_forward.9} parent=5 // pred_fallthru
      _
    %p124 = scmp.lt.s32.totalorder %s9, 5
    // Predicated region
    $region21: #{grasp_model_forward.9} parent=5 // pred_check
      %p125 = pneg %p124
    $region22: #{grasp_model_forward.9} parent=5 // pred_check_branch
      %127 = sbr.rel (%p125) target = $region24
    $region23: #{grasp_model_forward.9} parent=5 // pred_region
      // Predicated region
      $region25: #{grasp_model_forward.9} parent=23 // pred_check
        %p128 = pneg %p29
      $region26: #{grasp_model_forward.9} parent=23 // pred_check_branch
        %130 = sbr.rel (%p128) target = $region28
      $region27: #{grasp_model_forward.9} parent=23 // pred_region
        %s131 = smul.u32 45, %s9
        %p132 = scmp.lt.s32.totalorder %s131, 224
        %s133 = scalar_select %p132, %s131, 224
        %s134 = smul.addr %s133, 8
        %s135 = scalar_lea.vmem %s0, %s134
        %s136 = smul.u32 45, %s9
      $region28: #{grasp_model_forward.9} parent=23 // pred_fallthru
        _
    $region24: #{grasp_model_forward.9} parent=5 // pred_fallthru
      _
    %p137 = scmp.le.s32.totalorder 1, %s9
    %p138 = scmp.lt.s32.totalorder %s9, 6
    %p139 = pnand %p137, %p138
    %p140 = pneg %p139
    // Predicated region
    $region29: #{grasp_model_forward.9} parent=5 // pred_check
      _
    $region30: #{grasp_model_forward.9} parent=5 // pred_check_branch
      %142 = sbr.rel (%p139) target = $region32
    $region31: #{grasp_model_forward.9} parent=5 // pred_region
      %s143 = ssub.s32 %s9, 1
      %s144 = smul.u32 45, %s14
      %p145 = scmp.lt.s32.totalorder %s144, 224
      %s146 = scalar_select %p145, %s144, 224
      %s147 = smul.addr %s146, 8
      %s148 = scalar_lea.vmem %s0, %s147
      %p149 = pneg %p35
      %p150 = pneg %p32
      %p151 = pneg %p56
      %p152 = pneg %p53
      %p153 = pneg %p77
      %p154 = pneg %p74
      %p155 = pneg %p103
      %p156 = pneg %p100
      %s157 = smul.u32 45, %s14
      %p158 = scmp.lt.s32.totalorder %s157, 224
      %s159 = scalar_select %p158, %s157, 224
      %s160 = smul.addr %s159, 8
      %s161 = scalar_lea.vmem %s3, %s160
      %s162 = smul.u32 45, %s14
      %p163 = scmp.lt.s32.totalorder %s162, 224
      %s164 = scalar_select %p163, %s162, 224
      %s165 = smul.addr %s164, 8
      %s166 = scalar_lea.vmem %s0, %s165
      %s167 = smul.u32 45, %s14
      %s168 = smul.u32 45, %s14
      %p169 = scmp.lt.s32.totalorder %s168, 224
      %s170 = scalar_select %p169, %s168, 224
      %s171 = smul.addr %s170, 8
      %s172 = scalar_lea.vmem %s3, %s171
      %s173 = smul.u32 45, %s14
      %v175 = vld [vmem:[%s166] sm:$0xff]
      %v176 = vld [vmem:[%s166 + $0x8] sm:$0xff]
      %v177 = vld [vmem:[%s166 + $0x10] sm:$0xff]
      %v178 = vld [vmem:[%s166 + $0x18] sm:$0xff]
      %v179 = vld [vmem:[%s166 + $0x20] sm:$0xff]
      %v180 = vld [vmem:[%s166 + $0x28] sm:$0xff]
      %v181 = vld [vmem:[%s166 + $0x30] sm:$0xff]
      %v182 = vld [vmem:[%s166 + $0x38] sm:$0xff]
      %v183 = vld [vmem:[%s166 + $0x40] sm:$0xff]
      %v184 = vld [vmem:[%s166 + $0x48] sm:$0xff]
      %v185 = vld [vmem:[%s166 + $0x50] sm:$0xff]
      %v186 = vld [vmem:[%s166 + $0x58] sm:$0xff]
      %v187 = vld [vmem:[%s166 + $0x60] sm:$0xff]
      %v188 = vld [vmem:[%s166 + $0x68] sm:$0xff]
      %v189 = vld [vmem:[%s166 + $0x70] sm:$0xff]
      %v190 = vld [vmem:[%s166 + $0x78] sm:$0xff]
      %v191 = vld [vmem:[%s166 + $0x80] sm:$0xff]
      %v192 = vld [vmem:[%s166 + $0x88] sm:$0xff]
      %v193 = vld [vmem:[%s166 + $0x90] sm:$0xff]
      %v194 = vld [vmem:[%s166 + $0x98] sm:$0xff]
      %v195 = vld [vmem:[%s166 + $0xa0] sm:$0xff]
      %v196 = vld [vmem:[%s166 + $0xa8] sm:$0xff]
      %v197 = vld [vmem:[%s166 + $0xb0] sm:$0xff]
      %v198 = vld [vmem:[%s166 + $0xb8] sm:$0xff]
      %v199 = vld [vmem:[%s166 + $0xc0] sm:$0xff]
      %v200 = vld [vmem:[%s166 + $0xc8] sm:$0xff]
      %v201 = vld [vmem:[%s166 + $0xd0] sm:$0xff]
      %v202 = vld [vmem:[%s166 + $0xd8] sm:$0xff]
      %v203 = vld [vmem:[%s166 + $0xe0] sm:$0xff]
      %v204 = vld [vmem:[%s166 + $0xe8] sm:$0xff]
      %v205 = vld [vmem:[%s166 + $0xf0] sm:$0xff]
      %v206 = vld [vmem:[%s166 + $0xf8] sm:$0xff]
      %v207 = vld [vmem:[%s166 + $0x100] sm:$0xff]
      %v208 = vld [vmem:[%s166 + $0x108] sm:$0xff]
      %v209 = vld [vmem:[%s166 + $0x110] sm:$0xff]
      %v210 = vld [vmem:[%s166 + $0x118] sm:$0xff]
      %v211 = vld [vmem:[%s166 + $0x120] sm:$0xff]
      %v212 = vld [vmem:[%s166 + $0x128] sm:$0xff]
      %v213 = vld [vmem:[%s166 + $0x130] sm:$0xff]
      %v214 = vld [vmem:[%s166 + $0x138] sm:$0xff]
      %v215 = vld [vmem:[%s166 + $0x140] sm:$0xff]
      %v216 = vld [vmem:[%s166 + $0x148] sm:$0xff]
      %v217 = vld [vmem:[%s166 + $0x150] sm:$0xff]
      %v218 = vld [vmem:[%s166 + $0x158] sm:$0xff]
      %v219 = vld [vmem:[%s166 + $0x160] sm:$0xff]
      %v220 = vpack.c.bf16 %v176, %v175
      %v221 = vpack.c.bf16 %v178, %v177
      %v222 = vpack.c.bf16 %v180, %v179
      %v223 = vpack.c.bf16 %v182, %v181
      %v224 = vpack.c.bf16 %v184, %v183
      %v225 = vpack.c.bf16 %v186, %v185
      %v226 = vpack.c.bf16 %v188, %v187
      %v227 = vpack.c.bf16 %v190, %v189
      %v228 = vpack.c.bf16 %v192, %v191
      %v229 = vpack.c.bf16 %v194, %v193
      %v230 = vpack.c.bf16 %v196, %v195
      %v231 = vpack.c.bf16 %v198, %v197
      %v232 = vpack.c.bf16 %v200, %v199
      %v233 = vpack.c.bf16 %v202, %v201
      %v234 = vpack.c.bf16 %v204, %v203
      %v235 = vpack.c.bf16 %v206, %v205
      %v236 = vpack.c.bf16 %v208, %v207
      %v237 = vpack.c.bf16 %v210, %v209
      %v238 = vpack.c.bf16 %v212, %v211
      %v239 = vpack.c.bf16 %v214, %v213
      %v240 = vpack.c.bf16 %v216, %v215
      %v241 = vpack.c.bf16 %v218, %v217
      %v242 = vpack.c.bf16 %v219, %v219
      %v243 = vld [vmem:[%s1] sm:$0xf]
      %v244 = vld [vmem:[%s1 + $0x4] sm:$0xf]
      %v245 = vld [vmem:[%s1 + $0x8] sm:$0xf]
      %v246 = vld [vmem:[%s1 + $0xc] sm:$0xf]
      %v247 = vld [vmem:[%s1 + $0x10] sm:$0x3]
      %v248 = vld [vmem:[%s2] sm:$0x1]
      %v250 = vperm.slane %v248, 0
      %v257 = vunpack.c.l.b16 %v243
      %v258 = vunpack.c.l.b16 %v244
      %v259 = vunpack.c.l.b16 %v245
      %v260 = vunpack.c.l.b16 %v246
      %v261 = vunpack.c.l.b16 %v247
      %v262 = vpack.c.b16 %v258, %v257
      %v263 = vpack.c.b16 %v260, %v259
      %v264 = vpack.c.b16 %v261, %v261
      %vm267 = vcmask 293888
      %v269 = vsel %vm267, %v220, 0
      %v272 = vsel %vm267, %v221, 0
      %v275 = vsel %vm267, %v222, 0
      %v278 = vsel %vm267, %v223, 0
      %v281 = vsel %vm267, %v224, 0
      %v284 = vsel %vm267, %v225, 0
      %v287 = vsel %vm267, %v226, 0
      %v290 = vsel %vm267, %v227, 0
      %v293 = vsel %vm267, %v228, 0
      %v296 = vsel %vm267, %v229, 0
      %v299 = vsel %vm267, %v230, 0
      %v302 = vsel %vm267, %v231, 0
      %v305 = vsel %vm267, %v232, 0
      %v308 = vsel %vm267, %v233, 0
      %v311 = vsel %vm267, %v234, 0
      %v314 = vsel %vm267, %v235, 0
      %v317 = vsel %vm267, %v236, 0
      %v320 = vsel %vm267, %v237, 0
      %v323 = vsel %vm267, %v238, 0
      %v326 = vsel %vm267, %v239, 0
      %v329 = vsel %vm267, %v240, 0
      %v332 = vsel %vm267, %v241, 0
      %v335 = vsel %vm267, %v242, 0
      %vm337 = vcmask 1041408
      %v339 = vsel %vm337, %v264, 0
      %341 = vmatpush.bf16.msra.mxu0 0
      %342 = vmatpush.bf16.msra.mxu0 0
      %343 = vmatpush.bf16.msra.mxu0 0
      %344 = vmatpush.bf16.msra.mxu0 0
      %345 = vmatpush.bf16.msra.mxu0 0
      %346 = vmatpush.bf16.msra.mxu0 %v339
      %347 = vmatpush.bf16.msra.mxu0 %v263
      %348 = vmatpush.bf16.msra.mxu0 %v262
      %349 = vmatmul.bf16.gmra.mxu0 %v269
      %v350 = vpop.f32.mrf.mxu0
      %v351 = vadd.f32 %v250, %v350
      %v352 = vpop.f32.mrf.mxu0
      %v353 = vadd.f32 %v250, %v352
      %354 = vmatmul.bf16.gmra.mxu0 %v272
      %v355 = vpop.f32.mrf.mxu0
      %v356 = vadd.f32 %v250, %v355
      %v357 = vpop.f32.mrf.mxu0
      %v358 = vadd.f32 %v250, %v357
      %359 = vmatmul.bf16.gmra.mxu0 %v275
      %v360 = vpop.f32.mrf.mxu0
      %v361 = vadd.f32 %v250, %v360
      %v362 = vpop.f32.mrf.mxu0
      %v363 = vadd.f32 %v250, %v362
      %364 = vmatmul.bf16.gmra.mxu0 %v278
      %v365 = vpop.f32.mrf.mxu0
      %v366 = vadd.f32 %v250, %v365
      %v367 = vpop.f32.mrf.mxu0
      %v368 = vadd.f32 %v250, %v367
      %369 = vmatmul.bf16.gmra.mxu0 %v281
      %v370 = vpop.f32.mrf.mxu0
      %v371 = vadd.f32 %v250, %v370
      %v372 = vpop.f32.mrf.mxu0
      %v373 = vadd.f32 %v250, %v372
      %374 = vmatmul.bf16.gmra.mxu0 %v284
      %v375 = vpop.f32.mrf.mxu0
      %v376 = vadd.f32 %v250, %v375
      %v377 = vpop.f32.mrf.mxu0
      %v378 = vadd.f32 %v250, %v377
      %379 = vmatmul.bf16.gmra.mxu0 %v287
      %v380 = vpop.f32.mrf.mxu0
      %v381 = vadd.f32 %v250, %v380
      %v382 = vpop.f32.mrf.mxu0
      %v383 = vadd.f32 %v250, %v382
      %384 = vmatmul.bf16.gmra.mxu0 %v290
      %v385 = vpop.f32.mrf.mxu0
      %v386 = vadd.f32 %v250, %v385
      %v387 = vpop.f32.mrf.mxu0
      %v388 = vadd.f32 %v250, %v387
      %389 = vmatmul.bf16.gmra.mxu0 %v293
      %v390 = vpop.f32.mrf.mxu0
      %v391 = vadd.f32 %v250, %v390
      %v392 = vpop.f32.mrf.mxu0
      %v393 = vadd.f32 %v250, %v392
      %394 = vmatmul.bf16.gmra.mxu0 %v296
      %v395 = vpop.f32.mrf.mxu0
      %v396 = vadd.f32 %v250, %v395
      %v397 = vpop.f32.mrf.mxu0
      %v398 = vadd.f32 %v250, %v397
      %399 = vmatmul.bf16.gmra.mxu0 %v299
      %v400 = vpop.f32.mrf.mxu0
      %v401 = vadd.f32 %v250, %v400
      %v402 = vpop.f32.mrf.mxu0
      %v403 = vadd.f32 %v250, %v402
      %404 = vmatmul.bf16.gmra.mxu0 %v302
      %v405 = vpop.f32.mrf.mxu0
      %v406 = vadd.f32 %v250, %v405
      %v407 = vpop.f32.mrf.mxu0
      %v408 = vadd.f32 %v250, %v407
      %409 = vmatmul.bf16.gmra.mxu0 %v305
      %v410 = vpop.f32.mrf.mxu0
      %v411 = vadd.f32 %v250, %v410
      %v412 = vpop.f32.mrf.mxu0
      %v413 = vadd.f32 %v250, %v412
      %414 = vmatmul.bf16.gmra.mxu0 %v308
      %v415 = vpop.f32.mrf.mxu0
      %v416 = vadd.f32 %v250, %v415
      %v417 = vpop.f32.mrf.mxu0
      %v418 = vadd.f32 %v250, %v417
      %419 = vmatmul.bf16.gmra.mxu0 %v311
      %v420 = vpop.f32.mrf.mxu0
      %v421 = vadd.f32 %v250, %v420
      %v422 = vpop.f32.mrf.mxu0
      %v423 = vadd.f32 %v250, %v422
      %424 = vmatmul.bf16.gmra.mxu0 %v314
      %v425 = vpop.f32.mrf.mxu0
      %v426 = vadd.f32 %v250, %v425
      %v427 = vpop.f32.mrf.mxu0
      %v428 = vadd.f32 %v250, %v427
      %429 = vmatmul.bf16.gmra.mxu0 %v317
      %v430 = vpop.f32.mrf.mxu0
      %v431 = vadd.f32 %v250, %v430
      %v432 = vpop.f32.mrf.mxu0
      %v433 = vadd.f32 %v250, %v432
      %434 = vmatmul.bf16.gmra.mxu0 %v320
      %v435 = vpop.f32.mrf.mxu0
      %v436 = vadd.f32 %v250, %v435
      %v437 = vpop.f32.mrf.mxu0
      %v438 = vadd.f32 %v250, %v437
      %439 = vmatmul.bf16.gmra.mxu0 %v323
      %v440 = vpop.f32.mrf.mxu0
      %v441 = vadd.f32 %v250, %v440
      %v442 = vpop.f32.mrf.mxu0
      %v443 = vadd.f32 %v250, %v442
      %444 = vmatmul.bf16.gmra.mxu0 %v326
      %v445 = vpop.f32.mrf.mxu0
      %v446 = vadd.f32 %v250, %v445
      %v447 = vpop.f32.mrf.mxu0
      %v448 = vadd.f32 %v250, %v447
      %449 = vmatmul.bf16.gmra.mxu0 %v329
      %v450 = vpop.f32.mrf.mxu0
      %v451 = vadd.f32 %v250, %v450
      %v452 = vpop.f32.mrf.mxu0
      %v453 = vadd.f32 %v250, %v452
      %454 = vmatmul.bf16.gmra.mxu0 %v332
      %v455 = vpop.f32.mrf.mxu0
      %v456 = vadd.f32 %v250, %v455
      %v457 = vpop.f32.mrf.mxu0
      %v458 = vadd.f32 %v250, %v457
      %459 = vmatmul.bf16.gmra.mxu0 %v335
      %v460 = vpop.f32.mrf.mxu0
      %v461 = vadd.f32 %v250, %v460
      %v462 = vpop.f32.mrf.mxu0
      %463 = vdwg.mxu0
      %v464 = vmul.f32 %v351, 0.01
      %v465 = vmul.f32 %v353, 0.01
      %v466 = vmul.f32 %v356, 0.01
      %v467 = vmul.f32 %v358, 0.01
      %v468 = vmul.f32 %v361, 0.01
      %v469 = vmul.f32 %v363, 0.01
      %v470 = vmul.f32 %v366, 0.01
      %v471 = vmul.f32 %v368, 0.01
      %v472 = vmul.f32 %v371, 0.01
      %v473 = vmul.f32 %v373, 0.01
      %v474 = vmul.f32 %v376, 0.01
      %v475 = vmul.f32 %v378, 0.01
      %v476 = vmul.f32 %v381, 0.01
      %v477 = vmul.f32 %v383, 0.01
      %v478 = vmul.f32 %v386, 0.01
      %v479 = vmul.f32 %v388, 0.01
      %v480 = vmul.f32 %v391, 0.01
      %v481 = vmul.f32 %v393, 0.01
      %v482 = vmul.f32 %v396, 0.01
      %v483 = vmul.f32 %v398, 0.01
      %v484 = vmul.f32 %v401, 0.01
      %v485 = vmul.f32 %v403, 0.01
      %v486 = vmul.f32 %v406, 0.01
      %v487 = vmul.f32 %v408, 0.01
      %v488 = vmul.f32 %v411, 0.01
      %v489 = vmul.f32 %v413, 0.01
      %v490 = vmul.f32 %v416, 0.01
      %v491 = vmul.f32 %v418, 0.01
      %v492 = vmul.f32 %v421, 0.01
      %v493 = vmul.f32 %v423, 0.01
      %v494 = vmul.f32 %v426, 0.01
      %v495 = vmul.f32 %v428, 0.01
      %v496 = vmul.f32 %v431, 0.01
      %v497 = vmul.f32 %v433, 0.01
      %v498 = vmul.f32 %v436, 0.01
      %v499 = vmul.f32 %v438, 0.01
      %v500 = vmul.f32 %v441, 0.01
      %v501 = vmul.f32 %v443, 0.01
      %v502 = vmul.f32 %v446, 0.01
      %v503 = vmul.f32 %v448, 0.01
      %v504 = vmul.f32 %v451, 0.01
      %v505 = vmul.f32 %v453, 0.01
      %v506 = vmul.f32 %v456, 0.01
      %v507 = vmul.f32 %v458, 0.01
      %v508 = vmul.f32 %v461, 0.01
      %v509 = vmax.f32 %v351, %v464
      %v510 = vmax.f32 %v353, %v465
      %v511 = vmax.f32 %v356, %v466
      %v512 = vmax.f32 %v358, %v467
      %v513 = vmax.f32 %v361, %v468
      %v514 = vmax.f32 %v363, %v469
      %v515 = vmax.f32 %v366, %v470
      %v516 = vmax.f32 %v368, %v471
      %v517 = vmax.f32 %v371, %v472
      %v518 = vmax.f32 %v373, %v473
      %v519 = vmax.f32 %v376, %v474
      %v520 = vmax.f32 %v378, %v475
      %v521 = vmax.f32 %v381, %v476
      %v522 = vmax.f32 %v383, %v477
      %v523 = vmax.f32 %v386, %v478
      %v524 = vmax.f32 %v388, %v479
      %v525 = vmax.f32 %v391, %v480
      %v526 = vmax.f32 %v393, %v481
      %v527 = vmax.f32 %v396, %v482
      %v528 = vmax.f32 %v398, %v483
      %v529 = vmax.f32 %v401, %v484
      %v530 = vmax.f32 %v403, %v485
      %v531 = vmax.f32 %v406, %v486
      %v532 = vmax.f32 %v408, %v487
      %v533 = vmax.f32 %v411, %v488
      %v534 = vmax.f32 %v413, %v489
      %v535 = vmax.f32 %v416, %v490
      %v536 = vmax.f32 %v418, %v491
      %v537 = vmax.f32 %v421, %v492
      %v538 = vmax.f32 %v423, %v493
      %v539 = vmax.f32 %v426, %v494
      %v540 = vmax.f32 %v428, %v495
      %v541 = vmax.f32 %v431, %v496
      %v542 = vmax.f32 %v433, %v497
      %v543 = vmax.f32 %v436, %v498
      %v544 = vmax.f32 %v438, %v499
      %v545 = vmax.f32 %v441, %v500
      %v546 = vmax.f32 %v443, %v501
      %v547 = vmax.f32 %v446, %v502
      %v548 = vmax.f32 %v448, %v503
      %v549 = vmax.f32 %v451, %v504
      %v550 = vmax.f32 %v453, %v505
      %v551 = vmax.f32 %v456, %v506
      %v552 = vmax.f32 %v458, %v507
      %v553 = vmax.f32 %v461, %v508
      %vm554 = vcmask 261120
      %555 = vst.msk [vmem:[%s172] sm:$0xff] %vm554, %v509
      %556 = vst.msk [vmem:[%s172 + $0x8] sm:$0xff] %vm554, %v510
      %557 = vst.msk [vmem:[%s172 + $0x10] sm:$0xff] %vm554, %v511
      %558 = vst.msk [vmem:[%s172 + $0x18] sm:$0xff] %vm554, %v512
      %559 = vst.msk [vmem:[%s172 + $0x20] sm:$0xff] %vm554, %v513
      %560 = vst.msk [vmem:[%s172 + $0x28] sm:$0xff] %vm554, %v514
      %561 = vst.msk [vmem:[%s172 + $0x30] sm:$0xff] %vm554, %v515
      %562 = vst.msk [vmem:[%s172 + $0x38] sm:$0xff] %vm554, %v516
      %563 = vst.msk [vmem:[%s172 + $0x40] sm:$0xff] %vm554, %v517
      %564 = vst.msk [vmem:[%s172 + $0x48] sm:$0xff] %vm554, %v518
      %565 = vst.msk [vmem:[%s172 + $0x50] sm:$0xff] %vm554, %v519
      %566 = vst.msk [vmem:[%s172 + $0x58] sm:$0xff] %vm554, %v520
      %567 = vst.msk [vmem:[%s172 + $0x60] sm:$0xff] %vm554, %v521
      %568 = vst.msk [vmem:[%s172 + $0x68] sm:$0xff] %vm554, %v522
      %569 = vst.msk [vmem:[%s172 + $0x70] sm:$0xff] %vm554, %v523
      %570 = vst.msk [vmem:[%s172 + $0x78] sm:$0xff] %vm554, %v524
      %571 = vst.msk [vmem:[%s172 + $0x80] sm:$0xff] %vm554, %v525
      %572 = vst.msk [vmem:[%s172 + $0x88] sm:$0xff] %vm554, %v526
      %573 = vst.msk [vmem:[%s172 + $0x90] sm:$0xff] %vm554, %v527
      %574 = vst.msk [vmem:[%s172 + $0x98] sm:$0xff] %vm554, %v528
      %575 = vst.msk [vmem:[%s172 + $0xa0] sm:$0xff] %vm554, %v529
      %576 = vst.msk [vmem:[%s172 + $0xa8] sm:$0xff] %vm554, %v530
      %577 = vst.msk [vmem:[%s172 + $0xb0] sm:$0xff] %vm554, %v531
      %578 = vst.msk [vmem:[%s172 + $0xb8] sm:$0xff] %vm554, %v532
      %579 = vst.msk [vmem:[%s172 + $0xc0] sm:$0xff] %vm554, %v533
      %580 = vst.msk [vmem:[%s172 + $0xc8] sm:$0xff] %vm554, %v534
      %581 = vst.msk [vmem:[%s172 + $0xd0] sm:$0xff] %vm554, %v535
      %582 = vst.msk [vmem:[%s172 + $0xd8] sm:$0xff] %vm554, %v536
      %583 = vst.msk [vmem:[%s172 + $0xe0] sm:$0xff] %vm554, %v537
      %584 = vst.msk [vmem:[%s172 + $0xe8] sm:$0xff] %vm554, %v538
      %585 = vst.msk [vmem:[%s172 + $0xf0] sm:$0xff] %vm554, %v539
      %586 = vst.msk [vmem:[%s172 + $0xf8] sm:$0xff] %vm554, %v540
      %587 = vst.msk [vmem:[%s172 + $0x100] sm:$0xff] %vm554, %v541
      %588 = vst.msk [vmem:[%s172 + $0x108] sm:$0xff] %vm554, %v542
      %589 = vst.msk [vmem:[%s172 + $0x110] sm:$0xff] %vm554, %v543
      %590 = vst.msk [vmem:[%s172 + $0x118] sm:$0xff] %vm554, %v544
      %591 = vst.msk [vmem:[%s172 + $0x120] sm:$0xff] %vm554, %v545
      %592 = vst.msk [vmem:[%s172 + $0x128] sm:$0xff] %vm554, %v546
      %593 = vst.msk [vmem:[%s172 + $0x130] sm:$0xff] %vm554, %v547
      %594 = vst.msk [vmem:[%s172 + $0x138] sm:$0xff] %vm554, %v548
      %595 = vst.msk [vmem:[%s172 + $0x140] sm:$0xff] %vm554, %v549
      %596 = vst.msk [vmem:[%s172 + $0x148] sm:$0xff] %vm554, %v550
      %597 = vst.msk [vmem:[%s172 + $0x150] sm:$0xff] %vm554, %v551
      %598 = vst.msk [vmem:[%s172 + $0x158] sm:$0xff] %vm554, %v552
      %599 = vst.msk [vmem:[%s172 + $0x160] sm:$0xff] %vm554, %v553
      %s600 = smul.u32 45, %s14
      %p601 = scmp.lt.s32.totalorder %s600, 224
      %s602 = scalar_select %p601, %s600, 224
      %s603 = smul.addr %s602, 8
      %s604 = scalar_lea.vmem %s3, %s603
      // Predicated region
      $region33: #{grasp_model_forward.9} parent=31 // pred_check
        %p605 = pneg %p100
      $region34: #{grasp_model_forward.9} parent=31 // pred_check_branch
        %607 = sbr.rel (%p605) target = $region36
      $region35: #{grasp_model_forward.9} parent=31 // pred_region
        %s608 = smul.u32 45, %s14
      $region36: #{grasp_model_forward.9} parent=31 // pred_fallthru
        _
    $region32: #{grasp_model_forward.9} parent=5 // pred_fallthru
      _
    %p609 = scmp.le.s32.totalorder 2, %s9
    // Predicated region
    $region37: #{grasp_model_forward.9} parent=5 // pred_check
      %p610 = pneg %p609
    $region38: #{grasp_model_forward.9} parent=5 // pred_check_branch
      %612 = sbr.rel (%p610) target = $region40
    $region39: #{grasp_model_forward.9} parent=5 // pred_region
      %s613 = ssub.s32 %s9, 2
      // Predicated region
      $region41: #{grasp_model_forward.9} parent=39 // pred_check
        %p614 = pneg %p106
      $region42: #{grasp_model_forward.9} parent=39 // pred_check_branch
        %616 = sbr.rel (%p614) target = $region44
      $region43: #{grasp_model_forward.9} parent=39 // pred_region
        %s617 = smul.u32 45, %s15
        %p618 = scmp.lt.s32.totalorder %s617, 224
        %s619 = scalar_select %p618, %s617, 224
        %s620 = smul.addr %s619, 8
        %s621 = scalar_lea.vmem %s3, %s620
      $region44: #{grasp_model_forward.9} parent=39 // pred_fallthru
        _
    $region40: #{grasp_model_forward.9} parent=5 // pred_fallthru
      _
  $region6: #{grasp_model_forward.9} parent=0 // loop_footer
    %s13 = sadd.s32 1, %s9
  $region7: #{grasp_model_forward.9} parent=0 // loop_footer_branch
    %8 = sbr.rel target = $region3
  $region8: #{grasp_model_forward.9} parent=0 // loop_exit
    _

// kernel: grasp_model_forward.10
$region0: #{grasp_model_forward.10}
  #allocation0 [shape = 'u32[]', space=smem, size = 0x4, offset = 0x4, fixed_abs, tag = 'smem constant byte address 0x4 - core index']
  #allocation1 [shape = 'u32[72,128]{1,0:T(1,128)}', space=vmem, size = 0x9000, scoped, tag = 'internal scratch']
  %s0 = inlined_call_operand.vmem [shape: f32[392,288], index: 0, kind: input, shape index: {}]
  %s1 = inlined_call_operand.vmem [shape: bf16[288,32], index: 1, kind: input, shape index: {}]
  %s2 = inlined_call_operand.vmem [shape: f32[1,32], index: 2, kind: input, shape index: {}]
  %s3 = inlined_call_operand.vmem [shape: f32[392,32], index: 3, kind: output, shape index: {}]
  %s4 = sld [smem:[#allocation0]]
  $region22: #{grasp_model_forward.10} parent=0
    _
  %s6 = ssub.s32 1, %s4
  %s7 = scalar_select 0, %s6, %s4
  // Predicated region
  $region2: #{grasp_model_forward.10} parent=0 // pred_check
    _
  $region3: #{grasp_model_forward.10} parent=0 // pred_check_branch
    %9 = sbr.rel (0) target = $region5
  $region4: #{grasp_model_forward.10} parent=0 // pred_region
    _
  $region5: #{grasp_model_forward.10} parent=0 // pred_fallthru
    _
  // Predicated region
  $region6: #{grasp_model_forward.10} parent=0 // pred_check
    _
  $region7: #{grasp_model_forward.10} parent=0 // pred_check_branch
    %11 = sbr.rel (0) target = $region9
  $region8: #{grasp_model_forward.10} parent=0 // pred_region
    _
  $region9: #{grasp_model_forward.10} parent=0 // pred_fallthru
    _
  // Predicated region
  $region10: #{grasp_model_forward.10} parent=0 // pred_check
    _
  $region11: #{grasp_model_forward.10} parent=0 // pred_check_branch
    %13 = sbr.rel (0) target = $region13
  $region12: #{grasp_model_forward.10} parent=0 // pred_region
    _
  $region13: #{grasp_model_forward.10} parent=0 // pred_fallthru
    _
  %v15 = vld [vmem:[%s0] sm:$0xff]
  %v16 = vld [vmem:[%s0 + $0x8] sm:$0xff]
  %v17 = vld [vmem:[%s0 + $0x10] sm:$0xff]
  %v18 = vld [vmem:[%s0 + $0x18] sm:$0xff]
  %v19 = vld [vmem:[%s0 + $0x20] sm:$0xff]
  %v20 = vld [vmem:[%s0 + $0x28] sm:$0xff]
  %v21 = vld [vmem:[%s0 + $0x30] sm:$0xff]
  %v22 = vld [vmem:[%s0 + $0x38] sm:$0xff]
  %v23 = vld [vmem:[%s0 + $0x40] sm:$0xff]
  %v24 = vld [vmem:[%s0 + $0x48] sm:$0xff]
  %v25 = vld [vmem:[%s0 + $0x50] sm:$0xff]
  %v26 = vld [vmem:[%s0 + $0x58] sm:$0xff]
  %v27 = vld [vmem:[%s0 + $0x60] sm:$0xff]
  %v28 = vld [vmem:[%s0 + $0x68] sm:$0xff]
  %v29 = vld [vmem:[%s0 + $0x70] sm:$0xff]
  %v30 = vld [vmem:[%s0 + $0x78] sm:$0xff]
  %v31 = vld [vmem:[%s0 + $0x80] sm:$0xff]
  %v32 = vld [vmem:[%s0 + $0x88] sm:$0xff]
  %v33 = vld [vmem:[%s0 + $0x90] sm:$0xff]
  %v34 = vld [vmem:[%s0 + $0x98] sm:$0xff]
  %v35 = vld [vmem:[%s0 + $0xa0] sm:$0xff]
  %v36 = vld [vmem:[%s0 + $0xa8] sm:$0xff]
  %v37 = vld [vmem:[%s0 + $0xb0] sm:$0xff]
  %v38 = vld [vmem:[%s0 + $0xb8] sm:$0xff]
  %v39 = vld [vmem:[%s0 + $0xc0] sm:$0xff]
  %v40 = vld [vmem:[%s0 + $0xc8] sm:$0xff]
  %v41 = vld [vmem:[%s0 + $0xd0] sm:$0xff]
  %v42 = vld [vmem:[%s0 + $0xd8] sm:$0xff]
  %v43 = vld [vmem:[%s0 + $0xe0] sm:$0xff]
  %v44 = vld [vmem:[%s0 + $0xe8] sm:$0xff]
  %v45 = vld [vmem:[%s0 + $0xf0] sm:$0xff]
  %v46 = vld [vmem:[%s0 + $0xf8] sm:$0xff]
  %v47 = vld [vmem:[%s0 + $0x100] sm:$0xff]
  %v48 = vld [vmem:[%s0 + $0x108] sm:$0xff]
  %v49 = vld [vmem:[%s0 + $0x110] sm:$0xff]
  %v50 = vld [vmem:[%s0 + $0x118] sm:$0xff]
  %v51 = vld [vmem:[%s0 + $0x120] sm:$0xff]
  %v52 = vld [vmem:[%s0 + $0x128] sm:$0xff]
  %v53 = vld [vmem:[%s0 + $0x130] sm:$0xff]
  %v54 = vld [vmem:[%s0 + $0x138] sm:$0xff]
  %v55 = vld [vmem:[%s0 + $0x140] sm:$0xff]
  %v56 = vld [vmem:[%s0 + $0x148] sm:$0xff]
  %v57 = vld [vmem:[%s0 + $0x150] sm:$0xff]
  %v58 = vld [vmem:[%s0 + $0x158] sm:$0xff]
  %v59 = vld [vmem:[%s0 + $0x160] sm:$0xff]
  %v60 = vld [vmem:[%s0 + $0x168] sm:$0xff]
  %v61 = vld [vmem:[%s0 + $0x170] sm:$0xff]
  %v62 = vld [vmem:[%s0 + $0x178] sm:$0xff]
  %v63 = vld [vmem:[%s0 + $0x180] sm:$0xff]
  %v64 = vld [vmem:[%s0 + $0x188] sm:$0xff]
  %v65 = vld [vmem:[%s0 + $0x190] sm:$0xff]
  %v66 = vld [vmem:[%s0 + $0x198] sm:$0xff]
  %v67 = vld [vmem:[%s0 + $0x1a0] sm:$0xff]
  %v68 = vld [vmem:[%s0 + $0x1a8] sm:$0xff]
  %v69 = vld [vmem:[%s0 + $0x1b0] sm:$0xff]
  %v70 = vld [vmem:[%s0 + $0x1b8] sm:$0xff]
  %v71 = vld [vmem:[%s0 + $0x1c0] sm:$0xff]
  %v72 = vld [vmem:[%s0 + $0x1c8] sm:$0xff]
  %v73 = vld [vmem:[%s0 + $0x1d0] sm:$0xff]
  %v74 = vld [vmem:[%s0 + $0x1d8] sm:$0xff]
  %v75 = vld [vmem:[%s0 + $0x1e0] sm:$0xff]
  %v76 = vld [vmem:[%s0 + $0x1e8] sm:$0xff]
  %v77 = vld [vmem:[%s0 + $0x1f0] sm:$0xff]
  %v78 = vld [vmem:[%s0 + $0x1f8] sm:$0xff]
  %v79 = vld [vmem:[%s0 + $0x200] sm:$0xff]
  %v80 = vld [vmem:[%s0 + $0x208] sm:$0xff]
  %v81 = vld [vmem:[%s0 + $0x210] sm:$0xff]
  %v82 = vld [vmem:[%s0 + $0x218] sm:$0xff]
  %v83 = vld [vmem:[%s0 + $0x220] sm:$0xff]
  %v84 = vld [vmem:[%s0 + $0x228] sm:$0xff]
  %v85 = vld [vmem:[%s0 + $0x230] sm:$0xff]
  %v86 = vld [vmem:[%s0 + $0x238] sm:$0xff]
  %v87 = vld [vmem:[%s0 + $0x240] sm:$0xff]
  %v88 = vld [vmem:[%s0 + $0x248] sm:$0xff]
  %v89 = vld [vmem:[%s0 + $0x250] sm:$0xff]
  %v90 = vld [vmem:[%s0 + $0x258] sm:$0xff]
  %v91 = vld [vmem:[%s0 + $0x260] sm:$0xff]
  %v92 = vld [vmem:[%s0 + $0x268] sm:$0xff]
  %v93 = vld [vmem:[%s0 + $0x270] sm:$0xff]
  %v94 = vld [vmem:[%s0 + $0x278] sm:$0xff]
  %v95 = vld [vmem:[%s0 + $0x280] sm:$0xff]
  %v96 = vld [vmem:[%s0 + $0x288] sm:$0xff]
  %v97 = vld [vmem:[%s0 + $0x290] sm:$0xff]
  %v98 = vld [vmem:[%s0 + $0x298] sm:$0xff]
  %v99 = vld [vmem:[%s0 + $0x2a0] sm:$0xff]
  %v100 = vld [vmem:[%s0 + $0x2a8] sm:$0xff]
  %v101 = vld [vmem:[%s0 + $0x2b0] sm:$0xff]
  %v102 = vld [vmem:[%s0 + $0x2b8] sm:$0xff]
  %v103 = vld [vmem:[%s0 + $0x2c0] sm:$0xff]
  %v104 = vld [vmem:[%s0 + $0x2c8] sm:$0xff]
  %v105 = vld [vmem:[%s0 + $0x2d0] sm:$0xff]
  %v106 = vld [vmem:[%s0 + $0x2d8] sm:$0xff]
  %v107 = vld [vmem:[%s0 + $0x2e0] sm:$0xff]
  %v108 = vld [vmem:[%s0 + $0x2e8] sm:$0xff]
  %v109 = vld [vmem:[%s0 + $0x2f0] sm:$0xff]
  %v110 = vld [vmem:[%s0 + $0x2f8] sm:$0xff]
  %v111 = vld [vmem:[%s0 + $0x300] sm:$0xff]
  %v112 = vld [vmem:[%s0 + $0x308] sm:$0xff]
  %v113 = vld [vmem:[%s0 + $0x310] sm:$0xff]
  %v114 = vld [vmem:[%s0 + $0x318] sm:$0xff]
  %v115 = vld [vmem:[%s0 + $0x320] sm:$0xff]
  %v116 = vld [vmem:[%s0 + $0x328] sm:$0xff]
  %v117 = vld [vmem:[%s0 + $0x330] sm:$0xff]
  %v118 = vld [vmem:[%s0 + $0x338] sm:$0xff]
  %v119 = vld [vmem:[%s0 + $0x340] sm:$0xff]
  %v120 = vld [vmem:[%s0 + $0x348] sm:$0xff]
  %v121 = vld [vmem:[%s0 + $0x350] sm:$0xff]
  %v122 = vld [vmem:[%s0 + $0x358] sm:$0xff]
  %v123 = vld [vmem:[%s0 + $0x360] sm:$0xff]
  %v124 = vld [vmem:[%s0 + $0x368] sm:$0xff]
  %v125 = vld [vmem:[%s0 + $0x370] sm:$0xff]
  %v126 = vld [vmem:[%s0 + $0x378] sm:$0xff]
  %v127 = vld [vmem:[%s0 + $0x380] sm:$0xff]
  %v128 = vld [vmem:[%s0 + $0x388] sm:$0xff]
  %v129 = vld [vmem:[%s0 + $0x390] sm:$0xff]
  %v130 = vld [vmem:[%s0 + $0x398] sm:$0xff]
  %v131 = vld [vmem:[%s0 + $0x3a0] sm:$0xff]
  %v132 = vld [vmem:[%s0 + $0x3a8] sm:$0xff]
  %v133 = vld [vmem:[%s0 + $0x3b0] sm:$0xff]
  %v134 = vld [vmem:[%s0 + $0x3b8] sm:$0xff]
  %v135 = vld [vmem:[%s0 + $0x3c0] sm:$0xff]
  %v136 = vld [vmem:[%s0 + $0x3c8] sm:$0xff]
  %v137 = vld [vmem:[%s0 + $0x3d0] sm:$0xff]
  %v138 = vld [vmem:[%s0 + $0x3d8] sm:$0xff]
  %v139 = vld [vmem:[%s0 + $0x3e0] sm:$0xff]
  %v140 = vld [vmem:[%s0 + $0x3e8] sm:$0xff]
  %v141 = vld [vmem:[%s0 + $0x3f0] sm:$0xff]
  %v142 = vld [vmem:[%s0 + $0x3f8] sm:$0xff]
  %v143 = vld [vmem:[%s0 + $0x400] sm:$0xff]
  %v144 = vld [vmem:[%s0 + $0x408] sm:$0xff]
  %v145 = vld [vmem:[%s0 + $0x410] sm:$0xff]
  %v146 = vld [vmem:[%s0 + $0x418] sm:$0xff]
  %v147 = vld [vmem:[%s0 + $0x420] sm:$0xff]
  %v148 = vld [vmem:[%s0 + $0x428] sm:$0xff]
  %v149 = vld [vmem:[%s0 + $0x430] sm:$0xff]
  %v150 = vld [vmem:[%s0 + $0x438] sm:$0xff]
  %v151 = vld [vmem:[%s0 + $0x440] sm:$0xff]
  %v152 = vld [vmem:[%s0 + $0x448] sm:$0xff]
  %v153 = vld [vmem:[%s0 + $0x450] sm:$0xff]
  %v154 = vld [vmem:[%s0 + $0x458] sm:$0xff]
  %v155 = vld [vmem:[%s0 + $0x460] sm:$0xff]
  %v156 = vld [vmem:[%s0 + $0x468] sm:$0xff]
  %v157 = vld [vmem:[%s0 + $0x470] sm:$0xff]
  %v158 = vld [vmem:[%s0 + $0x478] sm:$0xff]
  %v159 = vld [vmem:[%s0 + $0x480] sm:$0xff]
  %v160 = vld [vmem:[%s0 + $0x488] sm:$0xff]
  %v161 = vld [vmem:[%s0 + $0x490] sm:$0xff]
  %v162 = vpack.c.bf16 %v18, %v15
  %v163 = vpack.c.bf16 %v19, %v16
  %v164 = vpack.c.bf16 %v20, %v17
  %v165 = vpack.c.bf16 %v24, %v21
  %v166 = vpack.c.bf16 %v25, %v22
  %v167 = vpack.c.bf16 %v26, %v23
  %v168 = vpack.c.bf16 %v30, %v27
  %v169 = vpack.c.bf16 %v31, %v28
  %v170 = vpack.c.bf16 %v32, %v29
  %v171 = vpack.c.bf16 %v36, %v33
  %v172 = vpack.c.bf16 %v37, %v34
  %v173 = vpack.c.bf16 %v38, %v35
  %v174 = vpack.c.bf16 %v42, %v39
  %v175 = vpack.c.bf16 %v43, %v40
  %v176 = vpack.c.bf16 %v44, %v41
  %v177 = vpack.c.bf16 %v48, %v45
  %v178 = vpack.c.bf16 %v49, %v46
  %v179 = vpack.c.bf16 %v50, %v47
  %v180 = vpack.c.bf16 %v54, %v51
  %v181 = vpack.c.bf16 %v55, %v52
  %v182 = vpack.c.bf16 %v56, %v53
  %v183 = vpack.c.bf16 %v60, %v57
  %v184 = vpack.c.bf16 %v61, %v58
  %v185 = vpack.c.bf16 %v62, %v59
  %v186 = vpack.c.bf16 %v66, %v63
  %v187 = vpack.c.bf16 %v67, %v64
  %v188 = vpack.c.bf16 %v68, %v65
  %v189 = vpack.c.bf16 %v72, %v69
  %v190 = vpack.c.bf16 %v73, %v70
  %v191 = vpack.c.bf16 %v74, %v71
  %v192 = vpack.c.bf16 %v78, %v75
  %v193 = vpack.c.bf16 %v79, %v76
  %v194 = vpack.c.bf16 %v80, %v77
  %v195 = vpack.c.bf16 %v84, %v81
  %v196 = vpack.c.bf16 %v85, %v82
  %v197 = vpack.c.bf16 %v86, %v83
  %v198 = vpack.c.bf16 %v90, %v87
  %v199 = vpack.c.bf16 %v91, %v88
  %v200 = vpack.c.bf16 %v92, %v89
  %v201 = vpack.c.bf16 %v96, %v93
  %v202 = vpack.c.bf16 %v97, %v94
  %v203 = vpack.c.bf16 %v98, %v95
  %v204 = vpack.c.bf16 %v102, %v99
  %v205 = vpack.c.bf16 %v103, %v100
  %v206 = vpack.c.bf16 %v104, %v101
  %v207 = vpack.c.bf16 %v108, %v105
  %v208 = vpack.c.bf16 %v109, %v106
  %v209 = vpack.c.bf16 %v110, %v107
  %v210 = vpack.c.bf16 %v114, %v111
  %v211 = vpack.c.bf16 %v115, %v112
  %v212 = vpack.c.bf16 %v116, %v113
  %v213 = vpack.c.bf16 %v120, %v117
  %v214 = vpack.c.bf16 %v121, %v118
  %v215 = vpack.c.bf16 %v122, %v119
  %v216 = vpack.c.bf16 %v126, %v123
  %v217 = vpack.c.bf16 %v127, %v124
  %v218 = vpack.c.bf16 %v128, %v125
  %v219 = vpack.c.bf16 %v132, %v129
  %v220 = vpack.c.bf16 %v133, %v130
  %v221 = vpack.c.bf16 %v134, %v131
  %v222 = vpack.c.bf16 %v138, %v135
  %v223 = vpack.c.bf16 %v139, %v136
  %v224 = vpack.c.bf16 %v140, %v137
  %v225 = vpack.c.bf16 %v144, %v141
  %v226 = vpack.c.bf16 %v145, %v142
  %v227 = vpack.c.bf16 %v146, %v143
  %v228 = vpack.c.bf16 %v150, %v147
  %v229 = vpack.c.bf16 %v151, %v148
  %v230 = vpack.c.bf16 %v152, %v149
  %v231 = vpack.c.bf16 %v156, %v153
  %v232 = vpack.c.bf16 %v157, %v154
  %v233 = vpack.c.bf16 %v158, %v155
  %v234 = vpack.c.bf16 %v159, %v159
  %v235 = vpack.c.bf16 %v160, %v160
  %v236 = vpack.c.bf16 %v161, %v161
  %v237 = vld [vmem:[%s1] sm:$0xf]
  %v238 = vld [vmem:[%s1 + $0x4] sm:$0xf]
  %v239 = vld [vmem:[%s1 + $0x8] sm:$0xf]
  %v240 = vld [vmem:[%s1 + $0xc] sm:$0xf]
  %v241 = vld [vmem:[%s1 + $0x10] sm:$0xf]
  %v242 = vld [vmem:[%s1 + $0x14] sm:$0xf]
  %v243 = vld [vmem:[%s1 + $0x18] sm:$0xf]
  %v244 = vld [vmem:[%s1 + $0x1c] sm:$0xf]
  %v245 = vld [vmem:[%s1 + $0x20] sm:$0xf]
  %v246 = vld [vmem:[%s1 + $0x24] sm:$0xf]
  %v247 = vld [vmem:[%s1 + $0x28] sm:$0xf]
  %v248 = vld [vmem:[%s1 + $0x2c] sm:$0xf]
  %v249 = vld [vmem:[%s1 + $0x30] sm:$0xf]
  %v250 = vld [vmem:[%s1 + $0x34] sm:$0xf]
  %v251 = vld [vmem:[%s1 + $0x38] sm:$0xf]
  %v252 = vld [vmem:[%s1 + $0x3c] sm:$0xf]
  %v253 = vld [vmem:[%s1 + $0x40] sm:$0xf]
  %v254 = vld [vmem:[%s1 + $0x44] sm:$0xf]
  %v255 = vld [vmem:[%s1 + $0x48] sm:$0xf]
  %v256 = vld [vmem:[%s1 + $0x4c] sm:$0xf]
  %v257 = vld [vmem:[%s1 + $0x50] sm:$0xf]
  %v258 = vld [vmem:[%s1 + $0x54] sm:$0xf]
  %v259 = vld [vmem:[%s1 + $0x58] sm:$0xf]
  %v260 = vld [vmem:[%s1 + $0x5c] sm:$0xf]
  %v261 = vld [vmem:[%s1 + $0x60] sm:$0xf]
  %v262 = vld [vmem:[%s1 + $0x64] sm:$0xf]
  %v263 = vld [vmem:[%s1 + $0x68] sm:$0xf]
  %v264 = vld [vmem:[%s1 + $0x6c] sm:$0xf]
  %v265 = vld [vmem:[%s1 + $0x70] sm:$0xf]
  %v266 = vld [vmem:[%s1 + $0x74] sm:$0xf]
  %v267 = vld [vmem:[%s1 + $0x78] sm:$0xf]
  %v268 = vld [vmem:[%s1 + $0x7c] sm:$0xf]
  %v269 = vld [vmem:[%s1 + $0x80] sm:$0xf]
  %v270 = vld [vmem:[%s1 + $0x84] sm:$0xf]
  %v271 = vld [vmem:[%s1 + $0x88] sm:$0xf]
  %v272 = vld [vmem:[%s1 + $0x8c] sm:$0xf]
  %v273 = vld [vmem:[%s2] sm:$0x1]
  %v275 = vperm.slane %v273, 0
  %v313 = vunpack.c.l.b16 %v237
  %v314 = vunpack.c.l.b16 %v238
  %v315 = vunpack.c.l.b16 %v239
  %v316 = vunpack.c.l.b16 %v240
  %v317 = vunpack.c.l.b16 %v241
  %v318 = vunpack.c.l.b16 %v242
  %v319 = vunpack.c.l.b16 %v243
  %v320 = vunpack.c.l.b16 %v244
  %v321 = vunpack.c.l.b16 %v245
  %v322 = vunpack.c.l.b16 %v246
  %v323 = vunpack.c.l.b16 %v247
  %v324 = vunpack.c.l.b16 %v248
  %v325 = vunpack.c.l.b16 %v249
  %v326 = vunpack.c.l.b16 %v250
  %v327 = vunpack.c.l.b16 %v251
  %v328 = vunpack.c.l.b16 %v252
  %v329 = vunpack.c.l.b16 %v253
  %v330 = vunpack.c.l.b16 %v254
  %v331 = vunpack.c.l.b16 %v255
  %v332 = vunpack.c.l.b16 %v256
  %v333 = vunpack.c.l.b16 %v257
  %v334 = vunpack.c.l.b16 %v258
  %v335 = vunpack.c.l.b16 %v259
  %v336 = vunpack.c.l.b16 %v260
  %v337 = vunpack.c.l.b16 %v261
  %v338 = vunpack.c.l.b16 %v262
  %v339 = vunpack.c.l.b16 %v263
  %v340 = vunpack.c.l.b16 %v264
  %v341 = vunpack.c.l.b16 %v265
  %v342 = vunpack.c.l.b16 %v266
  %v343 = vunpack.c.l.b16 %v267
  %v344 = vunpack.c.l.b16 %v268
  %v345 = vunpack.c.l.b16 %v269
  %v346 = vunpack.c.l.b16 %v270
  %v347 = vunpack.c.l.b16 %v271
  %v348 = vunpack.c.l.b16 %v272
  %v349 = vpack.c.b16 %v314, %v313
  %v350 = vpack.c.b16 %v316, %v315
  %v351 = vpack.c.b16 %v318, %v317
  %v352 = vpack.c.b16 %v320, %v319
  %v353 = vpack.c.b16 %v322, %v321
  %v354 = vpack.c.b16 %v324, %v323
  %v355 = vpack.c.b16 %v326, %v325
  %v356 = vpack.c.b16 %v328, %v327
  %v357 = vpack.c.b16 %v330, %v329
  %v358 = vpack.c.b16 %v332, %v331
  %v359 = vpack.c.b16 %v334, %v333
  %v360 = vpack.c.b16 %v336, %v335
  %v361 = vpack.c.b16 %v338, %v337
  %v362 = vpack.c.b16 %v340, %v339
  %v363 = vpack.c.b16 %v342, %v341
  %v364 = vpack.c.b16 %v344, %v343
  %v365 = vpack.c.b16 %v346, %v345
  %v366 = vpack.c.b16 %v348, %v347
  %vm385 = vcmask 261120
  %v387 = vsel %vm385, %v164, 0
  %v390 = vsel %vm385, %v167, 0
  %v393 = vsel %vm385, %v170, 0
  %v396 = vsel %vm385, %v173, 0
  %v399 = vsel %vm385, %v176, 0
  %v402 = vsel %vm385, %v179, 0
  %v405 = vsel %vm385, %v182, 0
  %v408 = vsel %vm385, %v185, 0
  %v411 = vsel %vm385, %v188, 0
  %v414 = vsel %vm385, %v191, 0
  %v417 = vsel %vm385, %v194, 0
  %v420 = vsel %vm385, %v197, 0
  %v423 = vsel %vm385, %v200, 0
  %v426 = vsel %vm385, %v203, 0
  %v429 = vsel %vm385, %v206, 0
  %v432 = vsel %vm385, %v209, 0
  %v435 = vsel %vm385, %v212, 0
  %v438 = vsel %vm385, %v215, 0
  %v441 = vsel %vm385, %v218, 0
  %v444 = vsel %vm385, %v221, 0
  %v447 = vsel %vm385, %v224, 0
  %v450 = vsel %vm385, %v227, 0
  %v453 = vsel %vm385, %v230, 0
  %v456 = vsel %vm385, %v233, 0
  %v459 = vsel %vm385, %v236, 0
  %461 = vmatpush.bf16.msra.mxu0 %v356
  %462 = vmatpush.bf16.msra.mxu0 %v355
  %463 = vmatpush.bf16.msra.mxu0 %v354
  %464 = vmatpush.bf16.msra.mxu0 %v353
  %465 = vmatpush.bf16.msra.mxu0 %v352
  %466 = vmatpush.bf16.msra.mxu0 %v351
  %467 = vmatpush.bf16.msra.mxu0 %v350
  %468 = vmatpush.bf16.msra.mxu0 %v349
  %469 = vmatmul.bf16.gmra.mxu0 %v162
  %v470 = vpop.f32.mrf.mxu0
  %v471 = vadd.f32 %v275, %v470
  %v472 = vpop.f32.mrf.mxu0
  %v473 = vadd.f32 %v275, %v472
  %474 = vmatmul.bf16.gmra.mxu0 %v165
  %v475 = vpop.f32.mrf.mxu0
  %v476 = vadd.f32 %v275, %v475
  %v477 = vpop.f32.mrf.mxu0
  %v478 = vadd.f32 %v275, %v477
  %479 = vmatmul.bf16.gmra.mxu0 %v168
  %v480 = vpop.f32.mrf.mxu0
  %v481 = vadd.f32 %v275, %v480
  %v482 = vpop.f32.mrf.mxu0
  %v483 = vadd.f32 %v275, %v482
  %484 = vmatmul.bf16.gmra.mxu0 %v171
  %v485 = vpop.f32.mrf.mxu0
  %v486 = vadd.f32 %v275, %v485
  %v487 = vpop.f32.mrf.mxu0
  %v488 = vadd.f32 %v275, %v487
  %489 = vmatmul.bf16.gmra.mxu0 %v174
  %v490 = vpop.f32.mrf.mxu0
  %v491 = vadd.f32 %v275, %v490
  %v492 = vpop.f32.mrf.mxu0
  %v493 = vadd.f32 %v275, %v492
  %494 = vmatmul.bf16.gmra.mxu0 %v177
  %v495 = vpop.f32.mrf.mxu0
  %v496 = vadd.f32 %v275, %v495
  %v497 = vpop.f32.mrf.mxu0
  %v498 = vadd.f32 %v275, %v497
  %499 = vmatmul.bf16.gmra.mxu0 %v180
  %v500 = vpop.f32.mrf.mxu0
  %v501 = vadd.f32 %v275, %v500
  %v502 = vpop.f32.mrf.mxu0
  %v503 = vadd.f32 %v275, %v502
  %504 = vmatmul.bf16.gmra.mxu0 %v183
  %v505 = vpop.f32.mrf.mxu0
  %v506 = vadd.f32 %v275, %v505
  %v507 = vpop.f32.mrf.mxu0
  %v508 = vadd.f32 %v275, %v507
  %509 = vmatmul.bf16.gmra.mxu0 %v186
  %v510 = vpop.f32.mrf.mxu0
  %v511 = vadd.f32 %v275, %v510
  %v512 = vpop.f32.mrf.mxu0
  %v513 = vadd.f32 %v275, %v512
  %514 = vmatmul.bf16.gmra.mxu0 %v189
  %v515 = vpop.f32.mrf.mxu0
  %v516 = vadd.f32 %v275, %v515
  %v517 = vpop.f32.mrf.mxu0
  %v518 = vadd.f32 %v275, %v517
  %519 = vmatmul.bf16.gmra.mxu0 %v192
  %v520 = vpop.f32.mrf.mxu0
  %v521 = vadd.f32 %v275, %v520
  %v522 = vpop.f32.mrf.mxu0
  %v523 = vadd.f32 %v275, %v522
  %524 = vmatmul.bf16.gmra.mxu0 %v195
  %v525 = vpop.f32.mrf.mxu0
  %v526 = vadd.f32 %v275, %v525
  %v527 = vpop.f32.mrf.mxu0
  %v528 = vadd.f32 %v275, %v527
  %529 = vmatmul.bf16.gmra.mxu0 %v198
  %v530 = vpop.f32.mrf.mxu0
  %v531 = vadd.f32 %v275, %v530
  %v532 = vpop.f32.mrf.mxu0
  %v533 = vadd.f32 %v275, %v532
  %534 = vmatmul.bf16.gmra.mxu0 %v201
  %v535 = vpop.f32.mrf.mxu0
  %v536 = vadd.f32 %v275, %v535
  %v537 = vpop.f32.mrf.mxu0
  %v538 = vadd.f32 %v275, %v537
  %539 = vmatmul.bf16.gmra.mxu0 %v204
  %v540 = vpop.f32.mrf.mxu0
  %v541 = vadd.f32 %v275, %v540
  %v542 = vpop.f32.mrf.mxu0
  %v543 = vadd.f32 %v275, %v542
  %544 = vmatmul.bf16.gmra.mxu0 %v207
  %v545 = vpop.f32.mrf.mxu0
  %v546 = vadd.f32 %v275, %v545
  %v547 = vpop.f32.mrf.mxu0
  %v548 = vadd.f32 %v275, %v547
  %549 = vmatmul.bf16.gmra.mxu0 %v210
  %v550 = vpop.f32.mrf.mxu0
  %v551 = vadd.f32 %v275, %v550
  %v552 = vpop.f32.mrf.mxu0
  %v553 = vadd.f32 %v275, %v552
  %554 = vmatmul.bf16.gmra.mxu0 %v213
  %v555 = vpop.f32.mrf.mxu0
  %v556 = vadd.f32 %v275, %v555
  %v557 = vpop.f32.mrf.mxu0
  %v558 = vadd.f32 %v275, %v557
  %559 = vmatmul.bf16.gmra.mxu0 %v216
  %v560 = vpop.f32.mrf.mxu0
  %v561 = vadd.f32 %v275, %v560
  %v562 = vpop.f32.mrf.mxu0
  %v563 = vadd.f32 %v275, %v562
  %564 = vmatmul.bf16.gmra.mxu0 %v219
  %v565 = vpop.f32.mrf.mxu0
  %v566 = vadd.f32 %v275, %v565
  %v567 = vpop.f32.mrf.mxu0
  %v568 = vadd.f32 %v275, %v567
  %569 = vmatmul.bf16.gmra.mxu0 %v222
  %v570 = vpop.f32.mrf.mxu0
  %v571 = vadd.f32 %v275, %v570
  %v572 = vpop.f32.mrf.mxu0
  %v573 = vadd.f32 %v275, %v572
  %574 = vmatmul.bf16.gmra.mxu0 %v225
  %v575 = vpop.f32.mrf.mxu0
  %v576 = vadd.f32 %v275, %v575
  %v577 = vpop.f32.mrf.mxu0
  %v578 = vadd.f32 %v275, %v577
  %579 = vmatmul.bf16.gmra.mxu0 %v228
  %v580 = vpop.f32.mrf.mxu0
  %v581 = vadd.f32 %v275, %v580
  %v582 = vpop.f32.mrf.mxu0
  %v583 = vadd.f32 %v275, %v582
  %584 = vmatmul.bf16.gmra.mxu0 %v231
  %v585 = vpop.f32.mrf.mxu0
  %v586 = vadd.f32 %v275, %v585
  %v587 = vpop.f32.mrf.mxu0
  %v588 = vadd.f32 %v275, %v587
  %589 = vmatmul.bf16.gmra.mxu0 %v234
  %v590 = vpop.f32.mrf.mxu0
  %v591 = vadd.f32 %v275, %v590
  %v592 = vpop.f32.mrf.mxu0
  %593 = vdwg.mxu0
  %594 = vmatpush.bf16.msra.mxu0 %v364
  %595 = vmatpush.bf16.msra.mxu0 %v363
  %596 = vmatpush.bf16.msra.mxu0 %v362
  %597 = vmatpush.bf16.msra.mxu0 %v361
  %598 = vmatpush.bf16.msra.mxu0 %v360
  %599 = vmatpush.bf16.msra.mxu0 %v359
  %600 = vmatpush.bf16.msra.mxu0 %v358
  %601 = vmatpush.bf16.msra.mxu0 %v357
  %602 = vmatmul.bf16.gmra.mxu0 %v163
  %v603 = vpop.f32.mrf.mxu0
  %v604 = vadd.f32 %v471, %v603
  %v605 = vpop.f32.mrf.mxu0
  %v606 = vadd.f32 %v473, %v605
  %607 = vmatmul.bf16.gmra.mxu0 %v166
  %v608 = vpop.f32.mrf.mxu0
  %v609 = vadd.f32 %v476, %v608
  %v610 = vpop.f32.mrf.mxu0
  %v611 = vadd.f32 %v478, %v610
  %612 = vmatmul.bf16.gmra.mxu0 %v169
  %v613 = vpop.f32.mrf.mxu0
  %v614 = vadd.f32 %v481, %v613
  %v615 = vpop.f32.mrf.mxu0
  %v616 = vadd.f32 %v483, %v615
  %617 = vmatmul.bf16.gmra.mxu0 %v172
  %v618 = vpop.f32.mrf.mxu0
  %v619 = vadd.f32 %v486, %v618
  %v620 = vpop.f32.mrf.mxu0
  %v621 = vadd.f32 %v488, %v620
  %622 = vmatmul.bf16.gmra.mxu0 %v175
  %v623 = vpop.f32.mrf.mxu0
  %v624 = vadd.f32 %v491, %v623
  %v625 = vpop.f32.mrf.mxu0
  %v626 = vadd.f32 %v493, %v625
  %627 = vmatmul.bf16.gmra.mxu0 %v178
  %v628 = vpop.f32.mrf.mxu0
  %v629 = vadd.f32 %v496, %v628
  %v630 = vpop.f32.mrf.mxu0
  %v631 = vadd.f32 %v498, %v630
  %632 = vmatmul.bf16.gmra.mxu0 %v181
  %v633 = vpop.f32.mrf.mxu0
  %v634 = vadd.f32 %v501, %v633
  %v635 = vpop.f32.mrf.mxu0
  %v636 = vadd.f32 %v503, %v635
  %637 = vmatmul.bf16.gmra.mxu0 %v184
  %v638 = vpop.f32.mrf.mxu0
  %v639 = vadd.f32 %v506, %v638
  %v640 = vpop.f32.mrf.mxu0
  %v641 = vadd.f32 %v508, %v640
  %642 = vmatmul.bf16.gmra.mxu0 %v187
  %v643 = vpop.f32.mrf.mxu0
  %v644 = vadd.f32 %v511, %v643
  %v645 = vpop.f32.mrf.mxu0
  %v646 = vadd.f32 %v513, %v645
  %647 = vmatmul.bf16.gmra.mxu0 %v190
  %v648 = vpop.f32.mrf.mxu0
  %v649 = vadd.f32 %v516, %v648
  %v650 = vpop.f32.mrf.mxu0
  %v651 = vadd.f32 %v518, %v650
  %652 = vmatmul.bf16.gmra.mxu0 %v193
  %v653 = vpop.f32.mrf.mxu0
  %v654 = vadd.f32 %v521, %v653
  %v655 = vpop.f32.mrf.mxu0
  %v656 = vadd.f32 %v523, %v655
  %657 = vmatmul.bf16.gmra.mxu0 %v196
  %v658 = vpop.f32.mrf.mxu0
  %v659 = vadd.f32 %v526, %v658
  %v660 = vpop.f32.mrf.mxu0
  %v661 = vadd.f32 %v528, %v660
  %662 = vmatmul.bf16.gmra.mxu0 %v199
  %v663 = vpop.f32.mrf.mxu0
  %v664 = vadd.f32 %v531, %v663
  %v665 = vpop.f32.mrf.mxu0
  %v666 = vadd.f32 %v533, %v665
  %667 = vmatmul.bf16.gmra.mxu0 %v202
  %v668 = vpop.f32.mrf.mxu0
  %v669 = vadd.f32 %v536, %v668
  %v670 = vpop.f32.mrf.mxu0
  %v671 = vadd.f32 %v538, %v670
  %672 = vmatmul.bf16.gmra.mxu0 %v205
  %v673 = vpop.f32.mrf.mxu0
  %v674 = vadd.f32 %v541, %v673
  %v675 = vpop.f32.mrf.mxu0
  %v676 = vadd.f32 %v543, %v675
  %677 = vmatmul.bf16.gmra.mxu0 %v208
  %v678 = vpop.f32.mrf.mxu0
  %v679 = vadd.f32 %v546, %v678
  %v680 = vpop.f32.mrf.mxu0
  %v681 = vadd.f32 %v548, %v680
  %682 = vmatmul.bf16.gmra.mxu0 %v211
  %v683 = vpop.f32.mrf.mxu0
  %v684 = vadd.f32 %v551, %v683
  %v685 = vpop.f32.mrf.mxu0
  %v686 = vadd.f32 %v553, %v685
  %687 = vmatmul.bf16.gmra.mxu0 %v214
  %v688 = vpop.f32.mrf.mxu0
  %v689 = vadd.f32 %v556, %v688
  %v690 = vpop.f32.mrf.mxu0
  %v691 = vadd.f32 %v558, %v690
  %692 = vmatmul.bf16.gmra.mxu0 %v217
  %v693 = vpop.f32.mrf.mxu0
  %v694 = vadd.f32 %v561, %v693
  %v695 = vpop.f32.mrf.mxu0
  %v696 = vadd.f32 %v563, %v695
  %697 = vmatmul.bf16.gmra.mxu0 %v220
  %v698 = vpop.f32.mrf.mxu0
  %v699 = vadd.f32 %v566, %v698
  %v700 = vpop.f32.mrf.mxu0
  %v701 = vadd.f32 %v568, %v700
  %702 = vmatmul.bf16.gmra.mxu0 %v223
  %v703 = vpop.f32.mrf.mxu0
  %v704 = vadd.f32 %v571, %v703
  %v705 = vpop.f32.mrf.mxu0
  %v706 = vadd.f32 %v573, %v705
  %707 = vmatmul.bf16.gmra.mxu0 %v226
  %v708 = vpop.f32.mrf.mxu0
  %v709 = vadd.f32 %v576, %v708
  %v710 = vpop.f32.mrf.mxu0
  %v711 = vadd.f32 %v578, %v710
  %712 = vmatmul.bf16.gmra.mxu0 %v229
  %v713 = vpop.f32.mrf.mxu0
  %v714 = vadd.f32 %v581, %v713
  %v715 = vpop.f32.mrf.mxu0
  %v716 = vadd.f32 %v583, %v715
  %717 = vmatmul.bf16.gmra.mxu0 %v232
  %v718 = vpop.f32.mrf.mxu0
  %v719 = vadd.f32 %v586, %v718
  %v720 = vpop.f32.mrf.mxu0
  %v721 = vadd.f32 %v588, %v720
  %722 = vmatmul.bf16.gmra.mxu0 %v235
  %v723 = vpop.f32.mrf.mxu0
  %v724 = vadd.f32 %v591, %v723
  %v725 = vpop.f32.mrf.mxu0
  %726 = vdwg.mxu0
  %727 = vmatpush.bf16.msra.mxu0 0
  %728 = vmatpush.bf16.msra.mxu0 0
  %729 = vmatpush.bf16.msra.mxu0 0
  %730 = vmatpush.bf16.msra.mxu0 0
  %731 = vmatpush.bf16.msra.mxu0 0
  %732 = vmatpush.bf16.msra.mxu0 0
  %733 = vmatpush.bf16.msra.mxu0 %v366
  %734 = vmatpush.bf16.msra.mxu0 %v365
  %735 = vmatmul.bf16.gmra.mxu0 %v387
  %v736 = vpop.f32.mrf.mxu0
  %v737 = vadd.f32 %v604, %v736
  %v738 = vpop.f32.mrf.mxu0
  %v739 = vadd.f32 %v606, %v738
  %740 = vmatmul.bf16.gmra.mxu0 %v390
  %v741 = vpop.f32.mrf.mxu0
  %v742 = vadd.f32 %v609, %v741
  %v743 = vpop.f32.mrf.mxu0
  %v744 = vadd.f32 %v611, %v743
  %745 = vmatmul.bf16.gmra.mxu0 %v393
  %v746 = vpop.f32.mrf.mxu0
  %v747 = vadd.f32 %v614, %v746
  %v748 = vpop.f32.mrf.mxu0
  %v749 = vadd.f32 %v616, %v748
  %750 = vmatmul.bf16.gmra.mxu0 %v396
  %v751 = vpop.f32.mrf.mxu0
  %v752 = vadd.f32 %v619, %v751
  %v753 = vpop.f32.mrf.mxu0
  %v754 = vadd.f32 %v621, %v753
  %755 = vmatmul.bf16.gmra.mxu0 %v399
  %v756 = vpop.f32.mrf.mxu0
  %v757 = vadd.f32 %v624, %v756
  %v758 = vpop.f32.mrf.mxu0
  %v759 = vadd.f32 %v626, %v758
  %760 = vmatmul.bf16.gmra.mxu0 %v402
  %v761 = vpop.f32.mrf.mxu0
  %v762 = vadd.f32 %v629, %v761
  %v763 = vpop.f32.mrf.mxu0
  %v764 = vadd.f32 %v631, %v763
  %765 = vmatmul.bf16.gmra.mxu0 %v405
  %v766 = vpop.f32.mrf.mxu0
  %v767 = vadd.f32 %v634, %v766
  %v768 = vpop.f32.mrf.mxu0
  %v769 = vadd.f32 %v636, %v768
  %770 = vmatmul.bf16.gmra.mxu0 %v408
  %v771 = vpop.f32.mrf.mxu0
  %v772 = vadd.f32 %v639, %v771
  %v773 = vpop.f32.mrf.mxu0
  %v774 = vadd.f32 %v641, %v773
  %775 = vmatmul.bf16.gmra.mxu0 %v411
  %v776 = vpop.f32.mrf.mxu0
  %v777 = vadd.f32 %v644, %v776
  %v778 = vpop.f32.mrf.mxu0
  %v779 = vadd.f32 %v646, %v778
  %780 = vmatmul.bf16.gmra.mxu0 %v414
  %v781 = vpop.f32.mrf.mxu0
  %v782 = vadd.f32 %v649, %v781
  %v783 = vpop.f32.mrf.mxu0
  %v784 = vadd.f32 %v651, %v783
  %785 = vmatmul.bf16.gmra.mxu0 %v417
  %v786 = vpop.f32.mrf.mxu0
  %v787 = vadd.f32 %v654, %v786
  %v788 = vpop.f32.mrf.mxu0
  %v789 = vadd.f32 %v656, %v788
  %790 = vmatmul.bf16.gmra.mxu0 %v420
  %v791 = vpop.f32.mrf.mxu0
  %v792 = vadd.f32 %v659, %v791
  %v793 = vpop.f32.mrf.mxu0
  %v794 = vadd.f32 %v661, %v793
  %795 = vmatmul.bf16.gmra.mxu0 %v423
  %v796 = vpop.f32.mrf.mxu0
  %v797 = vadd.f32 %v664, %v796
  %v798 = vpop.f32.mrf.mxu0
  %v799 = vadd.f32 %v666, %v798
  %800 = vmatmul.bf16.gmra.mxu0 %v426
  %v801 = vpop.f32.mrf.mxu0
  %v802 = vadd.f32 %v669, %v801
  %v803 = vpop.f32.mrf.mxu0
  %v804 = vadd.f32 %v671, %v803
  %805 = vmatmul.bf16.gmra.mxu0 %v429
  %v806 = vpop.f32.mrf.mxu0
  %v807 = vadd.f32 %v674, %v806
  %v808 = vpop.f32.mrf.mxu0
  %v809 = vadd.f32 %v676, %v808
  %810 = vmatmul.bf16.gmra.mxu0 %v432
  %v811 = vpop.f32.mrf.mxu0
  %v812 = vadd.f32 %v679, %v811
  %v813 = vpop.f32.mrf.mxu0
  %v814 = vadd.f32 %v681, %v813
  %815 = vmatmul.bf16.gmra.mxu0 %v435
  %v816 = vpop.f32.mrf.mxu0
  %v817 = vadd.f32 %v684, %v816
  %v818 = vpop.f32.mrf.mxu0
  %v819 = vadd.f32 %v686, %v818
  %820 = vmatmul.bf16.gmra.mxu0 %v438
  %v821 = vpop.f32.mrf.mxu0
  %v822 = vadd.f32 %v689, %v821
  %v823 = vpop.f32.mrf.mxu0
  %v824 = vadd.f32 %v691, %v823
  %825 = vmatmul.bf16.gmra.mxu0 %v441
  %v826 = vpop.f32.mrf.mxu0
  %v827 = vadd.f32 %v694, %v826
  %v828 = vpop.f32.mrf.mxu0
  %v829 = vadd.f32 %v696, %v828
  %830 = vmatmul.bf16.gmra.mxu0 %v444
  %v831 = vpop.f32.mrf.mxu0
  %v832 = vadd.f32 %v699, %v831
  %v833 = vpop.f32.mrf.mxu0
  %v834 = vadd.f32 %v701, %v833
  %835 = vmatmul.bf16.gmra.mxu0 %v447
  %v836 = vpop.f32.mrf.mxu0
  %v837 = vadd.f32 %v704, %v836
  %v838 = vpop.f32.mrf.mxu0
  %v839 = vadd.f32 %v706, %v838
  %840 = vmatmul.bf16.gmra.mxu0 %v450
  %v841 = vpop.f32.mrf.mxu0
  %v842 = vadd.f32 %v709, %v841
  %v843 = vpop.f32.mrf.mxu0
  %v844 = vadd.f32 %v711, %v843
  %845 = vmatmul.bf16.gmra.mxu0 %v453
  %v846 = vpop.f32.mrf.mxu0
  %v847 = vadd.f32 %v714, %v846
  %v848 = vpop.f32.mrf.mxu0
  %v849 = vadd.f32 %v716, %v848
  %850 = vmatmul.bf16.gmra.mxu0 %v456
  %v851 = vpop.f32.mrf.mxu0
  %v852 = vadd.f32 %v719, %v851
  %v853 = vpop.f32.mrf.mxu0
  %v854 = vadd.f32 %v721, %v853
  %855 = vmatmul.bf16.gmra.mxu0 %v459
  %v856 = vpop.f32.mrf.mxu0
  %v857 = vadd.f32 %v724, %v856
  %v858 = vpop.f32.mrf.mxu0
  %859 = vdwg.mxu0
  %v860 = vmul.f32 %v737, 0.01
  %v861 = vmul.f32 %v739, 0.01
  %v862 = vmul.f32 %v742, 0.01
  %v863 = vmul.f32 %v744, 0.01
  %v864 = vmul.f32 %v747, 0.01
  %v865 = vmul.f32 %v749, 0.01
  %v866 = vmul.f32 %v752, 0.01
  %v867 = vmul.f32 %v754, 0.01
  %v868 = vmul.f32 %v757, 0.01
  %v869 = vmul.f32 %v759, 0.01
  %v870 = vmul.f32 %v762, 0.01
  %v871 = vmul.f32 %v764, 0.01
  %v872 = vmul.f32 %v767, 0.01
  %v873 = vmul.f32 %v769, 0.01
  %v874 = vmul.f32 %v772, 0.01
  %v875 = vmul.f32 %v774, 0.01
  %v876 = vmul.f32 %v777, 0.01
  %v877 = vmul.f32 %v779, 0.01
  %v878 = vmul.f32 %v782, 0.01
  %v879 = vmul.f32 %v784, 0.01
  %v880 = vmul.f32 %v787, 0.01
  %v881 = vmul.f32 %v789, 0.01
  %v882 = vmul.f32 %v792, 0.01
  %v883 = vmul.f32 %v794, 0.01
  %v884 = vmul.f32 %v797, 0.01
  %v885 = vmul.f32 %v799, 0.01
  %v886 = vmul.f32 %v802, 0.01
  %v887 = vmul.f32 %v804, 0.01
  %v888 = vmul.f32 %v807, 0.01
  %v889 = vmul.f32 %v809, 0.01
  %v890 = vmul.f32 %v812, 0.01
  %v891 = vmul.f32 %v814, 0.01
  %v892 = vmul.f32 %v817, 0.01
  %v893 = vmul.f32 %v819, 0.01
  %v894 = vmul.f32 %v822, 0.01
  %v895 = vmul.f32 %v824, 0.01
  %v896 = vmul.f32 %v827, 0.01
  %v897 = vmul.f32 %v829, 0.01
  %v898 = vmul.f32 %v832, 0.01
  %v899 = vmul.f32 %v834, 0.01
  %v900 = vmul.f32 %v837, 0.01
  %v901 = vmul.f32 %v839, 0.01
  %v902 = vmul.f32 %v842, 0.01
  %v903 = vmul.f32 %v844, 0.01
  %v904 = vmul.f32 %v847, 0.01
  %v905 = vmul.f32 %v849, 0.01
  %v906 = vmul.f32 %v852, 0.01
  %v907 = vmul.f32 %v854, 0.01
  %v908 = vmul.f32 %v857, 0.01
  %v909 = vmax.f32 %v737, %v860
  %v910 = vmax.f32 %v739, %v861
  %v911 = vmax.f32 %v742, %v862
  %v912 = vmax.f32 %v744, %v863
  %v913 = vmax.f32 %v747, %v864
  %v914 = vmax.f32 %v749, %v865
  %v915 = vmax.f32 %v752, %v866
  %v916 = vmax.f32 %v754, %v867
  %v917 = vmax.f32 %v757, %v868
  %v918 = vmax.f32 %v759, %v869
  %v919 = vmax.f32 %v762, %v870
  %v920 = vmax.f32 %v764, %v871
  %v921 = vmax.f32 %v767, %v872
  %v922 = vmax.f32 %v769, %v873
  %v923 = vmax.f32 %v772, %v874
  %v924 = vmax.f32 %v774, %v875
  %v925 = vmax.f32 %v777, %v876
  %v926 = vmax.f32 %v779, %v877
  %v927 = vmax.f32 %v782, %v878
  %v928 = vmax.f32 %v784, %v879
  %v929 = vmax.f32 %v787, %v880
  %v930 = vmax.f32 %v789, %v881
  %v931 = vmax.f32 %v792, %v882
  %v932 = vmax.f32 %v794, %v883
  %v933 = vmax.f32 %v797, %v884
  %v934 = vmax.f32 %v799, %v885
  %v935 = vmax.f32 %v802, %v886
  %v936 = vmax.f32 %v804, %v887
  %v937 = vmax.f32 %v807, %v888
  %v938 = vmax.f32 %v809, %v889
  %v939 = vmax.f32 %v812, %v890
  %v940 = vmax.f32 %v814, %v891
  %v941 = vmax.f32 %v817, %v892
  %v942 = vmax.f32 %v819, %v893
  %v943 = vmax.f32 %v822, %v894
  %v944 = vmax.f32 %v824, %v895
  %v945 = vmax.f32 %v827, %v896
  %v946 = vmax.f32 %v829, %v897
  %v947 = vmax.f32 %v832, %v898
  %v948 = vmax.f32 %v834, %v899
  %v949 = vmax.f32 %v837, %v900
  %v950 = vmax.f32 %v839, %v901
  %v951 = vmax.f32 %v842, %v902
  %v952 = vmax.f32 %v844, %v903
  %v953 = vmax.f32 %v847, %v904
  %v954 = vmax.f32 %v849, %v905
  %v955 = vmax.f32 %v852, %v906
  %v956 = vmax.f32 %v854, %v907
  %v957 = vmax.f32 %v857, %v908
  %958 = vst.msk [vmem:[%s3] sm:$0xff] %vm385, %v909
  %959 = vst.msk [vmem:[%s3 + $0x8] sm:$0xff] %vm385, %v910
  %960 = vst.msk [vmem:[%s3 + $0x10] sm:$0xff] %vm385, %v911
  %961 = vst.msk [vmem:[%s3 + $0x18] sm:$0xff] %vm385, %v912
  %962 = vst.msk [vmem:[%s3 + $0x20] sm:$0xff] %vm385, %v913
  %963 = vst.msk [vmem:[%s3 + $0x28] sm:$0xff] %vm385, %v914
  %964 = vst.msk [vmem:[%s3 + $0x30] sm:$0xff] %vm385, %v915
  %965 = vst.msk [vmem:[%s3 + $0x38] sm:$0xff] %vm385, %v916
  %966 = vst.msk [vmem:[%s3 + $0x40] sm:$0xff] %vm385, %v917
  %967 = vst.msk [vmem:[%s3 + $0x48] sm:$0xff] %vm385, %v918
  %968 = vst.msk [vmem:[%s3 + $0x50] sm:$0xff] %vm385, %v919
  %969 = vst.msk [vmem:[%s3 + $0x58] sm:$0xff] %vm385, %v920
  %970 = vst.msk [vmem:[%s3 + $0x60] sm:$0xff] %vm385, %v921
  %971 = vst.msk [vmem:[%s3 + $0x68] sm:$0xff] %vm385, %v922
  %972 = vst.msk [vmem:[%s3 + $0x70] sm:$0xff] %vm385, %v923
  %973 = vst.msk [vmem:[%s3 + $0x78] sm:$0xff] %vm385, %v924
  %974 = vst.msk [vmem:[%s3 + $0x80] sm:$0xff] %vm385, %v925
  %975 = vst.msk [vmem:[%s3 + $0x88] sm:$0xff] %vm385, %v926
  %976 = vst.msk [vmem:[%s3 + $0x90] sm:$0xff] %vm385, %v927
  %977 = vst.msk [vmem:[%s3 + $0x98] sm:$0xff] %vm385, %v928
  %978 = vst.msk [vmem:[%s3 + $0xa0] sm:$0xff] %vm385, %v929
  %979 = vst.msk [vmem:[%s3 + $0xa8] sm:$0xff] %vm385, %v930
  %980 = vst.msk [vmem:[%s3 + $0xb0] sm:$0xff] %vm385, %v931
  %981 = vst.msk [vmem:[%s3 + $0xb8] sm:$0xff] %vm385, %v932
  %982 = vst.msk [vmem:[%s3 + $0xc0] sm:$0xff] %vm385, %v933
  %983 = vst.msk [vmem:[%s3 + $0xc8] sm:$0xff] %vm385, %v934
  %984 = vst.msk [vmem:[%s3 + $0xd0] sm:$0xff] %vm385, %v935
  %985 = vst.msk [vmem:[%s3 + $0xd8] sm:$0xff] %vm385, %v936
  %986 = vst.msk [vmem:[%s3 + $0xe0] sm:$0xff] %vm385, %v937
  %987 = vst.msk [vmem:[%s3 + $0xe8] sm:$0xff] %vm385, %v938
  %988 = vst.msk [vmem:[%s3 + $0xf0] sm:$0xff] %vm385, %v939
  %989 = vst.msk [vmem:[%s3 + $0xf8] sm:$0xff] %vm385, %v940
  %990 = vst.msk [vmem:[%s3 + $0x100] sm:$0xff] %vm385, %v941
  %991 = vst.msk [vmem:[%s3 + $0x108] sm:$0xff] %vm385, %v942
  %992 = vst.msk [vmem:[%s3 + $0x110] sm:$0xff] %vm385, %v943
  %993 = vst.msk [vmem:[%s3 + $0x118] sm:$0xff] %vm385, %v944
  %994 = vst.msk [vmem:[%s3 + $0x120] sm:$0xff] %vm385, %v945
  %995 = vst.msk [vmem:[%s3 + $0x128] sm:$0xff] %vm385, %v946
  %996 = vst.msk [vmem:[%s3 + $0x130] sm:$0xff] %vm385, %v947
  %997 = vst.msk [vmem:[%s3 + $0x138] sm:$0xff] %vm385, %v948
  %998 = vst.msk [vmem:[%s3 + $0x140] sm:$0xff] %vm385, %v949
  %999 = vst.msk [vmem:[%s3 + $0x148] sm:$0xff] %vm385, %v950
  %1000 = vst.msk [vmem:[%s3 + $0x150] sm:$0xff] %vm385, %v951
  %1001 = vst.msk [vmem:[%s3 + $0x158] sm:$0xff] %vm385, %v952
  %1002 = vst.msk [vmem:[%s3 + $0x160] sm:$0xff] %vm385, %v953
  %1003 = vst.msk [vmem:[%s3 + $0x168] sm:$0xff] %vm385, %v954
  %1004 = vst.msk [vmem:[%s3 + $0x170] sm:$0xff] %vm385, %v955
  %1005 = vst.msk [vmem:[%s3 + $0x178] sm:$0xff] %vm385, %v956
  %1006 = vst.msk [vmem:[%s3 + $0x180] sm:$0xff] %vm385, %v957
  // Predicated region
  $region14: #{grasp_model_forward.10} parent=0 // pred_check
    _
  $region15: #{grasp_model_forward.10} parent=0 // pred_check_branch
    %1008 = sbr.rel (0) target = $region17
  $region16: #{grasp_model_forward.10} parent=0 // pred_region
    _
  $region17: #{grasp_model_forward.10} parent=0 // pred_fallthru
    _
  // Predicated region
  $region18: #{grasp_model_forward.10} parent=0 // pred_check
    _
  $region19: #{grasp_model_forward.10} parent=0 // pred_check_branch
    %1010 = sbr.rel (0) target = $region21
  $region20: #{grasp_model_forward.10} parent=0 // pred_region
    _
  $region21: #{grasp_model_forward.10} parent=0 // pred_fallthru
    _

// kernel: grasp_model_forward.11
$region0: #{grasp_model_forward.11}
  #allocation0 [shape = 'u32[]', space=smem, size = 0x4, offset = 0x4, fixed_abs, tag = 'smem constant byte address 0x4 - core index']
  #allocation1 [shape = 'u32[72,128]{1,0:T(1,128)}', space=vmem, size = 0x9000, scoped, tag = 'internal scratch']
  %s0 = inlined_call_operand.vmem [shape: f32[288,288], index: 0, kind: input, shape index: {}]
  %s1 = inlined_call_operand.vmem [shape: bf16[288,32], index: 1, kind: input, shape index: {}]
  %s2 = inlined_call_operand.vmem [shape: f32[1,32], index: 2, kind: input, shape index: {}]
  %s3 = inlined_call_operand.vmem [shape: f32[288,32], index: 3, kind: output, shape index: {}]
  %s4 = sld [smem:[#allocation0]]
  $region22: #{grasp_model_forward.11} parent=0
    _
  %s6 = ssub.s32 1, %s4
  %s7 = scalar_select 0, %s6, %s4
  // Predicated region
  $region2: #{grasp_model_forward.11} parent=0 // pred_check
    _
  $region3: #{grasp_model_forward.11} parent=0 // pred_check_branch
    %9 = sbr.rel (0) target = $region5
  $region4: #{grasp_model_forward.11} parent=0 // pred_region
    _
  $region5: #{grasp_model_forward.11} parent=0 // pred_fallthru
    _
  // Predicated region
  $region6: #{grasp_model_forward.11} parent=0 // pred_check
    _
  $region7: #{grasp_model_forward.11} parent=0 // pred_check_branch
    %11 = sbr.rel (0) target = $region9
  $region8: #{grasp_model_forward.11} parent=0 // pred_region
    _
  $region9: #{grasp_model_forward.11} parent=0 // pred_fallthru
    _
  // Predicated region
  $region10: #{grasp_model_forward.11} parent=0 // pred_check
    _
  $region11: #{grasp_model_forward.11} parent=0 // pred_check_branch
    %13 = sbr.rel (0) target = $region13
  $region12: #{grasp_model_forward.11} parent=0 // pred_region
    _
  $region13: #{grasp_model_forward.11} parent=0 // pred_fallthru
    _
  %v15 = vld [vmem:[%s0] sm:$0xff]
  %v16 = vld [vmem:[%s0 + $0x8] sm:$0xff]
  %v17 = vld [vmem:[%s0 + $0x10] sm:$0xff]
  %v18 = vld [vmem:[%s0 + $0x18] sm:$0xff]
  %v19 = vld [vmem:[%s0 + $0x20] sm:$0xff]
  %v20 = vld [vmem:[%s0 + $0x28] sm:$0xff]
  %v21 = vld [vmem:[%s0 + $0x30] sm:$0xff]
  %v22 = vld [vmem:[%s0 + $0x38] sm:$0xff]
  %v23 = vld [vmem:[%s0 + $0x40] sm:$0xff]
  %v24 = vld [vmem:[%s0 + $0x48] sm:$0xff]
  %v25 = vld [vmem:[%s0 + $0x50] sm:$0xff]
  %v26 = vld [vmem:[%s0 + $0x58] sm:$0xff]
  %v27 = vld [vmem:[%s0 + $0x60] sm:$0xff]
  %v28 = vld [vmem:[%s0 + $0x68] sm:$0xff]
  %v29 = vld [vmem:[%s0 + $0x70] sm:$0xff]
  %v30 = vld [vmem:[%s0 + $0x78] sm:$0xff]
  %v31 = vld [vmem:[%s0 + $0x80] sm:$0xff]
  %v32 = vld [vmem:[%s0 + $0x88] sm:$0xff]
  %v33 = vld [vmem:[%s0 + $0x90] sm:$0xff]
  %v34 = vld [vmem:[%s0 + $0x98] sm:$0xff]
  %v35 = vld [vmem:[%s0 + $0xa0] sm:$0xff]
  %v36 = vld [vmem:[%s0 + $0xa8] sm:$0xff]
  %v37 = vld [vmem:[%s0 + $0xb0] sm:$0xff]
  %v38 = vld [vmem:[%s0 + $0xb8] sm:$0xff]
  %v39 = vld [vmem:[%s0 + $0xc0] sm:$0xff]
  %v40 = vld [vmem:[%s0 + $0xc8] sm:$0xff]
  %v41 = vld [vmem:[%s0 + $0xd0] sm:$0xff]
  %v42 = vld [vmem:[%s0 + $0xd8] sm:$0xff]
  %v43 = vld [vmem:[%s0 + $0xe0] sm:$0xff]
  %v44 = vld [vmem:[%s0 + $0xe8] sm:$0xff]
  %v45 = vld [vmem:[%s0 + $0xf0] sm:$0xff]
  %v46 = vld [vmem:[%s0 + $0xf8] sm:$0xff]
  %v47 = vld [vmem:[%s0 + $0x100] sm:$0xff]
  %v48 = vld [vmem:[%s0 + $0x108] sm:$0xff]
  %v49 = vld [vmem:[%s0 + $0x110] sm:$0xff]
  %v50 = vld [vmem:[%s0 + $0x118] sm:$0xff]
  %v51 = vld [vmem:[%s0 + $0x120] sm:$0xff]
  %v52 = vld [vmem:[%s0 + $0x128] sm:$0xff]
  %v53 = vld [vmem:[%s0 + $0x130] sm:$0xff]
  %v54 = vld [vmem:[%s0 + $0x138] sm:$0xff]
  %v55 = vld [vmem:[%s0 + $0x140] sm:$0xff]
  %v56 = vld [vmem:[%s0 + $0x148] sm:$0xff]
  %v57 = vld [vmem:[%s0 + $0x150] sm:$0xff]
  %v58 = vld [vmem:[%s0 + $0x158] sm:$0xff]
  %v59 = vld [vmem:[%s0 + $0x160] sm:$0xff]
  %v60 = vld [vmem:[%s0 + $0x168] sm:$0xff]
  %v61 = vld [vmem:[%s0 + $0x170] sm:$0xff]
  %v62 = vld [vmem:[%s0 + $0x178] sm:$0xff]
  %v63 = vld [vmem:[%s0 + $0x180] sm:$0xff]
  %v64 = vld [vmem:[%s0 + $0x188] sm:$0xff]
  %v65 = vld [vmem:[%s0 + $0x190] sm:$0xff]
  %v66 = vld [vmem:[%s0 + $0x198] sm:$0xff]
  %v67 = vld [vmem:[%s0 + $0x1a0] sm:$0xff]
  %v68 = vld [vmem:[%s0 + $0x1a8] sm:$0xff]
  %v69 = vld [vmem:[%s0 + $0x1b0] sm:$0xff]
  %v70 = vld [vmem:[%s0 + $0x1b8] sm:$0xff]
  %v71 = vld [vmem:[%s0 + $0x1c0] sm:$0xff]
  %v72 = vld [vmem:[%s0 + $0x1c8] sm:$0xff]
  %v73 = vld [vmem:[%s0 + $0x1d0] sm:$0xff]
  %v74 = vld [vmem:[%s0 + $0x1d8] sm:$0xff]
  %v75 = vld [vmem:[%s0 + $0x1e0] sm:$0xff]
  %v76 = vld [vmem:[%s0 + $0x1e8] sm:$0xff]
  %v77 = vld [vmem:[%s0 + $0x1f0] sm:$0xff]
  %v78 = vld [vmem:[%s0 + $0x1f8] sm:$0xff]
  %v79 = vld [vmem:[%s0 + $0x200] sm:$0xff]
  %v80 = vld [vmem:[%s0 + $0x208] sm:$0xff]
  %v81 = vld [vmem:[%s0 + $0x210] sm:$0xff]
  %v82 = vld [vmem:[%s0 + $0x218] sm:$0xff]
  %v83 = vld [vmem:[%s0 + $0x220] sm:$0xff]
  %v84 = vld [vmem:[%s0 + $0x228] sm:$0xff]
  %v85 = vld [vmem:[%s0 + $0x230] sm:$0xff]
  %v86 = vld [vmem:[%s0 + $0x238] sm:$0xff]
  %v87 = vld [vmem:[%s0 + $0x240] sm:$0xff]
  %v88 = vld [vmem:[%s0 + $0x248] sm:$0xff]
  %v89 = vld [vmem:[%s0 + $0x250] sm:$0xff]
  %v90 = vld [vmem:[%s0 + $0x258] sm:$0xff]
  %v91 = vld [vmem:[%s0 + $0x260] sm:$0xff]
  %v92 = vld [vmem:[%s0 + $0x268] sm:$0xff]
  %v93 = vld [vmem:[%s0 + $0x270] sm:$0xff]
  %v94 = vld [vmem:[%s0 + $0x278] sm:$0xff]
  %v95 = vld [vmem:[%s0 + $0x280] sm:$0xff]
  %v96 = vld [vmem:[%s0 + $0x288] sm:$0xff]
  %v97 = vld [vmem:[%s0 + $0x290] sm:$0xff]
  %v98 = vld [vmem:[%s0 + $0x298] sm:$0xff]
  %v99 = vld [vmem:[%s0 + $0x2a0] sm:$0xff]
  %v100 = vld [vmem:[%s0 + $0x2a8] sm:$0xff]
  %v101 = vld [vmem:[%s0 + $0x2b0] sm:$0xff]
  %v102 = vld [vmem:[%s0 + $0x2b8] sm:$0xff]
  %v103 = vld [vmem:[%s0 + $0x2c0] sm:$0xff]
  %v104 = vld [vmem:[%s0 + $0x2c8] sm:$0xff]
  %v105 = vld [vmem:[%s0 + $0x2d0] sm:$0xff]
  %v106 = vld [vmem:[%s0 + $0x2d8] sm:$0xff]
  %v107 = vld [vmem:[%s0 + $0x2e0] sm:$0xff]
  %v108 = vld [vmem:[%s0 + $0x2e8] sm:$0xff]
  %v109 = vld [vmem:[%s0 + $0x2f0] sm:$0xff]
  %v110 = vld [vmem:[%s0 + $0x2f8] sm:$0xff]
  %v111 = vld [vmem:[%s0 + $0x300] sm:$0xff]
  %v112 = vld [vmem:[%s0 + $0x308] sm:$0xff]
  %v113 = vld [vmem:[%s0 + $0x310] sm:$0xff]
  %v114 = vld [vmem:[%s0 + $0x318] sm:$0xff]
  %v115 = vld [vmem:[%s0 + $0x320] sm:$0xff]
  %v116 = vld [vmem:[%s0 + $0x328] sm:$0xff]
  %v117 = vld [vmem:[%s0 + $0x330] sm:$0xff]
  %v118 = vld [vmem:[%s0 + $0x338] sm:$0xff]
  %v119 = vld [vmem:[%s0 + $0x340] sm:$0xff]
  %v120 = vld [vmem:[%s0 + $0x348] sm:$0xff]
  %v121 = vld [vmem:[%s0 + $0x350] sm:$0xff]
  %v122 = vld [vmem:[%s0 + $0x358] sm:$0xff]
  %v123 = vpack.c.bf16 %v18, %v15
  %v124 = vpack.c.bf16 %v19, %v16
  %v125 = vpack.c.bf16 %v20, %v17
  %v126 = vpack.c.bf16 %v24, %v21
  %v127 = vpack.c.bf16 %v25, %v22
  %v128 = vpack.c.bf16 %v26, %v23
  %v129 = vpack.c.bf16 %v30, %v27
  %v130 = vpack.c.bf16 %v31, %v28
  %v131 = vpack.c.bf16 %v32, %v29
  %v132 = vpack.c.bf16 %v36, %v33
  %v133 = vpack.c.bf16 %v37, %v34
  %v134 = vpack.c.bf16 %v38, %v35
  %v135 = vpack.c.bf16 %v42, %v39
  %v136 = vpack.c.bf16 %v43, %v40
  %v137 = vpack.c.bf16 %v44, %v41
  %v138 = vpack.c.bf16 %v48, %v45
  %v139 = vpack.c.bf16 %v49, %v46
  %v140 = vpack.c.bf16 %v50, %v47
  %v141 = vpack.c.bf16 %v54, %v51
  %v142 = vpack.c.bf16 %v55, %v52
  %v143 = vpack.c.bf16 %v56, %v53
  %v144 = vpack.c.bf16 %v60, %v57
  %v145 = vpack.c.bf16 %v61, %v58
  %v146 = vpack.c.bf16 %v62, %v59
  %v147 = vpack.c.bf16 %v66, %v63
  %v148 = vpack.c.bf16 %v67, %v64
  %v149 = vpack.c.bf16 %v68, %v65
  %v150 = vpack.c.bf16 %v72, %v69
  %v151 = vpack.c.bf16 %v73, %v70
  %v152 = vpack.c.bf16 %v74, %v71
  %v153 = vpack.c.bf16 %v78, %v75
  %v154 = vpack.c.bf16 %v79, %v76
  %v155 = vpack.c.bf16 %v80, %v77
  %v156 = vpack.c.bf16 %v84, %v81
  %v157 = vpack.c.bf16 %v85, %v82
  %v158 = vpack.c.bf16 %v86, %v83
  %v159 = vpack.c.bf16 %v90, %v87
  %v160 = vpack.c.bf16 %v91, %v88
  %v161 = vpack.c.bf16 %v92, %v89
  %v162 = vpack.c.bf16 %v96, %v93
  %v163 = vpack.c.bf16 %v97, %v94
  %v164 = vpack.c.bf16 %v98, %v95
  %v165 = vpack.c.bf16 %v102, %v99
  %v166 = vpack.c.bf16 %v103, %v100
  %v167 = vpack.c.bf16 %v104, %v101
  %v168 = vpack.c.bf16 %v108, %v105
  %v169 = vpack.c.bf16 %v109, %v106
  %v170 = vpack.c.bf16 %v110, %v107
  %v171 = vpack.c.bf16 %v114, %v111
  %v172 = vpack.c.bf16 %v115, %v112
  %v173 = vpack.c.bf16 %v116, %v113
  %v174 = vpack.c.bf16 %v120, %v117
  %v175 = vpack.c.bf16 %v121, %v118
  %v176 = vpack.c.bf16 %v122, %v119
  %v177 = vld [vmem:[%s1] sm:$0xf]
  %v178 = vld [vmem:[%s1 + $0x4] sm:$0xf]
  %v179 = vld [vmem:[%s1 + $0x8] sm:$0xf]
  %v180 = vld [vmem:[%s1 + $0xc] sm:$0xf]
  %v181 = vld [vmem:[%s1 + $0x10] sm:$0xf]
  %v182 = vld [vmem:[%s1 + $0x14] sm:$0xf]
  %v183 = vld [vmem:[%s1 + $0x18] sm:$0xf]
  %v184 = vld [vmem:[%s1 + $0x1c] sm:$0xf]
  %v185 = vld [vmem:[%s1 + $0x20] sm:$0xf]
  %v186 = vld [vmem:[%s1 + $0x24] sm:$0xf]
  %v187 = vld [vmem:[%s1 + $0x28] sm:$0xf]
  %v188 = vld [vmem:[%s1 + $0x2c] sm:$0xf]
  %v189 = vld [vmem:[%s1 + $0x30] sm:$0xf]
  %v190 = vld [vmem:[%s1 + $0x34] sm:$0xf]
  %v191 = vld [vmem:[%s1 + $0x38] sm:$0xf]
  %v192 = vld [vmem:[%s1 + $0x3c] sm:$0xf]
  %v193 = vld [vmem:[%s1 + $0x40] sm:$0xf]
  %v194 = vld [vmem:[%s1 + $0x44] sm:$0xf]
  %v195 = vld [vmem:[%s1 + $0x48] sm:$0xf]
  %v196 = vld [vmem:[%s1 + $0x4c] sm:$0xf]
  %v197 = vld [vmem:[%s1 + $0x50] sm:$0xf]
  %v198 = vld [vmem:[%s1 + $0x54] sm:$0xf]
  %v199 = vld [vmem:[%s1 + $0x58] sm:$0xf]
  %v200 = vld [vmem:[%s1 + $0x5c] sm:$0xf]
  %v201 = vld [vmem:[%s1 + $0x60] sm:$0xf]
  %v202 = vld [vmem:[%s1 + $0x64] sm:$0xf]
  %v203 = vld [vmem:[%s1 + $0x68] sm:$0xf]
  %v204 = vld [vmem:[%s1 + $0x6c] sm:$0xf]
  %v205 = vld [vmem:[%s1 + $0x70] sm:$0xf]
  %v206 = vld [vmem:[%s1 + $0x74] sm:$0xf]
  %v207 = vld [vmem:[%s1 + $0x78] sm:$0xf]
  %v208 = vld [vmem:[%s1 + $0x7c] sm:$0xf]
  %v209 = vld [vmem:[%s1 + $0x80] sm:$0xf]
  %v210 = vld [vmem:[%s1 + $0x84] sm:$0xf]
  %v211 = vld [vmem:[%s1 + $0x88] sm:$0xf]
  %v212 = vld [vmem:[%s1 + $0x8c] sm:$0xf]
  %v213 = vld [vmem:[%s2] sm:$0x1]
  %v215 = vperm.slane %v213, 0
  %v253 = vunpack.c.l.b16 %v177
  %v254 = vunpack.c.l.b16 %v178
  %v255 = vunpack.c.l.b16 %v179
  %v256 = vunpack.c.l.b16 %v180
  %v257 = vunpack.c.l.b16 %v181
  %v258 = vunpack.c.l.b16 %v182
  %v259 = vunpack.c.l.b16 %v183
  %v260 = vunpack.c.l.b16 %v184
  %v261 = vunpack.c.l.b16 %v185
  %v262 = vunpack.c.l.b16 %v186
  %v263 = vunpack.c.l.b16 %v187
  %v264 = vunpack.c.l.b16 %v188
  %v265 = vunpack.c.l.b16 %v189
  %v266 = vunpack.c.l.b16 %v190
  %v267 = vunpack.c.l.b16 %v191
  %v268 = vunpack.c.l.b16 %v192
  %v269 = vunpack.c.l.b16 %v193
  %v270 = vunpack.c.l.b16 %v194
  %v271 = vunpack.c.l.b16 %v195
  %v272 = vunpack.c.l.b16 %v196
  %v273 = vunpack.c.l.b16 %v197
  %v274 = vunpack.c.l.b16 %v198
  %v275 = vunpack.c.l.b16 %v199
  %v276 = vunpack.c.l.b16 %v200
  %v277 = vunpack.c.l.b16 %v201
  %v278 = vunpack.c.l.b16 %v202
  %v279 = vunpack.c.l.b16 %v203
  %v280 = vunpack.c.l.b16 %v204
  %v281 = vunpack.c.l.b16 %v205
  %v282 = vunpack.c.l.b16 %v206
  %v283 = vunpack.c.l.b16 %v207
  %v284 = vunpack.c.l.b16 %v208
  %v285 = vunpack.c.l.b16 %v209
  %v286 = vunpack.c.l.b16 %v210
  %v287 = vunpack.c.l.b16 %v211
  %v288 = vunpack.c.l.b16 %v212
  %v289 = vpack.c.b16 %v254, %v253
  %v290 = vpack.c.b16 %v256, %v255
  %v291 = vpack.c.b16 %v258, %v257
  %v292 = vpack.c.b16 %v260, %v259
  %v293 = vpack.c.b16 %v262, %v261
  %v294 = vpack.c.b16 %v264, %v263
  %v295 = vpack.c.b16 %v266, %v265
  %v296 = vpack.c.b16 %v268, %v267
  %v297 = vpack.c.b16 %v270, %v269
  %v298 = vpack.c.b16 %v272, %v271
  %v299 = vpack.c.b16 %v274, %v273
  %v300 = vpack.c.b16 %v276, %v275
  %v301 = vpack.c.b16 %v278, %v277
  %v302 = vpack.c.b16 %v280, %v279
  %v303 = vpack.c.b16 %v282, %v281
  %v304 = vpack.c.b16 %v284, %v283
  %v305 = vpack.c.b16 %v286, %v285
  %v306 = vpack.c.b16 %v288, %v287
  %vm325 = vcmask 261120
  %v327 = vsel %vm325, %v125, 0
  %v330 = vsel %vm325, %v128, 0
  %v333 = vsel %vm325, %v131, 0
  %v336 = vsel %vm325, %v134, 0
  %v339 = vsel %vm325, %v137, 0
  %v342 = vsel %vm325, %v140, 0
  %v345 = vsel %vm325, %v143, 0
  %v348 = vsel %vm325, %v146, 0
  %v351 = vsel %vm325, %v149, 0
  %v354 = vsel %vm325, %v152, 0
  %v357 = vsel %vm325, %v155, 0
  %v360 = vsel %vm325, %v158, 0
  %v363 = vsel %vm325, %v161, 0
  %v366 = vsel %vm325, %v164, 0
  %v369 = vsel %vm325, %v167, 0
  %v372 = vsel %vm325, %v170, 0
  %v375 = vsel %vm325, %v173, 0
  %v378 = vsel %vm325, %v176, 0
  %380 = vmatpush.bf16.msra.mxu0 %v296
  %381 = vmatpush.bf16.msra.mxu0 %v295
  %382 = vmatpush.bf16.msra.mxu0 %v294
  %383 = vmatpush.bf16.msra.mxu0 %v293
  %384 = vmatpush.bf16.msra.mxu0 %v292
  %385 = vmatpush.bf16.msra.mxu0 %v291
  %386 = vmatpush.bf16.msra.mxu0 %v290
  %387 = vmatpush.bf16.msra.mxu0 %v289
  %388 = vmatmul.bf16.gmra.mxu0 %v123
  %v389 = vpop.f32.mrf.mxu0
  %v390 = vadd.f32 %v215, %v389
  %v391 = vpop.f32.mrf.mxu0
  %v392 = vadd.f32 %v215, %v391
  %393 = vmatmul.bf16.gmra.mxu0 %v126
  %v394 = vpop.f32.mrf.mxu0
  %v395 = vadd.f32 %v215, %v394
  %v396 = vpop.f32.mrf.mxu0
  %v397 = vadd.f32 %v215, %v396
  %398 = vmatmul.bf16.gmra.mxu0 %v129
  %v399 = vpop.f32.mrf.mxu0
  %v400 = vadd.f32 %v215, %v399
  %v401 = vpop.f32.mrf.mxu0
  %v402 = vadd.f32 %v215, %v401
  %403 = vmatmul.bf16.gmra.mxu0 %v132
  %v404 = vpop.f32.mrf.mxu0
  %v405 = vadd.f32 %v215, %v404
  %v406 = vpop.f32.mrf.mxu0
  %v407 = vadd.f32 %v215, %v406
  %408 = vmatmul.bf16.gmra.mxu0 %v135
  %v409 = vpop.f32.mrf.mxu0
  %v410 = vadd.f32 %v215, %v409
  %v411 = vpop.f32.mrf.mxu0
  %v412 = vadd.f32 %v215, %v411
  %413 = vmatmul.bf16.gmra.mxu0 %v138
  %v414 = vpop.f32.mrf.mxu0
  %v415 = vadd.f32 %v215, %v414
  %v416 = vpop.f32.mrf.mxu0
  %v417 = vadd.f32 %v215, %v416
  %418 = vmatmul.bf16.gmra.mxu0 %v141
  %v419 = vpop.f32.mrf.mxu0
  %v420 = vadd.f32 %v215, %v419
  %v421 = vpop.f32.mrf.mxu0
  %v422 = vadd.f32 %v215, %v421
  %423 = vmatmul.bf16.gmra.mxu0 %v144
  %v424 = vpop.f32.mrf.mxu0
  %v425 = vadd.f32 %v215, %v424
  %v426 = vpop.f32.mrf.mxu0
  %v427 = vadd.f32 %v215, %v426
  %428 = vmatmul.bf16.gmra.mxu0 %v147
  %v429 = vpop.f32.mrf.mxu0
  %v430 = vadd.f32 %v215, %v429
  %v431 = vpop.f32.mrf.mxu0
  %v432 = vadd.f32 %v215, %v431
  %433 = vmatmul.bf16.gmra.mxu0 %v150
  %v434 = vpop.f32.mrf.mxu0
  %v435 = vadd.f32 %v215, %v434
  %v436 = vpop.f32.mrf.mxu0
  %v437 = vadd.f32 %v215, %v436
  %438 = vmatmul.bf16.gmra.mxu0 %v153
  %v439 = vpop.f32.mrf.mxu0
  %v440 = vadd.f32 %v215, %v439
  %v441 = vpop.f32.mrf.mxu0
  %v442 = vadd.f32 %v215, %v441
  %443 = vmatmul.bf16.gmra.mxu0 %v156
  %v444 = vpop.f32.mrf.mxu0
  %v445 = vadd.f32 %v215, %v444
  %v446 = vpop.f32.mrf.mxu0
  %v447 = vadd.f32 %v215, %v446
  %448 = vmatmul.bf16.gmra.mxu0 %v159
  %v449 = vpop.f32.mrf.mxu0
  %v450 = vadd.f32 %v215, %v449
  %v451 = vpop.f32.mrf.mxu0
  %v452 = vadd.f32 %v215, %v451
  %453 = vmatmul.bf16.gmra.mxu0 %v162
  %v454 = vpop.f32.mrf.mxu0
  %v455 = vadd.f32 %v215, %v454
  %v456 = vpop.f32.mrf.mxu0
  %v457 = vadd.f32 %v215, %v456
  %458 = vmatmul.bf16.gmra.mxu0 %v165
  %v459 = vpop.f32.mrf.mxu0
  %v460 = vadd.f32 %v215, %v459
  %v461 = vpop.f32.mrf.mxu0
  %v462 = vadd.f32 %v215, %v461
  %463 = vmatmul.bf16.gmra.mxu0 %v168
  %v464 = vpop.f32.mrf.mxu0
  %v465 = vadd.f32 %v215, %v464
  %v466 = vpop.f32.mrf.mxu0
  %v467 = vadd.f32 %v215, %v466
  %468 = vmatmul.bf16.gmra.mxu0 %v171
  %v469 = vpop.f32.mrf.mxu0
  %v470 = vadd.f32 %v215, %v469
  %v471 = vpop.f32.mrf.mxu0
  %v472 = vadd.f32 %v215, %v471
  %473 = vmatmul.bf16.gmra.mxu0 %v174
  %v474 = vpop.f32.mrf.mxu0
  %v475 = vadd.f32 %v215, %v474
  %v476 = vpop.f32.mrf.mxu0
  %v477 = vadd.f32 %v215, %v476
  %478 = vdwg.mxu0
  %479 = vmatpush.bf16.msra.mxu0 %v304
  %480 = vmatpush.bf16.msra.mxu0 %v303
  %481 = vmatpush.bf16.msra.mxu0 %v302
  %482 = vmatpush.bf16.msra.mxu0 %v301
  %483 = vmatpush.bf16.msra.mxu0 %v300
  %484 = vmatpush.bf16.msra.mxu0 %v299
  %485 = vmatpush.bf16.msra.mxu0 %v298
  %486 = vmatpush.bf16.msra.mxu0 %v297
  %487 = vmatmul.bf16.gmra.mxu0 %v124
  %v488 = vpop.f32.mrf.mxu0
  %v489 = vadd.f32 %v390, %v488
  %v490 = vpop.f32.mrf.mxu0
  %v491 = vadd.f32 %v392, %v490
  %492 = vmatmul.bf16.gmra.mxu0 %v127
  %v493 = vpop.f32.mrf.mxu0
  %v494 = vadd.f32 %v395, %v493
  %v495 = vpop.f32.mrf.mxu0
  %v496 = vadd.f32 %v397, %v495
  %497 = vmatmul.bf16.gmra.mxu0 %v130
  %v498 = vpop.f32.mrf.mxu0
  %v499 = vadd.f32 %v400, %v498
  %v500 = vpop.f32.mrf.mxu0
  %v501 = vadd.f32 %v402, %v500
  %502 = vmatmul.bf16.gmra.mxu0 %v133
  %v503 = vpop.f32.mrf.mxu0
  %v504 = vadd.f32 %v405, %v503
  %v505 = vpop.f32.mrf.mxu0
  %v506 = vadd.f32 %v407, %v505
  %507 = vmatmul.bf16.gmra.mxu0 %v136
  %v508 = vpop.f32.mrf.mxu0
  %v509 = vadd.f32 %v410, %v508
  %v510 = vpop.f32.mrf.mxu0
  %v511 = vadd.f32 %v412, %v510
  %512 = vmatmul.bf16.gmra.mxu0 %v139
  %v513 = vpop.f32.mrf.mxu0
  %v514 = vadd.f32 %v415, %v513
  %v515 = vpop.f32.mrf.mxu0
  %v516 = vadd.f32 %v417, %v515
  %517 = vmatmul.bf16.gmra.mxu0 %v142
  %v518 = vpop.f32.mrf.mxu0
  %v519 = vadd.f32 %v420, %v518
  %v520 = vpop.f32.mrf.mxu0
  %v521 = vadd.f32 %v422, %v520
  %522 = vmatmul.bf16.gmra.mxu0 %v145
  %v523 = vpop.f32.mrf.mxu0
  %v524 = vadd.f32 %v425, %v523
  %v525 = vpop.f32.mrf.mxu0
  %v526 = vadd.f32 %v427, %v525
  %527 = vmatmul.bf16.gmra.mxu0 %v148
  %v528 = vpop.f32.mrf.mxu0
  %v529 = vadd.f32 %v430, %v528
  %v530 = vpop.f32.mrf.mxu0
  %v531 = vadd.f32 %v432, %v530
  %532 = vmatmul.bf16.gmra.mxu0 %v151
  %v533 = vpop.f32.mrf.mxu0
  %v534 = vadd.f32 %v435, %v533
  %v535 = vpop.f32.mrf.mxu0
  %v536 = vadd.f32 %v437, %v535
  %537 = vmatmul.bf16.gmra.mxu0 %v154
  %v538 = vpop.f32.mrf.mxu0
  %v539 = vadd.f32 %v440, %v538
  %v540 = vpop.f32.mrf.mxu0
  %v541 = vadd.f32 %v442, %v540
  %542 = vmatmul.bf16.gmra.mxu0 %v157
  %v543 = vpop.f32.mrf.mxu0
  %v544 = vadd.f32 %v445, %v543
  %v545 = vpop.f32.mrf.mxu0
  %v546 = vadd.f32 %v447, %v545
  %547 = vmatmul.bf16.gmra.mxu0 %v160
  %v548 = vpop.f32.mrf.mxu0
  %v549 = vadd.f32 %v450, %v548
  %v550 = vpop.f32.mrf.mxu0
  %v551 = vadd.f32 %v452, %v550
  %552 = vmatmul.bf16.gmra.mxu0 %v163
  %v553 = vpop.f32.mrf.mxu0
  %v554 = vadd.f32 %v455, %v553
  %v555 = vpop.f32.mrf.mxu0
  %v556 = vadd.f32 %v457, %v555
  %557 = vmatmul.bf16.gmra.mxu0 %v166
  %v558 = vpop.f32.mrf.mxu0
  %v559 = vadd.f32 %v460, %v558
  %v560 = vpop.f32.mrf.mxu0
  %v561 = vadd.f32 %v462, %v560
  %562 = vmatmul.bf16.gmra.mxu0 %v169
  %v563 = vpop.f32.mrf.mxu0
  %v564 = vadd.f32 %v465, %v563
  %v565 = vpop.f32.mrf.mxu0
  %v566 = vadd.f32 %v467, %v565
  %567 = vmatmul.bf16.gmra.mxu0 %v172
  %v568 = vpop.f32.mrf.mxu0
  %v569 = vadd.f32 %v470, %v568
  %v570 = vpop.f32.mrf.mxu0
  %v571 = vadd.f32 %v472, %v570
  %572 = vmatmul.bf16.gmra.mxu0 %v175
  %v573 = vpop.f32.mrf.mxu0
  %v574 = vadd.f32 %v475, %v573
  %v575 = vpop.f32.mrf.mxu0
  %v576 = vadd.f32 %v477, %v575
  %577 = vdwg.mxu0
  %578 = vmatpush.bf16.msra.mxu0 0
  %579 = vmatpush.bf16.msra.mxu0 0
  %580 = vmatpush.bf16.msra.mxu0 0
  %581 = vmatpush.bf16.msra.mxu0 0
  %582 = vmatpush.bf16.msra.mxu0 0
  %583 = vmatpush.bf16.msra.mxu0 0
  %584 = vmatpush.bf16.msra.mxu0 %v306
  %585 = vmatpush.bf16.msra.mxu0 %v305
  %586 = vmatmul.bf16.gmra.mxu0 %v327
  %v587 = vpop.f32.mrf.mxu0
  %v588 = vadd.f32 %v489, %v587
  %v589 = vpop.f32.mrf.mxu0
  %v590 = vadd.f32 %v491, %v589
  %591 = vmatmul.bf16.gmra.mxu0 %v330
  %v592 = vpop.f32.mrf.mxu0
  %v593 = vadd.f32 %v494, %v592
  %v594 = vpop.f32.mrf.mxu0
  %v595 = vadd.f32 %v496, %v594
  %596 = vmatmul.bf16.gmra.mxu0 %v333
  %v597 = vpop.f32.mrf.mxu0
  %v598 = vadd.f32 %v499, %v597
  %v599 = vpop.f32.mrf.mxu0
  %v600 = vadd.f32 %v501, %v599
  %601 = vmatmul.bf16.gmra.mxu0 %v336
  %v602 = vpop.f32.mrf.mxu0
  %v603 = vadd.f32 %v504, %v602
  %v604 = vpop.f32.mrf.mxu0
  %v605 = vadd.f32 %v506, %v604
  %606 = vmatmul.bf16.gmra.mxu0 %v339
  %v607 = vpop.f32.mrf.mxu0
  %v608 = vadd.f32 %v509, %v607
  %v609 = vpop.f32.mrf.mxu0
  %v610 = vadd.f32 %v511, %v609
  %611 = vmatmul.bf16.gmra.mxu0 %v342
  %v612 = vpop.f32.mrf.mxu0
  %v613 = vadd.f32 %v514, %v612
  %v614 = vpop.f32.mrf.mxu0
  %v615 = vadd.f32 %v516, %v614
  %616 = vmatmul.bf16.gmra.mxu0 %v345
  %v617 = vpop.f32.mrf.mxu0
  %v618 = vadd.f32 %v519, %v617
  %v619 = vpop.f32.mrf.mxu0
  %v620 = vadd.f32 %v521, %v619
  %621 = vmatmul.bf16.gmra.mxu0 %v348
  %v622 = vpop.f32.mrf.mxu0
  %v623 = vadd.f32 %v524, %v622
  %v624 = vpop.f32.mrf.mxu0
  %v625 = vadd.f32 %v526, %v624
  %626 = vmatmul.bf16.gmra.mxu0 %v351
  %v627 = vpop.f32.mrf.mxu0
  %v628 = vadd.f32 %v529, %v627
  %v629 = vpop.f32.mrf.mxu0
  %v630 = vadd.f32 %v531, %v629
  %631 = vmatmul.bf16.gmra.mxu0 %v354
  %v632 = vpop.f32.mrf.mxu0
  %v633 = vadd.f32 %v534, %v632
  %v634 = vpop.f32.mrf.mxu0
  %v635 = vadd.f32 %v536, %v634
  %636 = vmatmul.bf16.gmra.mxu0 %v357
  %v637 = vpop.f32.mrf.mxu0
  %v638 = vadd.f32 %v539, %v637
  %v639 = vpop.f32.mrf.mxu0
  %v640 = vadd.f32 %v541, %v639
  %641 = vmatmul.bf16.gmra.mxu0 %v360
  %v642 = vpop.f32.mrf.mxu0
  %v643 = vadd.f32 %v544, %v642
  %v644 = vpop.f32.mrf.mxu0
  %v645 = vadd.f32 %v546, %v644
  %646 = vmatmul.bf16.gmra.mxu0 %v363
  %v647 = vpop.f32.mrf.mxu0
  %v648 = vadd.f32 %v549, %v647
  %v649 = vpop.f32.mrf.mxu0
  %v650 = vadd.f32 %v551, %v649
  %651 = vmatmul.bf16.gmra.mxu0 %v366
  %v652 = vpop.f32.mrf.mxu0
  %v653 = vadd.f32 %v554, %v652
  %v654 = vpop.f32.mrf.mxu0
  %v655 = vadd.f32 %v556, %v654
  %656 = vmatmul.bf16.gmra.mxu0 %v369
  %v657 = vpop.f32.mrf.mxu0
  %v658 = vadd.f32 %v559, %v657
  %v659 = vpop.f32.mrf.mxu0
  %v660 = vadd.f32 %v561, %v659
  %661 = vmatmul.bf16.gmra.mxu0 %v372
  %v662 = vpop.f32.mrf.mxu0
  %v663 = vadd.f32 %v564, %v662
  %v664 = vpop.f32.mrf.mxu0
  %v665 = vadd.f32 %v566, %v664
  %666 = vmatmul.bf16.gmra.mxu0 %v375
  %v667 = vpop.f32.mrf.mxu0
  %v668 = vadd.f32 %v569, %v667
  %v669 = vpop.f32.mrf.mxu0
  %v670 = vadd.f32 %v571, %v669
  %671 = vmatmul.bf16.gmra.mxu0 %v378
  %v672 = vpop.f32.mrf.mxu0
  %v673 = vadd.f32 %v574, %v672
  %v674 = vpop.f32.mrf.mxu0
  %v675 = vadd.f32 %v576, %v674
  %676 = vdwg.mxu0
  %v677 = vmul.f32 %v588, 0.01
  %v678 = vmul.f32 %v590, 0.01
  %v679 = vmul.f32 %v593, 0.01
  %v680 = vmul.f32 %v595, 0.01
  %v681 = vmul.f32 %v598, 0.01
  %v682 = vmul.f32 %v600, 0.01
  %v683 = vmul.f32 %v603, 0.01
  %v684 = vmul.f32 %v605, 0.01
  %v685 = vmul.f32 %v608, 0.01
  %v686 = vmul.f32 %v610, 0.01
  %v687 = vmul.f32 %v613, 0.01
  %v688 = vmul.f32 %v615, 0.01
  %v689 = vmul.f32 %v618, 0.01
  %v690 = vmul.f32 %v620, 0.01
  %v691 = vmul.f32 %v623, 0.01
  %v692 = vmul.f32 %v625, 0.01
  %v693 = vmul.f32 %v628, 0.01
  %v694 = vmul.f32 %v630, 0.01
  %v695 = vmul.f32 %v633, 0.01
  %v696 = vmul.f32 %v635, 0.01
  %v697 = vmul.f32 %v638, 0.01
  %v698 = vmul.f32 %v640, 0.01
  %v699 = vmul.f32 %v643, 0.01
  %v700 = vmul.f32 %v645, 0.01
  %v701 = vmul.f32 %v648, 0.01
  %v702 = vmul.f32 %v650, 0.01
  %v703 = vmul.f32 %v653, 0.01
  %v704 = vmul.f32 %v655, 0.01
  %v705 = vmul.f32 %v658, 0.01
  %v706 = vmul.f32 %v660, 0.01
  %v707 = vmul.f32 %v663, 0.01
  %v708 = vmul.f32 %v665, 0.01
  %v709 = vmul.f32 %v668, 0.01
  %v710 = vmul.f32 %v670, 0.01
  %v711 = vmul.f32 %v673, 0.01
  %v712 = vmul.f32 %v675, 0.01
  %v713 = vmax.f32 %v588, %v677
  %v714 = vmax.f32 %v590, %v678
  %v715 = vmax.f32 %v593, %v679
  %v716 = vmax.f32 %v595, %v680
  %v717 = vmax.f32 %v598, %v681
  %v718 = vmax.f32 %v600, %v682
  %v719 = vmax.f32 %v603, %v683
  %v720 = vmax.f32 %v605, %v684
  %v721 = vmax.f32 %v608, %v685
  %v722 = vmax.f32 %v610, %v686
  %v723 = vmax.f32 %v613, %v687
  %v724 = vmax.f32 %v615, %v688
  %v725 = vmax.f32 %v618, %v689
  %v726 = vmax.f32 %v620, %v690
  %v727 = vmax.f32 %v623, %v691
  %v728 = vmax.f32 %v625, %v692
  %v729 = vmax.f32 %v628, %v693
  %v730 = vmax.f32 %v630, %v694
  %v731 = vmax.f32 %v633, %v695
  %v732 = vmax.f32 %v635, %v696
  %v733 = vmax.f32 %v638, %v697
  %v734 = vmax.f32 %v640, %v698
  %v735 = vmax.f32 %v643, %v699
  %v736 = vmax.f32 %v645, %v700
  %v737 = vmax.f32 %v648, %v701
  %v738 = vmax.f32 %v650, %v702
  %v739 = vmax.f32 %v653, %v703
  %v740 = vmax.f32 %v655, %v704
  %v741 = vmax.f32 %v658, %v705
  %v742 = vmax.f32 %v660, %v706
  %v743 = vmax.f32 %v663, %v707
  %v744 = vmax.f32 %v665, %v708
  %v745 = vmax.f32 %v668, %v709
  %v746 = vmax.f32 %v670, %v710
  %v747 = vmax.f32 %v673, %v711
  %v748 = vmax.f32 %v675, %v712
  %749 = vst.msk [vmem:[%s3] sm:$0xff] %vm325, %v713
  %750 = vst.msk [vmem:[%s3 + $0x8] sm:$0xff] %vm325, %v714
  %751 = vst.msk [vmem:[%s3 + $0x10] sm:$0xff] %vm325, %v715
  %752 = vst.msk [vmem:[%s3 + $0x18] sm:$0xff] %vm325, %v716
  %753 = vst.msk [vmem:[%s3 + $0x20] sm:$0xff] %vm325, %v717
  %754 = vst.msk [vmem:[%s3 + $0x28] sm:$0xff] %vm325, %v718
  %755 = vst.msk [vmem:[%s3 + $0x30] sm:$0xff] %vm325, %v719
  %756 = vst.msk [vmem:[%s3 + $0x38] sm:$0xff] %vm325, %v720
  %757 = vst.msk [vmem:[%s3 + $0x40] sm:$0xff] %vm325, %v721
  %758 = vst.msk [vmem:[%s3 + $0x48] sm:$0xff] %vm325, %v722
  %759 = vst.msk [vmem:[%s3 + $0x50] sm:$0xff] %vm325, %v723
  %760 = vst.msk [vmem:[%s3 + $0x58] sm:$0xff] %vm325, %v724
  %761 = vst.msk [vmem:[%s3 + $0x60] sm:$0xff] %vm325, %v725
  %762 = vst.msk [vmem:[%s3 + $0x68] sm:$0xff] %vm325, %v726
  %763 = vst.msk [vmem:[%s3 + $0x70] sm:$0xff] %vm325, %v727
  %764 = vst.msk [vmem:[%s3 + $0x78] sm:$0xff] %vm325, %v728
  %765 = vst.msk [vmem:[%s3 + $0x80] sm:$0xff] %vm325, %v729
  %766 = vst.msk [vmem:[%s3 + $0x88] sm:$0xff] %vm325, %v730
  %767 = vst.msk [vmem:[%s3 + $0x90] sm:$0xff] %vm325, %v731
  %768 = vst.msk [vmem:[%s3 + $0x98] sm:$0xff] %vm325, %v732
  %769 = vst.msk [vmem:[%s3 + $0xa0] sm:$0xff] %vm325, %v733
  %770 = vst.msk [vmem:[%s3 + $0xa8] sm:$0xff] %vm325, %v734
  %771 = vst.msk [vmem:[%s3 + $0xb0] sm:$0xff] %vm325, %v735
  %772 = vst.msk [vmem:[%s3 + $0xb8] sm:$0xff] %vm325, %v736
  %773 = vst.msk [vmem:[%s3 + $0xc0] sm:$0xff] %vm325, %v737
  %774 = vst.msk [vmem:[%s3 + $0xc8] sm:$0xff] %vm325, %v738
  %775 = vst.msk [vmem:[%s3 + $0xd0] sm:$0xff] %vm325, %v739
  %776 = vst.msk [vmem:[%s3 + $0xd8] sm:$0xff] %vm325, %v740
  %777 = vst.msk [vmem:[%s3 + $0xe0] sm:$0xff] %vm325, %v741
  %778 = vst.msk [vmem:[%s3 + $0xe8] sm:$0xff] %vm325, %v742
  %779 = vst.msk [vmem:[%s3 + $0xf0] sm:$0xff] %vm325, %v743
  %780 = vst.msk [vmem:[%s3 + $0xf8] sm:$0xff] %vm325, %v744
  %781 = vst.msk [vmem:[%s3 + $0x100] sm:$0xff] %vm325, %v745
  %782 = vst.msk [vmem:[%s3 + $0x108] sm:$0xff] %vm325, %v746
  %783 = vst.msk [vmem:[%s3 + $0x110] sm:$0xff] %vm325, %v747
  %784 = vst.msk [vmem:[%s3 + $0x118] sm:$0xff] %vm325, %v748
  // Predicated region
  $region14: #{grasp_model_forward.11} parent=0 // pred_check
    _
  $region15: #{grasp_model_forward.11} parent=0 // pred_check_branch
    %786 = sbr.rel (0) target = $region17
  $region16: #{grasp_model_forward.11} parent=0 // pred_region
    _
  $region17: #{grasp_model_forward.11} parent=0 // pred_fallthru
    _
  // Predicated region
  $region18: #{grasp_model_forward.11} parent=0 // pred_check
    _
  $region19: #{grasp_model_forward.11} parent=0 // pred_check_branch
    %788 = sbr.rel (0) target = $region21
  $region20: #{grasp_model_forward.11} parent=0 // pred_region
    _
  $region21: #{grasp_model_forward.11} parent=0 // pred_fallthru
    _

// kernel: grasp_model_forward.12
$region0: #{grasp_model_forward.12}
  #allocation0 [shape = 'u32[]', space=smem, size = 0x4, offset = 0x4, fixed_abs, tag = 'smem constant byte address 0x4 - core index']
  #allocation1 [shape = 'u32[72,128]{1,0:T(1,128)}', space=vmem, size = 0x9000, scoped, tag = 'internal scratch']
  %s0 = inlined_call_operand.vmem [shape: f32[200,288], index: 0, kind: input, shape index: {}]
  %s1 = inlined_call_operand.vmem [shape: bf16[288,112], index: 1, kind: input, shape index: {}]
  %s2 = inlined_call_operand.vmem [shape: f32[1,112], index: 2, kind: input, shape index: {}]
  %s3 = inlined_call_operand.vmem [shape: f32[200,112], index: 3, kind: output, shape index: {}]
  %s4 = sld [smem:[#allocation0]]
  $region22: #{grasp_model_forward.12} parent=0
    _
  %s6 = ssub.s32 1, %s4
  %s7 = scalar_select 0, %s6, %s4
  // Predicated region
  $region2: #{grasp_model_forward.12} parent=0 // pred_check
    _
  $region3: #{grasp_model_forward.12} parent=0 // pred_check_branch
    %9 = sbr.rel (0) target = $region5
  $region4: #{grasp_model_forward.12} parent=0 // pred_region
    _
  $region5: #{grasp_model_forward.12} parent=0 // pred_fallthru
    _
  // Predicated region
  $region6: #{grasp_model_forward.12} parent=0 // pred_check
    _
  $region7: #{grasp_model_forward.12} parent=0 // pred_check_branch
    %11 = sbr.rel (0) target = $region9
  $region8: #{grasp_model_forward.12} parent=0 // pred_region
    _
  $region9: #{grasp_model_forward.12} parent=0 // pred_fallthru
    _
  // Predicated region
  $region10: #{grasp_model_forward.12} parent=0 // pred_check
    _
  $region11: #{grasp_model_forward.12} parent=0 // pred_check_branch
    %13 = sbr.rel (0) target = $region13
  $region12: #{grasp_model_forward.12} parent=0 // pred_region
    _
  $region13: #{grasp_model_forward.12} parent=0 // pred_fallthru
    _
  %v15 = vld [vmem:[%s0] sm:$0xff]
  %v16 = vld [vmem:[%s0 + $0x8] sm:$0xff]
  %v17 = vld [vmem:[%s0 + $0x10] sm:$0xff]
  %v18 = vld [vmem:[%s0 + $0x18] sm:$0xff]
  %v19 = vld [vmem:[%s0 + $0x20] sm:$0xff]
  %v20 = vld [vmem:[%s0 + $0x28] sm:$0xff]
  %v21 = vld [vmem:[%s0 + $0x30] sm:$0xff]
  %v22 = vld [vmem:[%s0 + $0x38] sm:$0xff]
  %v23 = vld [vmem:[%s0 + $0x40] sm:$0xff]
  %v24 = vld [vmem:[%s0 + $0x48] sm:$0xff]
  %v25 = vld [vmem:[%s0 + $0x50] sm:$0xff]
  %v26 = vld [vmem:[%s0 + $0x58] sm:$0xff]
  %v27 = vld [vmem:[%s0 + $0x60] sm:$0xff]
  %v28 = vld [vmem:[%s0 + $0x68] sm:$0xff]
  %v29 = vld [vmem:[%s0 + $0x70] sm:$0xff]
  %v30 = vld [vmem:[%s0 + $0x78] sm:$0xff]
  %v31 = vld [vmem:[%s0 + $0x80] sm:$0xff]
  %v32 = vld [vmem:[%s0 + $0x88] sm:$0xff]
  %v33 = vld [vmem:[%s0 + $0x90] sm:$0xff]
  %v34 = vld [vmem:[%s0 + $0x98] sm:$0xff]
  %v35 = vld [vmem:[%s0 + $0xa0] sm:$0xff]
  %v36 = vld [vmem:[%s0 + $0xa8] sm:$0xff]
  %v37 = vld [vmem:[%s0 + $0xb0] sm:$0xff]
  %v38 = vld [vmem:[%s0 + $0xb8] sm:$0xff]
  %v39 = vld [vmem:[%s0 + $0xc0] sm:$0xff]
  %v40 = vld [vmem:[%s0 + $0xc8] sm:$0xff]
  %v41 = vld [vmem:[%s0 + $0xd0] sm:$0xff]
  %v42 = vld [vmem:[%s0 + $0xd8] sm:$0xff]
  %v43 = vld [vmem:[%s0 + $0xe0] sm:$0xff]
  %v44 = vld [vmem:[%s0 + $0xe8] sm:$0xff]
  %v45 = vld [vmem:[%s0 + $0xf0] sm:$0xff]
  %v46 = vld [vmem:[%s0 + $0xf8] sm:$0xff]
  %v47 = vld [vmem:[%s0 + $0x100] sm:$0xff]
  %v48 = vld [vmem:[%s0 + $0x108] sm:$0xff]
  %v49 = vld [vmem:[%s0 + $0x110] sm:$0xff]
  %v50 = vld [vmem:[%s0 + $0x118] sm:$0xff]
  %v51 = vld [vmem:[%s0 + $0x120] sm:$0xff]
  %v52 = vld [vmem:[%s0 + $0x128] sm:$0xff]
  %v53 = vld [vmem:[%s0 + $0x130] sm:$0xff]
  %v54 = vld [vmem:[%s0 + $0x138] sm:$0xff]
  %v55 = vld [vmem:[%s0 + $0x140] sm:$0xff]
  %v56 = vld [vmem:[%s0 + $0x148] sm:$0xff]
  %v57 = vld [vmem:[%s0 + $0x150] sm:$0xff]
  %v58 = vld [vmem:[%s0 + $0x158] sm:$0xff]
  %v59 = vld [vmem:[%s0 + $0x160] sm:$0xff]
  %v60 = vld [vmem:[%s0 + $0x168] sm:$0xff]
  %v61 = vld [vmem:[%s0 + $0x170] sm:$0xff]
  %v62 = vld [vmem:[%s0 + $0x178] sm:$0xff]
  %v63 = vld [vmem:[%s0 + $0x180] sm:$0xff]
  %v64 = vld [vmem:[%s0 + $0x188] sm:$0xff]
  %v65 = vld [vmem:[%s0 + $0x190] sm:$0xff]
  %v66 = vld [vmem:[%s0 + $0x198] sm:$0xff]
  %v67 = vld [vmem:[%s0 + $0x1a0] sm:$0xff]
  %v68 = vld [vmem:[%s0 + $0x1a8] sm:$0xff]
  %v69 = vld [vmem:[%s0 + $0x1b0] sm:$0xff]
  %v70 = vld [vmem:[%s0 + $0x1b8] sm:$0xff]
  %v71 = vld [vmem:[%s0 + $0x1c0] sm:$0xff]
  %v72 = vld [vmem:[%s0 + $0x1c8] sm:$0xff]
  %v73 = vld [vmem:[%s0 + $0x1d0] sm:$0xff]
  %v74 = vld [vmem:[%s0 + $0x1d8] sm:$0xff]
  %v75 = vld [vmem:[%s0 + $0x1e0] sm:$0xff]
  %v76 = vld [vmem:[%s0 + $0x1e8] sm:$0xff]
  %v77 = vld [vmem:[%s0 + $0x1f0] sm:$0xff]
  %v78 = vld [vmem:[%s0 + $0x1f8] sm:$0xff]
  %v79 = vld [vmem:[%s0 + $0x200] sm:$0xff]
  %v80 = vld [vmem:[%s0 + $0x208] sm:$0xff]
  %v81 = vld [vmem:[%s0 + $0x210] sm:$0xff]
  %v82 = vld [vmem:[%s0 + $0x218] sm:$0xff]
  %v83 = vld [vmem:[%s0 + $0x220] sm:$0xff]
  %v84 = vld [vmem:[%s0 + $0x228] sm:$0xff]
  %v85 = vld [vmem:[%s0 + $0x230] sm:$0xff]
  %v86 = vld [vmem:[%s0 + $0x238] sm:$0xff]
  %v87 = vld [vmem:[%s0 + $0x240] sm:$0xff]
  %v88 = vld [vmem:[%s0 + $0x248] sm:$0xff]
  %v89 = vld [vmem:[%s0 + $0x250] sm:$0xff]
  %v90 = vpack.c.bf16 %v18, %v15
  %v91 = vpack.c.bf16 %v19, %v16
  %v92 = vpack.c.bf16 %v20, %v17
  %v93 = vpack.c.bf16 %v24, %v21
  %v94 = vpack.c.bf16 %v25, %v22
  %v95 = vpack.c.bf16 %v26, %v23
  %v96 = vpack.c.bf16 %v30, %v27
  %v97 = vpack.c.bf16 %v31, %v28
  %v98 = vpack.c.bf16 %v32, %v29
  %v99 = vpack.c.bf16 %v36, %v33
  %v100 = vpack.c.bf16 %v37, %v34
  %v101 = vpack.c.bf16 %v38, %v35
  %v102 = vpack.c.bf16 %v42, %v39
  %v103 = vpack.c.bf16 %v43, %v40
  %v104 = vpack.c.bf16 %v44, %v41
  %v105 = vpack.c.bf16 %v48, %v45
  %v106 = vpack.c.bf16 %v49, %v46
  %v107 = vpack.c.bf16 %v50, %v47
  %v108 = vpack.c.bf16 %v54, %v51
  %v109 = vpack.c.bf16 %v55, %v52
  %v110 = vpack.c.bf16 %v56, %v53
  %v111 = vpack.c.bf16 %v60, %v57
  %v112 = vpack.c.bf16 %v61, %v58
  %v113 = vpack.c.bf16 %v62, %v59
  %v114 = vpack.c.bf16 %v66, %v63
  %v115 = vpack.c.bf16 %v67, %v64
  %v116 = vpack.c.bf16 %v68, %v65
  %v117 = vpack.c.bf16 %v72, %v69
  %v118 = vpack.c.bf16 %v73, %v70
  %v119 = vpack.c.bf16 %v74, %v71
  %v120 = vpack.c.bf16 %v78, %v75
  %v121 = vpack.c.bf16 %v79, %v76
  %v122 = vpack.c.bf16 %v80, %v77
  %v123 = vpack.c.bf16 %v84, %v81
  %v124 = vpack.c.bf16 %v85, %v82
  %v125 = vpack.c.bf16 %v86, %v83
  %v126 = vpack.c.bf16 %v87, %v87
  %v127 = vpack.c.bf16 %v88, %v88
  %v128 = vpack.c.bf16 %v89, %v89
  %v129 = vld [vmem:[%s1] sm:$0xf]
  %v130 = vld [vmem:[%s1 + $0x4] sm:$0xf]
  %v131 = vld [vmem:[%s1 + $0x8] sm:$0xf]
  %v132 = vld [vmem:[%s1 + $0xc] sm:$0xf]
  %v133 = vld [vmem:[%s1 + $0x10] sm:$0xf]
  %v134 = vld [vmem:[%s1 + $0x14] sm:$0xf]
  %v135 = vld [vmem:[%s1 + $0x18] sm:$0xf]
  %v136 = vld [vmem:[%s1 + $0x1c] sm:$0xf]
  %v137 = vld [vmem:[%s1 + $0x20] sm:$0xf]
  %v138 = vld [vmem:[%s1 + $0x24] sm:$0xf]
  %v139 = vld [vmem:[%s1 + $0x28] sm:$0xf]
  %v140 = vld [vmem:[%s1 + $0x2c] sm:$0xf]
  %v141 = vld [vmem:[%s1 + $0x30] sm:$0xf]
  %v142 = vld [vmem:[%s1 + $0x34] sm:$0xf]
  %v143 = vld [vmem:[%s1 + $0x38] sm:$0xf]
  %v144 = vld [vmem:[%s1 + $0x3c] sm:$0xf]
  %v145 = vld [vmem:[%s1 + $0x40] sm:$0xf]
  %v146 = vld [vmem:[%s1 + $0x44] sm:$0xf]
  %v147 = vld [vmem:[%s1 + $0x48] sm:$0xf]
  %v148 = vld [vmem:[%s1 + $0x4c] sm:$0xf]
  %v149 = vld [vmem:[%s1 + $0x50] sm:$0xf]
  %v150 = vld [vmem:[%s1 + $0x54] sm:$0xf]
  %v151 = vld [vmem:[%s1 + $0x58] sm:$0xf]
  %v152 = vld [vmem:[%s1 + $0x5c] sm:$0xf]
  %v153 = vld [vmem:[%s1 + $0x60] sm:$0xf]
  %v154 = vld [vmem:[%s1 + $0x64] sm:$0xf]
  %v155 = vld [vmem:[%s1 + $0x68] sm:$0xf]
  %v156 = vld [vmem:[%s1 + $0x6c] sm:$0xf]
  %v157 = vld [vmem:[%s1 + $0x70] sm:$0xf]
  %v158 = vld [vmem:[%s1 + $0x74] sm:$0xf]
  %v159 = vld [vmem:[%s1 + $0x78] sm:$0xf]
  %v160 = vld [vmem:[%s1 + $0x7c] sm:$0xf]
  %v161 = vld [vmem:[%s1 + $0x80] sm:$0xf]
  %v162 = vld [vmem:[%s1 + $0x84] sm:$0xf]
  %v163 = vld [vmem:[%s1 + $0x88] sm:$0xf]
  %v164 = vld [vmem:[%s1 + $0x8c] sm:$0xf]
  %v165 = vld [vmem:[%s2] sm:$0x1]
  %v167 = vperm.slane %v165, 0
  %v205 = vunpack.c.l.b16 %v129
  %v206 = vunpack.c.l.b16 %v130
  %v207 = vunpack.c.l.b16 %v131
  %v208 = vunpack.c.l.b16 %v132
  %v209 = vunpack.c.l.b16 %v133
  %v210 = vunpack.c.l.b16 %v134
  %v211 = vunpack.c.l.b16 %v135
  %v212 = vunpack.c.l.b16 %v136
  %v213 = vunpack.c.l.b16 %v137
  %v214 = vunpack.c.l.b16 %v138
  %v215 = vunpack.c.l.b16 %v139
  %v216 = vunpack.c.l.b16 %v140
  %v217 = vunpack.c.l.b16 %v141
  %v218 = vunpack.c.l.b16 %v142
  %v219 = vunpack.c.l.b16 %v143
  %v220 = vunpack.c.l.b16 %v144
  %v221 = vunpack.c.l.b16 %v145
  %v222 = vunpack.c.l.b16 %v146
  %v223 = vunpack.c.l.b16 %v147
  %v224 = vunpack.c.l.b16 %v148
  %v225 = vunpack.c.l.b16 %v149
  %v226 = vunpack.c.l.b16 %v150
  %v227 = vunpack.c.l.b16 %v151
  %v228 = vunpack.c.l.b16 %v152
  %v229 = vunpack.c.l.b16 %v153
  %v230 = vunpack.c.l.b16 %v154
  %v231 = vunpack.c.l.b16 %v155
  %v232 = vunpack.c.l.b16 %v156
  %v233 = vunpack.c.l.b16 %v157
  %v234 = vunpack.c.l.b16 %v158
  %v235 = vunpack.c.l.b16 %v159
  %v236 = vunpack.c.l.b16 %v160
  %v237 = vunpack.c.l.b16 %v161
  %v238 = vunpack.c.l.b16 %v162
  %v239 = vunpack.c.l.b16 %v163
  %v240 = vunpack.c.l.b16 %v164
  %v241 = vpack.c.b16 %v206, %v205
  %v242 = vpack.c.b16 %v208, %v207
  %v243 = vpack.c.b16 %v210, %v209
  %v244 = vpack.c.b16 %v212, %v211
  %v245 = vpack.c.b16 %v214, %v213
  %v246 = vpack.c.b16 %v216, %v215
  %v247 = vpack.c.b16 %v218, %v217
  %v248 = vpack.c.b16 %v220, %v219
  %v249 = vpack.c.b16 %v222, %v221
  %v250 = vpack.c.b16 %v224, %v223
  %v251 = vpack.c.b16 %v226, %v225
  %v252 = vpack.c.b16 %v228, %v227
  %v253 = vpack.c.b16 %v230, %v229
  %v254 = vpack.c.b16 %v232, %v231
  %v255 = vpack.c.b16 %v234, %v233
  %v256 = vpack.c.b16 %v236, %v235
  %v257 = vpack.c.b16 %v238, %v237
  %v258 = vpack.c.b16 %v240, %v239
  %vm277 = vcmask 261120
  %v279 = vsel %vm277, %v92, 0
  %v282 = vsel %vm277, %v95, 0
  %v285 = vsel %vm277, %v98, 0
  %v288 = vsel %vm277, %v101, 0
  %v291 = vsel %vm277, %v104, 0
  %v294 = vsel %vm277, %v107, 0
  %v297 = vsel %vm277, %v110, 0
  %v300 = vsel %vm277, %v113, 0
  %v303 = vsel %vm277, %v116, 0
  %v306 = vsel %vm277, %v119, 0
  %v309 = vsel %vm277, %v122, 0
  %v312 = vsel %vm277, %v125, 0
  %v315 = vsel %vm277, %v128, 0
  %317 = vmatpush.bf16.msra.mxu0 %v248
  %318 = vmatpush.bf16.msra.mxu0 %v247
  %319 = vmatpush.bf16.msra.mxu0 %v246
  %320 = vmatpush.bf16.msra.mxu0 %v245
  %321 = vmatpush.bf16.msra.mxu0 %v244
  %322 = vmatpush.bf16.msra.mxu0 %v243
  %323 = vmatpush.bf16.msra.mxu0 %v242
  %324 = vmatpush.bf16.msra.mxu0 %v241
  %325 = vmatmul.bf16.gmra.mxu0 %v90
  %v326 = vpop.f32.mrf.mxu0
  %v327 = vadd.f32 %v167, %v326
  %v328 = vpop.f32.mrf.mxu0
  %v329 = vadd.f32 %v167, %v328
  %330 = vmatmul.bf16.gmra.mxu0 %v93
  %v331 = vpop.f32.mrf.mxu0
  %v332 = vadd.f32 %v167, %v331
  %v333 = vpop.f32.mrf.mxu0
  %v334 = vadd.f32 %v167, %v333
  %335 = vmatmul.bf16.gmra.mxu0 %v96
  %v336 = vpop.f32.mrf.mxu0
  %v337 = vadd.f32 %v167, %v336
  %v338 = vpop.f32.mrf.mxu0
  %v339 = vadd.f32 %v167, %v338
  %340 = vmatmul.bf16.gmra.mxu0 %v99
  %v341 = vpop.f32.mrf.mxu0
  %v342 = vadd.f32 %v167, %v341
  %v343 = vpop.f32.mrf.mxu0
  %v344 = vadd.f32 %v167, %v343
  %345 = vmatmul.bf16.gmra.mxu0 %v102
  %v346 = vpop.f32.mrf.mxu0
  %v347 = vadd.f32 %v167, %v346
  %v348 = vpop.f32.mrf.mxu0
  %v349 = vadd.f32 %v167, %v348
  %350 = vmatmul.bf16.gmra.mxu0 %v105
  %v351 = vpop.f32.mrf.mxu0
  %v352 = vadd.f32 %v167, %v351
  %v353 = vpop.f32.mrf.mxu0
  %v354 = vadd.f32 %v167, %v353
  %355 = vmatmul.bf16.gmra.mxu0 %v108
  %v356 = vpop.f32.mrf.mxu0
  %v357 = vadd.f32 %v167, %v356
  %v358 = vpop.f32.mrf.mxu0
  %v359 = vadd.f32 %v167, %v358
  %360 = vmatmul.bf16.gmra.mxu0 %v111
  %v361 = vpop.f32.mrf.mxu0
  %v362 = vadd.f32 %v167, %v361
  %v363 = vpop.f32.mrf.mxu0
  %v364 = vadd.f32 %v167, %v363
  %365 = vmatmul.bf16.gmra.mxu0 %v114
  %v366 = vpop.f32.mrf.mxu0
  %v367 = vadd.f32 %v167, %v366
  %v368 = vpop.f32.mrf.mxu0
  %v369 = vadd.f32 %v167, %v368
  %370 = vmatmul.bf16.gmra.mxu0 %v117
  %v371 = vpop.f32.mrf.mxu0
  %v372 = vadd.f32 %v167, %v371
  %v373 = vpop.f32.mrf.mxu0
  %v374 = vadd.f32 %v167, %v373
  %375 = vmatmul.bf16.gmra.mxu0 %v120
  %v376 = vpop.f32.mrf.mxu0
  %v377 = vadd.f32 %v167, %v376
  %v378 = vpop.f32.mrf.mxu0
  %v379 = vadd.f32 %v167, %v378
  %380 = vmatmul.bf16.gmra.mxu0 %v123
  %v381 = vpop.f32.mrf.mxu0
  %v382 = vadd.f32 %v167, %v381
  %v383 = vpop.f32.mrf.mxu0
  %v384 = vadd.f32 %v167, %v383
  %385 = vmatmul.bf16.gmra.mxu0 %v126
  %v386 = vpop.f32.mrf.mxu0
  %v387 = vadd.f32 %v167, %v386
  %v388 = vpop.f32.mrf.mxu0
  %389 = vdwg.mxu0
  %390 = vmatpush.bf16.msra.mxu0 %v256
  %391 = vmatpush.bf16.msra.mxu0 %v255
  %392 = vmatpush.bf16.msra.mxu0 %v254
  %393 = vmatpush.bf16.msra.mxu0 %v253
  %394 = vmatpush.bf16.msra.mxu0 %v252
  %395 = vmatpush.bf16.msra.mxu0 %v251
  %396 = vmatpush.bf16.msra.mxu0 %v250
  %397 = vmatpush.bf16.msra.mxu0 %v249
  %398 = vmatmul.bf16.gmra.mxu0 %v91
  %v399 = vpop.f32.mrf.mxu0
  %v400 = vadd.f32 %v327, %v399
  %v401 = vpop.f32.mrf.mxu0
  %v402 = vadd.f32 %v329, %v401
  %403 = vmatmul.bf16.gmra.mxu0 %v94
  %v404 = vpop.f32.mrf.mxu0
  %v405 = vadd.f32 %v332, %v404
  %v406 = vpop.f32.mrf.mxu0
  %v407 = vadd.f32 %v334, %v406
  %408 = vmatmul.bf16.gmra.mxu0 %v97
  %v409 = vpop.f32.mrf.mxu0
  %v410 = vadd.f32 %v337, %v409
  %v411 = vpop.f32.mrf.mxu0
  %v412 = vadd.f32 %v339, %v411
  %413 = vmatmul.bf16.gmra.mxu0 %v100
  %v414 = vpop.f32.mrf.mxu0
  %v415 = vadd.f32 %v342, %v414
  %v416 = vpop.f32.mrf.mxu0
  %v417 = vadd.f32 %v344, %v416
  %418 = vmatmul.bf16.gmra.mxu0 %v103
  %v419 = vpop.f32.mrf.mxu0
  %v420 = vadd.f32 %v347, %v419
  %v421 = vpop.f32.mrf.mxu0
  %v422 = vadd.f32 %v349, %v421
  %423 = vmatmul.bf16.gmra.mxu0 %v106
  %v424 = vpop.f32.mrf.mxu0
  %v425 = vadd.f32 %v352, %v424
  %v426 = vpop.f32.mrf.mxu0
  %v427 = vadd.f32 %v354, %v426
  %428 = vmatmul.bf16.gmra.mxu0 %v109
  %v429 = vpop.f32.mrf.mxu0
  %v430 = vadd.f32 %v357, %v429
  %v431 = vpop.f32.mrf.mxu0
  %v432 = vadd.f32 %v359, %v431
  %433 = vmatmul.bf16.gmra.mxu0 %v112
  %v434 = vpop.f32.mrf.mxu0
  %v435 = vadd.f32 %v362, %v434
  %v436 = vpop.f32.mrf.mxu0
  %v437 = vadd.f32 %v364, %v436
  %438 = vmatmul.bf16.gmra.mxu0 %v115
  %v439 = vpop.f32.mrf.mxu0
  %v440 = vadd.f32 %v367, %v439
  %v441 = vpop.f32.mrf.mxu0
  %v442 = vadd.f32 %v369, %v441
  %443 = vmatmul.bf16.gmra.mxu0 %v118
  %v444 = vpop.f32.mrf.mxu0
  %v445 = vadd.f32 %v372, %v444
  %v446 = vpop.f32.mrf.mxu0
  %v447 = vadd.f32 %v374, %v446
  %448 = vmatmul.bf16.gmra.mxu0 %v121
  %v449 = vpop.f32.mrf.mxu0
  %v450 = vadd.f32 %v377, %v449
  %v451 = vpop.f32.mrf.mxu0
  %v452 = vadd.f32 %v379, %v451
  %453 = vmatmul.bf16.gmra.mxu0 %v124
  %v454 = vpop.f32.mrf.mxu0
  %v455 = vadd.f32 %v382, %v454
  %v456 = vpop.f32.mrf.mxu0
  %v457 = vadd.f32 %v384, %v456
  %458 = vmatmul.bf16.gmra.mxu0 %v127
  %v459 = vpop.f32.mrf.mxu0
  %v460 = vadd.f32 %v387, %v459
  %v461 = vpop.f32.mrf.mxu0
  %462 = vdwg.mxu0
  %463 = vmatpush.bf16.msra.mxu0 0
  %464 = vmatpush.bf16.msra.mxu0 0
  %465 = vmatpush.bf16.msra.mxu0 0
  %466 = vmatpush.bf16.msra.mxu0 0
  %467 = vmatpush.bf16.msra.mxu0 0
  %468 = vmatpush.bf16.msra.mxu0 0
  %469 = vmatpush.bf16.msra.mxu0 %v258
  %470 = vmatpush.bf16.msra.mxu0 %v257
  %471 = vmatmul.bf16.gmra.mxu0 %v279
  %v472 = vpop.f32.mrf.mxu0
  %v473 = vadd.f32 %v400, %v472
  %v474 = vpop.f32.mrf.mxu0
  %v475 = vadd.f32 %v402, %v474
  %476 = vmatmul.bf16.gmra.mxu0 %v282
  %v477 = vpop.f32.mrf.mxu0
  %v478 = vadd.f32 %v405, %v477
  %v479 = vpop.f32.mrf.mxu0
  %v480 = vadd.f32 %v407, %v479
  %481 = vmatmul.bf16.gmra.mxu0 %v285
  %v482 = vpop.f32.mrf.mxu0
  %v483 = vadd.f32 %v410, %v482
  %v484 = vpop.f32.mrf.mxu0
  %v485 = vadd.f32 %v412, %v484
  %486 = vmatmul.bf16.gmra.mxu0 %v288
  %v487 = vpop.f32.mrf.mxu0
  %v488 = vadd.f32 %v415, %v487
  %v489 = vpop.f32.mrf.mxu0
  %v490 = vadd.f32 %v417, %v489
  %491 = vmatmul.bf16.gmra.mxu0 %v291
  %v492 = vpop.f32.mrf.mxu0
  %v493 = vadd.f32 %v420, %v492
  %v494 = vpop.f32.mrf.mxu0
  %v495 = vadd.f32 %v422, %v494
  %496 = vmatmul.bf16.gmra.mxu0 %v294
  %v497 = vpop.f32.mrf.mxu0
  %v498 = vadd.f32 %v425, %v497
  %v499 = vpop.f32.mrf.mxu0
  %v500 = vadd.f32 %v427, %v499
  %501 = vmatmul.bf16.gmra.mxu0 %v297
  %v502 = vpop.f32.mrf.mxu0
  %v503 = vadd.f32 %v430, %v502
  %v504 = vpop.f32.mrf.mxu0
  %v505 = vadd.f32 %v432, %v504
  %506 = vmatmul.bf16.gmra.mxu0 %v300
  %v507 = vpop.f32.mrf.mxu0
  %v508 = vadd.f32 %v435, %v507
  %v509 = vpop.f32.mrf.mxu0
  %v510 = vadd.f32 %v437, %v509
  %511 = vmatmul.bf16.gmra.mxu0 %v303
  %v512 = vpop.f32.mrf.mxu0
  %v513 = vadd.f32 %v440, %v512
  %v514 = vpop.f32.mrf.mxu0
  %v515 = vadd.f32 %v442, %v514
  %516 = vmatmul.bf16.gmra.mxu0 %v306
  %v517 = vpop.f32.mrf.mxu0
  %v518 = vadd.f32 %v445, %v517
  %v519 = vpop.f32.mrf.mxu0
  %v520 = vadd.f32 %v447, %v519
  %521 = vmatmul.bf16.gmra.mxu0 %v309
  %v522 = vpop.f32.mrf.mxu0
  %v523 = vadd.f32 %v450, %v522
  %v524 = vpop.f32.mrf.mxu0
  %v525 = vadd.f32 %v452, %v524
  %526 = vmatmul.bf16.gmra.mxu0 %v312
  %v527 = vpop.f32.mrf.mxu0
  %v528 = vadd.f32 %v455, %v527
  %v529 = vpop.f32.mrf.mxu0
  %v530 = vadd.f32 %v457, %v529
  %531 = vmatmul.bf16.gmra.mxu0 %v315
  %v532 = vpop.f32.mrf.mxu0
  %v533 = vadd.f32 %v460, %v532
  %v534 = vpop.f32.mrf.mxu0
  %535 = vdwg.mxu0
  %v536 = vmul.f32 %v473, 0.01
  %v537 = vmul.f32 %v475, 0.01
  %v538 = vmul.f32 %v478, 0.01
  %v539 = vmul.f32 %v480, 0.01
  %v540 = vmul.f32 %v483, 0.01
  %v541 = vmul.f32 %v485, 0.01
  %v542 = vmul.f32 %v488, 0.01
  %v543 = vmul.f32 %v490, 0.01
  %v544 = vmul.f32 %v493, 0.01
  %v545 = vmul.f32 %v495, 0.01
  %v546 = vmul.f32 %v498, 0.01
  %v547 = vmul.f32 %v500, 0.01
  %v548 = vmul.f32 %v503, 0.01
  %v549 = vmul.f32 %v505, 0.01
  %v550 = vmul.f32 %v508, 0.01
  %v551 = vmul.f32 %v510, 0.01
  %v552 = vmul.f32 %v513, 0.01
  %v553 = vmul.f32 %v515, 0.01
  %v554 = vmul.f32 %v518, 0.01
  %v555 = vmul.f32 %v520, 0.01
  %v556 = vmul.f32 %v523, 0.01
  %v557 = vmul.f32 %v525, 0.01
  %v558 = vmul.f32 %v528, 0.01
  %v559 = vmul.f32 %v530, 0.01
  %v560 = vmul.f32 %v533, 0.01
  %v561 = vmax.f32 %v473, %v536
  %v562 = vmax.f32 %v475, %v537
  %v563 = vmax.f32 %v478, %v538
  %v564 = vmax.f32 %v480, %v539
  %v565 = vmax.f32 %v483, %v540
  %v566 = vmax.f32 %v485, %v541
  %v567 = vmax.f32 %v488, %v542
  %v568 = vmax.f32 %v490, %v543
  %v569 = vmax.f32 %v493, %v544
  %v570 = vmax.f32 %v495, %v545
  %v571 = vmax.f32 %v498, %v546
  %v572 = vmax.f32 %v500, %v547
  %v573 = vmax.f32 %v503, %v548
  %v574 = vmax.f32 %v505, %v549
  %v575 = vmax.f32 %v508, %v550
  %v576 = vmax.f32 %v510, %v551
  %v577 = vmax.f32 %v513, %v552
  %v578 = vmax.f32 %v515, %v553
  %v579 = vmax.f32 %v518, %v554
  %v580 = vmax.f32 %v520, %v555
  %v581 = vmax.f32 %v523, %v556
  %v582 = vmax.f32 %v525, %v557
  %v583 = vmax.f32 %v528, %v558
  %v584 = vmax.f32 %v530, %v559
  %v585 = vmax.f32 %v533, %v560
  %vm586 = vcmask 916480
  %587 = vst.msk [vmem:[%s3] sm:$0xff] %vm586, %v561
  %588 = vst.msk [vmem:[%s3 + $0x8] sm:$0xff] %vm586, %v562
  %589 = vst.msk [vmem:[%s3 + $0x10] sm:$0xff] %vm586, %v563
  %590 = vst.msk [vmem:[%s3 + $0x18] sm:$0xff] %vm586, %v564
  %591 = vst.msk [vmem:[%s3 + $0x20] sm:$0xff] %vm586, %v565
  %592 = vst.msk [vmem:[%s3 + $0x28] sm:$0xff] %vm586, %v566
  %593 = vst.msk [vmem:[%s3 + $0x30] sm:$0xff] %vm586, %v567
  %594 = vst.msk [vmem:[%s3 + $0x38] sm:$0xff] %vm586, %v568
  %595 = vst.msk [vmem:[%s3 + $0x40] sm:$0xff] %vm586, %v569
  %596 = vst.msk [vmem:[%s3 + $0x48] sm:$0xff] %vm586, %v570
  %597 = vst.msk [vmem:[%s3 + $0x50] sm:$0xff] %vm586, %v571
  %598 = vst.msk [vmem:[%s3 + $0x58] sm:$0xff] %vm586, %v572
  %599 = vst.msk [vmem:[%s3 + $0x60] sm:$0xff] %vm586, %v573
  %600 = vst.msk [vmem:[%s3 + $0x68] sm:$0xff] %vm586, %v574
  %601 = vst.msk [vmem:[%s3 + $0x70] sm:$0xff] %vm586, %v575
  %602 = vst.msk [vmem:[%s3 + $0x78] sm:$0xff] %vm586, %v576
  %603 = vst.msk [vmem:[%s3 + $0x80] sm:$0xff] %vm586, %v577
  %604 = vst.msk [vmem:[%s3 + $0x88] sm:$0xff] %vm586, %v578
  %605 = vst.msk [vmem:[%s3 + $0x90] sm:$0xff] %vm586, %v579
  %606 = vst.msk [vmem:[%s3 + $0x98] sm:$0xff] %vm586, %v580
  %607 = vst.msk [vmem:[%s3 + $0xa0] sm:$0xff] %vm586, %v581
  %608 = vst.msk [vmem:[%s3 + $0xa8] sm:$0xff] %vm586, %v582
  %609 = vst.msk [vmem:[%s3 + $0xb0] sm:$0xff] %vm586, %v583
  %610 = vst.msk [vmem:[%s3 + $0xb8] sm:$0xff] %vm586, %v584
  %611 = vst.msk [vmem:[%s3 + $0xc0] sm:$0xff] %vm586, %v585
  // Predicated region
  $region14: #{grasp_model_forward.12} parent=0 // pred_check
    _
  $region15: #{grasp_model_forward.12} parent=0 // pred_check_branch
    %613 = sbr.rel (0) target = $region17
  $region16: #{grasp_model_forward.12} parent=0 // pred_region
    _
  $region17: #{grasp_model_forward.12} parent=0 // pred_fallthru
    _
  // Predicated region
  $region18: #{grasp_model_forward.12} parent=0 // pred_check
    _
  $region19: #{grasp_model_forward.12} parent=0 // pred_check_branch
    %615 = sbr.rel (0) target = $region21
  $region20: #{grasp_model_forward.12} parent=0 // pred_region
    _
  $region21: #{grasp_model_forward.12} parent=0 // pred_fallthru
    _

// kernel: grasp_model_forward.13
$region0: #{grasp_model_forward.13}
  #allocation0 [shape = 'u32[]', space=smem, size = 0x4, offset = 0x4, fixed_abs, tag = 'smem constant byte address 0x4 - core index']
  #allocation1 [shape = 'u32[72,128]{1,0:T(1,128)}', space=vmem, size = 0x9000, scoped, tag = 'internal scratch']
  %s0 = inlined_call_operand.vmem [shape: f32[128,432], index: 0, kind: input, shape index: {}]
  %s1 = inlined_call_operand.vmem [shape: bf16[432,48], index: 1, kind: input, shape index: {}]
  %s2 = inlined_call_operand.vmem [shape: f32[1,48], index: 2, kind: input, shape index: {}]
  %s3 = inlined_call_operand.vmem [shape: f32[128,576], index: 3, kind: input, shape index: {}]
  %s4 = inlined_call_operand.vmem [shape: bf16[576,64], index: 4, kind: input, shape index: {}]
  %s5 = inlined_call_operand.vmem [shape: f32[1,64], index: 5, kind: input, shape index: {}]
  %s6 = inlined_call_operand.vmem [shape: f32[128,48], index: 6, kind: output, shape index: {0}]
  %s7 = inlined_call_operand.vmem [shape: f32[128,64], index: 7, kind: output, shape index: {1}]
  %8 = xla_tuple %s6, %s7
  %s9 = sld [smem:[#allocation0]]
  $region42: #{grasp_model_forward.13} parent=0
    _
  %s11 = ssub.s32 1, %s9
  %s12 = scalar_select 0, %s11, %s9
  // Predicated region
  $region2: #{grasp_model_forward.13} parent=0 // pred_check
    _
  $region3: #{grasp_model_forward.13} parent=0 // pred_check_branch
    %14 = sbr.rel (0) target = $region5
  $region4: #{grasp_model_forward.13} parent=0 // pred_region
    _
  $region5: #{grasp_model_forward.13} parent=0 // pred_fallthru
    _
  // Predicated region
  $region6: #{grasp_model_forward.13} parent=0 // pred_check
    _
  $region7: #{grasp_model_forward.13} parent=0 // pred_check_branch
    %16 = sbr.rel (0) target = $region9
  $region8: #{grasp_model_forward.13} parent=0 // pred_region
    _
  $region9: #{grasp_model_forward.13} parent=0 // pred_fallthru
    _
  // Predicated region
  $region10: #{grasp_model_forward.13} parent=0 // pred_check
    _
  $region11: #{grasp_model_forward.13} parent=0 // pred_check_branch
    %18 = sbr.rel (0) target = $region13
  $region12: #{grasp_model_forward.13} parent=0 // pred_region
    _
  $region13: #{grasp_model_forward.13} parent=0 // pred_fallthru
    _
  // Predicated region
  $region14: #{grasp_model_forward.13} parent=0 // pred_check
    _
  $region15: #{grasp_model_forward.13} parent=0 // pred_check_branch
    %20 = sbr.rel (0) target = $region17
  $region16: #{grasp_model_forward.13} parent=0 // pred_region
    _
  $region17: #{grasp_model_forward.13} parent=0 // pred_fallthru
    _
  // Predicated region
  $region18: #{grasp_model_forward.13} parent=0 // pred_check
    _
  $region19: #{grasp_model_forward.13} parent=0 // pred_check_branch
    %22 = sbr.rel (0) target = $region21
  $region20: #{grasp_model_forward.13} parent=0 // pred_region
    _
  $region21: #{grasp_model_forward.13} parent=0 // pred_fallthru
    _
  // Predicated region
  $region22: #{grasp_model_forward.13} parent=0 // pred_check
    _
  $region23: #{grasp_model_forward.13} parent=0 // pred_check_branch
    %24 = sbr.rel (0) target = $region25
  $region24: #{grasp_model_forward.13} parent=0 // pred_region
    _
  $region25: #{grasp_model_forward.13} parent=0 // pred_fallthru
    _
  %v26 = vld [vmem:[%s0] sm:$0xff]
  %v27 = vld [vmem:[%s0 + $0x8] sm:$0xff]
  %v28 = vld [vmem:[%s0 + $0x10] sm:$0xff]
  %v29 = vld [vmem:[%s0 + $0x18] sm:$0xff]
  %v30 = vld [vmem:[%s0 + $0x20] sm:$0xff]
  %v31 = vld [vmem:[%s0 + $0x28] sm:$0xff]
  %v32 = vld [vmem:[%s0 + $0x30] sm:$0xff]
  %v33 = vld [vmem:[%s0 + $0x38] sm:$0xff]
  %v34 = vld [vmem:[%s0 + $0x40] sm:$0xff]
  %v35 = vld [vmem:[%s0 + $0x48] sm:$0xff]
  %v36 = vld [vmem:[%s0 + $0x50] sm:$0xff]
  %v37 = vld [vmem:[%s0 + $0x58] sm:$0xff]
  %v38 = vld [vmem:[%s0 + $0x60] sm:$0xff]
  %v39 = vld [vmem:[%s0 + $0x68] sm:$0xff]
  %v40 = vld [vmem:[%s0 + $0x70] sm:$0xff]
  %v41 = vld [vmem:[%s0 + $0x78] sm:$0xff]
  %v42 = vld [vmem:[%s0 + $0x80] sm:$0xff]
  %v43 = vld [vmem:[%s0 + $0x88] sm:$0xff]
  %v44 = vld [vmem:[%s0 + $0x90] sm:$0xff]
  %v45 = vld [vmem:[%s0 + $0x98] sm:$0xff]
  %v46 = vld [vmem:[%s0 + $0xa0] sm:$0xff]
  %v47 = vld [vmem:[%s0 + $0xa8] sm:$0xff]
  %v48 = vld [vmem:[%s0 + $0xb0] sm:$0xff]
  %v49 = vld [vmem:[%s0 + $0xb8] sm:$0xff]
  %v50 = vld [vmem:[%s0 + $0xc0] sm:$0xff]
  %v51 = vld [vmem:[%s0 + $0xc8] sm:$0xff]
  %v52 = vld [vmem:[%s0 + $0xd0] sm:$0xff]
  %v53 = vld [vmem:[%s0 + $0xd8] sm:$0xff]
  %v54 = vld [vmem:[%s0 + $0xe0] sm:$0xff]
  %v55 = vld [vmem:[%s0 + $0xe8] sm:$0xff]
  %v56 = vld [vmem:[%s0 + $0xf0] sm:$0xff]
  %v57 = vld [vmem:[%s0 + $0xf8] sm:$0xff]
  %v58 = vld [vmem:[%s0 + $0x100] sm:$0xff]
  %v59 = vld [vmem:[%s0 + $0x108] sm:$0xff]
  %v60 = vld [vmem:[%s0 + $0x110] sm:$0xff]
  %v61 = vld [vmem:[%s0 + $0x118] sm:$0xff]
  %v62 = vld [vmem:[%s0 + $0x120] sm:$0xff]
  %v63 = vld [vmem:[%s0 + $0x128] sm:$0xff]
  %v64 = vld [vmem:[%s0 + $0x130] sm:$0xff]
  %v65 = vld [vmem:[%s0 + $0x138] sm:$0xff]
  %v66 = vld [vmem:[%s0 + $0x140] sm:$0xff]
  %v67 = vld [vmem:[%s0 + $0x148] sm:$0xff]
  %v68 = vld [vmem:[%s0 + $0x150] sm:$0xff]
  %v69 = vld [vmem:[%s0 + $0x158] sm:$0xff]
  %v70 = vld [vmem:[%s0 + $0x160] sm:$0xff]
  %v71 = vld [vmem:[%s0 + $0x168] sm:$0xff]
  %v72 = vld [vmem:[%s0 + $0x170] sm:$0xff]
  %v73 = vld [vmem:[%s0 + $0x178] sm:$0xff]
  %v74 = vld [vmem:[%s0 + $0x180] sm:$0xff]
  %v75 = vld [vmem:[%s0 + $0x188] sm:$0xff]
  %v76 = vld [vmem:[%s0 + $0x190] sm:$0xff]
  %v77 = vld [vmem:[%s0 + $0x198] sm:$0xff]
  %v78 = vld [vmem:[%s0 + $0x1a0] sm:$0xff]
  %v79 = vld [vmem:[%s0 + $0x1a8] sm:$0xff]
  %v80 = vld [vmem:[%s0 + $0x1b0] sm:$0xff]
  %v81 = vld [vmem:[%s0 + $0x1b8] sm:$0xff]
  %v82 = vld [vmem:[%s0 + $0x1c0] sm:$0xff]
  %v83 = vld [vmem:[%s0 + $0x1c8] sm:$0xff]
  %v84 = vld [vmem:[%s0 + $0x1d0] sm:$0xff]
  %v85 = vld [vmem:[%s0 + $0x1d8] sm:$0xff]
  %v86 = vld [vmem:[%s0 + $0x1e0] sm:$0xff]
  %v87 = vld [vmem:[%s0 + $0x1e8] sm:$0xff]
  %v88 = vld [vmem:[%s0 + $0x1f0] sm:$0xff]
  %v89 = vld [vmem:[%s0 + $0x1f8] sm:$0xff]
  %v90 = vpack.c.bf16 %v30, %v26
  %v91 = vpack.c.bf16 %v31, %v27
  %v92 = vpack.c.bf16 %v32, %v28
  %v93 = vpack.c.bf16 %v33, %v29
  %v94 = vpack.c.bf16 %v38, %v34
  %v95 = vpack.c.bf16 %v39, %v35
  %v96 = vpack.c.bf16 %v40, %v36
  %v97 = vpack.c.bf16 %v41, %v37
  %v98 = vpack.c.bf16 %v46, %v42
  %v99 = vpack.c.bf16 %v47, %v43
  %v100 = vpack.c.bf16 %v48, %v44
  %v101 = vpack.c.bf16 %v49, %v45
  %v102 = vpack.c.bf16 %v54, %v50
  %v103 = vpack.c.bf16 %v55, %v51
  %v104 = vpack.c.bf16 %v56, %v52
  %v105 = vpack.c.bf16 %v57, %v53
  %v106 = vpack.c.bf16 %v62, %v58
  %v107 = vpack.c.bf16 %v63, %v59
  %v108 = vpack.c.bf16 %v64, %v60
  %v109 = vpack.c.bf16 %v65, %v61
  %v110 = vpack.c.bf16 %v70, %v66
  %v111 = vpack.c.bf16 %v71, %v67
  %v112 = vpack.c.bf16 %v72, %v68
  %v113 = vpack.c.bf16 %v73, %v69
  %v114 = vpack.c.bf16 %v78, %v74
  %v115 = vpack.c.bf16 %v79, %v75
  %v116 = vpack.c.bf16 %v80, %v76
  %v117 = vpack.c.bf16 %v81, %v77
  %v118 = vpack.c.bf16 %v86, %v82
  %v119 = vpack.c.bf16 %v87, %v83
  %v120 = vpack.c.bf16 %v88, %v84
  %v121 = vpack.c.bf16 %v89, %v85
  %v122 = vld [vmem:[%s1] sm:$0xf]
  %v123 = vld [vmem:[%s1 + $0x4] sm:$0xf]
  %v124 = vld [vmem:[%s1 + $0x8] sm:$0xf]
  %v125 = vld [vmem:[%s1 + $0xc] sm:$0xf]
  %v126 = vld [vmem:[%s1 + $0x10] sm:$0xf]
  %v127 = vld [vmem:[%s1 + $0x14] sm:$0xf]
  %v128 = vld [vmem:[%s1 + $0x18] sm:$0xf]
  %v129 = vld [vmem:[%s1 + $0x1c] sm:$0xf]
  %v130 = vld [vmem:[%s1 + $0x20] sm:$0xf]
  %v131 = vld [vmem:[%s1 + $0x24] sm:$0xf]
  %v132 = vld [vmem:[%s1 + $0x28] sm:$0xf]
  %v133 = vld [vmem:[%s1 + $0x2c] sm:$0xf]
  %v134 = vld [vmem:[%s1 + $0x30] sm:$0xf]
  %v135 = vld [vmem:[%s1 + $0x34] sm:$0xf]
  %v136 = vld [vmem:[%s1 + $0x38] sm:$0xf]
  %v137 = vld [vmem:[%s1 + $0x3c] sm:$0xf]
  %v138 = vld [vmem:[%s1 + $0x40] sm:$0xf]
  %v139 = vld [vmem:[%s1 + $0x44] sm:$0xf]
  %v140 = vld [vmem:[%s1 + $0x48] sm:$0xf]
  %v141 = vld [vmem:[%s1 + $0x4c] sm:$0xf]
  %v142 = vld [vmem:[%s1 + $0x50] sm:$0xf]
  %v143 = vld [vmem:[%s1 + $0x54] sm:$0xf]
  %v144 = vld [vmem:[%s1 + $0x58] sm:$0xf]
  %v145 = vld [vmem:[%s1 + $0x5c] sm:$0xf]
  %v146 = vld [vmem:[%s1 + $0x60] sm:$0xf]
  %v147 = vld [vmem:[%s1 + $0x64] sm:$0xf]
  %v148 = vld [vmem:[%s1 + $0x68] sm:$0xf]
  %v149 = vld [vmem:[%s1 + $0x6c] sm:$0xf]
  %v150 = vld [vmem:[%s1 + $0x70] sm:$0xf]
  %v151 = vld [vmem:[%s1 + $0x74] sm:$0xf]
  %v152 = vld [vmem:[%s1 + $0x78] sm:$0xf]
  %v153 = vld [vmem:[%s1 + $0x7c] sm:$0xf]
  %v154 = vld [vmem:[%s1 + $0x80] sm:$0xf]
  %v155 = vld [vmem:[%s1 + $0x84] sm:$0xf]
  %v156 = vld [vmem:[%s1 + $0x88] sm:$0xf]
  %v157 = vld [vmem:[%s1 + $0x8c] sm:$0xf]
  %v158 = vld [vmem:[%s1 + $0x90] sm:$0xf]
  %v159 = vld [vmem:[%s1 + $0x94] sm:$0xf]
  %v160 = vld [vmem:[%s1 + $0x98] sm:$0xf]
  %v161 = vld [vmem:[%s1 + $0x9c] sm:$0xf]
  %v162 = vld [vmem:[%s1 + $0xa0] sm:$0xf]
  %v163 = vld [vmem:[%s1 + $0xa4] sm:$0xf]
  %v164 = vld [vmem:[%s1 + $0xa8] sm:$0xf]
  %v165 = vld [vmem:[%s1 + $0xac] sm:$0xf]
  %v166 = vld [vmem:[%s1 + $0xb0] sm:$0xf]
  %v167 = vld [vmem:[%s1 + $0xb4] sm:$0xf]
  %v168 = vld [vmem:[%s1 + $0xb8] sm:$0xf]
  %v169 = vld [vmem:[%s1 + $0xbc] sm:$0xf]
  %v170 = vld [vmem:[%s1 + $0xc0] sm:$0xf]
  %v171 = vld [vmem:[%s1 + $0xc4] sm:$0xf]
  %v172 = vld [vmem:[%s1 + $0xc8] sm:$0xf]
  %v173 = vld [vmem:[%s1 + $0xcc] sm:$0xf]
  %v174 = vld [vmem:[%s1 + $0xd0] sm:$0xf]
  %v175 = vld [vmem:[%s1 + $0xd4] sm:$0xf]
  %v176 = vld [vmem:[%s2] sm:$0x1]
  %v178 = vperm.slane %v176, 0
  %v234 = vunpack.c.l.b16 %v122
  %v235 = vunpack.c.l.b16 %v123
  %v236 = vunpack.c.l.b16 %v124
  %v237 = vunpack.c.l.b16 %v125
  %v238 = vunpack.c.l.b16 %v126
  %v239 = vunpack.c.l.b16 %v127
  %v240 = vunpack.c.l.b16 %v128
  %v241 = vunpack.c.l.b16 %v129
  %v242 = vunpack.c.l.b16 %v130
  %v243 = vunpack.c.l.b16 %v131
  %v244 = vunpack.c.l.b16 %v132
  %v245 = vunpack.c.l.b16 %v133
  %v246 = vunpack.c.l.b16 %v134
  %v247 = vunpack.c.l.b16 %v135
  %v248 = vunpack.c.l.b16 %v136
  %v249 = vunpack.c.l.b16 %v137
  %v250 = vunpack.c.l.b16 %v138
  %v251 = vunpack.c.l.b16 %v139
  %v252 = vunpack.c.l.b16 %v140
  %v253 = vunpack.c.l.b16 %v141
  %v254 = vunpack.c.l.b16 %v142
  %v255 = vunpack.c.l.b16 %v143
  %v256 = vunpack.c.l.b16 %v144
  %v257 = vunpack.c.l.b16 %v145
  %v258 = vunpack.c.l.b16 %v146
  %v259 = vunpack.c.l.b16 %v147
  %v260 = vunpack.c.l.b16 %v148
  %v261 = vunpack.c.l.b16 %v149
  %v262 = vunpack.c.l.b16 %v150
  %v263 = vunpack.c.l.b16 %v151
  %v264 = vunpack.c.l.b16 %v152
  %v265 = vunpack.c.l.b16 %v153
  %v266 = vunpack.c.l.b16 %v154
  %v267 = vunpack.c.l.b16 %v155
  %v268 = vunpack.c.l.b16 %v156
  %v269 = vunpack.c.l.b16 %v157
  %v270 = vunpack.c.l.b16 %v158
  %v271 = vunpack.c.l.b16 %v159
  %v272 = vunpack.c.l.b16 %v160
  %v273 = vunpack.c.l.b16 %v161
  %v274 = vunpack.c.l.b16 %v162
  %v275 = vunpack.c.l.b16 %v163
  %v276 = vunpack.c.l.b16 %v164
  %v277 = vunpack.c.l.b16 %v165
  %v278 = vunpack.c.l.b16 %v166
  %v279 = vunpack.c.l.b16 %v167
  %v280 = vunpack.c.l.b16 %v168
  %v281 = vunpack.c.l.b16 %v169
  %v282 = vunpack.c.l.b16 %v170
  %v283 = vunpack.c.l.b16 %v171
  %v284 = vunpack.c.l.b16 %v172
  %v285 = vunpack.c.l.b16 %v173
  %v286 = vunpack.c.l.b16 %v174
  %v287 = vunpack.c.l.b16 %v175
  %v288 = vpack.c.b16 %v235, %v234
  %v289 = vpack.c.b16 %v237, %v236
  %v290 = vpack.c.b16 %v239, %v238
  %v291 = vpack.c.b16 %v241, %v240
  %v292 = vpack.c.b16 %v243, %v242
  %v293 = vpack.c.b16 %v245, %v244
  %v294 = vpack.c.b16 %v247, %v246
  %v295 = vpack.c.b16 %v249, %v248
  %v296 = vpack.c.b16 %v251, %v250
  %v297 = vpack.c.b16 %v253, %v252
  %v298 = vpack.c.b16 %v255, %v254
  %v299 = vpack.c.b16 %v257, %v256
  %v300 = vpack.c.b16 %v259, %v258
  %v301 = vpack.c.b16 %v261, %v260
  %v302 = vpack.c.b16 %v263, %v262
  %v303 = vpack.c.b16 %v265, %v264
  %v304 = vpack.c.b16 %v267, %v266
  %v305 = vpack.c.b16 %v269, %v268
  %v306 = vpack.c.b16 %v271, %v270
  %v307 = vpack.c.b16 %v273, %v272
  %v308 = vpack.c.b16 %v275, %v274
  %v309 = vpack.c.b16 %v277, %v276
  %v310 = vpack.c.b16 %v279, %v278
  %v311 = vpack.c.b16 %v281, %v280
  %v312 = vpack.c.b16 %v283, %v282
  %v313 = vpack.c.b16 %v285, %v284
  %v314 = vpack.c.b16 %v287, %v286
  %vm342 = vcmask 392192
  %v344 = vsel %vm342, %v93, 0
  %v347 = vsel %vm342, %v97, 0
  %v350 = vsel %vm342, %v101, 0
  %v353 = vsel %vm342, %v105, 0
  %v356 = vsel %vm342, %v109, 0
  %v359 = vsel %vm342, %v113, 0
  %v362 = vsel %vm342, %v117, 0
  %v365 = vsel %vm342, %v121, 0
  %367 = vmatpush.bf16.msra.mxu0 %v295
  %368 = vmatpush.bf16.msra.mxu0 %v294
  %369 = vmatpush.bf16.msra.mxu0 %v293
  %370 = vmatpush.bf16.msra.mxu0 %v292
  %371 = vmatpush.bf16.msra.mxu0 %v291
  %372 = vmatpush.bf16.msra.mxu0 %v290
  %373 = vmatpush.bf16.msra.mxu0 %v289
  %374 = vmatpush.bf16.msra.mxu0 %v288
  %375 = vmatmul.bf16.gmra.mxu0 %v90
  %v376 = vpop.f32.mrf.mxu0
  %v377 = vadd.f32 %v178, %v376
  %v378 = vpop.f32.mrf.mxu0
  %v379 = vadd.f32 %v178, %v378
  %380 = vmatmul.bf16.gmra.mxu0 %v94
  %v381 = vpop.f32.mrf.mxu0
  %v382 = vadd.f32 %v178, %v381
  %v383 = vpop.f32.mrf.mxu0
  %v384 = vadd.f32 %v178, %v383
  %385 = vmatmul.bf16.gmra.mxu0 %v98
  %v386 = vpop.f32.mrf.mxu0
  %v387 = vadd.f32 %v178, %v386
  %v388 = vpop.f32.mrf.mxu0
  %v389 = vadd.f32 %v178, %v388
  %390 = vmatmul.bf16.gmra.mxu0 %v102
  %v391 = vpop.f32.mrf.mxu0
  %v392 = vadd.f32 %v178, %v391
  %v393 = vpop.f32.mrf.mxu0
  %v394 = vadd.f32 %v178, %v393
  %395 = vmatmul.bf16.gmra.mxu0 %v106
  %v396 = vpop.f32.mrf.mxu0
  %v397 = vadd.f32 %v178, %v396
  %v398 = vpop.f32.mrf.mxu0
  %v399 = vadd.f32 %v178, %v398
  %400 = vmatmul.bf16.gmra.mxu0 %v110
  %v401 = vpop.f32.mrf.mxu0
  %v402 = vadd.f32 %v178, %v401
  %v403 = vpop.f32.mrf.mxu0
  %v404 = vadd.f32 %v178, %v403
  %405 = vmatmul.bf16.gmra.mxu0 %v114
  %v406 = vpop.f32.mrf.mxu0
  %v407 = vadd.f32 %v178, %v406
  %v408 = vpop.f32.mrf.mxu0
  %v409 = vadd.f32 %v178, %v408
  %410 = vmatmul.bf16.gmra.mxu0 %v118
  %v411 = vpop.f32.mrf.mxu0
  %v412 = vadd.f32 %v178, %v411
  %v413 = vpop.f32.mrf.mxu0
  %v414 = vadd.f32 %v178, %v413
  %415 = vdwg.mxu0
  %416 = vmatpush.bf16.msra.mxu0 %v303
  %417 = vmatpush.bf16.msra.mxu0 %v302
  %418 = vmatpush.bf16.msra.mxu0 %v301
  %419 = vmatpush.bf16.msra.mxu0 %v300
  %420 = vmatpush.bf16.msra.mxu0 %v299
  %421 = vmatpush.bf16.msra.mxu0 %v298
  %422 = vmatpush.bf16.msra.mxu0 %v297
  %423 = vmatpush.bf16.msra.mxu0 %v296
  %424 = vmatmul.bf16.gmra.mxu0 %v91
  %v425 = vpop.f32.mrf.mxu0
  %v426 = vadd.f32 %v377, %v425
  %v427 = vpop.f32.mrf.mxu0
  %v428 = vadd.f32 %v379, %v427
  %429 = vmatmul.bf16.gmra.mxu0 %v95
  %v430 = vpop.f32.mrf.mxu0
  %v431 = vadd.f32 %v382, %v430
  %v432 = vpop.f32.mrf.mxu0
  %v433 = vadd.f32 %v384, %v432
  %434 = vmatmul.bf16.gmra.mxu0 %v99
  %v435 = vpop.f32.mrf.mxu0
  %v436 = vadd.f32 %v387, %v435
  %v437 = vpop.f32.mrf.mxu0
  %v438 = vadd.f32 %v389, %v437
  %439 = vmatmul.bf16.gmra.mxu0 %v103
  %v440 = vpop.f32.mrf.mxu0
  %v441 = vadd.f32 %v392, %v440
  %v442 = vpop.f32.mrf.mxu0
  %v443 = vadd.f32 %v394, %v442
  %444 = vmatmul.bf16.gmra.mxu0 %v107
  %v445 = vpop.f32.mrf.mxu0
  %v446 = vadd.f32 %v397, %v445
  %v447 = vpop.f32.mrf.mxu0
  %v448 = vadd.f32 %v399, %v447
  %449 = vmatmul.bf16.gmra.mxu0 %v111
  %v450 = vpop.f32.mrf.mxu0
  %v451 = vadd.f32 %v402, %v450
  %v452 = vpop.f32.mrf.mxu0
  %v453 = vadd.f32 %v404, %v452
  %454 = vmatmul.bf16.gmra.mxu0 %v115
  %v455 = vpop.f32.mrf.mxu0
  %v456 = vadd.f32 %v407, %v455
  %v457 = vpop.f32.mrf.mxu0
  %v458 = vadd.f32 %v409, %v457
  %459 = vmatmul.bf16.gmra.mxu0 %v119
  %v460 = vpop.f32.mrf.mxu0
  %v461 = vadd.f32 %v412, %v460
  %v462 = vpop.f32.mrf.mxu0
  %v463 = vadd.f32 %v414, %v462
  %464 = vdwg.mxu0
  %465 = vmatpush.bf16.msra.mxu0 %v311
  %466 = vmatpush.bf16.msra.mxu0 %v310
  %467 = vmatpush.bf16.msra.mxu0 %v309
  %468 = vmatpush.bf16.msra.mxu0 %v308
  %469 = vmatpush.bf16.msra.mxu0 %v307
  %470 = vmatpush.bf16.msra.mxu0 %v306
  %471 = vmatpush.bf16.msra.mxu0 %v305
  %472 = vmatpush.bf16.msra.mxu0 %v304
  %473 = vmatmul.bf16.gmra.mxu0 %v92
  %v474 = vpop.f32.mrf.mxu0
  %v475 = vadd.f32 %v426, %v474
  %v476 = vpop.f32.mrf.mxu0
  %v477 = vadd.f32 %v428, %v476
  %478 = vmatmul.bf16.gmra.mxu0 %v96
  %v479 = vpop.f32.mrf.mxu0
  %v480 = vadd.f32 %v431, %v479
  %v481 = vpop.f32.mrf.mxu0
  %v482 = vadd.f32 %v433, %v481
  %483 = vmatmul.bf16.gmra.mxu0 %v100
  %v484 = vpop.f32.mrf.mxu0
  %v485 = vadd.f32 %v436, %v484
  %v486 = vpop.f32.mrf.mxu0
  %v487 = vadd.f32 %v438, %v486
  %488 = vmatmul.bf16.gmra.mxu0 %v104
  %v489 = vpop.f32.mrf.mxu0
  %v490 = vadd.f32 %v441, %v489
  %v491 = vpop.f32.mrf.mxu0
  %v492 = vadd.f32 %v443, %v491
  %493 = vmatmul.bf16.gmra.mxu0 %v108
  %v494 = vpop.f32.mrf.mxu0
  %v495 = vadd.f32 %v446, %v494
  %v496 = vpop.f32.mrf.mxu0
  %v497 = vadd.f32 %v448, %v496
  %498 = vmatmul.bf16.gmra.mxu0 %v112
  %v499 = vpop.f32.mrf.mxu0
  %v500 = vadd.f32 %v451, %v499
  %v501 = vpop.f32.mrf.mxu0
  %v502 = vadd.f32 %v453, %v501
  %503 = vmatmul.bf16.gmra.mxu0 %v116
  %v504 = vpop.f32.mrf.mxu0
  %v505 = vadd.f32 %v456, %v504
  %v506 = vpop.f32.mrf.mxu0
  %v507 = vadd.f32 %v458, %v506
  %508 = vmatmul.bf16.gmra.mxu0 %v120
  %v509 = vpop.f32.mrf.mxu0
  %v510 = vadd.f32 %v461, %v509
  %v511 = vpop.f32.mrf.mxu0
  %v512 = vadd.f32 %v463, %v511
  %513 = vdwg.mxu0
  %514 = vmatpush.bf16.msra.mxu0 0
  %515 = vmatpush.bf16.msra.mxu0 0
  %516 = vmatpush.bf16.msra.mxu0 0
  %517 = vmatpush.bf16.msra.mxu0 0
  %518 = vmatpush.bf16.msra.mxu0 0
  %519 = vmatpush.bf16.msra.mxu0 %v314
  %520 = vmatpush.bf16.msra.mxu0 %v313
  %521 = vmatpush.bf16.msra.mxu0 %v312
  %522 = vmatmul.bf16.gmra.mxu0 %v344
  %v523 = vpop.f32.mrf.mxu0
  %v524 = vadd.f32 %v475, %v523
  %v525 = vpop.f32.mrf.mxu0
  %v526 = vadd.f32 %v477, %v525
  %527 = vmatmul.bf16.gmra.mxu0 %v347
  %v528 = vpop.f32.mrf.mxu0
  %v529 = vadd.f32 %v480, %v528
  %v530 = vpop.f32.mrf.mxu0
  %v531 = vadd.f32 %v482, %v530
  %532 = vmatmul.bf16.gmra.mxu0 %v350
  %v533 = vpop.f32.mrf.mxu0
  %v534 = vadd.f32 %v485, %v533
  %v535 = vpop.f32.mrf.mxu0
  %v536 = vadd.f32 %v487, %v535
  %537 = vmatmul.bf16.gmra.mxu0 %v353
  %v538 = vpop.f32.mrf.mxu0
  %v539 = vadd.f32 %v490, %v538
  %v540 = vpop.f32.mrf.mxu0
  %v541 = vadd.f32 %v492, %v540
  %542 = vmatmul.bf16.gmra.mxu0 %v356
  %v543 = vpop.f32.mrf.mxu0
  %v544 = vadd.f32 %v495, %v543
  %v545 = vpop.f32.mrf.mxu0
  %v546 = vadd.f32 %v497, %v545
  %547 = vmatmul.bf16.gmra.mxu0 %v359
  %v548 = vpop.f32.mrf.mxu0
  %v549 = vadd.f32 %v500, %v548
  %v550 = vpop.f32.mrf.mxu0
  %v551 = vadd.f32 %v502, %v550
  %552 = vmatmul.bf16.gmra.mxu0 %v362
  %v553 = vpop.f32.mrf.mxu0
  %v554 = vadd.f32 %v505, %v553
  %v555 = vpop.f32.mrf.mxu0
  %v556 = vadd.f32 %v507, %v555
  %557 = vmatmul.bf16.gmra.mxu0 %v365
  %v558 = vpop.f32.mrf.mxu0
  %v559 = vadd.f32 %v510, %v558
  %v560 = vpop.f32.mrf.mxu0
  %v561 = vadd.f32 %v512, %v560
  %562 = vdwg.mxu0
  %v563 = vmul.f32 %v524, 0.01
  %v564 = vmul.f32 %v526, 0.01
  %v565 = vmul.f32 %v529, 0.01
  %v566 = vmul.f32 %v531, 0.01
  %v567 = vmul.f32 %v534, 0.01
  %v568 = vmul.f32 %v536, 0.01
  %v569 = vmul.f32 %v539, 0.01
  %v570 = vmul.f32 %v541, 0.01
  %v571 = vmul.f32 %v544, 0.01
  %v572 = vmul.f32 %v546, 0.01
  %v573 = vmul.f32 %v549, 0.01
  %v574 = vmul.f32 %v551, 0.01
  %v575 = vmul.f32 %v554, 0.01
  %v576 = vmul.f32 %v556, 0.01
  %v577 = vmul.f32 %v559, 0.01
  %v578 = vmul.f32 %v561, 0.01
  %v579 = vmax.f32 %v524, %v563
  %v580 = vmax.f32 %v526, %v564
  %v581 = vmax.f32 %v529, %v565
  %v582 = vmax.f32 %v531, %v566
  %v583 = vmax.f32 %v534, %v567
  %v584 = vmax.f32 %v536, %v568
  %v585 = vmax.f32 %v539, %v569
  %v586 = vmax.f32 %v541, %v570
  %v587 = vmax.f32 %v544, %v571
  %v588 = vmax.f32 %v546, %v572
  %v589 = vmax.f32 %v549, %v573
  %v590 = vmax.f32 %v551, %v574
  %v591 = vmax.f32 %v554, %v575
  %v592 = vmax.f32 %v556, %v576
  %v593 = vmax.f32 %v559, %v577
  %v594 = vmax.f32 %v561, %v578
  %595 = vst.msk [vmem:[%s6] sm:$0xff] %vm342, %v579
  %596 = vst.msk [vmem:[%s6 + $0x8] sm:$0xff] %vm342, %v580
  %597 = vst.msk [vmem:[%s6 + $0x10] sm:$0xff] %vm342, %v581
  %598 = vst.msk [vmem:[%s6 + $0x18] sm:$0xff] %vm342, %v582
  %599 = vst.msk [vmem:[%s6 + $0x20] sm:$0xff] %vm342, %v583
  %600 = vst.msk [vmem:[%s6 + $0x28] sm:$0xff] %vm342, %v584
  %601 = vst.msk [vmem:[%s6 + $0x30] sm:$0xff] %vm342, %v585
  %602 = vst.msk [vmem:[%s6 + $0x38] sm:$0xff] %vm342, %v586
  %603 = vst.msk [vmem:[%s6 + $0x40] sm:$0xff] %vm342, %v587
  %604 = vst.msk [vmem:[%s6 + $0x48] sm:$0xff] %vm342, %v588
  %605 = vst.msk [vmem:[%s6 + $0x50] sm:$0xff] %vm342, %v589
  %606 = vst.msk [vmem:[%s6 + $0x58] sm:$0xff] %vm342, %v590
  %607 = vst.msk [vmem:[%s6 + $0x60] sm:$0xff] %vm342, %v591
  %608 = vst.msk [vmem:[%s6 + $0x68] sm:$0xff] %vm342, %v592
  %609 = vst.msk [vmem:[%s6 + $0x70] sm:$0xff] %vm342, %v593
  %610 = vst.msk [vmem:[%s6 + $0x78] sm:$0xff] %vm342, %v594
  %v611 = vld [vmem:[%s3] sm:$0xff]
  %v612 = vld [vmem:[%s3 + $0x8] sm:$0xff]
  %v613 = vld [vmem:[%s3 + $0x10] sm:$0xff]
  %v614 = vld [vmem:[%s3 + $0x18] sm:$0xff]
  %v615 = vld [vmem:[%s3 + $0x20] sm:$0xff]
  %v616 = vld [vmem:[%s3 + $0x28] sm:$0xff]
  %v617 = vld [vmem:[%s3 + $0x30] sm:$0xff]
  %v618 = vld [vmem:[%s3 + $0x38] sm:$0xff]
  %v619 = vld [vmem:[%s3 + $0x40] sm:$0xff]
  %v620 = vld [vmem:[%s3 + $0x48] sm:$0xff]
  %v621 = vld [vmem:[%s3 + $0x50] sm:$0xff]
  %v622 = vld [vmem:[%s3 + $0x58] sm:$0xff]
  %v623 = vld [vmem:[%s3 + $0x60] sm:$0xff]
  %v624 = vld [vmem:[%s3 + $0x68] sm:$0xff]
  %v625 = vld [vmem:[%s3 + $0x70] sm:$0xff]
  %v626 = vld [vmem:[%s3 + $0x78] sm:$0xff]
  %v627 = vld [vmem:[%s3 + $0x80] sm:$0xff]
  %v628 = vld [vmem:[%s3 + $0x88] sm:$0xff]
  %v629 = vld [vmem:[%s3 + $0x90] sm:$0xff]
  %v630 = vld [vmem:[%s3 + $0x98] sm:$0xff]
  %v631 = vld [vmem:[%s3 + $0xa0] sm:$0xff]
  %v632 = vld [vmem:[%s3 + $0xa8] sm:$0xff]
  %v633 = vld [vmem:[%s3 + $0xb0] sm:$0xff]
  %v634 = vld [vmem:[%s3 + $0xb8] sm:$0xff]
  %v635 = vld [vmem:[%s3 + $0xc0] sm:$0xff]
  %v636 = vld [vmem:[%s3 + $0xc8] sm:$0xff]
  %v637 = vld [vmem:[%s3 + $0xd0] sm:$0xff]
  %v638 = vld [vmem:[%s3 + $0xd8] sm:$0xff]
  %v639 = vld [vmem:[%s3 + $0xe0] sm:$0xff]
  %v640 = vld [vmem:[%s3 + $0xe8] sm:$0xff]
  %v641 = vld [vmem:[%s3 + $0xf0] sm:$0xff]
  %v642 = vld [vmem:[%s3 + $0xf8] sm:$0xff]
  %v643 = vld [vmem:[%s3 + $0x100] sm:$0xff]
  %v644 = vld [vmem:[%s3 + $0x108] sm:$0xff]
  %v645 = vld [vmem:[%s3 + $0x110] sm:$0xff]
  %v646 = vld [vmem:[%s3 + $0x118] sm:$0xff]
  %v647 = vld [vmem:[%s3 + $0x120] sm:$0xff]
  %v648 = vld [vmem:[%s3 + $0x128] sm:$0xff]
  %v649 = vld [vmem:[%s3 + $0x130] sm:$0xff]
  %v650 = vld [vmem:[%s3 + $0x138] sm:$0xff]
  %v651 = vld [vmem:[%s3 + $0x140] sm:$0xff]
  %v652 = vld [vmem:[%s3 + $0x148] sm:$0xff]
  %v653 = vld [vmem:[%s3 + $0x150] sm:$0xff]
  %v654 = vld [vmem:[%s3 + $0x158] sm:$0xff]
  %v655 = vld [vmem:[%s3 + $0x160] sm:$0xff]
  %v656 = vld [vmem:[%s3 + $0x168] sm:$0xff]
  %v657 = vld [vmem:[%s3 + $0x170] sm:$0xff]
  %v658 = vld [vmem:[%s3 + $0x178] sm:$0xff]
  %v659 = vld [vmem:[%s3 + $0x180] sm:$0xff]
  %v660 = vld [vmem:[%s3 + $0x188] sm:$0xff]
  %v661 = vld [vmem:[%s3 + $0x190] sm:$0xff]
  %v662 = vld [vmem:[%s3 + $0x198] sm:$0xff]
  %v663 = vld [vmem:[%s3 + $0x1a0] sm:$0xff]
  %v664 = vld [vmem:[%s3 + $0x1a8] sm:$0xff]
  %v665 = vld [vmem:[%s3 + $0x1b0] sm:$0xff]
  %v666 = vld [vmem:[%s3 + $0x1b8] sm:$0xff]
  %v667 = vld [vmem:[%s3 + $0x1c0] sm:$0xff]
  %v668 = vld [vmem:[%s3 + $0x1c8] sm:$0xff]
  %v669 = vld [vmem:[%s3 + $0x1d0] sm:$0xff]
  %v670 = vld [vmem:[%s3 + $0x1d8] sm:$0xff]
  %v671 = vld [vmem:[%s3 + $0x1e0] sm:$0xff]
  %v672 = vld [vmem:[%s3 + $0x1e8] sm:$0xff]
  %v673 = vld [vmem:[%s3 + $0x1f0] sm:$0xff]
  %v674 = vld [vmem:[%s3 + $0x1f8] sm:$0xff]
  %v675 = vld [vmem:[%s3 + $0x200] sm:$0xff]
  %v676 = vld [vmem:[%s3 + $0x208] sm:$0xff]
  %v677 = vld [vmem:[%s3 + $0x210] sm:$0xff]
  %v678 = vld [vmem:[%s3 + $0x218] sm:$0xff]
  %v679 = vld [vmem:[%s3 + $0x220] sm:$0xff]
  %v680 = vld [vmem:[%s3 + $0x228] sm:$0xff]
  %v681 = vld [vmem:[%s3 + $0x230] sm:$0xff]
  %v682 = vld [vmem:[%s3 + $0x238] sm:$0xff]
  %v683 = vld [vmem:[%s3 + $0x240] sm:$0xff]
  %v684 = vld [vmem:[%s3 + $0x248] sm:$0xff]
  %v685 = vld [vmem:[%s3 + $0x250] sm:$0xff]
  %v686 = vld [vmem:[%s3 + $0x258] sm:$0xff]
  %v687 = vld [vmem:[%s3 + $0x260] sm:$0xff]
  %v688 = vld [vmem:[%s3 + $0x268] sm:$0xff]
  %v689 = vld [vmem:[%s3 + $0x270] sm:$0xff]
  %v690 = vld [vmem:[%s3 + $0x278] sm:$0xff]
  %v691 = vpack.c.bf16 %v616, %v611
  %v692 = vpack.c.bf16 %v617, %v612
  %v693 = vpack.c.bf16 %v618, %v613
  %v694 = vpack.c.bf16 %v619, %v614
  %v695 = vpack.c.bf16 %v620, %v615
  %v696 = vpack.c.bf16 %v626, %v621
  %v697 = vpack.c.bf16 %v627, %v622
  %v698 = vpack.c.bf16 %v628, %v623
  %v699 = vpack.c.bf16 %v629, %v624
  %v700 = vpack.c.bf16 %v630, %v625
  %v701 = vpack.c.bf16 %v636, %v631
  %v702 = vpack.c.bf16 %v637, %v632
  %v703 = vpack.c.bf16 %v638, %v633
  %v704 = vpack.c.bf16 %v639, %v634
  %v705 = vpack.c.bf16 %v640, %v635
  %v706 = vpack.c.bf16 %v646, %v641
  %v707 = vpack.c.bf16 %v647, %v642
  %v708 = vpack.c.bf16 %v648, %v643
  %v709 = vpack.c.bf16 %v649, %v644
  %v710 = vpack.c.bf16 %v650, %v645
  %v711 = vpack.c.bf16 %v656, %v651
  %v712 = vpack.c.bf16 %v657, %v652
  %v713 = vpack.c.bf16 %v658, %v653
  %v714 = vpack.c.bf16 %v659, %v654
  %v715 = vpack.c.bf16 %v660, %v655
  %v716 = vpack.c.bf16 %v666, %v661
  %v717 = vpack.c.bf16 %v667, %v662
  %v718 = vpack.c.bf16 %v668, %v663
  %v719 = vpack.c.bf16 %v669, %v664
  %v720 = vpack.c.bf16 %v670, %v665
  %v721 = vpack.c.bf16 %v676, %v671
  %v722 = vpack.c.bf16 %v677, %v672
  %v723 = vpack.c.bf16 %v678, %v673
  %v724 = vpack.c.bf16 %v679, %v674
  %v725 = vpack.c.bf16 %v680, %v675
  %v726 = vpack.c.bf16 %v686, %v681
  %v727 = vpack.c.bf16 %v687, %v682
  %v728 = vpack.c.bf16 %v688, %v683
  %v729 = vpack.c.bf16 %v689, %v684
  %v730 = vpack.c.bf16 %v690, %v685
  %v731 = vld [vmem:[%s4] sm:$0xf]
  %v732 = vld [vmem:[%s4 + $0x4] sm:$0xf]
  %v733 = vld [vmem:[%s4 + $0x8] sm:$0xf]
  %v734 = vld [vmem:[%s4 + $0xc] sm:$0xf]
  %v735 = vld [vmem:[%s4 + $0x10] sm:$0xf]
  %v736 = vld [vmem:[%s4 + $0x14] sm:$0xf]
  %v737 = vld [vmem:[%s4 + $0x18] sm:$0xf]
  %v738 = vld [vmem:[%s4 + $0x1c] sm:$0xf]
  %v739 = vld [vmem:[%s4 + $0x20] sm:$0xf]
  %v740 = vld [vmem:[%s4 + $0x24] sm:$0xf]
  %v741 = vld [vmem:[%s4 + $0x28] sm:$0xf]
  %v742 = vld [vmem:[%s4 + $0x2c] sm:$0xf]
  %v743 = vld [vmem:[%s4 + $0x30] sm:$0xf]
  %v744 = vld [vmem:[%s4 + $0x34] sm:$0xf]
  %v745 = vld [vmem:[%s4 + $0x38] sm:$0xf]
  %v746 = vld [vmem:[%s4 + $0x3c] sm:$0xf]
  %v747 = vld [vmem:[%s4 + $0x40] sm:$0xf]
  %v748 = vld [vmem:[%s4 + $0x44] sm:$0xf]
  %v749 = vld [vmem:[%s4 + $0x48] sm:$0xf]
  %v750 = vld [vmem:[%s4 + $0x4c] sm:$0xf]
  %v751 = vld [vmem:[%s4 + $0x50] sm:$0xf]
  %v752 = vld [vmem:[%s4 + $0x54] sm:$0xf]
  %v753 = vld [vmem:[%s4 + $0x58] sm:$0xf]
  %v754 = vld [vmem:[%s4 + $0x5c] sm:$0xf]
  %v755 = vld [vmem:[%s4 + $0x60] sm:$0xf]
  %v756 = vld [vmem:[%s4 + $0x64] sm:$0xf]
  %v757 = vld [vmem:[%s4 + $0x68] sm:$0xf]
  %v758 = vld [vmem:[%s4 + $0x6c] sm:$0xf]
  %v759 = vld [vmem:[%s4 + $0x70] sm:$0xf]
  %v760 = vld [vmem:[%s4 + $0x74] sm:$0xf]
  %v761 = vld [vmem:[%s4 + $0x78] sm:$0xf]
  %v762 = vld [vmem:[%s4 + $0x7c] sm:$0xf]
  %v763 = vld [vmem:[%s4 + $0x80] sm:$0xf]
  %v764 = vld [vmem:[%s4 + $0x84] sm:$0xf]
  %v765 = vld [vmem:[%s4 + $0x88] sm:$0xf]
  %v766 = vld [vmem:[%s4 + $0x8c] sm:$0xf]
  %v767 = vld [vmem:[%s4 + $0x90] sm:$0xf]
  %v768 = vld [vmem:[%s4 + $0x94] sm:$0xf]
  %v769 = vld [vmem:[%s4 + $0x98] sm:$0xf]
  %v770 = vld [vmem:[%s4 + $0x9c] sm:$0xf]
  %v771 = vld [vmem:[%s4 + $0xa0] sm:$0xf]
  %v772 = vld [vmem:[%s4 + $0xa4] sm:$0xf]
  %v773 = vld [vmem:[%s4 + $0xa8] sm:$0xf]
  %v774 = vld [vmem:[%s4 + $0xac] sm:$0xf]
  %v775 = vld [vmem:[%s4 + $0xb0] sm:$0xf]
  %v776 = vld [vmem:[%s4 + $0xb4] sm:$0xf]
  %v777 = vld [vmem:[%s4 + $0xb8] sm:$0xf]
  %v778 = vld [vmem:[%s4 + $0xbc] sm:$0xf]
  %v779 = vld [vmem:[%s4 + $0xc0] sm:$0xf]
  %v780 = vld [vmem:[%s4 + $0xc4] sm:$0xf]
  %v781 = vld [vmem:[%s4 + $0xc8] sm:$0xf]
  %v782 = vld [vmem:[%s4 + $0xcc] sm:$0xf]
  %v783 = vld [vmem:[%s4 + $0xd0] sm:$0xf]
  %v784 = vld [vmem:[%s4 + $0xd4] sm:$0xf]
  %v785 = vld [vmem:[%s4 + $0xd8] sm:$0xf]
  %v786 = vld [vmem:[%s4 + $0xdc] sm:$0xf]
  %v787 = vld [vmem:[%s4 + $0xe0] sm:$0xf]
  %v788 = vld [vmem:[%s4 + $0xe4] sm:$0xf]
  %v789 = vld [vmem:[%s4 + $0xe8] sm:$0xf]
  %v790 = vld [vmem:[%s4 + $0xec] sm:$0xf]
  %v791 = vld [vmem:[%s4 + $0xf0] sm:$0xf]
  %v792 = vld [vmem:[%s4 + $0xf4] sm:$0xf]
  %v793 = vld [vmem:[%s4 + $0xf8] sm:$0xf]
  %v794 = vld [vmem:[%s4 + $0xfc] sm:$0xf]
  %v795 = vld [vmem:[%s4 + $0x100] sm:$0xf]
  %v796 = vld [vmem:[%s4 + $0x104] sm:$0xf]
  %v797 = vld [vmem:[%s4 + $0x108] sm:$0xf]
  %v798 = vld [vmem:[%s4 + $0x10c] sm:$0xf]
  %v799 = vld [vmem:[%s4 + $0x110] sm:$0xf]
  %v800 = vld [vmem:[%s4 + $0x114] sm:$0xf]
  %v801 = vld [vmem:[%s4 + $0x118] sm:$0xf]
  %v802 = vld [vmem:[%s4 + $0x11c] sm:$0xf]
  %v803 = vld [vmem:[%s5] sm:$0x1]
  %v805 = vperm.slane %v803, 0
  %v879 = vunpack.c.l.b16 %v731
  %v880 = vunpack.c.l.b16 %v732
  %v881 = vunpack.c.l.b16 %v733
  %v882 = vunpack.c.l.b16 %v734
  %v883 = vunpack.c.l.b16 %v735
  %v884 = vunpack.c.l.b16 %v736
  %v885 = vunpack.c.l.b16 %v737
  %v886 = vunpack.c.l.b16 %v738
  %v887 = vunpack.c.l.b16 %v739
  %v888 = vunpack.c.l.b16 %v740
  %v889 = vunpack.c.l.b16 %v741
  %v890 = vunpack.c.l.b16 %v742
  %v891 = vunpack.c.l.b16 %v743
  %v892 = vunpack.c.l.b16 %v744
  %v893 = vunpack.c.l.b16 %v745
  %v894 = vunpack.c.l.b16 %v746
  %v895 = vunpack.c.l.b16 %v747
  %v896 = vunpack.c.l.b16 %v748
  %v897 = vunpack.c.l.b16 %v749
  %v898 = vunpack.c.l.b16 %v750
  %v899 = vunpack.c.l.b16 %v751
  %v900 = vunpack.c.l.b16 %v752
  %v901 = vunpack.c.l.b16 %v753
  %v902 = vunpack.c.l.b16 %v754
  %v903 = vunpack.c.l.b16 %v755
  %v904 = vunpack.c.l.b16 %v756
  %v905 = vunpack.c.l.b16 %v757
  %v906 = vunpack.c.l.b16 %v758
  %v907 = vunpack.c.l.b16 %v759
  %v908 = vunpack.c.l.b16 %v760
  %v909 = vunpack.c.l.b16 %v761
  %v910 = vunpack.c.l.b16 %v762
  %v911 = vunpack.c.l.b16 %v763
  %v912 = vunpack.c.l.b16 %v764
  %v913 = vunpack.c.l.b16 %v765
  %v914 = vunpack.c.l.b16 %v766
  %v915 = vunpack.c.l.b16 %v767
  %v916 = vunpack.c.l.b16 %v768
  %v917 = vunpack.c.l.b16 %v769
  %v918 = vunpack.c.l.b16 %v770
  %v919 = vunpack.c.l.b16 %v771
  %v920 = vunpack.c.l.b16 %v772
  %v921 = vunpack.c.l.b16 %v773
  %v922 = vunpack.c.l.b16 %v774
  %v923 = vunpack.c.l.b16 %v775
  %v924 = vunpack.c.l.b16 %v776
  %v925 = vunpack.c.l.b16 %v777
  %v926 = vunpack.c.l.b16 %v778
  %v927 = vunpack.c.l.b16 %v779
  %v928 = vunpack.c.l.b16 %v780
  %v929 = vunpack.c.l.b16 %v781
  %v930 = vunpack.c.l.b16 %v782
  %v931 = vunpack.c.l.b16 %v783
  %v932 = vunpack.c.l.b16 %v784
  %v933 = vunpack.c.l.b16 %v785
  %v934 = vunpack.c.l.b16 %v786
  %v935 = vunpack.c.l.b16 %v787
  %v936 = vunpack.c.l.b16 %v788
  %v937 = vunpack.c.l.b16 %v789
  %v938 = vunpack.c.l.b16 %v790
  %v939 = vunpack.c.l.b16 %v791
  %v940 = vunpack.c.l.b16 %v792
  %v941 = vunpack.c.l.b16 %v793
  %v942 = vunpack.c.l.b16 %v794
  %v943 = vunpack.c.l.b16 %v795
  %v944 = vunpack.c.l.b16 %v796
  %v945 = vunpack.c.l.b16 %v797
  %v946 = vunpack.c.l.b16 %v798
  %v947 = vunpack.c.l.b16 %v799
  %v948 = vunpack.c.l.b16 %v800
  %v949 = vunpack.c.l.b16 %v801
  %v950 = vunpack.c.l.b16 %v802
  %v951 = vpack.c.b16 %v880, %v879
  %v952 = vpack.c.b16 %v882, %v881
  %v953 = vpack.c.b16 %v884, %v883
  %v954 = vpack.c.b16 %v886, %v885
  %v955 = vpack.c.b16 %v888, %v887
  %v956 = vpack.c.b16 %v890, %v889
  %v957 = vpack.c.b16 %v892, %v891
  %v958 = vpack.c.b16 %v894, %v893
  %v959 = vpack.c.b16 %v896, %v895
  %v960 = vpack.c.b16 %v898, %v897
  %v961 = vpack.c.b16 %v900, %v899
  %v962 = vpack.c.b16 %v902, %v901
  %v963 = vpack.c.b16 %v904, %v903
  %v964 = vpack.c.b16 %v906, %v905
  %v965 = vpack.c.b16 %v908, %v907
  %v966 = vpack.c.b16 %v910, %v909
  %v967 = vpack.c.b16 %v912, %v911
  %v968 = vpack.c.b16 %v914, %v913
  %v969 = vpack.c.b16 %v916, %v915
  %v970 = vpack.c.b16 %v918, %v917
  %v971 = vpack.c.b16 %v920, %v919
  %v972 = vpack.c.b16 %v922, %v921
  %v973 = vpack.c.b16 %v924, %v923
  %v974 = vpack.c.b16 %v926, %v925
  %v975 = vpack.c.b16 %v928, %v927
  %v976 = vpack.c.b16 %v930, %v929
  %v977 = vpack.c.b16 %v932, %v931
  %v978 = vpack.c.b16 %v934, %v933
  %v979 = vpack.c.b16 %v936, %v935
  %v980 = vpack.c.b16 %v938, %v937
  %v981 = vpack.c.b16 %v940, %v939
  %v982 = vpack.c.b16 %v942, %v941
  %v983 = vpack.c.b16 %v944, %v943
  %v984 = vpack.c.b16 %v946, %v945
  %v985 = vpack.c.b16 %v948, %v947
  %v986 = vpack.c.b16 %v950, %v949
  %vm1023 = vcmask 523264
  %v1025 = vsel %vm1023, %v695, 0
  %v1028 = vsel %vm1023, %v700, 0
  %v1031 = vsel %vm1023, %v705, 0
  %v1034 = vsel %vm1023, %v710, 0
  %v1037 = vsel %vm1023, %v715, 0
  %v1040 = vsel %vm1023, %v720, 0
  %v1043 = vsel %vm1023, %v725, 0
  %v1046 = vsel %vm1023, %v730, 0
  %1048 = vmatpush.bf16.msra.mxu0 %v958
  %1049 = vmatpush.bf16.msra.mxu0 %v957
  %1050 = vmatpush.bf16.msra.mxu0 %v956
  %1051 = vmatpush.bf16.msra.mxu0 %v955
  %1052 = vmatpush.bf16.msra.mxu0 %v954
  %1053 = vmatpush.bf16.msra.mxu0 %v953
  %1054 = vmatpush.bf16.msra.mxu0 %v952
  %1055 = vmatpush.bf16.msra.mxu0 %v951
  %1056 = vmatmul.bf16.gmra.mxu0 %v691
  %v1057 = vpop.f32.mrf.mxu0
  %v1058 = vadd.f32 %v805, %v1057
  %v1059 = vpop.f32.mrf.mxu0
  %v1060 = vadd.f32 %v805, %v1059
  %1061 = vmatmul.bf16.gmra.mxu0 %v696
  %v1062 = vpop.f32.mrf.mxu0
  %v1063 = vadd.f32 %v805, %v1062
  %v1064 = vpop.f32.mrf.mxu0
  %v1065 = vadd.f32 %v805, %v1064
  %1066 = vmatmul.bf16.gmra.mxu0 %v701
  %v1067 = vpop.f32.mrf.mxu0
  %v1068 = vadd.f32 %v805, %v1067
  %v1069 = vpop.f32.mrf.mxu0
  %v1070 = vadd.f32 %v805, %v1069
  %1071 = vmatmul.bf16.gmra.mxu0 %v706
  %v1072 = vpop.f32.mrf.mxu0
  %v1073 = vadd.f32 %v805, %v1072
  %v1074 = vpop.f32.mrf.mxu0
  %v1075 = vadd.f32 %v805, %v1074
  %1076 = vmatmul.bf16.gmra.mxu0 %v711
  %v1077 = vpop.f32.mrf.mxu0
  %v1078 = vadd.f32 %v805, %v1077
  %v1079 = vpop.f32.mrf.mxu0
  %v1080 = vadd.f32 %v805, %v1079
  %1081 = vmatmul.bf16.gmra.mxu0 %v716
  %v1082 = vpop.f32.mrf.mxu0
  %v1083 = vadd.f32 %v805, %v1082
  %v1084 = vpop.f32.mrf.mxu0
  %v1085 = vadd.f32 %v805, %v1084
  %1086 = vmatmul.bf16.gmra.mxu0 %v721
  %v1087 = vpop.f32.mrf.mxu0
  %v1088 = vadd.f32 %v805, %v1087
  %v1089 = vpop.f32.mrf.mxu0
  %v1090 = vadd.f32 %v805, %v1089
  %1091 = vmatmul.bf16.gmra.mxu0 %v726
  %v1092 = vpop.f32.mrf.mxu0
  %v1093 = vadd.f32 %v805, %v1092
  %v1094 = vpop.f32.mrf.mxu0
  %v1095 = vadd.f32 %v805, %v1094
  %1096 = vdwg.mxu0
  %1097 = vmatpush.bf16.msra.mxu0 %v966
  %1098 = vmatpush.bf16.msra.mxu0 %v965
  %1099 = vmatpush.bf16.msra.mxu0 %v964
  %1100 = vmatpush.bf16.msra.mxu0 %v963
  %1101 = vmatpush.bf16.msra.mxu0 %v962
  %1102 = vmatpush.bf16.msra.mxu0 %v961
  %1103 = vmatpush.bf16.msra.mxu0 %v960
  %1104 = vmatpush.bf16.msra.mxu0 %v959
  %1105 = vmatmul.bf16.gmra.mxu0 %v692
  %v1106 = vpop.f32.mrf.mxu0
  %v1107 = vadd.f32 %v1058, %v1106
  %v1108 = vpop.f32.mrf.mxu0
  %v1109 = vadd.f32 %v1060, %v1108
  %1110 = vmatmul.bf16.gmra.mxu0 %v697
  %v1111 = vpop.f32.mrf.mxu0
  %v1112 = vadd.f32 %v1063, %v1111
  %v1113 = vpop.f32.mrf.mxu0
  %v1114 = vadd.f32 %v1065, %v1113
  %1115 = vmatmul.bf16.gmra.mxu0 %v702
  %v1116 = vpop.f32.mrf.mxu0
  %v1117 = vadd.f32 %v1068, %v1116
  %v1118 = vpop.f32.mrf.mxu0
  %v1119 = vadd.f32 %v1070, %v1118
  %1120 = vmatmul.bf16.gmra.mxu0 %v707
  %v1121 = vpop.f32.mrf.mxu0
  %v1122 = vadd.f32 %v1073, %v1121
  %v1123 = vpop.f32.mrf.mxu0
  %v1124 = vadd.f32 %v1075, %v1123
  %1125 = vmatmul.bf16.gmra.mxu0 %v712
  %v1126 = vpop.f32.mrf.mxu0
  %v1127 = vadd.f32 %v1078, %v1126
  %v1128 = vpop.f32.mrf.mxu0
  %v1129 = vadd.f32 %v1080, %v1128
  %1130 = vmatmul.bf16.gmra.mxu0 %v717
  %v1131 = vpop.f32.mrf.mxu0
  %v1132 = vadd.f32 %v1083, %v1131
  %v1133 = vpop.f32.mrf.mxu0
  %v1134 = vadd.f32 %v1085, %v1133
  %1135 = vmatmul.bf16.gmra.mxu0 %v722
  %v1136 = vpop.f32.mrf.mxu0
  %v1137 = vadd.f32 %v1088, %v1136
  %v1138 = vpop.f32.mrf.mxu0
  %v1139 = vadd.f32 %v1090, %v1138
  %1140 = vmatmul.bf16.gmra.mxu0 %v727
  %v1141 = vpop.f32.mrf.mxu0
  %v1142 = vadd.f32 %v1093, %v1141
  %v1143 = vpop.f32.mrf.mxu0
  %v1144 = vadd.f32 %v1095, %v1143
  %1145 = vdwg.mxu0
  %1146 = vmatpush.bf16.msra.mxu0 %v974
  %1147 = vmatpush.bf16.msra.mxu0 %v973
  %1148 = vmatpush.bf16.msra.mxu0 %v972
  %1149 = vmatpush.bf16.msra.mxu0 %v971
  %1150 = vmatpush.bf16.msra.mxu0 %v970
  %1151 = vmatpush.bf16.msra.mxu0 %v969
  %1152 = vmatpush.bf16.msra.mxu0 %v968
  %1153 = vmatpush.bf16.msra.mxu0 %v967
  %1154 = vmatmul.bf16.gmra.mxu0 %v693
  %v1155 = vpop.f32.mrf.mxu0
  %v1156 = vadd.f32 %v1107, %v1155
  %v1157 = vpop.f32.mrf.mxu0
  %v1158 = vadd.f32 %v1109, %v1157
  %1159 = vmatmul.bf16.gmra.mxu0 %v698
  %v1160 = vpop.f32.mrf.mxu0
  %v1161 = vadd.f32 %v1112, %v1160
  %v1162 = vpop.f32.mrf.mxu0
  %v1163 = vadd.f32 %v1114, %v1162
  %1164 = vmatmul.bf16.gmra.mxu0 %v703
  %v1165 = vpop.f32.mrf.mxu0
  %v1166 = vadd.f32 %v1117, %v1165
  %v1167 = vpop.f32.mrf.mxu0
  %v1168 = vadd.f32 %v1119, %v1167
  %1169 = vmatmul.bf16.gmra.mxu0 %v708
  %v1170 = vpop.f32.mrf.mxu0
  %v1171 = vadd.f32 %v1122, %v1170
  %v1172 = vpop.f32.mrf.mxu0
  %v1173 = vadd.f32 %v1124, %v1172
  %1174 = vmatmul.bf16.gmra.mxu0 %v713
  %v1175 = vpop.f32.mrf.mxu0
  %v1176 = vadd.f32 %v1127, %v1175
  %v1177 = vpop.f32.mrf.mxu0
  %v1178 = vadd.f32 %v1129, %v1177
  %1179 = vmatmul.bf16.gmra.mxu0 %v718
  %v1180 = vpop.f32.mrf.mxu0
  %v1181 = vadd.f32 %v1132, %v1180
  %v1182 = vpop.f32.mrf.mxu0
  %v1183 = vadd.f32 %v1134, %v1182
  %1184 = vmatmul.bf16.gmra.mxu0 %v723
  %v1185 = vpop.f32.mrf.mxu0
  %v1186 = vadd.f32 %v1137, %v1185
  %v1187 = vpop.f32.mrf.mxu0
  %v1188 = vadd.f32 %v1139, %v1187
  %1189 = vmatmul.bf16.gmra.mxu0 %v728
  %v1190 = vpop.f32.mrf.mxu0
  %v1191 = vadd.f32 %v1142, %v1190
  %v1192 = vpop.f32.mrf.mxu0
  %v1193 = vadd.f32 %v1144, %v1192
  %1194 = vdwg.mxu0
  %1195 = vmatpush.bf16.msra.mxu0 %v982
  %1196 = vmatpush.bf16.msra.mxu0 %v981
  %1197 = vmatpush.bf16.msra.mxu0 %v980
  %1198 = vmatpush.bf16.msra.mxu0 %v979
  %1199 = vmatpush.bf16.msra.mxu0 %v978
  %1200 = vmatpush.bf16.msra.mxu0 %v977
  %1201 = vmatpush.bf16.msra.mxu0 %v976
  %1202 = vmatpush.bf16.msra.mxu0 %v975
  %1203 = vmatmul.bf16.gmra.mxu0 %v694
  %v1204 = vpop.f32.mrf.mxu0
  %v1205 = vadd.f32 %v1156, %v1204
  %v1206 = vpop.f32.mrf.mxu0
  %v1207 = vadd.f32 %v1158, %v1206
  %1208 = vmatmul.bf16.gmra.mxu0 %v699
  %v1209 = vpop.f32.mrf.mxu0
  %v1210 = vadd.f32 %v1161, %v1209
  %v1211 = vpop.f32.mrf.mxu0
  %v1212 = vadd.f32 %v1163, %v1211
  %1213 = vmatmul.bf16.gmra.mxu0 %v704
  %v1214 = vpop.f32.mrf.mxu0
  %v1215 = vadd.f32 %v1166, %v1214
  %v1216 = vpop.f32.mrf.mxu0
  %v1217 = vadd.f32 %v1168, %v1216
  %1218 = vmatmul.bf16.gmra.mxu0 %v709
  %v1219 = vpop.f32.mrf.mxu0
  %v1220 = vadd.f32 %v1171, %v1219
  %v1221 = vpop.f32.mrf.mxu0
  %v1222 = vadd.f32 %v1173, %v1221
  %1223 = vmatmul.bf16.gmra.mxu0 %v714
  %v1224 = vpop.f32.mrf.mxu0
  %v1225 = vadd.f32 %v1176, %v1224
  %v1226 = vpop.f32.mrf.mxu0
  %v1227 = vadd.f32 %v1178, %v1226
  %1228 = vmatmul.bf16.gmra.mxu0 %v719
  %v1229 = vpop.f32.mrf.mxu0
  %v1230 = vadd.f32 %v1181, %v1229
  %v1231 = vpop.f32.mrf.mxu0
  %v1232 = vadd.f32 %v1183, %v1231
  %1233 = vmatmul.bf16.gmra.mxu0 %v724
  %v1234 = vpop.f32.mrf.mxu0
  %v1235 = vadd.f32 %v1186, %v1234
  %v1236 = vpop.f32.mrf.mxu0
  %v1237 = vadd.f32 %v1188, %v1236
  %1238 = vmatmul.bf16.gmra.mxu0 %v729
  %v1239 = vpop.f32.mrf.mxu0
  %v1240 = vadd.f32 %v1191, %v1239
  %v1241 = vpop.f32.mrf.mxu0
  %v1242 = vadd.f32 %v1193, %v1241
  %1243 = vdwg.mxu0
  %1244 = vmatpush.bf16.msra.mxu0 0
  %1245 = vmatpush.bf16.msra.mxu0 0
  %1246 = vmatpush.bf16.msra.mxu0 0
  %1247 = vmatpush.bf16.msra.mxu0 0
  %1248 = vmatpush.bf16.msra.mxu0 %v986
  %1249 = vmatpush.bf16.msra.mxu0 %v985
  %1250 = vmatpush.bf16.msra.mxu0 %v984
  %1251 = vmatpush.bf16.msra.mxu0 %v983
  %1252 = vmatmul.bf16.gmra.mxu0 %v1025
  %v1253 = vpop.f32.mrf.mxu0
  %v1254 = vadd.f32 %v1205, %v1253
  %v1255 = vpop.f32.mrf.mxu0
  %v1256 = vadd.f32 %v1207, %v1255
  %1257 = vmatmul.bf16.gmra.mxu0 %v1028
  %v1258 = vpop.f32.mrf.mxu0
  %v1259 = vadd.f32 %v1210, %v1258
  %v1260 = vpop.f32.mrf.mxu0
  %v1261 = vadd.f32 %v1212, %v1260
  %1262 = vmatmul.bf16.gmra.mxu0 %v1031
  %v1263 = vpop.f32.mrf.mxu0
  %v1264 = vadd.f32 %v1215, %v1263
  %v1265 = vpop.f32.mrf.mxu0
  %v1266 = vadd.f32 %v1217, %v1265
  %1267 = vmatmul.bf16.gmra.mxu0 %v1034
  %v1268 = vpop.f32.mrf.mxu0
  %v1269 = vadd.f32 %v1220, %v1268
  %v1270 = vpop.f32.mrf.mxu0
  %v1271 = vadd.f32 %v1222, %v1270
  %1272 = vmatmul.bf16.gmra.mxu0 %v1037
  %v1273 = vpop.f32.mrf.mxu0
  %v1274 = vadd.f32 %v1225, %v1273
  %v1275 = vpop.f32.mrf.mxu0
  %v1276 = vadd.f32 %v1227, %v1275
  %1277 = vmatmul.bf16.gmra.mxu0 %v1040
  %v1278 = vpop.f32.mrf.mxu0
  %v1279 = vadd.f32 %v1230, %v1278
  %v1280 = vpop.f32.mrf.mxu0
  %v1281 = vadd.f32 %v1232, %v1280
  %1282 = vmatmul.bf16.gmra.mxu0 %v1043
  %v1283 = vpop.f32.mrf.mxu0
  %v1284 = vadd.f32 %v1235, %v1283
  %v1285 = vpop.f32.mrf.mxu0
  %v1286 = vadd.f32 %v1237, %v1285
  %1287 = vmatmul.bf16.gmra.mxu0 %v1046
  %v1288 = vpop.f32.mrf.mxu0
  %v1289 = vadd.f32 %v1240, %v1288
  %v1290 = vpop.f32.mrf.mxu0
  %v1291 = vadd.f32 %v1242, %v1290
  %1292 = vdwg.mxu0
  %v1293 = vmul.f32 %v1254, 0.01
  %v1294 = vmul.f32 %v1256, 0.01
  %v1295 = vmul.f32 %v1259, 0.01
  %v1296 = vmul.f32 %v1261, 0.01
  %v1297 = vmul.f32 %v1264, 0.01
  %v1298 = vmul.f32 %v1266, 0.01
  %v1299 = vmul.f32 %v1269, 0.01
  %v1300 = vmul.f32 %v1271, 0.01
  %v1301 = vmul.f32 %v1274, 0.01
  %v1302 = vmul.f32 %v1276, 0.01
  %v1303 = vmul.f32 %v1279, 0.01
  %v1304 = vmul.f32 %v1281, 0.01
  %v1305 = vmul.f32 %v1284, 0.01
  %v1306 = vmul.f32 %v1286, 0.01
  %v1307 = vmul.f32 %v1289, 0.01
  %v1308 = vmul.f32 %v1291, 0.01
  %v1309 = vmax.f32 %v1254, %v1293
  %v1310 = vmax.f32 %v1256, %v1294
  %v1311 = vmax.f32 %v1259, %v1295
  %v1312 = vmax.f32 %v1261, %v1296
  %v1313 = vmax.f32 %v1264, %v1297
  %v1314 = vmax.f32 %v1266, %v1298
  %v1315 = vmax.f32 %v1269, %v1299
  %v1316 = vmax.f32 %v1271, %v1300
  %v1317 = vmax.f32 %v1274, %v1301
  %v1318 = vmax.f32 %v1276, %v1302
  %v1319 = vmax.f32 %v1279, %v1303
  %v1320 = vmax.f32 %v1281, %v1304
  %v1321 = vmax.f32 %v1284, %v1305
  %v1322 = vmax.f32 %v1286, %v1306
  %v1323 = vmax.f32 %v1289, %v1307
  %v1324 = vmax.f32 %v1291, %v1308
  %1325 = vst.msk [vmem:[%s7] sm:$0xff] %vm1023, %v1309
  %1326 = vst.msk [vmem:[%s7 + $0x8] sm:$0xff] %vm1023, %v1310
  %1327 = vst.msk [vmem:[%s7 + $0x10] sm:$0xff] %vm1023, %v1311
  %1328 = vst.msk [vmem:[%s7 + $0x18] sm:$0xff] %vm1023, %v1312
  %1329 = vst.msk [vmem:[%s7 + $0x20] sm:$0xff] %vm1023, %v1313
  %1330 = vst.msk [vmem:[%s7 + $0x28] sm:$0xff] %vm1023, %v1314
  %1331 = vst.msk [vmem:[%s7 + $0x30] sm:$0xff] %vm1023, %v1315
  %1332 = vst.msk [vmem:[%s7 + $0x38] sm:$0xff] %vm1023, %v1316
  %1333 = vst.msk [vmem:[%s7 + $0x40] sm:$0xff] %vm1023, %v1317
  %1334 = vst.msk [vmem:[%s7 + $0x48] sm:$0xff] %vm1023, %v1318
  %1335 = vst.msk [vmem:[%s7 + $0x50] sm:$0xff] %vm1023, %v1319
  %1336 = vst.msk [vmem:[%s7 + $0x58] sm:$0xff] %vm1023, %v1320
  %1337 = vst.msk [vmem:[%s7 + $0x60] sm:$0xff] %vm1023, %v1321
  %1338 = vst.msk [vmem:[%s7 + $0x68] sm:$0xff] %vm1023, %v1322
  %1339 = vst.msk [vmem:[%s7 + $0x70] sm:$0xff] %vm1023, %v1323
  %1340 = vst.msk [vmem:[%s7 + $0x78] sm:$0xff] %vm1023, %v1324
  // Predicated region
  $region26: #{grasp_model_forward.13} parent=0 // pred_check
    _
  $region27: #{grasp_model_forward.13} parent=0 // pred_check_branch
    %1342 = sbr.rel (0) target = $region29
  $region28: #{grasp_model_forward.13} parent=0 // pred_region
    _
  $region29: #{grasp_model_forward.13} parent=0 // pred_fallthru
    _
  // Predicated region
  $region30: #{grasp_model_forward.13} parent=0 // pred_check
    _
  $region31: #{grasp_model_forward.13} parent=0 // pred_check_branch
    %1344 = sbr.rel (0) target = $region33
  $region32: #{grasp_model_forward.13} parent=0 // pred_region
    _
  $region33: #{grasp_model_forward.13} parent=0 // pred_fallthru
    _
  // Predicated region
  $region34: #{grasp_model_forward.13} parent=0 // pred_check
    _
  $region35: #{grasp_model_forward.13} parent=0 // pred_check_branch
    %1346 = sbr.rel (0) target = $region37
  $region36: #{grasp_model_forward.13} parent=0 // pred_region
    _
  $region37: #{grasp_model_forward.13} parent=0 // pred_fallthru
    _
  // Predicated region
  $region38: #{grasp_model_forward.13} parent=0 // pred_check
    _
  $region39: #{grasp_model_forward.13} parent=0 // pred_check_branch
    %1348 = sbr.rel (0) target = $region41
  $region40: #{grasp_model_forward.13} parent=0 // pred_region
    _
  $region41: #{grasp_model_forward.13} parent=0 // pred_fallthru
    _

// kernel: grasp_model_forward.14
$region0: #{grasp_model_forward.14}
  #allocation0 [shape = 'u32[]', space=smem, size = 0x4, offset = 0x4, fixed_abs, tag = 'smem constant byte address 0x4 - core index']
  #allocation1 [shape = 'u32[72,128]{1,0:T(1,128)}', space=vmem, size = 0x9000, scoped, tag = 'internal scratch']
  %s0 = inlined_call_operand.vmem [shape: f32[72,432], index: 0, kind: input, shape index: {}]
  %s1 = inlined_call_operand.vmem [shape: bf16[432,64], index: 1, kind: input, shape index: {}]
  %s2 = inlined_call_operand.vmem [shape: f32[1,64], index: 2, kind: input, shape index: {}]
  %s3 = inlined_call_operand.vmem [shape: f32[72,576], index: 3, kind: input, shape index: {}]
  %s4 = inlined_call_operand.vmem [shape: bf16[576,96], index: 4, kind: input, shape index: {}]
  %s5 = inlined_call_operand.vmem [shape: f32[1,96], index: 5, kind: input, shape index: {}]
  %s6 = inlined_call_operand.vmem [shape: f32[72,64], index: 6, kind: output, shape index: {0}]
  %s7 = inlined_call_operand.vmem [shape: f32[72,96], index: 7, kind: output, shape index: {1}]
  %8 = xla_tuple %s6, %s7
  %s9 = sld [smem:[#allocation0]]
  $region42: #{grasp_model_forward.14} parent=0
    _
  %s11 = ssub.s32 1, %s9
  %s12 = scalar_select 0, %s11, %s9
  // Predicated region
  $region2: #{grasp_model_forward.14} parent=0 // pred_check
    _
  $region3: #{grasp_model_forward.14} parent=0 // pred_check_branch
    %14 = sbr.rel (0) target = $region5
  $region4: #{grasp_model_forward.14} parent=0 // pred_region
    _
  $region5: #{grasp_model_forward.14} parent=0 // pred_fallthru
    _
  // Predicated region
  $region6: #{grasp_model_forward.14} parent=0 // pred_check
    _
  $region7: #{grasp_model_forward.14} parent=0 // pred_check_branch
    %16 = sbr.rel (0) target = $region9
  $region8: #{grasp_model_forward.14} parent=0 // pred_region
    _
  $region9: #{grasp_model_forward.14} parent=0 // pred_fallthru
    _
  // Predicated region
  $region10: #{grasp_model_forward.14} parent=0 // pred_check
    _
  $region11: #{grasp_model_forward.14} parent=0 // pred_check_branch
    %18 = sbr.rel (0) target = $region13
  $region12: #{grasp_model_forward.14} parent=0 // pred_region
    _
  $region13: #{grasp_model_forward.14} parent=0 // pred_fallthru
    _
  // Predicated region
  $region14: #{grasp_model_forward.14} parent=0 // pred_check
    _
  $region15: #{grasp_model_forward.14} parent=0 // pred_check_branch
    %20 = sbr.rel (0) target = $region17
  $region16: #{grasp_model_forward.14} parent=0 // pred_region
    _
  $region17: #{grasp_model_forward.14} parent=0 // pred_fallthru
    _
  // Predicated region
  $region18: #{grasp_model_forward.14} parent=0 // pred_check
    _
  $region19: #{grasp_model_forward.14} parent=0 // pred_check_branch
    %22 = sbr.rel (0) target = $region21
  $region20: #{grasp_model_forward.14} parent=0 // pred_region
    _
  $region21: #{grasp_model_forward.14} parent=0 // pred_fallthru
    _
  // Predicated region
  $region22: #{grasp_model_forward.14} parent=0 // pred_check
    _
  $region23: #{grasp_model_forward.14} parent=0 // pred_check_branch
    %24 = sbr.rel (0) target = $region25
  $region24: #{grasp_model_forward.14} parent=0 // pred_region
    _
  $region25: #{grasp_model_forward.14} parent=0 // pred_fallthru
    _
  %v26 = vld [vmem:[%s0] sm:$0xff]
  %v27 = vld [vmem:[%s0 + $0x8] sm:$0xff]
  %v28 = vld [vmem:[%s0 + $0x10] sm:$0xff]
  %v29 = vld [vmem:[%s0 + $0x18] sm:$0xff]
  %v30 = vld [vmem:[%s0 + $0x20] sm:$0xff]
  %v31 = vld [vmem:[%s0 + $0x28] sm:$0xff]
  %v32 = vld [vmem:[%s0 + $0x30] sm:$0xff]
  %v33 = vld [vmem:[%s0 + $0x38] sm:$0xff]
  %v34 = vld [vmem:[%s0 + $0x40] sm:$0xff]
  %v35 = vld [vmem:[%s0 + $0x48] sm:$0xff]
  %v36 = vld [vmem:[%s0 + $0x50] sm:$0xff]
  %v37 = vld [vmem:[%s0 + $0x58] sm:$0xff]
  %v38 = vld [vmem:[%s0 + $0x60] sm:$0xff]
  %v39 = vld [vmem:[%s0 + $0x68] sm:$0xff]
  %v40 = vld [vmem:[%s0 + $0x70] sm:$0xff]
  %v41 = vld [vmem:[%s0 + $0x78] sm:$0xff]
  %v42 = vld [vmem:[%s0 + $0x80] sm:$0xff]
  %v43 = vld [vmem:[%s0 + $0x88] sm:$0xff]
  %v44 = vld [vmem:[%s0 + $0x90] sm:$0xff]
  %v45 = vld [vmem:[%s0 + $0x98] sm:$0xff]
  %v46 = vld [vmem:[%s0 + $0xa0] sm:$0xff]
  %v47 = vld [vmem:[%s0 + $0xa8] sm:$0xff]
  %v48 = vld [vmem:[%s0 + $0xb0] sm:$0xff]
  %v49 = vld [vmem:[%s0 + $0xb8] sm:$0xff]
  %v50 = vld [vmem:[%s0 + $0xc0] sm:$0xff]
  %v51 = vld [vmem:[%s0 + $0xc8] sm:$0xff]
  %v52 = vld [vmem:[%s0 + $0xd0] sm:$0xff]
  %v53 = vld [vmem:[%s0 + $0xd8] sm:$0xff]
  %v54 = vld [vmem:[%s0 + $0xe0] sm:$0xff]
  %v55 = vld [vmem:[%s0 + $0xe8] sm:$0xff]
  %v56 = vld [vmem:[%s0 + $0xf0] sm:$0xff]
  %v57 = vld [vmem:[%s0 + $0xf8] sm:$0xff]
  %v58 = vld [vmem:[%s0 + $0x100] sm:$0xff]
  %v59 = vld [vmem:[%s0 + $0x108] sm:$0xff]
  %v60 = vld [vmem:[%s0 + $0x110] sm:$0xff]
  %v61 = vld [vmem:[%s0 + $0x118] sm:$0xff]
  %v62 = vpack.c.bf16 %v30, %v26
  %v63 = vpack.c.bf16 %v31, %v27
  %v64 = vpack.c.bf16 %v32, %v28
  %v65 = vpack.c.bf16 %v33, %v29
  %v66 = vpack.c.bf16 %v38, %v34
  %v67 = vpack.c.bf16 %v39, %v35
  %v68 = vpack.c.bf16 %v40, %v36
  %v69 = vpack.c.bf16 %v41, %v37
  %v70 = vpack.c.bf16 %v46, %v42
  %v71 = vpack.c.bf16 %v47, %v43
  %v72 = vpack.c.bf16 %v48, %v44
  %v73 = vpack.c.bf16 %v49, %v45
  %v74 = vpack.c.bf16 %v54, %v50
  %v75 = vpack.c.bf16 %v55, %v51
  %v76 = vpack.c.bf16 %v56, %v52
  %v77 = vpack.c.bf16 %v57, %v53
  %v78 = vpack.c.bf16 %v58, %v58
  %v79 = vpack.c.bf16 %v59, %v59
  %v80 = vpack.c.bf16 %v60, %v60
  %v81 = vpack.c.bf16 %v61, %v61
  %v82 = vld [vmem:[%s1] sm:$0xf]
  %v83 = vld [vmem:[%s1 + $0x4] sm:$0xf]
  %v84 = vld [vmem:[%s1 + $0x8] sm:$0xf]
  %v85 = vld [vmem:[%s1 + $0xc] sm:$0xf]
  %v86 = vld [vmem:[%s1 + $0x10] sm:$0xf]
  %v87 = vld [vmem:[%s1 + $0x14] sm:$0xf]
  %v88 = vld [vmem:[%s1 + $0x18] sm:$0xf]
  %v89 = vld [vmem:[%s1 + $0x1c] sm:$0xf]
  %v90 = vld [vmem:[%s1 + $0x20] sm:$0xf]
  %v91 = vld [vmem:[%s1 + $0x24] sm:$0xf]
  %v92 = vld [vmem:[%s1 + $0x28] sm:$0xf]
  %v93 = vld [vmem:[%s1 + $0x2c] sm:$0xf]
  %v94 = vld [vmem:[%s1 + $0x30] sm:$0xf]
  %v95 = vld [vmem:[%s1 + $0x34] sm:$0xf]
  %v96 = vld [vmem:[%s1 + $0x38] sm:$0xf]
  %v97 = vld [vmem:[%s1 + $0x3c] sm:$0xf]
  %v98 = vld [vmem:[%s1 + $0x40] sm:$0xf]
  %v99 = vld [vmem:[%s1 + $0x44] sm:$0xf]
  %v100 = vld [vmem:[%s1 + $0x48] sm:$0xf]
  %v101 = vld [vmem:[%s1 + $0x4c] sm:$0xf]
  %v102 = vld [vmem:[%s1 + $0x50] sm:$0xf]
  %v103 = vld [vmem:[%s1 + $0x54] sm:$0xf]
  %v104 = vld [vmem:[%s1 + $0x58] sm:$0xf]
  %v105 = vld [vmem:[%s1 + $0x5c] sm:$0xf]
  %v106 = vld [vmem:[%s1 + $0x60] sm:$0xf]
  %v107 = vld [vmem:[%s1 + $0x64] sm:$0xf]
  %v108 = vld [vmem:[%s1 + $0x68] sm:$0xf]
  %v109 = vld [vmem:[%s1 + $0x6c] sm:$0xf]
  %v110 = vld [vmem:[%s1 + $0x70] sm:$0xf]
  %v111 = vld [vmem:[%s1 + $0x74] sm:$0xf]
  %v112 = vld [vmem:[%s1 + $0x78] sm:$0xf]
  %v113 = vld [vmem:[%s1 + $0x7c] sm:$0xf]
  %v114 = vld [vmem:[%s1 + $0x80] sm:$0xf]
  %v115 = vld [vmem:[%s1 + $0x84] sm:$0xf]
  %v116 = vld [vmem:[%s1 + $0x88] sm:$0xf]
  %v117 = vld [vmem:[%s1 + $0x8c] sm:$0xf]
  %v118 = vld [vmem:[%s1 + $0x90] sm:$0xf]
  %v119 = vld [vmem:[%s1 + $0x94] sm:$0xf]
  %v120 = vld [vmem:[%s1 + $0x98] sm:$0xf]
  %v121 = vld [vmem:[%s1 + $0x9c] sm:$0xf]
  %v122 = vld [vmem:[%s1 + $0xa0] sm:$0xf]
  %v123 = vld [vmem:[%s1 + $0xa4] sm:$0xf]
  %v124 = vld [vmem:[%s1 + $0xa8] sm:$0xf]
  %v125 = vld [vmem:[%s1 + $0xac] sm:$0xf]
  %v126 = vld [vmem:[%s1 + $0xb0] sm:$0xf]
  %v127 = vld [vmem:[%s1 + $0xb4] sm:$0xf]
  %v128 = vld [vmem:[%s1 + $0xb8] sm:$0xf]
  %v129 = vld [vmem:[%s1 + $0xbc] sm:$0xf]
  %v130 = vld [vmem:[%s1 + $0xc0] sm:$0xf]
  %v131 = vld [vmem:[%s1 + $0xc4] sm:$0xf]
  %v132 = vld [vmem:[%s1 + $0xc8] sm:$0xf]
  %v133 = vld [vmem:[%s1 + $0xcc] sm:$0xf]
  %v134 = vld [vmem:[%s1 + $0xd0] sm:$0xf]
  %v135 = vld [vmem:[%s1 + $0xd4] sm:$0xf]
  %v136 = vld [vmem:[%s2] sm:$0x1]
  %v138 = vperm.slane %v136, 0
  %v194 = vunpack.c.l.b16 %v82
  %v195 = vunpack.c.l.b16 %v83
  %v196 = vunpack.c.l.b16 %v84
  %v197 = vunpack.c.l.b16 %v85
  %v198 = vunpack.c.l.b16 %v86
  %v199 = vunpack.c.l.b16 %v87
  %v200 = vunpack.c.l.b16 %v88
  %v201 = vunpack.c.l.b16 %v89
  %v202 = vunpack.c.l.b16 %v90
  %v203 = vunpack.c.l.b16 %v91
  %v204 = vunpack.c.l.b16 %v92
  %v205 = vunpack.c.l.b16 %v93
  %v206 = vunpack.c.l.b16 %v94
  %v207 = vunpack.c.l.b16 %v95
  %v208 = vunpack.c.l.b16 %v96
  %v209 = vunpack.c.l.b16 %v97
  %v210 = vunpack.c.l.b16 %v98
  %v211 = vunpack.c.l.b16 %v99
  %v212 = vunpack.c.l.b16 %v100
  %v213 = vunpack.c.l.b16 %v101
  %v214 = vunpack.c.l.b16 %v102
  %v215 = vunpack.c.l.b16 %v103
  %v216 = vunpack.c.l.b16 %v104
  %v217 = vunpack.c.l.b16 %v105
  %v218 = vunpack.c.l.b16 %v106
  %v219 = vunpack.c.l.b16 %v107
  %v220 = vunpack.c.l.b16 %v108
  %v221 = vunpack.c.l.b16 %v109
  %v222 = vunpack.c.l.b16 %v110
  %v223 = vunpack.c.l.b16 %v111
  %v224 = vunpack.c.l.b16 %v112
  %v225 = vunpack.c.l.b16 %v113
  %v226 = vunpack.c.l.b16 %v114
  %v227 = vunpack.c.l.b16 %v115
  %v228 = vunpack.c.l.b16 %v116
  %v229 = vunpack.c.l.b16 %v117
  %v230 = vunpack.c.l.b16 %v118
  %v231 = vunpack.c.l.b16 %v119
  %v232 = vunpack.c.l.b16 %v120
  %v233 = vunpack.c.l.b16 %v121
  %v234 = vunpack.c.l.b16 %v122
  %v235 = vunpack.c.l.b16 %v123
  %v236 = vunpack.c.l.b16 %v124
  %v237 = vunpack.c.l.b16 %v125
  %v238 = vunpack.c.l.b16 %v126
  %v239 = vunpack.c.l.b16 %v127
  %v240 = vunpack.c.l.b16 %v128
  %v241 = vunpack.c.l.b16 %v129
  %v242 = vunpack.c.l.b16 %v130
  %v243 = vunpack.c.l.b16 %v131
  %v244 = vunpack.c.l.b16 %v132
  %v245 = vunpack.c.l.b16 %v133
  %v246 = vunpack.c.l.b16 %v134
  %v247 = vunpack.c.l.b16 %v135
  %v248 = vpack.c.b16 %v195, %v194
  %v249 = vpack.c.b16 %v197, %v196
  %v250 = vpack.c.b16 %v199, %v198
  %v251 = vpack.c.b16 %v201, %v200
  %v252 = vpack.c.b16 %v203, %v202
  %v253 = vpack.c.b16 %v205, %v204
  %v254 = vpack.c.b16 %v207, %v206
  %v255 = vpack.c.b16 %v209, %v208
  %v256 = vpack.c.b16 %v211, %v210
  %v257 = vpack.c.b16 %v213, %v212
  %v258 = vpack.c.b16 %v215, %v214
  %v259 = vpack.c.b16 %v217, %v216
  %v260 = vpack.c.b16 %v219, %v218
  %v261 = vpack.c.b16 %v221, %v220
  %v262 = vpack.c.b16 %v223, %v222
  %v263 = vpack.c.b16 %v225, %v224
  %v264 = vpack.c.b16 %v227, %v226
  %v265 = vpack.c.b16 %v229, %v228
  %v266 = vpack.c.b16 %v231, %v230
  %v267 = vpack.c.b16 %v233, %v232
  %v268 = vpack.c.b16 %v235, %v234
  %v269 = vpack.c.b16 %v237, %v236
  %v270 = vpack.c.b16 %v239, %v238
  %v271 = vpack.c.b16 %v241, %v240
  %v272 = vpack.c.b16 %v243, %v242
  %v273 = vpack.c.b16 %v245, %v244
  %v274 = vpack.c.b16 %v247, %v246
  %vm302 = vcmask 392192
  %v304 = vsel %vm302, %v65, 0
  %v307 = vsel %vm302, %v69, 0
  %v310 = vsel %vm302, %v73, 0
  %v313 = vsel %vm302, %v77, 0
  %v316 = vsel %vm302, %v81, 0
  %318 = vmatpush.bf16.msra.mxu0 %v255
  %319 = vmatpush.bf16.msra.mxu0 %v254
  %320 = vmatpush.bf16.msra.mxu0 %v253
  %321 = vmatpush.bf16.msra.mxu0 %v252
  %322 = vmatpush.bf16.msra.mxu0 %v251
  %323 = vmatpush.bf16.msra.mxu0 %v250
  %324 = vmatpush.bf16.msra.mxu0 %v249
  %325 = vmatpush.bf16.msra.mxu0 %v248
  %326 = vmatmul.bf16.gmra.mxu0 %v62
  %v327 = vpop.f32.mrf.mxu0
  %v328 = vadd.f32 %v138, %v327
  %v329 = vpop.f32.mrf.mxu0
  %v330 = vadd.f32 %v138, %v329
  %331 = vmatmul.bf16.gmra.mxu0 %v66
  %v332 = vpop.f32.mrf.mxu0
  %v333 = vadd.f32 %v138, %v332
  %v334 = vpop.f32.mrf.mxu0
  %v335 = vadd.f32 %v138, %v334
  %336 = vmatmul.bf16.gmra.mxu0 %v70
  %v337 = vpop.f32.mrf.mxu0
  %v338 = vadd.f32 %v138, %v337
  %v339 = vpop.f32.mrf.mxu0
  %v340 = vadd.f32 %v138, %v339
  %341 = vmatmul.bf16.gmra.mxu0 %v74
  %v342 = vpop.f32.mrf.mxu0
  %v343 = vadd.f32 %v138, %v342
  %v344 = vpop.f32.mrf.mxu0
  %v345 = vadd.f32 %v138, %v344
  %346 = vmatmul.bf16.gmra.mxu0 %v78
  %v347 = vpop.f32.mrf.mxu0
  %v348 = vadd.f32 %v138, %v347
  %v349 = vpop.f32.mrf.mxu0
  %350 = vdwg.mxu0
  %351 = vmatpush.bf16.msra.mxu0 %v263
  %352 = vmatpush.bf16.msra.mxu0 %v262
  %353 = vmatpush.bf16.msra.mxu0 %v261
  %354 = vmatpush.bf16.msra.mxu0 %v260
  %355 = vmatpush.bf16.msra.mxu0 %v259
  %356 = vmatpush.bf16.msra.mxu0 %v258
  %357 = vmatpush.bf16.msra.mxu0 %v257
  %358 = vmatpush.bf16.msra.mxu0 %v256
  %359 = vmatmul.bf16.gmra.mxu0 %v63
  %v360 = vpop.f32.mrf.mxu0
  %v361 = vadd.f32 %v328, %v360
  %v362 = vpop.f32.mrf.mxu0
  %v363 = vadd.f32 %v330, %v362
  %364 = vmatmul.bf16.gmra.mxu0 %v67
  %v365 = vpop.f32.mrf.mxu0
  %v366 = vadd.f32 %v333, %v365
  %v367 = vpop.f32.mrf.mxu0
  %v368 = vadd.f32 %v335, %v367
  %369 = vmatmul.bf16.gmra.mxu0 %v71
  %v370 = vpop.f32.mrf.mxu0
  %v371 = vadd.f32 %v338, %v370
  %v372 = vpop.f32.mrf.mxu0
  %v373 = vadd.f32 %v340, %v372
  %374 = vmatmul.bf16.gmra.mxu0 %v75
  %v375 = vpop.f32.mrf.mxu0
  %v376 = vadd.f32 %v343, %v375
  %v377 = vpop.f32.mrf.mxu0
  %v378 = vadd.f32 %v345, %v377
  %379 = vmatmul.bf16.gmra.mxu0 %v79
  %v380 = vpop.f32.mrf.mxu0
  %v381 = vadd.f32 %v348, %v380
  %v382 = vpop.f32.mrf.mxu0
  %383 = vdwg.mxu0
  %384 = vmatpush.bf16.msra.mxu0 %v271
  %385 = vmatpush.bf16.msra.mxu0 %v270
  %386 = vmatpush.bf16.msra.mxu0 %v269
  %387 = vmatpush.bf16.msra.mxu0 %v268
  %388 = vmatpush.bf16.msra.mxu0 %v267
  %389 = vmatpush.bf16.msra.mxu0 %v266
  %390 = vmatpush.bf16.msra.mxu0 %v265
  %391 = vmatpush.bf16.msra.mxu0 %v264
  %392 = vmatmul.bf16.gmra.mxu0 %v64
  %v393 = vpop.f32.mrf.mxu0
  %v394 = vadd.f32 %v361, %v393
  %v395 = vpop.f32.mrf.mxu0
  %v396 = vadd.f32 %v363, %v395
  %397 = vmatmul.bf16.gmra.mxu0 %v68
  %v398 = vpop.f32.mrf.mxu0
  %v399 = vadd.f32 %v366, %v398
  %v400 = vpop.f32.mrf.mxu0
  %v401 = vadd.f32 %v368, %v400
  %402 = vmatmul.bf16.gmra.mxu0 %v72
  %v403 = vpop.f32.mrf.mxu0
  %v404 = vadd.f32 %v371, %v403
  %v405 = vpop.f32.mrf.mxu0
  %v406 = vadd.f32 %v373, %v405
  %407 = vmatmul.bf16.gmra.mxu0 %v76
  %v408 = vpop.f32.mrf.mxu0
  %v409 = vadd.f32 %v376, %v408
  %v410 = vpop.f32.mrf.mxu0
  %v411 = vadd.f32 %v378, %v410
  %412 = vmatmul.bf16.gmra.mxu0 %v80
  %v413 = vpop.f32.mrf.mxu0
  %v414 = vadd.f32 %v381, %v413
  %v415 = vpop.f32.mrf.mxu0
  %416 = vdwg.mxu0
  %417 = vmatpush.bf16.msra.mxu0 0
  %418 = vmatpush.bf16.msra.mxu0 0
  %419 = vmatpush.bf16.msra.mxu0 0
  %420 = vmatpush.bf16.msra.mxu0 0
  %421 = vmatpush.bf16.msra.mxu0 0
  %422 = vmatpush.bf16.msra.mxu0 %v274
  %423 = vmatpush.bf16.msra.mxu0 %v273
  %424 = vmatpush.bf16.msra.mxu0 %v272
  %425 = vmatmul.bf16.gmra.mxu0 %v304
  %v426 = vpop.f32.mrf.mxu0
  %v427 = vadd.f32 %v394, %v426
  %v428 = vpop.f32.mrf.mxu0
  %v429 = vadd.f32 %v396, %v428
  %430 = vmatmul.bf16.gmra.mxu0 %v307
  %v431 = vpop.f32.mrf.mxu0
  %v432 = vadd.f32 %v399, %v431
  %v433 = vpop.f32.mrf.mxu0
  %v434 = vadd.f32 %v401, %v433
  %435 = vmatmul.bf16.gmra.mxu0 %v310
  %v436 = vpop.f32.mrf.mxu0
  %v437 = vadd.f32 %v404, %v436
  %v438 = vpop.f32.mrf.mxu0
  %v439 = vadd.f32 %v406, %v438
  %440 = vmatmul.bf16.gmra.mxu0 %v313
  %v441 = vpop.f32.mrf.mxu0
  %v442 = vadd.f32 %v409, %v441
  %v443 = vpop.f32.mrf.mxu0
  %v444 = vadd.f32 %v411, %v443
  %445 = vmatmul.bf16.gmra.mxu0 %v316
  %v446 = vpop.f32.mrf.mxu0
  %v447 = vadd.f32 %v414, %v446
  %v448 = vpop.f32.mrf.mxu0
  %449 = vdwg.mxu0
  %v450 = vmul.f32 %v427, 0.01
  %v451 = vmul.f32 %v429, 0.01
  %v452 = vmul.f32 %v432, 0.01
  %v453 = vmul.f32 %v434, 0.01
  %v454 = vmul.f32 %v437, 0.01
  %v455 = vmul.f32 %v439, 0.01
  %v456 = vmul.f32 %v442, 0.01
  %v457 = vmul.f32 %v444, 0.01
  %v458 = vmul.f32 %v447, 0.01
  %v459 = vmax.f32 %v427, %v450
  %v460 = vmax.f32 %v429, %v451
  %v461 = vmax.f32 %v432, %v452
  %v462 = vmax.f32 %v434, %v453
  %v463 = vmax.f32 %v437, %v454
  %v464 = vmax.f32 %v439, %v455
  %v465 = vmax.f32 %v442, %v456
  %v466 = vmax.f32 %v444, %v457
  %v467 = vmax.f32 %v447, %v458
  %vm468 = vcmask 523264
  %469 = vst.msk [vmem:[%s6] sm:$0xff] %vm468, %v459
  %470 = vst.msk [vmem:[%s6 + $0x8] sm:$0xff] %vm468, %v460
  %471 = vst.msk [vmem:[%s6 + $0x10] sm:$0xff] %vm468, %v461
  %472 = vst.msk [vmem:[%s6 + $0x18] sm:$0xff] %vm468, %v462
  %473 = vst.msk [vmem:[%s6 + $0x20] sm:$0xff] %vm468, %v463
  %474 = vst.msk [vmem:[%s6 + $0x28] sm:$0xff] %vm468, %v464
  %475 = vst.msk [vmem:[%s6 + $0x30] sm:$0xff] %vm468, %v465
  %476 = vst.msk [vmem:[%s6 + $0x38] sm:$0xff] %vm468, %v466
  %477 = vst.msk [vmem:[%s6 + $0x40] sm:$0xff] %vm468, %v467
  %v478 = vld [vmem:[%s3] sm:$0xff]
  %v479 = vld [vmem:[%s3 + $0x8] sm:$0xff]
  %v480 = vld [vmem:[%s3 + $0x10] sm:$0xff]
  %v481 = vld [vmem:[%s3 + $0x18] sm:$0xff]
  %v482 = vld [vmem:[%s3 + $0x20] sm:$0xff]
  %v483 = vld [vmem:[%s3 + $0x28] sm:$0xff]
  %v484 = vld [vmem:[%s3 + $0x30] sm:$0xff]
  %v485 = vld [vmem:[%s3 + $0x38] sm:$0xff]
  %v486 = vld [vmem:[%s3 + $0x40] sm:$0xff]
  %v487 = vld [vmem:[%s3 + $0x48] sm:$0xff]
  %v488 = vld [vmem:[%s3 + $0x50] sm:$0xff]
  %v489 = vld [vmem:[%s3 + $0x58] sm:$0xff]
  %v490 = vld [vmem:[%s3 + $0x60] sm:$0xff]
  %v491 = vld [vmem:[%s3 + $0x68] sm:$0xff]
  %v492 = vld [vmem:[%s3 + $0x70] sm:$0xff]
  %v493 = vld [vmem:[%s3 + $0x78] sm:$0xff]
  %v494 = vld [vmem:[%s3 + $0x80] sm:$0xff]
  %v495 = vld [vmem:[%s3 + $0x88] sm:$0xff]
  %v496 = vld [vmem:[%s3 + $0x90] sm:$0xff]
  %v497 = vld [vmem:[%s3 + $0x98] sm:$0xff]
  %v498 = vld [vmem:[%s3 + $0xa0] sm:$0xff]
  %v499 = vld [vmem:[%s3 + $0xa8] sm:$0xff]
  %v500 = vld [vmem:[%s3 + $0xb0] sm:$0xff]
  %v501 = vld [vmem:[%s3 + $0xb8] sm:$0xff]
  %v502 = vld [vmem:[%s3 + $0xc0] sm:$0xff]
  %v503 = vld [vmem:[%s3 + $0xc8] sm:$0xff]
  %v504 = vld [vmem:[%s3 + $0xd0] sm:$0xff]
  %v505 = vld [vmem:[%s3 + $0xd8] sm:$0xff]
  %v506 = vld [vmem:[%s3 + $0xe0] sm:$0xff]
  %v507 = vld [vmem:[%s3 + $0xe8] sm:$0xff]
  %v508 = vld [vmem:[%s3 + $0xf0] sm:$0xff]
  %v509 = vld [vmem:[%s3 + $0xf8] sm:$0xff]
  %v510 = vld [vmem:[%s3 + $0x100] sm:$0xff]
  %v511 = vld [vmem:[%s3 + $0x108] sm:$0xff]
  %v512 = vld [vmem:[%s3 + $0x110] sm:$0xff]
  %v513 = vld [vmem:[%s3 + $0x118] sm:$0xff]
  %v514 = vld [vmem:[%s3 + $0x120] sm:$0xff]
  %v515 = vld [vmem:[%s3 + $0x128] sm:$0xff]
  %v516 = vld [vmem:[%s3 + $0x130] sm:$0xff]
  %v517 = vld [vmem:[%s3 + $0x138] sm:$0xff]
  %v518 = vld [vmem:[%s3 + $0x140] sm:$0xff]
  %v519 = vld [vmem:[%s3 + $0x148] sm:$0xff]
  %v520 = vld [vmem:[%s3 + $0x150] sm:$0xff]
  %v521 = vld [vmem:[%s3 + $0x158] sm:$0xff]
  %v522 = vld [vmem:[%s3 + $0x160] sm:$0xff]
  %v523 = vpack.c.bf16 %v483, %v478
  %v524 = vpack.c.bf16 %v484, %v479
  %v525 = vpack.c.bf16 %v485, %v480
  %v526 = vpack.c.bf16 %v486, %v481
  %v527 = vpack.c.bf16 %v487, %v482
  %v528 = vpack.c.bf16 %v493, %v488
  %v529 = vpack.c.bf16 %v494, %v489
  %v530 = vpack.c.bf16 %v495, %v490
  %v531 = vpack.c.bf16 %v496, %v491
  %v532 = vpack.c.bf16 %v497, %v492
  %v533 = vpack.c.bf16 %v503, %v498
  %v534 = vpack.c.bf16 %v504, %v499
  %v535 = vpack.c.bf16 %v505, %v500
  %v536 = vpack.c.bf16 %v506, %v501
  %v537 = vpack.c.bf16 %v507, %v502
  %v538 = vpack.c.bf16 %v513, %v508
  %v539 = vpack.c.bf16 %v514, %v509
  %v540 = vpack.c.bf16 %v515, %v510
  %v541 = vpack.c.bf16 %v516, %v511
  %v542 = vpack.c.bf16 %v517, %v512
  %v543 = vpack.c.bf16 %v518, %v518
  %v544 = vpack.c.bf16 %v519, %v519
  %v545 = vpack.c.bf16 %v520, %v520
  %v546 = vpack.c.bf16 %v521, %v521
  %v547 = vpack.c.bf16 %v522, %v522
  %v548 = vld [vmem:[%s4] sm:$0xf]
  %v549 = vld [vmem:[%s4 + $0x4] sm:$0xf]
  %v550 = vld [vmem:[%s4 + $0x8] sm:$0xf]
  %v551 = vld [vmem:[%s4 + $0xc] sm:$0xf]
  %v552 = vld [vmem:[%s4 + $0x10] sm:$0xf]
  %v553 = vld [vmem:[%s4 + $0x14] sm:$0xf]
  %v554 = vld [vmem:[%s4 + $0x18] sm:$0xf]
  %v555 = vld [vmem:[%s4 + $0x1c] sm:$0xf]
  %v556 = vld [vmem:[%s4 + $0x20] sm:$0xf]
  %v557 = vld [vmem:[%s4 + $0x24] sm:$0xf]
  %v558 = vld [vmem:[%s4 + $0x28] sm:$0xf]
  %v559 = vld [vmem:[%s4 + $0x2c] sm:$0xf]
  %v560 = vld [vmem:[%s4 + $0x30] sm:$0xf]
  %v561 = vld [vmem:[%s4 + $0x34] sm:$0xf]
  %v562 = vld [vmem:[%s4 + $0x38] sm:$0xf]
  %v563 = vld [vmem:[%s4 + $0x3c] sm:$0xf]
  %v564 = vld [vmem:[%s4 + $0x40] sm:$0xf]
  %v565 = vld [vmem:[%s4 + $0x44] sm:$0xf]
  %v566 = vld [vmem:[%s4 + $0x48] sm:$0xf]
  %v567 = vld [vmem:[%s4 + $0x4c] sm:$0xf]
  %v568 = vld [vmem:[%s4 + $0x50] sm:$0xf]
  %v569 = vld [vmem:[%s4 + $0x54] sm:$0xf]
  %v570 = vld [vmem:[%s4 + $0x58] sm:$0xf]
  %v571 = vld [vmem:[%s4 + $0x5c] sm:$0xf]
  %v572 = vld [vmem:[%s4 + $0x60] sm:$0xf]
  %v573 = vld [vmem:[%s4 + $0x64] sm:$0xf]
  %v574 = vld [vmem:[%s4 + $0x68] sm:$0xf]
  %v575 = vld [vmem:[%s4 + $0x6c] sm:$0xf]
  %v576 = vld [vmem:[%s4 + $0x70] sm:$0xf]
  %v577 = vld [vmem:[%s4 + $0x74] sm:$0xf]
  %v578 = vld [vmem:[%s4 + $0x78] sm:$0xf]
  %v579 = vld [vmem:[%s4 + $0x7c] sm:$0xf]
  %v580 = vld [vmem:[%s4 + $0x80] sm:$0xf]
  %v581 = vld [vmem:[%s4 + $0x84] sm:$0xf]
  %v582 = vld [vmem:[%s4 + $0x88] sm:$0xf]
  %v583 = vld [vmem:[%s4 + $0x8c] sm:$0xf]
  %v584 = vld [vmem:[%s4 + $0x90] sm:$0xf]
  %v585 = vld [vmem:[%s4 + $0x94] sm:$0xf]
  %v586 = vld [vmem:[%s4 + $0x98] sm:$0xf]
  %v587 = vld [vmem:[%s4 + $0x9c] sm:$0xf]
  %v588 = vld [vmem:[%s4 + $0xa0] sm:$0xf]
  %v589 = vld [vmem:[%s4 + $0xa4] sm:$0xf]
  %v590 = vld [vmem:[%s4 + $0xa8] sm:$0xf]
  %v591 = vld [vmem:[%s4 + $0xac] sm:$0xf]
  %v592 = vld [vmem:[%s4 + $0xb0] sm:$0xf]
  %v593 = vld [vmem:[%s4 + $0xb4] sm:$0xf]
  %v594 = vld [vmem:[%s4 + $0xb8] sm:$0xf]
  %v595 = vld [vmem:[%s4 + $0xbc] sm:$0xf]
  %v596 = vld [vmem:[%s4 + $0xc0] sm:$0xf]
  %v597 = vld [vmem:[%s4 + $0xc4] sm:$0xf]
  %v598 = vld [vmem:[%s4 + $0xc8] sm:$0xf]
  %v599 = vld [vmem:[%s4 + $0xcc] sm:$0xf]
  %v600 = vld [vmem:[%s4 + $0xd0] sm:$0xf]
  %v601 = vld [vmem:[%s4 + $0xd4] sm:$0xf]
  %v602 = vld [vmem:[%s4 + $0xd8] sm:$0xf]
  %v603 = vld [vmem:[%s4 + $0xdc] sm:$0xf]
  %v604 = vld [vmem:[%s4 + $0xe0] sm:$0xf]
  %v605 = vld [vmem:[%s4 + $0xe4] sm:$0xf]
  %v606 = vld [vmem:[%s4 + $0xe8] sm:$0xf]
  %v607 = vld [vmem:[%s4 + $0xec] sm:$0xf]
  %v608 = vld [vmem:[%s4 + $0xf0] sm:$0xf]
  %v609 = vld [vmem:[%s4 + $0xf4] sm:$0xf]
  %v610 = vld [vmem:[%s4 + $0xf8] sm:$0xf]
  %v611 = vld [vmem:[%s4 + $0xfc] sm:$0xf]
  %v612 = vld [vmem:[%s4 + $0x100] sm:$0xf]
  %v613 = vld [vmem:[%s4 + $0x104] sm:$0xf]
  %v614 = vld [vmem:[%s4 + $0x108] sm:$0xf]
  %v615 = vld [vmem:[%s4 + $0x10c] sm:$0xf]
  %v616 = vld [vmem:[%s4 + $0x110] sm:$0xf]
  %v617 = vld [vmem:[%s4 + $0x114] sm:$0xf]
  %v618 = vld [vmem:[%s4 + $0x118] sm:$0xf]
  %v619 = vld [vmem:[%s4 + $0x11c] sm:$0xf]
  %v620 = vld [vmem:[%s5] sm:$0x1]
  %v622 = vperm.slane %v620, 0
  %v696 = vunpack.c.l.b16 %v548
  %v697 = vunpack.c.l.b16 %v549
  %v698 = vunpack.c.l.b16 %v550
  %v699 = vunpack.c.l.b16 %v551
  %v700 = vunpack.c.l.b16 %v552
  %v701 = vunpack.c.l.b16 %v553
  %v702 = vunpack.c.l.b16 %v554
  %v703 = vunpack.c.l.b16 %v555
  %v704 = vunpack.c.l.b16 %v556
  %v705 = vunpack.c.l.b16 %v557
  %v706 = vunpack.c.l.b16 %v558
  %v707 = vunpack.c.l.b16 %v559
  %v708 = vunpack.c.l.b16 %v560
  %v709 = vunpack.c.l.b16 %v561
  %v710 = vunpack.c.l.b16 %v562
  %v711 = vunpack.c.l.b16 %v563
  %v712 = vunpack.c.l.b16 %v564
  %v713 = vunpack.c.l.b16 %v565
  %v714 = vunpack.c.l.b16 %v566
  %v715 = vunpack.c.l.b16 %v567
  %v716 = vunpack.c.l.b16 %v568
  %v717 = vunpack.c.l.b16 %v569
  %v718 = vunpack.c.l.b16 %v570
  %v719 = vunpack.c.l.b16 %v571
  %v720 = vunpack.c.l.b16 %v572
  %v721 = vunpack.c.l.b16 %v573
  %v722 = vunpack.c.l.b16 %v574
  %v723 = vunpack.c.l.b16 %v575
  %v724 = vunpack.c.l.b16 %v576
  %v725 = vunpack.c.l.b16 %v577
  %v726 = vunpack.c.l.b16 %v578
  %v727 = vunpack.c.l.b16 %v579
  %v728 = vunpack.c.l.b16 %v580
  %v729 = vunpack.c.l.b16 %v581
  %v730 = vunpack.c.l.b16 %v582
  %v731 = vunpack.c.l.b16 %v583
  %v732 = vunpack.c.l.b16 %v584
  %v733 = vunpack.c.l.b16 %v585
  %v734 = vunpack.c.l.b16 %v586
  %v735 = vunpack.c.l.b16 %v587
  %v736 = vunpack.c.l.b16 %v588
  %v737 = vunpack.c.l.b16 %v589
  %v738 = vunpack.c.l.b16 %v590
  %v739 = vunpack.c.l.b16 %v591
  %v740 = vunpack.c.l.b16 %v592
  %v741 = vunpack.c.l.b16 %v593
  %v742 = vunpack.c.l.b16 %v594
  %v743 = vunpack.c.l.b16 %v595
  %v744 = vunpack.c.l.b16 %v596
  %v745 = vunpack.c.l.b16 %v597
  %v746 = vunpack.c.l.b16 %v598
  %v747 = vunpack.c.l.b16 %v599
  %v748 = vunpack.c.l.b16 %v600
  %v749 = vunpack.c.l.b16 %v601
  %v750 = vunpack.c.l.b16 %v602
  %v751 = vunpack.c.l.b16 %v603
  %v752 = vunpack.c.l.b16 %v604
  %v753 = vunpack.c.l.b16 %v605
  %v754 = vunpack.c.l.b16 %v606
  %v755 = vunpack.c.l.b16 %v607
  %v756 = vunpack.c.l.b16 %v608
  %v757 = vunpack.c.l.b16 %v609
  %v758 = vunpack.c.l.b16 %v610
  %v759 = vunpack.c.l.b16 %v611
  %v760 = vunpack.c.l.b16 %v612
  %v761 = vunpack.c.l.b16 %v613
  %v762 = vunpack.c.l.b16 %v614
  %v763 = vunpack.c.l.b16 %v615
  %v764 = vunpack.c.l.b16 %v616
  %v765 = vunpack.c.l.b16 %v617
  %v766 = vunpack.c.l.b16 %v618
  %v767 = vunpack.c.l.b16 %v619
  %v768 = vpack.c.b16 %v697, %v696
  %v769 = vpack.c.b16 %v699, %v698
  %v770 = vpack.c.b16 %v701, %v700
  %v771 = vpack.c.b16 %v703, %v702
  %v772 = vpack.c.b16 %v705, %v704
  %v773 = vpack.c.b16 %v707, %v706
  %v774 = vpack.c.b16 %v709, %v708
  %v775 = vpack.c.b16 %v711, %v710
  %v776 = vpack.c.b16 %v713, %v712
  %v777 = vpack.c.b16 %v715, %v714
  %v778 = vpack.c.b16 %v717, %v716
  %v779 = vpack.c.b16 %v719, %v718
  %v780 = vpack.c.b16 %v721, %v720
  %v781 = vpack.c.b16 %v723, %v722
  %v782 = vpack.c.b16 %v725, %v724
  %v783 = vpack.c.b16 %v727, %v726
  %v784 = vpack.c.b16 %v729, %v728
  %v785 = vpack.c.b16 %v731, %v730
  %v786 = vpack.c.b16 %v733, %v732
  %v787 = vpack.c.b16 %v735, %v734
  %v788 = vpack.c.b16 %v737, %v736
  %v789 = vpack.c.b16 %v739, %v738
  %v790 = vpack.c.b16 %v741, %v740
  %v791 = vpack.c.b16 %v743, %v742
  %v792 = vpack.c.b16 %v745, %v744
  %v793 = vpack.c.b16 %v747, %v746
  %v794 = vpack.c.b16 %v749, %v748
  %v795 = vpack.c.b16 %v751, %v750
  %v796 = vpack.c.b16 %v753, %v752
  %v797 = vpack.c.b16 %v755, %v754
  %v798 = vpack.c.b16 %v757, %v756
  %v799 = vpack.c.b16 %v759, %v758
  %v800 = vpack.c.b16 %v761, %v760
  %v801 = vpack.c.b16 %v763, %v762
  %v802 = vpack.c.b16 %v765, %v764
  %v803 = vpack.c.b16 %v767, %v766
  %v841 = vsel %vm468, %v527, 0
  %v844 = vsel %vm468, %v532, 0
  %v847 = vsel %vm468, %v537, 0
  %v850 = vsel %vm468, %v542, 0
  %v853 = vsel %vm468, %v547, 0
  %855 = vmatpush.bf16.msra.mxu0 %v775
  %856 = vmatpush.bf16.msra.mxu0 %v774
  %857 = vmatpush.bf16.msra.mxu0 %v773
  %858 = vmatpush.bf16.msra.mxu0 %v772
  %859 = vmatpush.bf16.msra.mxu0 %v771
  %860 = vmatpush.bf16.msra.mxu0 %v770
  %861 = vmatpush.bf16.msra.mxu0 %v769
  %862 = vmatpush.bf16.msra.mxu0 %v768
  %863 = vmatmul.bf16.gmra.mxu0 %v523
  %v864 = vpop.f32.mrf.mxu0
  %v865 = vadd.f32 %v622, %v864
  %v866 = vpop.f32.mrf.mxu0
  %v867 = vadd.f32 %v622, %v866
  %868 = vmatmul.bf16.gmra.mxu0 %v528
  %v869 = vpop.f32.mrf.mxu0
  %v870 = vadd.f32 %v622, %v869
  %v871 = vpop.f32.mrf.mxu0
  %v872 = vadd.f32 %v622, %v871
  %873 = vmatmul.bf16.gmra.mxu0 %v533
  %v874 = vpop.f32.mrf.mxu0
  %v875 = vadd.f32 %v622, %v874
  %v876 = vpop.f32.mrf.mxu0
  %v877 = vadd.f32 %v622, %v876
  %878 = vmatmul.bf16.gmra.mxu0 %v538
  %v879 = vpop.f32.mrf.mxu0
  %v880 = vadd.f32 %v622, %v879
  %v881 = vpop.f32.mrf.mxu0
  %v882 = vadd.f32 %v622, %v881
  %883 = vmatmul.bf16.gmra.mxu0 %v543
  %v884 = vpop.f32.mrf.mxu0
  %v885 = vadd.f32 %v622, %v884
  %v886 = vpop.f32.mrf.mxu0
  %887 = vdwg.mxu0
  %888 = vmatpush.bf16.msra.mxu0 %v783
  %889 = vmatpush.bf16.msra.mxu0 %v782
  %890 = vmatpush.bf16.msra.mxu0 %v781
  %891 = vmatpush.bf16.msra.mxu0 %v780
  %892 = vmatpush.bf16.msra.mxu0 %v779
  %893 = vmatpush.bf16.msra.mxu0 %v778
  %894 = vmatpush.bf16.msra.mxu0 %v777
  %895 = vmatpush.bf16.msra.mxu0 %v776
  %896 = vmatmul.bf16.gmra.mxu0 %v524
  %v897 = vpop.f32.mrf.mxu0
  %v898 = vadd.f32 %v865, %v897
  %v899 = vpop.f32.mrf.mxu0
  %v900 = vadd.f32 %v867, %v899
  %901 = vmatmul.bf16.gmra.mxu0 %v529
  %v902 = vpop.f32.mrf.mxu0
  %v903 = vadd.f32 %v870, %v902
  %v904 = vpop.f32.mrf.mxu0
  %v905 = vadd.f32 %v872, %v904
  %906 = vmatmul.bf16.gmra.mxu0 %v534
  %v907 = vpop.f32.mrf.mxu0
  %v908 = vadd.f32 %v875, %v907
  %v909 = vpop.f32.mrf.mxu0
  %v910 = vadd.f32 %v877, %v909
  %911 = vmatmul.bf16.gmra.mxu0 %v539
  %v912 = vpop.f32.mrf.mxu0
  %v913 = vadd.f32 %v880, %v912
  %v914 = vpop.f32.mrf.mxu0
  %v915 = vadd.f32 %v882, %v914
  %916 = vmatmul.bf16.gmra.mxu0 %v544
  %v917 = vpop.f32.mrf.mxu0
  %v918 = vadd.f32 %v885, %v917
  %v919 = vpop.f32.mrf.mxu0
  %920 = vdwg.mxu0
  %921 = vmatpush.bf16.msra.mxu0 %v791
  %922 = vmatpush.bf16.msra.mxu0 %v790
  %923 = vmatpush.bf16.msra.mxu0 %v789
  %924 = vmatpush.bf16.msra.mxu0 %v788
  %925 = vmatpush.bf16.msra.mxu0 %v787
  %926 = vmatpush.bf16.msra.mxu0 %v786
  %927 = vmatpush.bf16.msra.mxu0 %v785
  %928 = vmatpush.bf16.msra.mxu0 %v784
  %929 = vmatmul.bf16.gmra.mxu0 %v525
  %v930 = vpop.f32.mrf.mxu0
  %v931 = vadd.f32 %v898, %v930
  %v932 = vpop.f32.mrf.mxu0
  %v933 = vadd.f32 %v900, %v932
  %934 = vmatmul.bf16.gmra.mxu0 %v530
  %v935 = vpop.f32.mrf.mxu0
  %v936 = vadd.f32 %v903, %v935
  %v937 = vpop.f32.mrf.mxu0
  %v938 = vadd.f32 %v905, %v937
  %939 = vmatmul.bf16.gmra.mxu0 %v535
  %v940 = vpop.f32.mrf.mxu0
  %v941 = vadd.f32 %v908, %v940
  %v942 = vpop.f32.mrf.mxu0
  %v943 = vadd.f32 %v910, %v942
  %944 = vmatmul.bf16.gmra.mxu0 %v540
  %v945 = vpop.f32.mrf.mxu0
  %v946 = vadd.f32 %v913, %v945
  %v947 = vpop.f32.mrf.mxu0
  %v948 = vadd.f32 %v915, %v947
  %949 = vmatmul.bf16.gmra.mxu0 %v545
  %v950 = vpop.f32.mrf.mxu0
  %v951 = vadd.f32 %v918, %v950
  %v952 = vpop.f32.mrf.mxu0
  %953 = vdwg.mxu0
  %954 = vmatpush.bf16.msra.mxu0 %v799
  %955 = vmatpush.bf16.msra.mxu0 %v798
  %956 = vmatpush.bf16.msra.mxu0 %v797
  %957 = vmatpush.bf16.msra.mxu0 %v796
  %958 = vmatpush.bf16.msra.mxu0 %v795
  %959 = vmatpush.bf16.msra.mxu0 %v794
  %960 = vmatpush.bf16.msra.mxu0 %v793
  %961 = vmatpush.bf16.msra.mxu0 %v792
  %962 = vmatmul.bf16.gmra.mxu0 %v526
  %v963 = vpop.f32.mrf.mxu0
  %v964 = vadd.f32 %v931, %v963
  %v965 = vpop.f32.mrf.mxu0
  %v966 = vadd.f32 %v933, %v965
  %967 = vmatmul.bf16.gmra.mxu0 %v531
  %v968 = vpop.f32.mrf.mxu0
  %v969 = vadd.f32 %v936, %v968
  %v970 = vpop.f32.mrf.mxu0
  %v971 = vadd.f32 %v938, %v970
  %972 = vmatmul.bf16.gmra.mxu0 %v536
  %v973 = vpop.f32.mrf.mxu0
  %v974 = vadd.f32 %v941, %v973
  %v975 = vpop.f32.mrf.mxu0
  %v976 = vadd.f32 %v943, %v975
  %977 = vmatmul.bf16.gmra.mxu0 %v541
  %v978 = vpop.f32.mrf.mxu0
  %v979 = vadd.f32 %v946, %v978
  %v980 = vpop.f32.mrf.mxu0
  %v981 = vadd.f32 %v948, %v980
  %982 = vmatmul.bf16.gmra.mxu0 %v546
  %v983 = vpop.f32.mrf.mxu0
  %v984 = vadd.f32 %v951, %v983
  %v985 = vpop.f32.mrf.mxu0
  %986 = vdwg.mxu0
  %987 = vmatpush.bf16.msra.mxu0 0
  %988 = vmatpush.bf16.msra.mxu0 0
  %989 = vmatpush.bf16.msra.mxu0 0
  %990 = vmatpush.bf16.msra.mxu0 0
  %991 = vmatpush.bf16.msra.mxu0 %v803
  %992 = vmatpush.bf16.msra.mxu0 %v802
  %993 = vmatpush.bf16.msra.mxu0 %v801
  %994 = vmatpush.bf16.msra.mxu0 %v800
  %995 = vmatmul.bf16.gmra.mxu0 %v841
  %v996 = vpop.f32.mrf.mxu0
  %v997 = vadd.f32 %v964, %v996
  %v998 = vpop.f32.mrf.mxu0
  %v999 = vadd.f32 %v966, %v998
  %1000 = vmatmul.bf16.gmra.mxu0 %v844
  %v1001 = vpop.f32.mrf.mxu0
  %v1002 = vadd.f32 %v969, %v1001
  %v1003 = vpop.f32.mrf.mxu0
  %v1004 = vadd.f32 %v971, %v1003
  %1005 = vmatmul.bf16.gmra.mxu0 %v847
  %v1006 = vpop.f32.mrf.mxu0
  %v1007 = vadd.f32 %v974, %v1006
  %v1008 = vpop.f32.mrf.mxu0
  %v1009 = vadd.f32 %v976, %v1008
  %1010 = vmatmul.bf16.gmra.mxu0 %v850
  %v1011 = vpop.f32.mrf.mxu0
  %v1012 = vadd.f32 %v979, %v1011
  %v1013 = vpop.f32.mrf.mxu0
  %v1014 = vadd.f32 %v981, %v1013
  %1015 = vmatmul.bf16.gmra.mxu0 %v853
  %v1016 = vpop.f32.mrf.mxu0
  %v1017 = vadd.f32 %v984, %v1016
  %v1018 = vpop.f32.mrf.mxu0
  %1019 = vdwg.mxu0
  %v1020 = vmul.f32 %v997, 0.01
  %v1021 = vmul.f32 %v999, 0.01
  %v1022 = vmul.f32 %v1002, 0.01
  %v1023 = vmul.f32 %v1004, 0.01
  %v1024 = vmul.f32 %v1007, 0.01
  %v1025 = vmul.f32 %v1009, 0.01
  %v1026 = vmul.f32 %v1012, 0.01
  %v1027 = vmul.f32 %v1014, 0.01
  %v1028 = vmul.f32 %v1017, 0.01
  %v1029 = vmax.f32 %v997, %v1020
  %v1030 = vmax.f32 %v999, %v1021
  %v1031 = vmax.f32 %v1002, %v1022
  %v1032 = vmax.f32 %v1004, %v1023
  %v1033 = vmax.f32 %v1007, %v1024
  %v1034 = vmax.f32 %v1009, %v1025
  %v1035 = vmax.f32 %v1012, %v1026
  %v1036 = vmax.f32 %v1014, %v1027
  %v1037 = vmax.f32 %v1017, %v1028
  %vm1038 = vcmask 785408
  %1039 = vst.msk [vmem:[%s7] sm:$0xff] %vm1038, %v1029
  %1040 = vst.msk [vmem:[%s7 + $0x8] sm:$0xff] %vm1038, %v1030
  %1041 = vst.msk [vmem:[%s7 + $0x10] sm:$0xff] %vm1038, %v1031
  %1042 = vst.msk [vmem:[%s7 + $0x18] sm:$0xff] %vm1038, %v1032
  %1043 = vst.msk [vmem:[%s7 + $0x20] sm:$0xff] %vm1038, %v1033
  %1044 = vst.msk [vmem:[%s7 + $0x28] sm:$0xff] %vm1038, %v1034
  %1045 = vst.msk [vmem:[%s7 + $0x30] sm:$0xff] %vm1038, %v1035
  %1046 = vst.msk [vmem:[%s7 + $0x38] sm:$0xff] %vm1038, %v1036
  %1047 = vst.msk [vmem:[%s7 + $0x40] sm:$0xff] %vm1038, %v1037
  // Predicated region
  $region26: #{grasp_model_forward.14} parent=0 // pred_check
    _
  $region27: #{grasp_model_forward.14} parent=0 // pred_check_branch
    %1049 = sbr.rel (0) target = $region29
  $region28: #{grasp_model_forward.14} parent=0 // pred_region
    _
  $region29: #{grasp_model_forward.14} parent=0 // pred_fallthru
    _
  // Predicated region
  $region30: #{grasp_model_forward.14} parent=0 // pred_check
    _
  $region31: #{grasp_model_forward.14} parent=0 // pred_check_branch
    %1051 = sbr.rel (0) target = $region33
  $region32: #{grasp_model_forward.14} parent=0 // pred_region
    _
  $region33: #{grasp_model_forward.14} parent=0 // pred_fallthru
    _
  // Predicated region
  $region34: #{grasp_model_forward.14} parent=0 // pred_check
    _
  $region35: #{grasp_model_forward.14} parent=0 // pred_check_branch
    %1053 = sbr.rel (0) target = $region37
  $region36: #{grasp_model_forward.14} parent=0 // pred_region
    _
  $region37: #{grasp_model_forward.14} parent=0 // pred_fallthru
    _
  // Predicated region
  $region38: #{grasp_model_forward.14} parent=0 // pred_check
    _
  $region39: #{grasp_model_forward.14} parent=0 // pred_check_branch
    %1055 = sbr.rel (0) target = $region41
  $region40: #{grasp_model_forward.14} parent=0 // pred_region
    _
  $region41: #{grasp_model_forward.14} parent=0 // pred_fallthru
    _

// kernel: grasp_model_forward.15
$region0: #{grasp_model_forward.15}
  #allocation0 [shape = 'u32[]', space=smem, size = 0x4, offset = 0x4, fixed_abs, tag = 'smem constant byte address 0x4 - core index']
  #allocation1 [shape = 'u32[72,128]{1,0:T(1,128)}', space=vmem, size = 0x9000, scoped, tag = 'internal scratch']
  %s0 = inlined_call_operand.vmem [shape: f32[32,576], index: 0, kind: input, shape index: {}]
  %s1 = inlined_call_operand.vmem [shape: bf16[576,64], index: 1, kind: input, shape index: {}]
  %s2 = inlined_call_operand.vmem [shape: f32[1,64], index: 2, kind: input, shape index: {}]
  %s3 = inlined_call_operand.vmem [shape: f32[32,864], index: 3, kind: input, shape index: {}]
  %s4 = inlined_call_operand.vmem [shape: bf16[864,96], index: 4, kind: input, shape index: {}]
  %s5 = inlined_call_operand.vmem [shape: f32[1,96], index: 5, kind: input, shape index: {}]
  %s6 = inlined_call_operand.vmem [shape: f32[32,64], index: 6, kind: output, shape index: {0}]
  %s7 = inlined_call_operand.vmem [shape: f32[32,96], index: 7, kind: output, shape index: {1}]
  %8 = xla_tuple %s6, %s7
  %s9 = sld [smem:[#allocation0]]
  $region42: #{grasp_model_forward.15} parent=0
    _
  %s11 = ssub.s32 1, %s9
  %s12 = scalar_select 0, %s11, %s9
  // Predicated region
  $region2: #{grasp_model_forward.15} parent=0 // pred_check
    _
  $region3: #{grasp_model_forward.15} parent=0 // pred_check_branch
    %14 = sbr.rel (0) target = $region5
  $region4: #{grasp_model_forward.15} parent=0 // pred_region
    _
  $region5: #{grasp_model_forward.15} parent=0 // pred_fallthru
    _
  // Predicated region
  $region6: #{grasp_model_forward.15} parent=0 // pred_check
    _
  $region7: #{grasp_model_forward.15} parent=0 // pred_check_branch
    %16 = sbr.rel (0) target = $region9
  $region8: #{grasp_model_forward.15} parent=0 // pred_region
    _
  $region9: #{grasp_model_forward.15} parent=0 // pred_fallthru
    _
  // Predicated region
  $region10: #{grasp_model_forward.15} parent=0 // pred_check
    _
  $region11: #{grasp_model_forward.15} parent=0 // pred_check_branch
    %18 = sbr.rel (0) target = $region13
  $region12: #{grasp_model_forward.15} parent=0 // pred_region
    _
  $region13: #{grasp_model_forward.15} parent=0 // pred_fallthru
    _
  // Predicated region
  $region14: #{grasp_model_forward.15} parent=0 // pred_check
    _
  $region15: #{grasp_model_forward.15} parent=0 // pred_check_branch
    %20 = sbr.rel (0) target = $region17
  $region16: #{grasp_model_forward.15} parent=0 // pred_region
    _
  $region17: #{grasp_model_forward.15} parent=0 // pred_fallthru
    _
  // Predicated region
  $region18: #{grasp_model_forward.15} parent=0 // pred_check
    _
  $region19: #{grasp_model_forward.15} parent=0 // pred_check_branch
    %22 = sbr.rel (0) target = $region21
  $region20: #{grasp_model_forward.15} parent=0 // pred_region
    _
  $region21: #{grasp_model_forward.15} parent=0 // pred_fallthru
    _
  // Predicated region
  $region22: #{grasp_model_forward.15} parent=0 // pred_check
    _
  $region23: #{grasp_model_forward.15} parent=0 // pred_check_branch
    %24 = sbr.rel (0) target = $region25
  $region24: #{grasp_model_forward.15} parent=0 // pred_region
    _
  $region25: #{grasp_model_forward.15} parent=0 // pred_fallthru
    _
  %v26 = vld [vmem:[%s0] sm:$0xff]
  %v27 = vld [vmem:[%s0 + $0x8] sm:$0xff]
  %v28 = vld [vmem:[%s0 + $0x10] sm:$0xff]
  %v29 = vld [vmem:[%s0 + $0x18] sm:$0xff]
  %v30 = vld [vmem:[%s0 + $0x20] sm:$0xff]
  %v31 = vld [vmem:[%s0 + $0x28] sm:$0xff]
  %v32 = vld [vmem:[%s0 + $0x30] sm:$0xff]
  %v33 = vld [vmem:[%s0 + $0x38] sm:$0xff]
  %v34 = vld [vmem:[%s0 + $0x40] sm:$0xff]
  %v35 = vld [vmem:[%s0 + $0x48] sm:$0xff]
  %v36 = vld [vmem:[%s0 + $0x50] sm:$0xff]
  %v37 = vld [vmem:[%s0 + $0x58] sm:$0xff]
  %v38 = vld [vmem:[%s0 + $0x60] sm:$0xff]
  %v39 = vld [vmem:[%s0 + $0x68] sm:$0xff]
  %v40 = vld [vmem:[%s0 + $0x70] sm:$0xff]
  %v41 = vld [vmem:[%s0 + $0x78] sm:$0xff]
  %v42 = vld [vmem:[%s0 + $0x80] sm:$0xff]
  %v43 = vld [vmem:[%s0 + $0x88] sm:$0xff]
  %v44 = vld [vmem:[%s0 + $0x90] sm:$0xff]
  %v45 = vld [vmem:[%s0 + $0x98] sm:$0xff]
  %v46 = vpack.c.bf16 %v31, %v26
  %v47 = vpack.c.bf16 %v32, %v27
  %v48 = vpack.c.bf16 %v33, %v28
  %v49 = vpack.c.bf16 %v34, %v29
  %v50 = vpack.c.bf16 %v35, %v30
  %v51 = vpack.c.bf16 %v41, %v36
  %v52 = vpack.c.bf16 %v42, %v37
  %v53 = vpack.c.bf16 %v43, %v38
  %v54 = vpack.c.bf16 %v44, %v39
  %v55 = vpack.c.bf16 %v45, %v40
  %v56 = vld [vmem:[%s1] sm:$0xf]
  %v57 = vld [vmem:[%s1 + $0x4] sm:$0xf]
  %v58 = vld [vmem:[%s1 + $0x8] sm:$0xf]
  %v59 = vld [vmem:[%s1 + $0xc] sm:$0xf]
  %v60 = vld [vmem:[%s1 + $0x10] sm:$0xf]
  %v61 = vld [vmem:[%s1 + $0x14] sm:$0xf]
  %v62 = vld [vmem:[%s1 + $0x18] sm:$0xf]
  %v63 = vld [vmem:[%s1 + $0x1c] sm:$0xf]
  %v64 = vld [vmem:[%s1 + $0x20] sm:$0xf]
  %v65 = vld [vmem:[%s1 + $0x24] sm:$0xf]
  %v66 = vld [vmem:[%s1 + $0x28] sm:$0xf]
  %v67 = vld [vmem:[%s1 + $0x2c] sm:$0xf]
  %v68 = vld [vmem:[%s1 + $0x30] sm:$0xf]
  %v69 = vld [vmem:[%s1 + $0x34] sm:$0xf]
  %v70 = vld [vmem:[%s1 + $0x38] sm:$0xf]
  %v71 = vld [vmem:[%s1 + $0x3c] sm:$0xf]
  %v72 = vld [vmem:[%s1 + $0x40] sm:$0xf]
  %v73 = vld [vmem:[%s1 + $0x44] sm:$0xf]
  %v74 = vld [vmem:[%s1 + $0x48] sm:$0xf]
  %v75 = vld [vmem:[%s1 + $0x4c] sm:$0xf]
  %v76 = vld [vmem:[%s1 + $0x50] sm:$0xf]
  %v77 = vld [vmem:[%s1 + $0x54] sm:$0xf]
  %v78 = vld [vmem:[%s1 + $0x58] sm:$0xf]
  %v79 = vld [vmem:[%s1 + $0x5c] sm:$0xf]
  %v80 = vld [vmem:[%s1 + $0x60] sm:$0xf]
  %v81 = vld [vmem:[%s1 + $0x64] sm:$0xf]
  %v82 = vld [vmem:[%s1 + $0x68] sm:$0xf]
  %v83 = vld [vmem:[%s1 + $0x6c] sm:$0xf]
  %v84 = vld [vmem:[%s1 + $0x70] sm:$0xf]
  %v85 = vld [vmem:[%s1 + $0x74] sm:$0xf]
  %v86 = vld [vmem:[%s1 + $0x78] sm:$0xf]
  %v87 = vld [vmem:[%s1 + $0x7c] sm:$0xf]
  %v88 = vld [vmem:[%s1 + $0x80] sm:$0xf]
  %v89 = vld [vmem:[%s1 + $0x84] sm:$0xf]
  %v90 = vld [vmem:[%s1 + $0x88] sm:$0xf]
  %v91 = vld [vmem:[%s1 + $0x8c] sm:$0xf]
  %v92 = vld [vmem:[%s1 + $0x90] sm:$0xf]
  %v93 = vld [vmem:[%s1 + $0x94] sm:$0xf]
  %v94 = vld [vmem:[%s1 + $0x98] sm:$0xf]
  %v95 = vld [vmem:[%s1 + $0x9c] sm:$0xf]
  %v96 = vld [vmem:[%s1 + $0xa0] sm:$0xf]
  %v97 = vld [vmem:[%s1 + $0xa4] sm:$0xf]
  %v98 = vld [vmem:[%s1 + $0xa8] sm:$0xf]
  %v99 = vld [vmem:[%s1 + $0xac] sm:$0xf]
  %v100 = vld [vmem:[%s1 + $0xb0] sm:$0xf]
  %v101 = vld [vmem:[%s1 + $0xb4] sm:$0xf]
  %v102 = vld [vmem:[%s1 + $0xb8] sm:$0xf]
  %v103 = vld [vmem:[%s1 + $0xbc] sm:$0xf]
  %v104 = vld [vmem:[%s1 + $0xc0] sm:$0xf]
  %v105 = vld [vmem:[%s1 + $0xc4] sm:$0xf]
  %v106 = vld [vmem:[%s1 + $0xc8] sm:$0xf]
  %v107 = vld [vmem:[%s1 + $0xcc] sm:$0xf]
  %v108 = vld [vmem:[%s1 + $0xd0] sm:$0xf]
  %v109 = vld [vmem:[%s1 + $0xd4] sm:$0xf]
  %v110 = vld [vmem:[%s1 + $0xd8] sm:$0xf]
  %v111 = vld [vmem:[%s1 + $0xdc] sm:$0xf]
  %v112 = vld [vmem:[%s1 + $0xe0] sm:$0xf]
  %v113 = vld [vmem:[%s1 + $0xe4] sm:$0xf]
  %v114 = vld [vmem:[%s1 + $0xe8] sm:$0xf]
  %v115 = vld [vmem:[%s1 + $0xec] sm:$0xf]
  %v116 = vld [vmem:[%s1 + $0xf0] sm:$0xf]
  %v117 = vld [vmem:[%s1 + $0xf4] sm:$0xf]
  %v118 = vld [vmem:[%s1 + $0xf8] sm:$0xf]
  %v119 = vld [vmem:[%s1 + $0xfc] sm:$0xf]
  %v120 = vld [vmem:[%s1 + $0x100] sm:$0xf]
  %v121 = vld [vmem:[%s1 + $0x104] sm:$0xf]
  %v122 = vld [vmem:[%s1 + $0x108] sm:$0xf]
  %v123 = vld [vmem:[%s1 + $0x10c] sm:$0xf]
  %v124 = vld [vmem:[%s1 + $0x110] sm:$0xf]
  %v125 = vld [vmem:[%s1 + $0x114] sm:$0xf]
  %v126 = vld [vmem:[%s1 + $0x118] sm:$0xf]
  %v127 = vld [vmem:[%s1 + $0x11c] sm:$0xf]
  %v128 = vld [vmem:[%s2] sm:$0x1]
  %v130 = vperm.slane %v128, 0
  %v204 = vunpack.c.l.b16 %v56
  %v205 = vunpack.c.l.b16 %v57
  %v206 = vunpack.c.l.b16 %v58
  %v207 = vunpack.c.l.b16 %v59
  %v208 = vunpack.c.l.b16 %v60
  %v209 = vunpack.c.l.b16 %v61
  %v210 = vunpack.c.l.b16 %v62
  %v211 = vunpack.c.l.b16 %v63
  %v212 = vunpack.c.l.b16 %v64
  %v213 = vunpack.c.l.b16 %v65
  %v214 = vunpack.c.l.b16 %v66
  %v215 = vunpack.c.l.b16 %v67
  %v216 = vunpack.c.l.b16 %v68
  %v217 = vunpack.c.l.b16 %v69
  %v218 = vunpack.c.l.b16 %v70
  %v219 = vunpack.c.l.b16 %v71
  %v220 = vunpack.c.l.b16 %v72
  %v221 = vunpack.c.l.b16 %v73
  %v222 = vunpack.c.l.b16 %v74
  %v223 = vunpack.c.l.b16 %v75
  %v224 = vunpack.c.l.b16 %v76
  %v225 = vunpack.c.l.b16 %v77
  %v226 = vunpack.c.l.b16 %v78
  %v227 = vunpack.c.l.b16 %v79
  %v228 = vunpack.c.l.b16 %v80
  %v229 = vunpack.c.l.b16 %v81
  %v230 = vunpack.c.l.b16 %v82
  %v231 = vunpack.c.l.b16 %v83
  %v232 = vunpack.c.l.b16 %v84
  %v233 = vunpack.c.l.b16 %v85
  %v234 = vunpack.c.l.b16 %v86
  %v235 = vunpack.c.l.b16 %v87
  %v236 = vunpack.c.l.b16 %v88
  %v237 = vunpack.c.l.b16 %v89
  %v238 = vunpack.c.l.b16 %v90
  %v239 = vunpack.c.l.b16 %v91
  %v240 = vunpack.c.l.b16 %v92
  %v241 = vunpack.c.l.b16 %v93
  %v242 = vunpack.c.l.b16 %v94
  %v243 = vunpack.c.l.b16 %v95
  %v244 = vunpack.c.l.b16 %v96
  %v245 = vunpack.c.l.b16 %v97
  %v246 = vunpack.c.l.b16 %v98
  %v247 = vunpack.c.l.b16 %v99
  %v248 = vunpack.c.l.b16 %v100
  %v249 = vunpack.c.l.b16 %v101
  %v250 = vunpack.c.l.b16 %v102
  %v251 = vunpack.c.l.b16 %v103
  %v252 = vunpack.c.l.b16 %v104
  %v253 = vunpack.c.l.b16 %v105
  %v254 = vunpack.c.l.b16 %v106
  %v255 = vunpack.c.l.b16 %v107
  %v256 = vunpack.c.l.b16 %v108
  %v257 = vunpack.c.l.b16 %v109
  %v258 = vunpack.c.l.b16 %v110
  %v259 = vunpack.c.l.b16 %v111
  %v260 = vunpack.c.l.b16 %v112
  %v261 = vunpack.c.l.b16 %v113
  %v262 = vunpack.c.l.b16 %v114
  %v263 = vunpack.c.l.b16 %v115
  %v264 = vunpack.c.l.b16 %v116
  %v265 = vunpack.c.l.b16 %v117
  %v266 = vunpack.c.l.b16 %v118
  %v267 = vunpack.c.l.b16 %v119
  %v268 = vunpack.c.l.b16 %v120
  %v269 = vunpack.c.l.b16 %v121
  %v270 = vunpack.c.l.b16 %v122
  %v271 = vunpack.c.l.b16 %v123
  %v272 = vunpack.c.l.b16 %v124
  %v273 = vunpack.c.l.b16 %v125
  %v274 = vunpack.c.l.b16 %v126
  %v275 = vunpack.c.l.b16 %v127
  %v276 = vpack.c.b16 %v205, %v204
  %v277 = vpack.c.b16 %v207, %v206
  %v278 = vpack.c.b16 %v209, %v208
  %v279 = vpack.c.b16 %v211, %v210
  %v280 = vpack.c.b16 %v213, %v212
  %v281 = vpack.c.b16 %v215, %v214
  %v282 = vpack.c.b16 %v217, %v216
  %v283 = vpack.c.b16 %v219, %v218
  %v284 = vpack.c.b16 %v221, %v220
  %v285 = vpack.c.b16 %v223, %v222
  %v286 = vpack.c.b16 %v225, %v224
  %v287 = vpack.c.b16 %v227, %v226
  %v288 = vpack.c.b16 %v229, %v228
  %v289 = vpack.c.b16 %v231, %v230
  %v290 = vpack.c.b16 %v233, %v232
  %v291 = vpack.c.b16 %v235, %v234
  %v292 = vpack.c.b16 %v237, %v236
  %v293 = vpack.c.b16 %v239, %v238
  %v294 = vpack.c.b16 %v241, %v240
  %v295 = vpack.c.b16 %v243, %v242
  %v296 = vpack.c.b16 %v245, %v244
  %v297 = vpack.c.b16 %v247, %v246
  %v298 = vpack.c.b16 %v249, %v248
  %v299 = vpack.c.b16 %v251, %v250
  %v300 = vpack.c.b16 %v253, %v252
  %v301 = vpack.c.b16 %v255, %v254
  %v302 = vpack.c.b16 %v257, %v256
  %v303 = vpack.c.b16 %v259, %v258
  %v304 = vpack.c.b16 %v261, %v260
  %v305 = vpack.c.b16 %v263, %v262
  %v306 = vpack.c.b16 %v265, %v264
  %v307 = vpack.c.b16 %v267, %v266
  %v308 = vpack.c.b16 %v269, %v268
  %v309 = vpack.c.b16 %v271, %v270
  %v310 = vpack.c.b16 %v273, %v272
  %v311 = vpack.c.b16 %v275, %v274
  %vm348 = vcmask 523264
  %v350 = vsel %vm348, %v50, 0
  %v353 = vsel %vm348, %v55, 0
  %355 = vmatpush.bf16.msra.mxu0 %v283
  %356 = vmatpush.bf16.msra.mxu0 %v282
  %357 = vmatpush.bf16.msra.mxu0 %v281
  %358 = vmatpush.bf16.msra.mxu0 %v280
  %359 = vmatpush.bf16.msra.mxu0 %v279
  %360 = vmatpush.bf16.msra.mxu0 %v278
  %361 = vmatpush.bf16.msra.mxu0 %v277
  %362 = vmatpush.bf16.msra.mxu0 %v276
  %363 = vmatmul.bf16.gmra.mxu0 %v46
  %v364 = vpop.f32.mrf.mxu0
  %v365 = vadd.f32 %v130, %v364
  %v366 = vpop.f32.mrf.mxu0
  %v367 = vadd.f32 %v130, %v366
  %368 = vmatmul.bf16.gmra.mxu0 %v51
  %v369 = vpop.f32.mrf.mxu0
  %v370 = vadd.f32 %v130, %v369
  %v371 = vpop.f32.mrf.mxu0
  %v372 = vadd.f32 %v130, %v371
  %373 = vdwg.mxu0
  %374 = vmatpush.bf16.msra.mxu0 %v291
  %375 = vmatpush.bf16.msra.mxu0 %v290
  %376 = vmatpush.bf16.msra.mxu0 %v289
  %377 = vmatpush.bf16.msra.mxu0 %v288
  %378 = vmatpush.bf16.msra.mxu0 %v287
  %379 = vmatpush.bf16.msra.mxu0 %v286
  %380 = vmatpush.bf16.msra.mxu0 %v285
  %381 = vmatpush.bf16.msra.mxu0 %v284
  %382 = vmatmul.bf16.gmra.mxu0 %v47
  %v383 = vpop.f32.mrf.mxu0
  %v384 = vadd.f32 %v365, %v383
  %v385 = vpop.f32.mrf.mxu0
  %v386 = vadd.f32 %v367, %v385
  %387 = vmatmul.bf16.gmra.mxu0 %v52
  %v388 = vpop.f32.mrf.mxu0
  %v389 = vadd.f32 %v370, %v388
  %v390 = vpop.f32.mrf.mxu0
  %v391 = vadd.f32 %v372, %v390
  %392 = vdwg.mxu0
  %393 = vmatpush.bf16.msra.mxu0 %v299
  %394 = vmatpush.bf16.msra.mxu0 %v298
  %395 = vmatpush.bf16.msra.mxu0 %v297
  %396 = vmatpush.bf16.msra.mxu0 %v296
  %397 = vmatpush.bf16.msra.mxu0 %v295
  %398 = vmatpush.bf16.msra.mxu0 %v294
  %399 = vmatpush.bf16.msra.mxu0 %v293
  %400 = vmatpush.bf16.msra.mxu0 %v292
  %401 = vmatmul.bf16.gmra.mxu0 %v48
  %v402 = vpop.f32.mrf.mxu0
  %v403 = vadd.f32 %v384, %v402
  %v404 = vpop.f32.mrf.mxu0
  %v405 = vadd.f32 %v386, %v404
  %406 = vmatmul.bf16.gmra.mxu0 %v53
  %v407 = vpop.f32.mrf.mxu0
  %v408 = vadd.f32 %v389, %v407
  %v409 = vpop.f32.mrf.mxu0
  %v410 = vadd.f32 %v391, %v409
  %411 = vdwg.mxu0
  %412 = vmatpush.bf16.msra.mxu0 %v307
  %413 = vmatpush.bf16.msra.mxu0 %v306
  %414 = vmatpush.bf16.msra.mxu0 %v305
  %415 = vmatpush.bf16.msra.mxu0 %v304
  %416 = vmatpush.bf16.msra.mxu0 %v303
  %417 = vmatpush.bf16.msra.mxu0 %v302
  %418 = vmatpush.bf16.msra.mxu0 %v301
  %419 = vmatpush.bf16.msra.mxu0 %v300
  %420 = vmatmul.bf16.gmra.mxu0 %v49
  %v421 = vpop.f32.mrf.mxu0
  %v422 = vadd.f32 %v403, %v421
  %v423 = vpop.f32.mrf.mxu0
  %v424 = vadd.f32 %v405, %v423
  %425 = vmatmul.bf16.gmra.mxu0 %v54
  %v426 = vpop.f32.mrf.mxu0
  %v427 = vadd.f32 %v408, %v426
  %v428 = vpop.f32.mrf.mxu0
  %v429 = vadd.f32 %v410, %v428
  %430 = vdwg.mxu0
  %431 = vmatpush.bf16.msra.mxu0 0
  %432 = vmatpush.bf16.msra.mxu0 0
  %433 = vmatpush.bf16.msra.mxu0 0
  %434 = vmatpush.bf16.msra.mxu0 0
  %435 = vmatpush.bf16.msra.mxu0 %v311
  %436 = vmatpush.bf16.msra.mxu0 %v310
  %437 = vmatpush.bf16.msra.mxu0 %v309
  %438 = vmatpush.bf16.msra.mxu0 %v308
  %439 = vmatmul.bf16.gmra.mxu0 %v350
  %v440 = vpop.f32.mrf.mxu0
  %v441 = vadd.f32 %v422, %v440
  %v442 = vpop.f32.mrf.mxu0
  %v443 = vadd.f32 %v424, %v442
  %444 = vmatmul.bf16.gmra.mxu0 %v353
  %v445 = vpop.f32.mrf.mxu0
  %v446 = vadd.f32 %v427, %v445
  %v447 = vpop.f32.mrf.mxu0
  %v448 = vadd.f32 %v429, %v447
  %449 = vdwg.mxu0
  %v450 = vmul.f32 %v441, 0.01
  %v451 = vmul.f32 %v443, 0.01
  %v452 = vmul.f32 %v446, 0.01
  %v453 = vmul.f32 %v448, 0.01
  %v454 = vmax.f32 %v441, %v450
  %v455 = vmax.f32 %v443, %v451
  %v456 = vmax.f32 %v446, %v452
  %v457 = vmax.f32 %v448, %v453
  %458 = vst.msk [vmem:[%s6] sm:$0xff] %vm348, %v454
  %459 = vst.msk [vmem:[%s6 + $0x8] sm:$0xff] %vm348, %v455
  %460 = vst.msk [vmem:[%s6 + $0x10] sm:$0xff] %vm348, %v456
  %461 = vst.msk [vmem:[%s6 + $0x18] sm:$0xff] %vm348, %v457
  %v462 = vld [vmem:[%s3] sm:$0xff]
  %v463 = vld [vmem:[%s3 + $0x8] sm:$0xff]
  %v464 = vld [vmem:[%s3 + $0x10] sm:$0xff]
  %v465 = vld [vmem:[%s3 + $0x18] sm:$0xff]
  %v466 = vld [vmem:[%s3 + $0x20] sm:$0xff]
  %v467 = vld [vmem:[%s3 + $0x28] sm:$0xff]
  %v468 = vld [vmem:[%s3 + $0x30] sm:$0xff]
  %v469 = vld [vmem:[%s3 + $0x38] sm:$0xff]
  %v470 = vld [vmem:[%s3 + $0x40] sm:$0xff]
  %v471 = vld [vmem:[%s3 + $0x48] sm:$0xff]
  %v472 = vld [vmem:[%s3 + $0x50] sm:$0xff]
  %v473 = vld [vmem:[%s3 + $0x58] sm:$0xff]
  %v474 = vld [vmem:[%s3 + $0x60] sm:$0xff]
  %v475 = vld [vmem:[%s3 + $0x68] sm:$0xff]
  %v476 = vld [vmem:[%s3 + $0x70] sm:$0xff]
  %v477 = vld [vmem:[%s3 + $0x78] sm:$0xff]
  %v478 = vld [vmem:[%s3 + $0x80] sm:$0xff]
  %v479 = vld [vmem:[%s3 + $0x88] sm:$0xff]
  %v480 = vld [vmem:[%s3 + $0x90] sm:$0xff]
  %v481 = vld [vmem:[%s3 + $0x98] sm:$0xff]
  %v482 = vld [vmem:[%s3 + $0xa0] sm:$0xff]
  %v483 = vld [vmem:[%s3 + $0xa8] sm:$0xff]
  %v484 = vld [vmem:[%s3 + $0xb0] sm:$0xff]
  %v485 = vld [vmem:[%s3 + $0xb8] sm:$0xff]
  %v486 = vld [vmem:[%s3 + $0xc0] sm:$0xff]
  %v487 = vld [vmem:[%s3 + $0xc8] sm:$0xff]
  %v488 = vld [vmem:[%s3 + $0xd0] sm:$0xff]
  %v489 = vld [vmem:[%s3 + $0xd8] sm:$0xff]
  %v490 = vpack.c.bf16 %v469, %v462
  %v491 = vpack.c.bf16 %v470, %v463
  %v492 = vpack.c.bf16 %v471, %v464
  %v493 = vpack.c.bf16 %v472, %v465
  %v494 = vpack.c.bf16 %v473, %v466
  %v495 = vpack.c.bf16 %v474, %v467
  %v496 = vpack.c.bf16 %v475, %v468
  %v497 = vpack.c.bf16 %v483, %v476
  %v498 = vpack.c.bf16 %v484, %v477
  %v499 = vpack.c.bf16 %v485, %v478
  %v500 = vpack.c.bf16 %v486, %v479
  %v501 = vpack.c.bf16 %v487, %v480
  %v502 = vpack.c.bf16 %v488, %v481
  %v503 = vpack.c.bf16 %v489, %v482
  %v504 = vld [vmem:[%s4] sm:$0xf]
  %v505 = vld [vmem:[%s4 + $0x4] sm:$0xf]
  %v506 = vld [vmem:[%s4 + $0x8] sm:$0xf]
  %v507 = vld [vmem:[%s4 + $0xc] sm:$0xf]
  %v508 = vld [vmem:[%s4 + $0x10] sm:$0xf]
  %v509 = vld [vmem:[%s4 + $0x14] sm:$0xf]
  %v510 = vld [vmem:[%s4 + $0x18] sm:$0xf]
  %v511 = vld [vmem:[%s4 + $0x1c] sm:$0xf]
  %v512 = vld [vmem:[%s4 + $0x20] sm:$0xf]
  %v513 = vld [vmem:[%s4 + $0x24] sm:$0xf]
  %v514 = vld [vmem:[%s4 + $0x28] sm:$0xf]
  %v515 = vld [vmem:[%s4 + $0x2c] sm:$0xf]
  %v516 = vld [vmem:[%s4 + $0x30] sm:$0xf]
  %v517 = vld [vmem:[%s4 + $0x34] sm:$0xf]
  %v518 = vld [vmem:[%s4 + $0x38] sm:$0xf]
  %v519 = vld [vmem:[%s4 + $0x3c] sm:$0xf]
  %v520 = vld [vmem:[%s4 + $0x40] sm:$0xf]
  %v521 = vld [vmem:[%s4 + $0x44] sm:$0xf]
  %v522 = vld [vmem:[%s4 + $0x48] sm:$0xf]
  %v523 = vld [vmem:[%s4 + $0x4c] sm:$0xf]
  %v524 = vld [vmem:[%s4 + $0x50] sm:$0xf]
  %v525 = vld [vmem:[%s4 + $0x54] sm:$0xf]
  %v526 = vld [vmem:[%s4 + $0x58] sm:$0xf]
  %v527 = vld [vmem:[%s4 + $0x5c] sm:$0xf]
  %v528 = vld [vmem:[%s4 + $0x60] sm:$0xf]
  %v529 = vld [vmem:[%s4 + $0x64] sm:$0xf]
  %v530 = vld [vmem:[%s4 + $0x68] sm:$0xf]
  %v531 = vld [vmem:[%s4 + $0x6c] sm:$0xf]
  %v532 = vld [vmem:[%s4 + $0x70] sm:$0xf]
  %v533 = vld [vmem:[%s4 + $0x74] sm:$0xf]
  %v534 = vld [vmem:[%s4 + $0x78] sm:$0xf]
  %v535 = vld [vmem:[%s4 + $0x7c] sm:$0xf]
  %v536 = vld [vmem:[%s4 + $0x80] sm:$0xf]
  %v537 = vld [vmem:[%s4 + $0x84] sm:$0xf]
  %v538 = vld [vmem:[%s4 + $0x88] sm:$0xf]
  %v539 = vld [vmem:[%s4 + $0x8c] sm:$0xf]
  %v540 = vld [vmem:[%s4 + $0x90] sm:$0xf]
  %v541 = vld [vmem:[%s4 + $0x94] sm:$0xf]
  %v542 = vld [vmem:[%s4 + $0x98] sm:$0xf]
  %v543 = vld [vmem:[%s4 + $0x9c] sm:$0xf]
  %v544 = vld [vmem:[%s4 + $0xa0] sm:$0xf]
  %v545 = vld [vmem:[%s4 + $0xa4] sm:$0xf]
  %v546 = vld [vmem:[%s4 + $0xa8] sm:$0xf]
  %v547 = vld [vmem:[%s4 + $0xac] sm:$0xf]
  %v548 = vld [vmem:[%s4 + $0xb0] sm:$0xf]
  %v549 = vld [vmem:[%s4 + $0xb4] sm:$0xf]
  %v550 = vld [vmem:[%s4 + $0xb8] sm:$0xf]
  %v551 = vld [vmem:[%s4 + $0xbc] sm:$0xf]
  %v552 = vld [vmem:[%s4 + $0xc0] sm:$0xf]
  %v553 = vld [vmem:[%s4 + $0xc4] sm:$0xf]
  %v554 = vld [vmem:[%s4 + $0xc8] sm:$0xf]
  %v555 = vld [vmem:[%s4 + $0xcc] sm:$0xf]
  %v556 = vld [vmem:[%s4 + $0xd0] sm:$0xf]
  %v557 = vld [vmem:[%s4 + $0xd4] sm:$0xf]
  %v558 = vld [vmem:[%s4 + $0xd8] sm:$0xf]
  %v559 = vld [vmem:[%s4 + $0xdc] sm:$0xf]
  %v560 = vld [vmem:[%s4 + $0xe0] sm:$0xf]
  %v561 = vld [vmem:[%s4 + $0xe4] sm:$0xf]
  %v562 = vld [vmem:[%s4 + $0xe8] sm:$0xf]
  %v563 = vld [vmem:[%s4 + $0xec] sm:$0xf]
  %v564 = vld [vmem:[%s4 + $0xf0] sm:$0xf]
  %v565 = vld [vmem:[%s4 + $0xf4] sm:$0xf]
  %v566 = vld [vmem:[%s4 + $0xf8] sm:$0xf]
  %v567 = vld [vmem:[%s4 + $0xfc] sm:$0xf]
  %v568 = vld [vmem:[%s4 + $0x100] sm:$0xf]
  %v569 = vld [vmem:[%s4 + $0x104] sm:$0xf]
  %v570 = vld [vmem:[%s4 + $0x108] sm:$0xf]
  %v571 = vld [vmem:[%s4 + $0x10c] sm:$0xf]
  %v572 = vld [vmem:[%s4 + $0x110] sm:$0xf]
  %v573 = vld [vmem:[%s4 + $0x114] sm:$0xf]
  %v574 = vld [vmem:[%s4 + $0x118] sm:$0xf]
  %v575 = vld [vmem:[%s4 + $0x11c] sm:$0xf]
  %v576 = vld [vmem:[%s4 + $0x120] sm:$0xf]
  %v577 = vld [vmem:[%s4 + $0x124] sm:$0xf]
  %v578 = vld [vmem:[%s4 + $0x128] sm:$0xf]
  %v579 = vld [vmem:[%s4 + $0x12c] sm:$0xf]
  %v580 = vld [vmem:[%s4 + $0x130] sm:$0xf]
  %v581 = vld [vmem:[%s4 + $0x134] sm:$0xf]
  %v582 = vld [vmem:[%s4 + $0x138] sm:$0xf]
  %v583 = vld [vmem:[%s4 + $0x13c] sm:$0xf]
  %v584 = vld [vmem:[%s4 + $0x140] sm:$0xf]
  %v585 = vld [vmem:[%s4 + $0x144] sm:$0xf]
  %v586 = vld [vmem:[%s4 + $0x148] sm:$0xf]
  %v587 = vld [vmem:[%s4 + $0x14c] sm:$0xf]
  %v588 = vld [vmem:[%s4 + $0x150] sm:$0xf]
  %v589 = vld [vmem:[%s4 + $0x154] sm:$0xf]
  %v590 = vld [vmem:[%s4 + $0x158] sm:$0xf]
  %v591 = vld [vmem:[%s4 + $0x15c] sm:$0xf]
  %v592 = vld [vmem:[%s4 + $0x160] sm:$0xf]
  %v593 = vld [vmem:[%s4 + $0x164] sm:$0xf]
  %v594 = vld [vmem:[%s4 + $0x168] sm:$0xf]
  %v595 = vld [vmem:[%s4 + $0x16c] sm:$0xf]
  %v596 = vld [vmem:[%s4 + $0x170] sm:$0xf]
  %v597 = vld [vmem:[%s4 + $0x174] sm:$0xf]
  %v598 = vld [vmem:[%s4 + $0x178] sm:$0xf]
  %v599 = vld [vmem:[%s4 + $0x17c] sm:$0xf]
  %v600 = vld [vmem:[%s4 + $0x180] sm:$0xf]
  %v601 = vld [vmem:[%s4 + $0x184] sm:$0xf]
  %v602 = vld [vmem:[%s4 + $0x188] sm:$0xf]
  %v603 = vld [vmem:[%s4 + $0x18c] sm:$0xf]
  %v604 = vld [vmem:[%s4 + $0x190] sm:$0xf]
  %v605 = vld [vmem:[%s4 + $0x194] sm:$0xf]
  %v606 = vld [vmem:[%s4 + $0x198] sm:$0xf]
  %v607 = vld [vmem:[%s4 + $0x19c] sm:$0xf]
  %v608 = vld [vmem:[%s4 + $0x1a0] sm:$0xf]
  %v609 = vld [vmem:[%s4 + $0x1a4] sm:$0xf]
  %v610 = vld [vmem:[%s4 + $0x1a8] sm:$0xf]
  %v611 = vld [vmem:[%s4 + $0x1ac] sm:$0xf]
  %v612 = vld [vmem:[%s5] sm:$0x1]
  %v614 = vperm.slane %v612, 0
  %v724 = vunpack.c.l.b16 %v504
  %v725 = vunpack.c.l.b16 %v505
  %v726 = vunpack.c.l.b16 %v506
  %v727 = vunpack.c.l.b16 %v507
  %v728 = vunpack.c.l.b16 %v508
  %v729 = vunpack.c.l.b16 %v509
  %v730 = vunpack.c.l.b16 %v510
  %v731 = vunpack.c.l.b16 %v511
  %v732 = vunpack.c.l.b16 %v512
  %v733 = vunpack.c.l.b16 %v513
  %v734 = vunpack.c.l.b16 %v514
  %v735 = vunpack.c.l.b16 %v515
  %v736 = vunpack.c.l.b16 %v516
  %v737 = vunpack.c.l.b16 %v517
  %v738 = vunpack.c.l.b16 %v518
  %v739 = vunpack.c.l.b16 %v519
  %v740 = vunpack.c.l.b16 %v520
  %v741 = vunpack.c.l.b16 %v521
  %v742 = vunpack.c.l.b16 %v522
  %v743 = vunpack.c.l.b16 %v523
  %v744 = vunpack.c.l.b16 %v524
  %v745 = vunpack.c.l.b16 %v525
  %v746 = vunpack.c.l.b16 %v526
  %v747 = vunpack.c.l.b16 %v527
  %v748 = vunpack.c.l.b16 %v528
  %v749 = vunpack.c.l.b16 %v529
  %v750 = vunpack.c.l.b16 %v530
  %v751 = vunpack.c.l.b16 %v531
  %v752 = vunpack.c.l.b16 %v532
  %v753 = vunpack.c.l.b16 %v533
  %v754 = vunpack.c.l.b16 %v534
  %v755 = vunpack.c.l.b16 %v535
  %v756 = vunpack.c.l.b16 %v536
  %v757 = vunpack.c.l.b16 %v537
  %v758 = vunpack.c.l.b16 %v538
  %v759 = vunpack.c.l.b16 %v539
  %v760 = vunpack.c.l.b16 %v540
  %v761 = vunpack.c.l.b16 %v541
  %v762 = vunpack.c.l.b16 %v542
  %v763 = vunpack.c.l.b16 %v543
  %v764 = vunpack.c.l.b16 %v544
  %v765 = vunpack.c.l.b16 %v545
  %v766 = vunpack.c.l.b16 %v546
  %v767 = vunpack.c.l.b16 %v547
  %v768 = vunpack.c.l.b16 %v548
  %v769 = vunpack.c.l.b16 %v549
  %v770 = vunpack.c.l.b16 %v550
  %v771 = vunpack.c.l.b16 %v551
  %v772 = vunpack.c.l.b16 %v552
  %v773 = vunpack.c.l.b16 %v553
  %v774 = vunpack.c.l.b16 %v554
  %v775 = vunpack.c.l.b16 %v555
  %v776 = vunpack.c.l.b16 %v556
  %v777 = vunpack.c.l.b16 %v557
  %v778 = vunpack.c.l.b16 %v558
  %v779 = vunpack.c.l.b16 %v559
  %v780 = vunpack.c.l.b16 %v560
  %v781 = vunpack.c.l.b16 %v561
  %v782 = vunpack.c.l.b16 %v562
  %v783 = vunpack.c.l.b16 %v563
  %v784 = vunpack.c.l.b16 %v564
  %v785 = vunpack.c.l.b16 %v565
  %v786 = vunpack.c.l.b16 %v566
  %v787 = vunpack.c.l.b16 %v567
  %v788 = vunpack.c.l.b16 %v568
  %v789 = vunpack.c.l.b16 %v569
  %v790 = vunpack.c.l.b16 %v570
  %v791 = vunpack.c.l.b16 %v571
  %v792 = vunpack.c.l.b16 %v572
  %v793 = vunpack.c.l.b16 %v573
  %v794 = vunpack.c.l.b16 %v574
  %v795 = vunpack.c.l.b16 %v575
  %v796 = vunpack.c.l.b16 %v576
  %v797 = vunpack.c.l.b16 %v577
  %v798 = vunpack.c.l.b16 %v578
  %v799 = vunpack.c.l.b16 %v579
  %v800 = vunpack.c.l.b16 %v580
  %v801 = vunpack.c.l.b16 %v581
  %v802 = vunpack.c.l.b16 %v582
  %v803 = vunpack.c.l.b16 %v583
  %v804 = vunpack.c.l.b16 %v584
  %v805 = vunpack.c.l.b16 %v585
  %v806 = vunpack.c.l.b16 %v586
  %v807 = vunpack.c.l.b16 %v587
  %v808 = vunpack.c.l.b16 %v588
  %v809 = vunpack.c.l.b16 %v589
  %v810 = vunpack.c.l.b16 %v590
  %v811 = vunpack.c.l.b16 %v591
  %v812 = vunpack.c.l.b16 %v592
  %v813 = vunpack.c.l.b16 %v593
  %v814 = vunpack.c.l.b16 %v594
  %v815 = vunpack.c.l.b16 %v595
  %v816 = vunpack.c.l.b16 %v596
  %v817 = vunpack.c.l.b16 %v597
  %v818 = vunpack.c.l.b16 %v598
  %v819 = vunpack.c.l.b16 %v599
  %v820 = vunpack.c.l.b16 %v600
  %v821 = vunpack.c.l.b16 %v601
  %v822 = vunpack.c.l.b16 %v602
  %v823 = vunpack.c.l.b16 %v603
  %v824 = vunpack.c.l.b16 %v604
  %v825 = vunpack.c.l.b16 %v605
  %v826 = vunpack.c.l.b16 %v606
  %v827 = vunpack.c.l.b16 %v607
  %v828 = vunpack.c.l.b16 %v608
  %v829 = vunpack.c.l.b16 %v609
  %v830 = vunpack.c.l.b16 %v610
  %v831 = vunpack.c.l.b16 %v611
  %v832 = vpack.c.b16 %v725, %v724
  %v833 = vpack.c.b16 %v727, %v726
  %v834 = vpack.c.b16 %v729, %v728
  %v835 = vpack.c.b16 %v731, %v730
  %v836 = vpack.c.b16 %v733, %v732
  %v837 = vpack.c.b16 %v735, %v734
  %v838 = vpack.c.b16 %v737, %v736
  %v839 = vpack.c.b16 %v739, %v738
  %v840 = vpack.c.b16 %v741, %v740
  %v841 = vpack.c.b16 %v743, %v742
  %v842 = vpack.c.b16 %v745, %v744
  %v843 = vpack.c.b16 %v747, %v746
  %v844 = vpack.c.b16 %v749, %v748
  %v845 = vpack.c.b16 %v751, %v750
  %v846 = vpack.c.b16 %v753, %v752
  %v847 = vpack.c.b16 %v755, %v754
  %v848 = vpack.c.b16 %v757, %v756
  %v849 = vpack.c.b16 %v759, %v758
  %v850 = vpack.c.b16 %v761, %v760
  %v851 = vpack.c.b16 %v763, %v762
  %v852 = vpack.c.b16 %v765, %v764
  %v853 = vpack.c.b16 %v767, %v766
  %v854 = vpack.c.b16 %v769, %v768
  %v855 = vpack.c.b16 %v771, %v770
  %v856 = vpack.c.b16 %v773, %v772
  %v857 = vpack.c.b16 %v775, %v774
  %v858 = vpack.c.b16 %v777, %v776
  %v859 = vpack.c.b16 %v779, %v778
  %v860 = vpack.c.b16 %v781, %v780
  %v861 = vpack.c.b16 %v783, %v782
  %v862 = vpack.c.b16 %v785, %v784
  %v863 = vpack.c.b16 %v787, %v786
  %v864 = vpack.c.b16 %v789, %v788
  %v865 = vpack.c.b16 %v791, %v790
  %v866 = vpack.c.b16 %v793, %v792
  %v867 = vpack.c.b16 %v795, %v794
  %v868 = vpack.c.b16 %v797, %v796
  %v869 = vpack.c.b16 %v799, %v798
  %v870 = vpack.c.b16 %v801, %v800
  %v871 = vpack.c.b16 %v803, %v802
  %v872 = vpack.c.b16 %v805, %v804
  %v873 = vpack.c.b16 %v807, %v806
  %v874 = vpack.c.b16 %v809, %v808
  %v875 = vpack.c.b16 %v811, %v810
  %v876 = vpack.c.b16 %v813, %v812
  %v877 = vpack.c.b16 %v815, %v814
  %v878 = vpack.c.b16 %v817, %v816
  %v879 = vpack.c.b16 %v819, %v818
  %v880 = vpack.c.b16 %v821, %v820
  %v881 = vpack.c.b16 %v823, %v822
  %v882 = vpack.c.b16 %v825, %v824
  %v883 = vpack.c.b16 %v827, %v826
  %v884 = vpack.c.b16 %v829, %v828
  %v885 = vpack.c.b16 %v831, %v830
  %vm940 = vcmask 785408
  %v942 = vsel %vm940, %v496, 0
  %v945 = vsel %vm940, %v503, 0
  %947 = vmatpush.bf16.msra.mxu0 %v839
  %948 = vmatpush.bf16.msra.mxu0 %v838
  %949 = vmatpush.bf16.msra.mxu0 %v837
  %950 = vmatpush.bf16.msra.mxu0 %v836
  %951 = vmatpush.bf16.msra.mxu0 %v835
  %952 = vmatpush.bf16.msra.mxu0 %v834
  %953 = vmatpush.bf16.msra.mxu0 %v833
  %954 = vmatpush.bf16.msra.mxu0 %v832
  %955 = vmatmul.bf16.gmra.mxu0 %v490
  %v956 = vpop.f32.mrf.mxu0
  %v957 = vadd.f32 %v614, %v956
  %v958 = vpop.f32.mrf.mxu0
  %v959 = vadd.f32 %v614, %v958
  %960 = vmatmul.bf16.gmra.mxu0 %v497
  %v961 = vpop.f32.mrf.mxu0
  %v962 = vadd.f32 %v614, %v961
  %v963 = vpop.f32.mrf.mxu0
  %v964 = vadd.f32 %v614, %v963
  %965 = vdwg.mxu0
  %966 = vmatpush.bf16.msra.mxu0 %v847
  %967 = vmatpush.bf16.msra.mxu0 %v846
  %968 = vmatpush.bf16.msra.mxu0 %v845
  %969 = vmatpush.bf16.msra.mxu0 %v844
  %970 = vmatpush.bf16.msra.mxu0 %v843
  %971 = vmatpush.bf16.msra.mxu0 %v842
  %972 = vmatpush.bf16.msra.mxu0 %v841
  %973 = vmatpush.bf16.msra.mxu0 %v840
  %974 = vmatmul.bf16.gmra.mxu0 %v491
  %v975 = vpop.f32.mrf.mxu0
  %v976 = vadd.f32 %v957, %v975
  %v977 = vpop.f32.mrf.mxu0
  %v978 = vadd.f32 %v959, %v977
  %979 = vmatmul.bf16.gmra.mxu0 %v498
  %v980 = vpop.f32.mrf.mxu0
  %v981 = vadd.f32 %v962, %v980
  %v982 = vpop.f32.mrf.mxu0
  %v983 = vadd.f32 %v964, %v982
  %984 = vdwg.mxu0
  %985 = vmatpush.bf16.msra.mxu0 %v855
  %986 = vmatpush.bf16.msra.mxu0 %v854
  %987 = vmatpush.bf16.msra.mxu0 %v853
  %988 = vmatpush.bf16.msra.mxu0 %v852
  %989 = vmatpush.bf16.msra.mxu0 %v851
  %990 = vmatpush.bf16.msra.mxu0 %v850
  %991 = vmatpush.bf16.msra.mxu0 %v849
  %992 = vmatpush.bf16.msra.mxu0 %v848
  %993 = vmatmul.bf16.gmra.mxu0 %v492
  %v994 = vpop.f32.mrf.mxu0
  %v995 = vadd.f32 %v976, %v994
  %v996 = vpop.f32.mrf.mxu0
  %v997 = vadd.f32 %v978, %v996
  %998 = vmatmul.bf16.gmra.mxu0 %v499
  %v999 = vpop.f32.mrf.mxu0
  %v1000 = vadd.f32 %v981, %v999
  %v1001 = vpop.f32.mrf.mxu0
  %v1002 = vadd.f32 %v983, %v1001
  %1003 = vdwg.mxu0
  %1004 = vmatpush.bf16.msra.mxu0 %v863
  %1005 = vmatpush.bf16.msra.mxu0 %v862
  %1006 = vmatpush.bf16.msra.mxu0 %v861
  %1007 = vmatpush.bf16.msra.mxu0 %v860
  %1008 = vmatpush.bf16.msra.mxu0 %v859
  %1009 = vmatpush.bf16.msra.mxu0 %v858
  %1010 = vmatpush.bf16.msra.mxu0 %v857
  %1011 = vmatpush.bf16.msra.mxu0 %v856
  %1012 = vmatmul.bf16.gmra.mxu0 %v493
  %v1013 = vpop.f32.mrf.mxu0
  %v1014 = vadd.f32 %v995, %v1013
  %v1015 = vpop.f32.mrf.mxu0
  %v1016 = vadd.f32 %v997, %v1015
  %1017 = vmatmul.bf16.gmra.mxu0 %v500
  %v1018 = vpop.f32.mrf.mxu0
  %v1019 = vadd.f32 %v1000, %v1018
  %v1020 = vpop.f32.mrf.mxu0
  %v1021 = vadd.f32 %v1002, %v1020
  %1022 = vdwg.mxu0
  %1023 = vmatpush.bf16.msra.mxu0 %v871
  %1024 = vmatpush.bf16.msra.mxu0 %v870
  %1025 = vmatpush.bf16.msra.mxu0 %v869
  %1026 = vmatpush.bf16.msra.mxu0 %v868
  %1027 = vmatpush.bf16.msra.mxu0 %v867
  %1028 = vmatpush.bf16.msra.mxu0 %v866
  %1029 = vmatpush.bf16.msra.mxu0 %v865
  %1030 = vmatpush.bf16.msra.mxu0 %v864
  %1031 = vmatmul.bf16.gmra.mxu0 %v494
  %v1032 = vpop.f32.mrf.mxu0
  %v1033 = vadd.f32 %v1014, %v1032
  %v1034 = vpop.f32.mrf.mxu0
  %v1035 = vadd.f32 %v1016, %v1034
  %1036 = vmatmul.bf16.gmra.mxu0 %v501
  %v1037 = vpop.f32.mrf.mxu0
  %v1038 = vadd.f32 %v1019, %v1037
  %v1039 = vpop.f32.mrf.mxu0
  %v1040 = vadd.f32 %v1021, %v1039
  %1041 = vdwg.mxu0
  %1042 = vmatpush.bf16.msra.mxu0 %v879
  %1043 = vmatpush.bf16.msra.mxu0 %v878
  %1044 = vmatpush.bf16.msra.mxu0 %v877
  %1045 = vmatpush.bf16.msra.mxu0 %v876
  %1046 = vmatpush.bf16.msra.mxu0 %v875
  %1047 = vmatpush.bf16.msra.mxu0 %v874
  %1048 = vmatpush.bf16.msra.mxu0 %v873
  %1049 = vmatpush.bf16.msra.mxu0 %v872
  %1050 = vmatmul.bf16.gmra.mxu0 %v495
  %v1051 = vpop.f32.mrf.mxu0
  %v1052 = vadd.f32 %v1033, %v1051
  %v1053 = vpop.f32.mrf.mxu0
  %v1054 = vadd.f32 %v1035, %v1053
  %1055 = vmatmul.bf16.gmra.mxu0 %v502
  %v1056 = vpop.f32.mrf.mxu0
  %v1057 = vadd.f32 %v1038, %v1056
  %v1058 = vpop.f32.mrf.mxu0
  %v1059 = vadd.f32 %v1040, %v1058
  %1060 = vdwg.mxu0
  %1061 = vmatpush.bf16.msra.mxu0 0
  %1062 = vmatpush.bf16.msra.mxu0 0
  %1063 = vmatpush.bf16.msra.mxu0 %v885
  %1064 = vmatpush.bf16.msra.mxu0 %v884
  %1065 = vmatpush.bf16.msra.mxu0 %v883
  %1066 = vmatpush.bf16.msra.mxu0 %v882
  %1067 = vmatpush.bf16.msra.mxu0 %v881
  %1068 = vmatpush.bf16.msra.mxu0 %v880
  %1069 = vmatmul.bf16.gmra.mxu0 %v942
  %v1070 = vpop.f32.mrf.mxu0
  %v1071 = vadd.f32 %v1052, %v1070
  %v1072 = vpop.f32.mrf.mxu0
  %v1073 = vadd.f32 %v1054, %v1072
  %1074 = vmatmul.bf16.gmra.mxu0 %v945
  %v1075 = vpop.f32.mrf.mxu0
  %v1076 = vadd.f32 %v1057, %v1075
  %v1077 = vpop.f32.mrf.mxu0
  %v1078 = vadd.f32 %v1059, %v1077
  %1079 = vdwg.mxu0
  %v1080 = vmul.f32 %v1071, 0.01
  %v1081 = vmul.f32 %v1073, 0.01
  %v1082 = vmul.f32 %v1076, 0.01
  %v1083 = vmul.f32 %v1078, 0.01
  %v1084 = vmax.f32 %v1071, %v1080
  %v1085 = vmax.f32 %v1073, %v1081
  %v1086 = vmax.f32 %v1076, %v1082
  %v1087 = vmax.f32 %v1078, %v1083
  %1088 = vst.msk [vmem:[%s7] sm:$0xff] %vm940, %v1084
  %1089 = vst.msk [vmem:[%s7 + $0x8] sm:$0xff] %vm940, %v1085
  %1090 = vst.msk [vmem:[%s7 + $0x10] sm:$0xff] %vm940, %v1086
  %1091 = vst.msk [vmem:[%s7 + $0x18] sm:$0xff] %vm940, %v1087
  // Predicated region
  $region26: #{grasp_model_forward.15} parent=0 // pred_check
    _
  $region27: #{grasp_model_forward.15} parent=0 // pred_check_branch
    %1093 = sbr.rel (0) target = $region29
  $region28: #{grasp_model_forward.15} parent=0 // pred_region
    _
  $region29: #{grasp_model_forward.15} parent=0 // pred_fallthru
    _
  // Predicated region
  $region30: #{grasp_model_forward.15} parent=0 // pred_check
    _
  $region31: #{grasp_model_forward.15} parent=0 // pred_check_branch
    %1095 = sbr.rel (0) target = $region33
  $region32: #{grasp_model_forward.15} parent=0 // pred_region
    _
  $region33: #{grasp_model_forward.15} parent=0 // pred_fallthru
    _
  // Predicated region
  $region34: #{grasp_model_forward.15} parent=0 // pred_check
    _
  $region35: #{grasp_model_forward.15} parent=0 // pred_check_branch
    %1097 = sbr.rel (0) target = $region37
  $region36: #{grasp_model_forward.15} parent=0 // pred_region
    _
  $region37: #{grasp_model_forward.15} parent=0 // pred_fallthru
    _
  // Predicated region
  $region38: #{grasp_model_forward.15} parent=0 // pred_check
    _
  $region39: #{grasp_model_forward.15} parent=0 // pred_check_branch
    %1099 = sbr.rel (0) target = $region41
  $region40: #{grasp_model_forward.15} parent=0 // pred_region
    _
  $region41: #{grasp_model_forward.15} parent=0 // pred_fallthru
    _

// kernel: grasp_model_forward.16
$region0: #{grasp_model_forward.16}
  #allocation0 [shape = 'u32[]', space=smem, size = 0x4, offset = 0x4, fixed_abs, tag = 'smem constant byte address 0x4 - core index']
  #allocation1 [shape = 'u32[72,128]{1,0:T(1,128)}', space=vmem, size = 0x9000, scoped, tag = 'internal scratch']
  %s0 = inlined_call_operand.vmem [shape: f32[8,576], index: 0, kind: input, shape index: {}]
  %s1 = inlined_call_operand.vmem [shape: bf16[576,64], index: 1, kind: input, shape index: {}]
  %s2 = inlined_call_operand.vmem [shape: f32[1,64], index: 2, kind: input, shape index: {}]
  %s3 = inlined_call_operand.vmem [shape: f32[8,864], index: 3, kind: input, shape index: {}]
  %s4 = inlined_call_operand.vmem [shape: bf16[864,128], index: 4, kind: input, shape index: {}]
  %s5 = inlined_call_operand.vmem [shape: f32[1,128], index: 5, kind: input, shape index: {}]
  %s6 = inlined_call_operand.vmem [shape: f32[8,64], index: 6, kind: output, shape index: {0}]
  %s7 = inlined_call_operand.vmem [shape: f32[8,128], index: 7, kind: output, shape index: {1}]
  %8 = xla_tuple %s6, %s7
  %s9 = sld [smem:[#allocation0]]
  $region42: #{grasp_model_forward.16} parent=0
    _
  %s11 = ssub.s32 1, %s9
  %s12 = scalar_select 0, %s11, %s9
  // Predicated region
  $region2: #{grasp_model_forward.16} parent=0 // pred_check
    _
  $region3: #{grasp_model_forward.16} parent=0 // pred_check_branch
    %14 = sbr.rel (0) target = $region5
  $region4: #{grasp_model_forward.16} parent=0 // pred_region
    _
  $region5: #{grasp_model_forward.16} parent=0 // pred_fallthru
    _
  // Predicated region
  $region6: #{grasp_model_forward.16} parent=0 // pred_check
    _
  $region7: #{grasp_model_forward.16} parent=0 // pred_check_branch
    %16 = sbr.rel (0) target = $region9
  $region8: #{grasp_model_forward.16} parent=0 // pred_region
    _
  $region9: #{grasp_model_forward.16} parent=0 // pred_fallthru
    _
  // Predicated region
  $region10: #{grasp_model_forward.16} parent=0 // pred_check
    _
  $region11: #{grasp_model_forward.16} parent=0 // pred_check_branch
    %18 = sbr.rel (0) target = $region13
  $region12: #{grasp_model_forward.16} parent=0 // pred_region
    _
  $region13: #{grasp_model_forward.16} parent=0 // pred_fallthru
    _
  // Predicated region
  $region14: #{grasp_model_forward.16} parent=0 // pred_check
    _
  $region15: #{grasp_model_forward.16} parent=0 // pred_check_branch
    %20 = sbr.rel (0) target = $region17
  $region16: #{grasp_model_forward.16} parent=0 // pred_region
    _
  $region17: #{grasp_model_forward.16} parent=0 // pred_fallthru
    _
  // Predicated region
  $region18: #{grasp_model_forward.16} parent=0 // pred_check
    _
  $region19: #{grasp_model_forward.16} parent=0 // pred_check_branch
    %22 = sbr.rel (0) target = $region21
  $region20: #{grasp_model_forward.16} parent=0 // pred_region
    _
  $region21: #{grasp_model_forward.16} parent=0 // pred_fallthru
    _
  // Predicated region
  $region22: #{grasp_model_forward.16} parent=0 // pred_check
    _
  $region23: #{grasp_model_forward.16} parent=0 // pred_check_branch
    %24 = sbr.rel (0) target = $region25
  $region24: #{grasp_model_forward.16} parent=0 // pred_region
    _
  $region25: #{grasp_model_forward.16} parent=0 // pred_fallthru
    _
  %v26 = vld [vmem:[%s0] sm:$0xff]
  %v27 = vld [vmem:[%s0 + $0x8] sm:$0xff]
  %v28 = vld [vmem:[%s0 + $0x10] sm:$0xff]
  %v29 = vld [vmem:[%s0 + $0x18] sm:$0xff]
  %v30 = vld [vmem:[%s0 + $0x20] sm:$0xff]
  %v31 = vpack.c.bf16 %v26, %v26
  %v32 = vpack.c.bf16 %v27, %v27
  %v33 = vpack.c.bf16 %v28, %v28
  %v34 = vpack.c.bf16 %v29, %v29
  %v35 = vpack.c.bf16 %v30, %v30
  %v36 = vld [vmem:[%s1] sm:$0xf]
  %v37 = vld [vmem:[%s1 + $0x4] sm:$0xf]
  %v38 = vld [vmem:[%s1 + $0x8] sm:$0xf]
  %v39 = vld [vmem:[%s1 + $0xc] sm:$0xf]
  %v40 = vld [vmem:[%s1 + $0x10] sm:$0xf]
  %v41 = vld [vmem:[%s1 + $0x14] sm:$0xf]
  %v42 = vld [vmem:[%s1 + $0x18] sm:$0xf]
  %v43 = vld [vmem:[%s1 + $0x1c] sm:$0xf]
  %v44 = vld [vmem:[%s1 + $0x20] sm:$0xf]
  %v45 = vld [vmem:[%s1 + $0x24] sm:$0xf]
  %v46 = vld [vmem:[%s1 + $0x28] sm:$0xf]
  %v47 = vld [vmem:[%s1 + $0x2c] sm:$0xf]
  %v48 = vld [vmem:[%s1 + $0x30] sm:$0xf]
  %v49 = vld [vmem:[%s1 + $0x34] sm:$0xf]
  %v50 = vld [vmem:[%s1 + $0x38] sm:$0xf]
  %v51 = vld [vmem:[%s1 + $0x3c] sm:$0xf]
  %v52 = vld [vmem:[%s1 + $0x40] sm:$0xf]
  %v53 = vld [vmem:[%s1 + $0x44] sm:$0xf]
  %v54 = vld [vmem:[%s1 + $0x48] sm:$0xf]
  %v55 = vld [vmem:[%s1 + $0x4c] sm:$0xf]
  %v56 = vld [vmem:[%s1 + $0x50] sm:$0xf]
  %v57 = vld [vmem:[%s1 + $0x54] sm:$0xf]
  %v58 = vld [vmem:[%s1 + $0x58] sm:$0xf]
  %v59 = vld [vmem:[%s1 + $0x5c] sm:$0xf]
  %v60 = vld [vmem:[%s1 + $0x60] sm:$0xf]
  %v61 = vld [vmem:[%s1 + $0x64] sm:$0xf]
  %v62 = vld [vmem:[%s1 + $0x68] sm:$0xf]
  %v63 = vld [vmem:[%s1 + $0x6c] sm:$0xf]
  %v64 = vld [vmem:[%s1 + $0x70] sm:$0xf]
  %v65 = vld [vmem:[%s1 + $0x74] sm:$0xf]
  %v66 = vld [vmem:[%s1 + $0x78] sm:$0xf]
  %v67 = vld [vmem:[%s1 + $0x7c] sm:$0xf]
  %v68 = vld [vmem:[%s1 + $0x80] sm:$0xf]
  %v69 = vld [vmem:[%s1 + $0x84] sm:$0xf]
  %v70 = vld [vmem:[%s1 + $0x88] sm:$0xf]
  %v71 = vld [vmem:[%s1 + $0x8c] sm:$0xf]
  %v72 = vld [vmem:[%s1 + $0x90] sm:$0xf]
  %v73 = vld [vmem:[%s1 + $0x94] sm:$0xf]
  %v74 = vld [vmem:[%s1 + $0x98] sm:$0xf]
  %v75 = vld [vmem:[%s1 + $0x9c] sm:$0xf]
  %v76 = vld [vmem:[%s1 + $0xa0] sm:$0xf]
  %v77 = vld [vmem:[%s1 + $0xa4] sm:$0xf]
  %v78 = vld [vmem:[%s1 + $0xa8] sm:$0xf]
  %v79 = vld [vmem:[%s1 + $0xac] sm:$0xf]
  %v80 = vld [vmem:[%s1 + $0xb0] sm:$0xf]
  %v81 = vld [vmem:[%s1 + $0xb4] sm:$0xf]
  %v82 = vld [vmem:[%s1 + $0xb8] sm:$0xf]
  %v83 = vld [vmem:[%s1 + $0xbc] sm:$0xf]
  %v84 = vld [vmem:[%s1 + $0xc0] sm:$0xf]
  %v85 = vld [vmem:[%s1 + $0xc4] sm:$0xf]
  %v86 = vld [vmem:[%s1 + $0xc8] sm:$0xf]
  %v87 = vld [vmem:[%s1 + $0xcc] sm:$0xf]
  %v88 = vld [vmem:[%s1 + $0xd0] sm:$0xf]
  %v89 = vld [vmem:[%s1 + $0xd4] sm:$0xf]
  %v90 = vld [vmem:[%s1 + $0xd8] sm:$0xf]
  %v91 = vld [vmem:[%s1 + $0xdc] sm:$0xf]
  %v92 = vld [vmem:[%s1 + $0xe0] sm:$0xf]
  %v93 = vld [vmem:[%s1 + $0xe4] sm:$0xf]
  %v94 = vld [vmem:[%s1 + $0xe8] sm:$0xf]
  %v95 = vld [vmem:[%s1 + $0xec] sm:$0xf]
  %v96 = vld [vmem:[%s1 + $0xf0] sm:$0xf]
  %v97 = vld [vmem:[%s1 + $0xf4] sm:$0xf]
  %v98 = vld [vmem:[%s1 + $0xf8] sm:$0xf]
  %v99 = vld [vmem:[%s1 + $0xfc] sm:$0xf]
  %v100 = vld [vmem:[%s1 + $0x100] sm:$0xf]
  %v101 = vld [vmem:[%s1 + $0x104] sm:$0xf]
  %v102 = vld [vmem:[%s1 + $0x108] sm:$0xf]
  %v103 = vld [vmem:[%s1 + $0x10c] sm:$0xf]
  %v104 = vld [vmem:[%s1 + $0x110] sm:$0xf]
  %v105 = vld [vmem:[%s1 + $0x114] sm:$0xf]
  %v106 = vld [vmem:[%s1 + $0x118] sm:$0xf]
  %v107 = vld [vmem:[%s1 + $0x11c] sm:$0xf]
  %v108 = vld [vmem:[%s2] sm:$0x1]
  %v110 = vperm.slane %v108, 0
  %v184 = vunpack.c.l.b16 %v36
  %v185 = vunpack.c.l.b16 %v37
  %v186 = vunpack.c.l.b16 %v38
  %v187 = vunpack.c.l.b16 %v39
  %v188 = vunpack.c.l.b16 %v40
  %v189 = vunpack.c.l.b16 %v41
  %v190 = vunpack.c.l.b16 %v42
  %v191 = vunpack.c.l.b16 %v43
  %v192 = vunpack.c.l.b16 %v44
  %v193 = vunpack.c.l.b16 %v45
  %v194 = vunpack.c.l.b16 %v46
  %v195 = vunpack.c.l.b16 %v47
  %v196 = vunpack.c.l.b16 %v48
  %v197 = vunpack.c.l.b16 %v49
  %v198 = vunpack.c.l.b16 %v50
  %v199 = vunpack.c.l.b16 %v51
  %v200 = vunpack.c.l.b16 %v52
  %v201 = vunpack.c.l.b16 %v53
  %v202 = vunpack.c.l.b16 %v54
  %v203 = vunpack.c.l.b16 %v55
  %v204 = vunpack.c.l.b16 %v56
  %v205 = vunpack.c.l.b16 %v57
  %v206 = vunpack.c.l.b16 %v58
  %v207 = vunpack.c.l.b16 %v59
  %v208 = vunpack.c.l.b16 %v60
  %v209 = vunpack.c.l.b16 %v61
  %v210 = vunpack.c.l.b16 %v62
  %v211 = vunpack.c.l.b16 %v63
  %v212 = vunpack.c.l.b16 %v64
  %v213 = vunpack.c.l.b16 %v65
  %v214 = vunpack.c.l.b16 %v66
  %v215 = vunpack.c.l.b16 %v67
  %v216 = vunpack.c.l.b16 %v68
  %v217 = vunpack.c.l.b16 %v69
  %v218 = vunpack.c.l.b16 %v70
  %v219 = vunpack.c.l.b16 %v71
  %v220 = vunpack.c.l.b16 %v72
  %v221 = vunpack.c.l.b16 %v73
  %v222 = vunpack.c.l.b16 %v74
  %v223 = vunpack.c.l.b16 %v75
  %v224 = vunpack.c.l.b16 %v76
  %v225 = vunpack.c.l.b16 %v77
  %v226 = vunpack.c.l.b16 %v78
  %v227 = vunpack.c.l.b16 %v79
  %v228 = vunpack.c.l.b16 %v80
  %v229 = vunpack.c.l.b16 %v81
  %v230 = vunpack.c.l.b16 %v82
  %v231 = vunpack.c.l.b16 %v83
  %v232 = vunpack.c.l.b16 %v84
  %v233 = vunpack.c.l.b16 %v85
  %v234 = vunpack.c.l.b16 %v86
  %v235 = vunpack.c.l.b16 %v87
  %v236 = vunpack.c.l.b16 %v88
  %v237 = vunpack.c.l.b16 %v89
  %v238 = vunpack.c.l.b16 %v90
  %v239 = vunpack.c.l.b16 %v91
  %v240 = vunpack.c.l.b16 %v92
  %v241 = vunpack.c.l.b16 %v93
  %v242 = vunpack.c.l.b16 %v94
  %v243 = vunpack.c.l.b16 %v95
  %v244 = vunpack.c.l.b16 %v96
  %v245 = vunpack.c.l.b16 %v97
  %v246 = vunpack.c.l.b16 %v98
  %v247 = vunpack.c.l.b16 %v99
  %v248 = vunpack.c.l.b16 %v100
  %v249 = vunpack.c.l.b16 %v101
  %v250 = vunpack.c.l.b16 %v102
  %v251 = vunpack.c.l.b16 %v103
  %v252 = vunpack.c.l.b16 %v104
  %v253 = vunpack.c.l.b16 %v105
  %v254 = vunpack.c.l.b16 %v106
  %v255 = vunpack.c.l.b16 %v107
  %v256 = vpack.c.b16 %v185, %v184
  %v257 = vpack.c.b16 %v187, %v186
  %v258 = vpack.c.b16 %v189, %v188
  %v259 = vpack.c.b16 %v191, %v190
  %v260 = vpack.c.b16 %v193, %v192
  %v261 = vpack.c.b16 %v195, %v194
  %v262 = vpack.c.b16 %v197, %v196
  %v263 = vpack.c.b16 %v199, %v198
  %v264 = vpack.c.b16 %v201, %v200
  %v265 = vpack.c.b16 %v203, %v202
  %v266 = vpack.c.b16 %v205, %v204
  %v267 = vpack.c.b16 %v207, %v206
  %v268 = vpack.c.b16 %v209, %v208
  %v269 = vpack.c.b16 %v211, %v210
  %v270 = vpack.c.b16 %v213, %v212
  %v271 = vpack.c.b16 %v215, %v214
  %v272 = vpack.c.b16 %v217, %v216
  %v273 = vpack.c.b16 %v219, %v218
  %v274 = vpack.c.b16 %v221, %v220
  %v275 = vpack.c.b16 %v223, %v222
  %v276 = vpack.c.b16 %v225, %v224
  %v277 = vpack.c.b16 %v227, %v226
  %v278 = vpack.c.b16 %v229, %v228
  %v279 = vpack.c.b16 %v231, %v230
  %v280 = vpack.c.b16 %v233, %v232
  %v281 = vpack.c.b16 %v235, %v234
  %v282 = vpack.c.b16 %v237, %v236
  %v283 = vpack.c.b16 %v239, %v238
  %v284 = vpack.c.b16 %v241, %v240
  %v285 = vpack.c.b16 %v243, %v242
  %v286 = vpack.c.b16 %v245, %v244
  %v287 = vpack.c.b16 %v247, %v246
  %v288 = vpack.c.b16 %v249, %v248
  %v289 = vpack.c.b16 %v251, %v250
  %v290 = vpack.c.b16 %v253, %v252
  %v291 = vpack.c.b16 %v255, %v254
  %vm328 = vcmask 523264
  %v330 = vsel %vm328, %v35, 0
  %332 = vmatpush.bf16.msra.mxu0 %v263
  %333 = vmatpush.bf16.msra.mxu0 %v262
  %334 = vmatpush.bf16.msra.mxu0 %v261
  %335 = vmatpush.bf16.msra.mxu0 %v260
  %336 = vmatpush.bf16.msra.mxu0 %v259
  %337 = vmatpush.bf16.msra.mxu0 %v258
  %338 = vmatpush.bf16.msra.mxu0 %v257
  %339 = vmatpush.bf16.msra.mxu0 %v256
  %340 = vmatmul.bf16.gmra.mxu0 %v31
  %v341 = vpop.f32.mrf.mxu0
  %v342 = vadd.f32 %v110, %v341
  %v343 = vpop.f32.mrf.mxu0
  %344 = vdwg.mxu0
  %345 = vmatpush.bf16.msra.mxu0 %v271
  %346 = vmatpush.bf16.msra.mxu0 %v270
  %347 = vmatpush.bf16.msra.mxu0 %v269
  %348 = vmatpush.bf16.msra.mxu0 %v268
  %349 = vmatpush.bf16.msra.mxu0 %v267
  %350 = vmatpush.bf16.msra.mxu0 %v266
  %351 = vmatpush.bf16.msra.mxu0 %v265
  %352 = vmatpush.bf16.msra.mxu0 %v264
  %353 = vmatmul.bf16.gmra.mxu0 %v32
  %v354 = vpop.f32.mrf.mxu0
  %v355 = vadd.f32 %v342, %v354
  %v356 = vpop.f32.mrf.mxu0
  %357 = vdwg.mxu0
  %358 = vmatpush.bf16.msra.mxu0 %v279
  %359 = vmatpush.bf16.msra.mxu0 %v278
  %360 = vmatpush.bf16.msra.mxu0 %v277
  %361 = vmatpush.bf16.msra.mxu0 %v276
  %362 = vmatpush.bf16.msra.mxu0 %v275
  %363 = vmatpush.bf16.msra.mxu0 %v274
  %364 = vmatpush.bf16.msra.mxu0 %v273
  %365 = vmatpush.bf16.msra.mxu0 %v272
  %366 = vmatmul.bf16.gmra.mxu0 %v33
  %v367 = vpop.f32.mrf.mxu0
  %v368 = vadd.f32 %v355, %v367
  %v369 = vpop.f32.mrf.mxu0
  %370 = vdwg.mxu0
  %371 = vmatpush.bf16.msra.mxu0 %v287
  %372 = vmatpush.bf16.msra.mxu0 %v286
  %373 = vmatpush.bf16.msra.mxu0 %v285
  %374 = vmatpush.bf16.msra.mxu0 %v284
  %375 = vmatpush.bf16.msra.mxu0 %v283
  %376 = vmatpush.bf16.msra.mxu0 %v282
  %377 = vmatpush.bf16.msra.mxu0 %v281
  %378 = vmatpush.bf16.msra.mxu0 %v280
  %379 = vmatmul.bf16.gmra.mxu0 %v34
  %v380 = vpop.f32.mrf.mxu0
  %v381 = vadd.f32 %v368, %v380
  %v382 = vpop.f32.mrf.mxu0
  %383 = vdwg.mxu0
  %384 = vmatpush.bf16.msra.mxu0 0
  %385 = vmatpush.bf16.msra.mxu0 0
  %386 = vmatpush.bf16.msra.mxu0 0
  %387 = vmatpush.bf16.msra.mxu0 0
  %388 = vmatpush.bf16.msra.mxu0 %v291
  %389 = vmatpush.bf16.msra.mxu0 %v290
  %390 = vmatpush.bf16.msra.mxu0 %v289
  %391 = vmatpush.bf16.msra.mxu0 %v288
  %392 = vmatmul.bf16.gmra.mxu0 %v330
  %v393 = vpop.f32.mrf.mxu0
  %v394 = vadd.f32 %v381, %v393
  %v395 = vpop.f32.mrf.mxu0
  %396 = vdwg.mxu0
  %v397 = vmul.f32 %v394, 0.01
  %v398 = vmax.f32 %v394, %v397
  %399 = vst.msk [vmem:[%s6] sm:$0xff] %vm328, %v398
  %v400 = vld [vmem:[%s3] sm:$0xff]
  %v401 = vld [vmem:[%s3 + $0x8] sm:$0xff]
  %v402 = vld [vmem:[%s3 + $0x10] sm:$0xff]
  %v403 = vld [vmem:[%s3 + $0x18] sm:$0xff]
  %v404 = vld [vmem:[%s3 + $0x20] sm:$0xff]
  %v405 = vld [vmem:[%s3 + $0x28] sm:$0xff]
  %v406 = vld [vmem:[%s3 + $0x30] sm:$0xff]
  %v407 = vpack.c.bf16 %v400, %v400
  %v408 = vpack.c.bf16 %v401, %v401
  %v409 = vpack.c.bf16 %v402, %v402
  %v410 = vpack.c.bf16 %v403, %v403
  %v411 = vpack.c.bf16 %v404, %v404
  %v412 = vpack.c.bf16 %v405, %v405
  %v413 = vpack.c.bf16 %v406, %v406
  %v414 = vld [vmem:[%s4] sm:$0xf]
  %v415 = vld [vmem:[%s4 + $0x4] sm:$0xf]
  %v416 = vld [vmem:[%s4 + $0x8] sm:$0xf]
  %v417 = vld [vmem:[%s4 + $0xc] sm:$0xf]
  %v418 = vld [vmem:[%s4 + $0x10] sm:$0xf]
  %v419 = vld [vmem:[%s4 + $0x14] sm:$0xf]
  %v420 = vld [vmem:[%s4 + $0x18] sm:$0xf]
  %v421 = vld [vmem:[%s4 + $0x1c] sm:$0xf]
  %v422 = vld [vmem:[%s4 + $0x20] sm:$0xf]
  %v423 = vld [vmem:[%s4 + $0x24] sm:$0xf]
  %v424 = vld [vmem:[%s4 + $0x28] sm:$0xf]
  %v425 = vld [vmem:[%s4 + $0x2c] sm:$0xf]
  %v426 = vld [vmem:[%s4 + $0x30] sm:$0xf]
  %v427 = vld [vmem:[%s4 + $0x34] sm:$0xf]
  %v428 = vld [vmem:[%s4 + $0x38] sm:$0xf]
  %v429 = vld [vmem:[%s4 + $0x3c] sm:$0xf]
  %v430 = vld [vmem:[%s4 + $0x40] sm:$0xf]
  %v431 = vld [vmem:[%s4 + $0x44] sm:$0xf]
  %v432 = vld [vmem:[%s4 + $0x48] sm:$0xf]
  %v433 = vld [vmem:[%s4 + $0x4c] sm:$0xf]
  %v434 = vld [vmem:[%s4 + $0x50] sm:$0xf]
  %v435 = vld [vmem:[%s4 + $0x54] sm:$0xf]
  %v436 = vld [vmem:[%s4 + $0x58] sm:$0xf]
  %v437 = vld [vmem:[%s4 + $0x5c] sm:$0xf]
  %v438 = vld [vmem:[%s4 + $0x60] sm:$0xf]
  %v439 = vld [vmem:[%s4 + $0x64] sm:$0xf]
  %v440 = vld [vmem:[%s4 + $0x68] sm:$0xf]
  %v441 = vld [vmem:[%s4 + $0x6c] sm:$0xf]
  %v442 = vld [vmem:[%s4 + $0x70] sm:$0xf]
  %v443 = vld [vmem:[%s4 + $0x74] sm:$0xf]
  %v444 = vld [vmem:[%s4 + $0x78] sm:$0xf]
  %v445 = vld [vmem:[%s4 + $0x7c] sm:$0xf]
  %v446 = vld [vmem:[%s4 + $0x80] sm:$0xf]
  %v447 = vld [vmem:[%s4 + $0x84] sm:$0xf]
  %v448 = vld [vmem:[%s4 + $0x88] sm:$0xf]
  %v449 = vld [vmem:[%s4 + $0x8c] sm:$0xf]
  %v450 = vld [vmem:[%s4 + $0x90] sm:$0xf]
  %v451 = vld [vmem:[%s4 + $0x94] sm:$0xf]
  %v452 = vld [vmem:[%s4 + $0x98] sm:$0xf]
  %v453 = vld [vmem:[%s4 + $0x9c] sm:$0xf]
  %v454 = vld [vmem:[%s4 + $0xa0] sm:$0xf]
  %v455 = vld [vmem:[%s4 + $0xa4] sm:$0xf]
  %v456 = vld [vmem:[%s4 + $0xa8] sm:$0xf]
  %v457 = vld [vmem:[%s4 + $0xac] sm:$0xf]
  %v458 = vld [vmem:[%s4 + $0xb0] sm:$0xf]
  %v459 = vld [vmem:[%s4 + $0xb4] sm:$0xf]
  %v460 = vld [vmem:[%s4 + $0xb8] sm:$0xf]
  %v461 = vld [vmem:[%s4 + $0xbc] sm:$0xf]
  %v462 = vld [vmem:[%s4 + $0xc0] sm:$0xf]
  %v463 = vld [vmem:[%s4 + $0xc4] sm:$0xf]
  %v464 = vld [vmem:[%s4 + $0xc8] sm:$0xf]
  %v465 = vld [vmem:[%s4 + $0xcc] sm:$0xf]
  %v466 = vld [vmem:[%s4 + $0xd0] sm:$0xf]
  %v467 = vld [vmem:[%s4 + $0xd4] sm:$0xf]
  %v468 = vld [vmem:[%s4 + $0xd8] sm:$0xf]
  %v469 = vld [vmem:[%s4 + $0xdc] sm:$0xf]
  %v470 = vld [vmem:[%s4 + $0xe0] sm:$0xf]
  %v471 = vld [vmem:[%s4 + $0xe4] sm:$0xf]
  %v472 = vld [vmem:[%s4 + $0xe8] sm:$0xf]
  %v473 = vld [vmem:[%s4 + $0xec] sm:$0xf]
  %v474 = vld [vmem:[%s4 + $0xf0] sm:$0xf]
  %v475 = vld [vmem:[%s4 + $0xf4] sm:$0xf]
  %v476 = vld [vmem:[%s4 + $0xf8] sm:$0xf]
  %v477 = vld [vmem:[%s4 + $0xfc] sm:$0xf]
  %v478 = vld [vmem:[%s4 + $0x100] sm:$0xf]
  %v479 = vld [vmem:[%s4 + $0x104] sm:$0xf]
  %v480 = vld [vmem:[%s4 + $0x108] sm:$0xf]
  %v481 = vld [vmem:[%s4 + $0x10c] sm:$0xf]
  %v482 = vld [vmem:[%s4 + $0x110] sm:$0xf]
  %v483 = vld [vmem:[%s4 + $0x114] sm:$0xf]
  %v484 = vld [vmem:[%s4 + $0x118] sm:$0xf]
  %v485 = vld [vmem:[%s4 + $0x11c] sm:$0xf]
  %v486 = vld [vmem:[%s4 + $0x120] sm:$0xf]
  %v487 = vld [vmem:[%s4 + $0x124] sm:$0xf]
  %v488 = vld [vmem:[%s4 + $0x128] sm:$0xf]
  %v489 = vld [vmem:[%s4 + $0x12c] sm:$0xf]
  %v490 = vld [vmem:[%s4 + $0x130] sm:$0xf]
  %v491 = vld [vmem:[%s4 + $0x134] sm:$0xf]
  %v492 = vld [vmem:[%s4 + $0x138] sm:$0xf]
  %v493 = vld [vmem:[%s4 + $0x13c] sm:$0xf]
  %v494 = vld [vmem:[%s4 + $0x140] sm:$0xf]
  %v495 = vld [vmem:[%s4 + $0x144] sm:$0xf]
  %v496 = vld [vmem:[%s4 + $0x148] sm:$0xf]
  %v497 = vld [vmem:[%s4 + $0x14c] sm:$0xf]
  %v498 = vld [vmem:[%s4 + $0x150] sm:$0xf]
  %v499 = vld [vmem:[%s4 + $0x154] sm:$0xf]
  %v500 = vld [vmem:[%s4 + $0x158] sm:$0xf]
  %v501 = vld [vmem:[%s4 + $0x15c] sm:$0xf]
  %v502 = vld [vmem:[%s4 + $0x160] sm:$0xf]
  %v503 = vld [vmem:[%s4 + $0x164] sm:$0xf]
  %v504 = vld [vmem:[%s4 + $0x168] sm:$0xf]
  %v505 = vld [vmem:[%s4 + $0x16c] sm:$0xf]
  %v506 = vld [vmem:[%s4 + $0x170] sm:$0xf]
  %v507 = vld [vmem:[%s4 + $0x174] sm:$0xf]
  %v508 = vld [vmem:[%s4 + $0x178] sm:$0xf]
  %v509 = vld [vmem:[%s4 + $0x17c] sm:$0xf]
  %v510 = vld [vmem:[%s4 + $0x180] sm:$0xf]
  %v511 = vld [vmem:[%s4 + $0x184] sm:$0xf]
  %v512 = vld [vmem:[%s4 + $0x188] sm:$0xf]
  %v513 = vld [vmem:[%s4 + $0x18c] sm:$0xf]
  %v514 = vld [vmem:[%s4 + $0x190] sm:$0xf]
  %v515 = vld [vmem:[%s4 + $0x194] sm:$0xf]
  %v516 = vld [vmem:[%s4 + $0x198] sm:$0xf]
  %v517 = vld [vmem:[%s4 + $0x19c] sm:$0xf]
  %v518 = vld [vmem:[%s4 + $0x1a0] sm:$0xf]
  %v519 = vld [vmem:[%s4 + $0x1a4] sm:$0xf]
  %v520 = vld [vmem:[%s4 + $0x1a8] sm:$0xf]
  %v521 = vld [vmem:[%s4 + $0x1ac] sm:$0xf]
  %v522 = vld [vmem:[%s5] sm:$0x1]
  %v524 = vperm.slane %v522, 0
  %v634 = vunpack.c.l.b16 %v414
  %v635 = vunpack.c.l.b16 %v415
  %v636 = vunpack.c.l.b16 %v416
  %v637 = vunpack.c.l.b16 %v417
  %v638 = vunpack.c.l.b16 %v418
  %v639 = vunpack.c.l.b16 %v419
  %v640 = vunpack.c.l.b16 %v420
  %v641 = vunpack.c.l.b16 %v421
  %v642 = vunpack.c.l.b16 %v422
  %v643 = vunpack.c.l.b16 %v423
  %v644 = vunpack.c.l.b16 %v424
  %v645 = vunpack.c.l.b16 %v425
  %v646 = vunpack.c.l.b16 %v426
  %v647 = vunpack.c.l.b16 %v427
  %v648 = vunpack.c.l.b16 %v428
  %v649 = vunpack.c.l.b16 %v429
  %v650 = vunpack.c.l.b16 %v430
  %v651 = vunpack.c.l.b16 %v431
  %v652 = vunpack.c.l.b16 %v432
  %v653 = vunpack.c.l.b16 %v433
  %v654 = vunpack.c.l.b16 %v434
  %v655 = vunpack.c.l.b16 %v435
  %v656 = vunpack.c.l.b16 %v436
  %v657 = vunpack.c.l.b16 %v437
  %v658 = vunpack.c.l.b16 %v438
  %v659 = vunpack.c.l.b16 %v439
  %v660 = vunpack.c.l.b16 %v440
  %v661 = vunpack.c.l.b16 %v441
  %v662 = vunpack.c.l.b16 %v442
  %v663 = vunpack.c.l.b16 %v443
  %v664 = vunpack.c.l.b16 %v444
  %v665 = vunpack.c.l.b16 %v445
  %v666 = vunpack.c.l.b16 %v446
  %v667 = vunpack.c.l.b16 %v447
  %v668 = vunpack.c.l.b16 %v448
  %v669 = vunpack.c.l.b16 %v449
  %v670 = vunpack.c.l.b16 %v450
  %v671 = vunpack.c.l.b16 %v451
  %v672 = vunpack.c.l.b16 %v452
  %v673 = vunpack.c.l.b16 %v453
  %v674 = vunpack.c.l.b16 %v454
  %v675 = vunpack.c.l.b16 %v455
  %v676 = vunpack.c.l.b16 %v456
  %v677 = vunpack.c.l.b16 %v457
  %v678 = vunpack.c.l.b16 %v458
  %v679 = vunpack.c.l.b16 %v459
  %v680 = vunpack.c.l.b16 %v460
  %v681 = vunpack.c.l.b16 %v461
  %v682 = vunpack.c.l.b16 %v462
  %v683 = vunpack.c.l.b16 %v463
  %v684 = vunpack.c.l.b16 %v464
  %v685 = vunpack.c.l.b16 %v465
  %v686 = vunpack.c.l.b16 %v466
  %v687 = vunpack.c.l.b16 %v467
  %v688 = vunpack.c.l.b16 %v468
  %v689 = vunpack.c.l.b16 %v469
  %v690 = vunpack.c.l.b16 %v470
  %v691 = vunpack.c.l.b16 %v471
  %v692 = vunpack.c.l.b16 %v472
  %v693 = vunpack.c.l.b16 %v473
  %v694 = vunpack.c.l.b16 %v474
  %v695 = vunpack.c.l.b16 %v475
  %v696 = vunpack.c.l.b16 %v476
  %v697 = vunpack.c.l.b16 %v477
  %v698 = vunpack.c.l.b16 %v478
  %v699 = vunpack.c.l.b16 %v479
  %v700 = vunpack.c.l.b16 %v480
  %v701 = vunpack.c.l.b16 %v481
  %v702 = vunpack.c.l.b16 %v482
  %v703 = vunpack.c.l.b16 %v483
  %v704 = vunpack.c.l.b16 %v484
  %v705 = vunpack.c.l.b16 %v485
  %v706 = vunpack.c.l.b16 %v486
  %v707 = vunpack.c.l.b16 %v487
  %v708 = vunpack.c.l.b16 %v488
  %v709 = vunpack.c.l.b16 %v489
  %v710 = vunpack.c.l.b16 %v490
  %v711 = vunpack.c.l.b16 %v491
  %v712 = vunpack.c.l.b16 %v492
  %v713 = vunpack.c.l.b16 %v493
  %v714 = vunpack.c.l.b16 %v494
  %v715 = vunpack.c.l.b16 %v495
  %v716 = vunpack.c.l.b16 %v496
  %v717 = vunpack.c.l.b16 %v497
  %v718 = vunpack.c.l.b16 %v498
  %v719 = vunpack.c.l.b16 %v499
  %v720 = vunpack.c.l.b16 %v500
  %v721 = vunpack.c.l.b16 %v501
  %v722 = vunpack.c.l.b16 %v502
  %v723 = vunpack.c.l.b16 %v503
  %v724 = vunpack.c.l.b16 %v504
  %v725 = vunpack.c.l.b16 %v505
  %v726 = vunpack.c.l.b16 %v506
  %v727 = vunpack.c.l.b16 %v507
  %v728 = vunpack.c.l.b16 %v508
  %v729 = vunpack.c.l.b16 %v509
  %v730 = vunpack.c.l.b16 %v510
  %v731 = vunpack.c.l.b16 %v511
  %v732 = vunpack.c.l.b16 %v512
  %v733 = vunpack.c.l.b16 %v513
  %v734 = vunpack.c.l.b16 %v514
  %v735 = vunpack.c.l.b16 %v515
  %v736 = vunpack.c.l.b16 %v516
  %v737 = vunpack.c.l.b16 %v517
  %v738 = vunpack.c.l.b16 %v518
  %v739 = vunpack.c.l.b16 %v519
  %v740 = vunpack.c.l.b16 %v520
  %v741 = vunpack.c.l.b16 %v521
  %v742 = vpack.c.b16 %v635, %v634
  %v743 = vpack.c.b16 %v637, %v636
  %v744 = vpack.c.b16 %v639, %v638
  %v745 = vpack.c.b16 %v641, %v640
  %v746 = vpack.c.b16 %v643, %v642
  %v747 = vpack.c.b16 %v645, %v644
  %v748 = vpack.c.b16 %v647, %v646
  %v749 = vpack.c.b16 %v649, %v648
  %v750 = vpack.c.b16 %v651, %v650
  %v751 = vpack.c.b16 %v653, %v652
  %v752 = vpack.c.b16 %v655, %v654
  %v753 = vpack.c.b16 %v657, %v656
  %v754 = vpack.c.b16 %v659, %v658
  %v755 = vpack.c.b16 %v661, %v660
  %v756 = vpack.c.b16 %v663, %v662
  %v757 = vpack.c.b16 %v665, %v664
  %v758 = vpack.c.b16 %v667, %v666
  %v759 = vpack.c.b16 %v669, %v668
  %v760 = vpack.c.b16 %v671, %v670
  %v761 = vpack.c.b16 %v673, %v672
  %v762 = vpack.c.b16 %v675, %v674
  %v763 = vpack.c.b16 %v677, %v676
  %v764 = vpack.c.b16 %v679, %v678
  %v765 = vpack.c.b16 %v681, %v680
  %v766 = vpack.c.b16 %v683, %v682
  %v767 = vpack.c.b16 %v685, %v684
  %v768 = vpack.c.b16 %v687, %v686
  %v769 = vpack.c.b16 %v689, %v688
  %v770 = vpack.c.b16 %v691, %v690
  %v771 = vpack.c.b16 %v693, %v692
  %v772 = vpack.c.b16 %v695, %v694
  %v773 = vpack.c.b16 %v697, %v696
  %v774 = vpack.c.b16 %v699, %v698
  %v775 = vpack.c.b16 %v701, %v700
  %v776 = vpack.c.b16 %v703, %v702
  %v777 = vpack.c.b16 %v705, %v704
  %v778 = vpack.c.b16 %v707, %v706
  %v779 = vpack.c.b16 %v709, %v708
  %v780 = vpack.c.b16 %v711, %v710
  %v781 = vpack.c.b16 %v713, %v712
  %v782 = vpack.c.b16 %v715, %v714
  %v783 = vpack.c.b16 %v717, %v716
  %v784 = vpack.c.b16 %v719, %v718
  %v785 = vpack.c.b16 %v721, %v720
  %v786 = vpack.c.b16 %v723, %v722
  %v787 = vpack.c.b16 %v725, %v724
  %v788 = vpack.c.b16 %v727, %v726
  %v789 = vpack.c.b16 %v729, %v728
  %v790 = vpack.c.b16 %v731, %v730
  %v791 = vpack.c.b16 %v733, %v732
  %v792 = vpack.c.b16 %v735, %v734
  %v793 = vpack.c.b16 %v737, %v736
  %v794 = vpack.c.b16 %v739, %v738
  %v795 = vpack.c.b16 %v741, %v740
  %vm850 = vcmask 785408
  %v852 = vsel %vm850, %v413, 0
  %854 = vmatpush.bf16.msra.mxu0 %v749
  %855 = vmatpush.bf16.msra.mxu0 %v748
  %856 = vmatpush.bf16.msra.mxu0 %v747
  %857 = vmatpush.bf16.msra.mxu0 %v746
  %858 = vmatpush.bf16.msra.mxu0 %v745
  %859 = vmatpush.bf16.msra.mxu0 %v744
  %860 = vmatpush.bf16.msra.mxu0 %v743
  %861 = vmatpush.bf16.msra.mxu0 %v742
  %862 = vmatmul.bf16.gmra.mxu0 %v407
  %v863 = vpop.f32.mrf.mxu0
  %v864 = vadd.f32 %v524, %v863
  %v865 = vpop.f32.mrf.mxu0
  %866 = vdwg.mxu0
  %867 = vmatpush.bf16.msra.mxu0 %v757
  %868 = vmatpush.bf16.msra.mxu0 %v756
  %869 = vmatpush.bf16.msra.mxu0 %v755
  %870 = vmatpush.bf16.msra.mxu0 %v754
  %871 = vmatpush.bf16.msra.mxu0 %v753
  %872 = vmatpush.bf16.msra.mxu0 %v752
  %873 = vmatpush.bf16.msra.mxu0 %v751
  %874 = vmatpush.bf16.msra.mxu0 %v750
  %875 = vmatmul.bf16.gmra.mxu0 %v408
  %v876 = vpop.f32.mrf.mxu0
  %v877 = vadd.f32 %v864, %v876
  %v878 = vpop.f32.mrf.mxu0
  %879 = vdwg.mxu0
  %880 = vmatpush.bf16.msra.mxu0 %v765
  %881 = vmatpush.bf16.msra.mxu0 %v764
  %882 = vmatpush.bf16.msra.mxu0 %v763
  %883 = vmatpush.bf16.msra.mxu0 %v762
  %884 = vmatpush.bf16.msra.mxu0 %v761
  %885 = vmatpush.bf16.msra.mxu0 %v760
  %886 = vmatpush.bf16.msra.mxu0 %v759
  %887 = vmatpush.bf16.msra.mxu0 %v758
  %888 = vmatmul.bf16.gmra.mxu0 %v409
  %v889 = vpop.f32.mrf.mxu0
  %v890 = vadd.f32 %v877, %v889
  %v891 = vpop.f32.mrf.mxu0
  %892 = vdwg.mxu0
  %893 = vmatpush.bf16.msra.mxu0 %v773
  %894 = vmatpush.bf16.msra.mxu0 %v772
  %895 = vmatpush.bf16.msra.mxu0 %v771
  %896 = vmatpush.bf16.msra.mxu0 %v770
  %897 = vmatpush.bf16.msra.mxu0 %v769
  %898 = vmatpush.bf16.msra.mxu0 %v768
  %899 = vmatpush.bf16.msra.mxu0 %v767
  %900 = vmatpush.bf16.msra.mxu0 %v766
  %901 = vmatmul.bf16.gmra.mxu0 %v410
  %v902 = vpop.f32.mrf.mxu0
  %v903 = vadd.f32 %v890, %v902
  %v904 = vpop.f32.mrf.mxu0
  %905 = vdwg.mxu0
  %906 = vmatpush.bf16.msra.mxu0 %v781
  %907 = vmatpush.bf16.msra.mxu0 %v780
  %908 = vmatpush.bf16.msra.mxu0 %v779
  %909 = vmatpush.bf16.msra.mxu0 %v778
  %910 = vmatpush.bf16.msra.mxu0 %v777
  %911 = vmatpush.bf16.msra.mxu0 %v776
  %912 = vmatpush.bf16.msra.mxu0 %v775
  %913 = vmatpush.bf16.msra.mxu0 %v774
  %914 = vmatmul.bf16.gmra.mxu0 %v411
  %v915 = vpop.f32.mrf.mxu0
  %v916 = vadd.f32 %v903, %v915
  %v917 = vpop.f32.mrf.mxu0
  %918 = vdwg.mxu0
  %919 = vmatpush.bf16.msra.mxu0 %v789
  %920 = vmatpush.bf16.msra.mxu0 %v788
  %921 = vmatpush.bf16.msra.mxu0 %v787
  %922 = vmatpush.bf16.msra.mxu0 %v786
  %923 = vmatpush.bf16.msra.mxu0 %v785
  %924 = vmatpush.bf16.msra.mxu0 %v784
  %925 = vmatpush.bf16.msra.mxu0 %v783
  %926 = vmatpush.bf16.msra.mxu0 %v782
  %927 = vmatmul.bf16.gmra.mxu0 %v412
  %v928 = vpop.f32.mrf.mxu0
  %v929 = vadd.f32 %v916, %v928
  %v930 = vpop.f32.mrf.mxu0
  %931 = vdwg.mxu0
  %932 = vmatpush.bf16.msra.mxu0 0
  %933 = vmatpush.bf16.msra.mxu0 0
  %934 = vmatpush.bf16.msra.mxu0 %v795
  %935 = vmatpush.bf16.msra.mxu0 %v794
  %936 = vmatpush.bf16.msra.mxu0 %v793
  %937 = vmatpush.bf16.msra.mxu0 %v792
  %938 = vmatpush.bf16.msra.mxu0 %v791
  %939 = vmatpush.bf16.msra.mxu0 %v790
  %940 = vmatmul.bf16.gmra.mxu0 %v852
  %v941 = vpop.f32.mrf.mxu0
  %v942 = vadd.f32 %v929, %v941
  %v943 = vpop.f32.mrf.mxu0
  %944 = vdwg.mxu0
  %v945 = vmul.f32 %v942, 0.01
  %v946 = vmax.f32 %v942, %v945
  %947 = vst [vmem:[%s7] sm:$0xff] %v946
  // Predicated region
  $region26: #{grasp_model_forward.16} parent=0 // pred_check
    _
  $region27: #{grasp_model_forward.16} parent=0 // pred_check_branch
    %949 = sbr.rel (0) target = $region29
  $region28: #{grasp_model_forward.16} parent=0 // pred_region
    _
  $region29: #{grasp_model_forward.16} parent=0 // pred_fallthru
    _
  // Predicated region
  $region30: #{grasp_model_forward.16} parent=0 // pred_check
    _
  $region31: #{grasp_model_forward.16} parent=0 // pred_check_branch
    %951 = sbr.rel (0) target = $region33
  $region32: #{grasp_model_forward.16} parent=0 // pred_region
    _
  $region33: #{grasp_model_forward.16} parent=0 // pred_fallthru
    _
  // Predicated region
  $region34: #{grasp_model_forward.16} parent=0 // pred_check
    _
  $region35: #{grasp_model_forward.16} parent=0 // pred_check_branch
    %953 = sbr.rel (0) target = $region37
  $region36: #{grasp_model_forward.16} parent=0 // pred_region
    _
  $region37: #{grasp_model_forward.16} parent=0 // pred_fallthru
    _
  // Predicated region
  $region38: #{grasp_model_forward.16} parent=0 // pred_check
    _
  $region39: #{grasp_model_forward.16} parent=0 // pred_check_branch
    %955 = sbr.rel (0) target = $region41
  $region40: #{grasp_model_forward.16} parent=0 // pred_region
    _
  $region41: #{grasp_model_forward.16} parent=0 // pred_fallthru
    _

// kernel: grasp_model_forward.17
$region0: #{grasp_model_forward.17}
  #allocation0 [shape = 'u32[]', space=smem, size = 0x4, offset = 0x4, fixed_abs, tag = 'smem constant byte address 0x4 - core index']
  #allocation1 [shape = 'u32[72,128]{1,0:T(1,128)}', space=vmem, size = 0x9000, scoped, tag = 'internal scratch']
  %s0 = inlined_call_operand.vmem [shape: f32[2,256], index: 0, kind: input, shape index: {}]
  %s1 = inlined_call_operand.vmem [shape: bf16[256,48], index: 1, kind: input, shape index: {}]
  %s2 = inlined_call_operand.vmem [shape: f32[1,48], index: 2, kind: input, shape index: {}]
  %s3 = inlined_call_operand.vmem [shape: bf16[48,3], index: 3, kind: input, shape index: {}]
  %s4 = inlined_call_operand.vmem [shape: f32[1,3], index: 4, kind: input, shape index: {}]
  %s5 = inlined_call_operand.vmem [shape: f32[2,512], index: 5, kind: input, shape index: {}]
  %s6 = inlined_call_operand.vmem [shape: bf16[512,128], index: 6, kind: input, shape index: {}]
  %s7 = inlined_call_operand.vmem [shape: f32[1,128], index: 7, kind: input, shape index: {}]
  %s8 = inlined_call_operand.vmem [shape: bf16[128,48], index: 8, kind: input, shape index: {}]
  %s9 = inlined_call_operand.vmem [shape: f32[1,48], index: 9, kind: input, shape index: {}]
  %s10 = inlined_call_operand.hbm [shape: f32[2,3], index: 10, kind: output, shape index: {0}]
  %s11 = inlined_call_operand.hbm [shape: f32[2,48], index: 11, kind: output, shape index: {1}]
  %12 = xla_tuple %s10, %s11
  %s13 = sld [smem:[#allocation0]]
  $region58: #{grasp_model_forward.17} parent=0
    _
  %s15 = ssub.s32 1, %s13
  %s16 = scalar_select 0, %s15, %s13
  $region1: #{grasp_model_forward.17} parent=0
    #allocation2 [shape = 'u8[1024]{0}', space=vmem, size = 0x400, scoped, tag = 'output window, operand 0, single buffered']
    #allocation3 [shape = 's32[1]{0}', space=sflag, size = 0x4, scoped, tag = 'scoped memory for grasp_model_forward.17']
    #allocation4 [shape = 'u8[1024]{0}', space=vmem, size = 0x400, scoped, tag = 'output window, operand 1, single buffered']
    #allocation5 [shape = 's32[1]{0}', space=sflag, size = 0x4, scoped, tag = 'scoped memory for grasp_model_forward.17']
    %17 = vsyncpa [#allocation3], 0
    %18 = vsyncpa [#allocation5], 0
    // Predicated region
    $region2: #{grasp_model_forward.17} parent=1 // pred_check
      _
    $region3: #{grasp_model_forward.17} parent=1 // pred_check_branch
      %20 = sbr.rel (0) target = $region5
    $region4: #{grasp_model_forward.17} parent=1 // pred_region
      _
    $region5: #{grasp_model_forward.17} parent=1 // pred_fallthru
      _
    // Predicated region
    $region6: #{grasp_model_forward.17} parent=1 // pred_check
      _
    $region7: #{grasp_model_forward.17} parent=1 // pred_check_branch
      %22 = sbr.rel (0) target = $region9
    $region8: #{grasp_model_forward.17} parent=1 // pred_region
      _
    $region9: #{grasp_model_forward.17} parent=1 // pred_fallthru
      _
    // Predicated region
    $region10: #{grasp_model_forward.17} parent=1 // pred_check
      _
    $region11: #{grasp_model_forward.17} parent=1 // pred_check_branch
      %24 = sbr.rel (0) target = $region13
    $region12: #{grasp_model_forward.17} parent=1 // pred_region
      _
    $region13: #{grasp_model_forward.17} parent=1 // pred_fallthru
      _
    // Predicated region
    $region14: #{grasp_model_forward.17} parent=1 // pred_check
      _
    $region15: #{grasp_model_forward.17} parent=1 // pred_check_branch
      %26 = sbr.rel (0) target = $region17
    $region16: #{grasp_model_forward.17} parent=1 // pred_region
      _
    $region17: #{grasp_model_forward.17} parent=1 // pred_fallthru
      _
    // Predicated region
    $region18: #{grasp_model_forward.17} parent=1 // pred_check
      _
    $region19: #{grasp_model_forward.17} parent=1 // pred_check_branch
      %28 = sbr.rel (0) target = $region21
    $region20: #{grasp_model_forward.17} parent=1 // pred_region
      _
    $region21: #{grasp_model_forward.17} parent=1 // pred_fallthru
      _
    // Predicated region
    $region22: #{grasp_model_forward.17} parent=1 // pred_check
      _
    $region23: #{grasp_model_forward.17} parent=1 // pred_check_branch
      %30 = sbr.rel (0) target = $region25
    $region24: #{grasp_model_forward.17} parent=1 // pred_region
      _
    $region25: #{grasp_model_forward.17} parent=1 // pred_fallthru
      _
    // Predicated region
    $region26: #{grasp_model_forward.17} parent=1 // pred_check
      _
    $region27: #{grasp_model_forward.17} parent=1 // pred_check_branch
      %32 = sbr.rel (0) target = $region29
    $region28: #{grasp_model_forward.17} parent=1 // pred_region
      _
    $region29: #{grasp_model_forward.17} parent=1 // pred_fallthru
      _
    // Predicated region
    $region30: #{grasp_model_forward.17} parent=1 // pred_check
      _
    $region31: #{grasp_model_forward.17} parent=1 // pred_check_branch
      %34 = sbr.rel (0) target = $region33
    $region32: #{grasp_model_forward.17} parent=1 // pred_region
      _
    $region33: #{grasp_model_forward.17} parent=1 // pred_fallthru
      _
    // Predicated region
    $region34: #{grasp_model_forward.17} parent=1 // pred_check
      _
    $region35: #{grasp_model_forward.17} parent=1 // pred_check_branch
      %36 = sbr.rel (0) target = $region37
    $region36: #{grasp_model_forward.17} parent=1 // pred_region
      _
    $region37: #{grasp_model_forward.17} parent=1 // pred_fallthru
      _
    // Predicated region
    $region38: #{grasp_model_forward.17} parent=1 // pred_check
      _
    $region39: #{grasp_model_forward.17} parent=1 // pred_check_branch
      %38 = sbr.rel (0) target = $region41
    $region40: #{grasp_model_forward.17} parent=1 // pred_region
      _
    $region41: #{grasp_model_forward.17} parent=1 // pred_fallthru
      _
    %v40 = vld [vmem:[%s0] sm:$0xf]
    %42 = vst [vmem:[#allocation1] ss:$4 sm:$0xff] %v40
    %v43 = vld.sshfl [vmem:[#allocation1] sm:$0xff pattern:$0x73625140]
    %v44 = vld.sshfl [vmem:[#allocation1 + $0x8] sm:$0xff pattern:$0x73625140]
    %v47 = vpack.c.bf16 %v43, %v43
    %v48 = vpack.c.bf16 %v44, %v44
    %v49 = vld [vmem:[%s1] sm:$0xf]
    %v50 = vld [vmem:[%s1 + $0x4] sm:$0xf]
    %v51 = vld [vmem:[%s1 + $0x8] sm:$0xf]
    %v52 = vld [vmem:[%s1 + $0xc] sm:$0xf]
    %v53 = vld [vmem:[%s1 + $0x10] sm:$0xf]
    %v54 = vld [vmem:[%s1 + $0x14] sm:$0xf]
    %v55 = vld [vmem:[%s1 + $0x18] sm:$0xf]
    %v56 = vld [vmem:[%s1 + $0x1c] sm:$0xf]
    %v57 = vld [vmem:[%s1 + $0x20] sm:$0xf]
    %v58 = vld [vmem:[%s1 + $0x24] sm:$0xf]
    %v59 = vld [vmem:[%s1 + $0x28] sm:$0xf]
    %v60 = vld [vmem:[%s1 + $0x2c] sm:$0xf]
    %v61 = vld [vmem:[%s1 + $0x30] sm:$0xf]
    %v62 = vld [vmem:[%s1 + $0x34] sm:$0xf]
    %v63 = vld [vmem:[%s1 + $0x38] sm:$0xf]
    %v64 = vld [vmem:[%s1 + $0x3c] sm:$0xf]
    %v65 = vld [vmem:[%s1 + $0x40] sm:$0xf]
    %v66 = vld [vmem:[%s1 + $0x44] sm:$0xf]
    %v67 = vld [vmem:[%s1 + $0x48] sm:$0xf]
    %v68 = vld [vmem:[%s1 + $0x4c] sm:$0xf]
    %v69 = vld [vmem:[%s1 + $0x50] sm:$0xf]
    %v70 = vld [vmem:[%s1 + $0x54] sm:$0xf]
    %v71 = vld [vmem:[%s1 + $0x58] sm:$0xf]
    %v72 = vld [vmem:[%s1 + $0x5c] sm:$0xf]
    %v73 = vld [vmem:[%s1 + $0x60] sm:$0xf]
    %v74 = vld [vmem:[%s1 + $0x64] sm:$0xf]
    %v75 = vld [vmem:[%s1 + $0x68] sm:$0xf]
    %v76 = vld [vmem:[%s1 + $0x6c] sm:$0xf]
    %v77 = vld [vmem:[%s1 + $0x70] sm:$0xf]
    %v78 = vld [vmem:[%s1 + $0x74] sm:$0xf]
    %v79 = vld [vmem:[%s1 + $0x78] sm:$0xf]
    %v80 = vld [vmem:[%s1 + $0x7c] sm:$0xf]
    %v81 = vld [vmem:[%s2] sm:$0x1]
    %v83 = vperm.slane %v81, 0
    %v117 = vunpack.c.l.b16 %v49
    %v118 = vunpack.c.l.b16 %v50
    %v119 = vunpack.c.l.b16 %v51
    %v120 = vunpack.c.l.b16 %v52
    %v121 = vunpack.c.l.b16 %v53
    %v122 = vunpack.c.l.b16 %v54
    %v123 = vunpack.c.l.b16 %v55
    %v124 = vunpack.c.l.b16 %v56
    %v125 = vunpack.c.l.b16 %v57
    %v126 = vunpack.c.l.b16 %v58
    %v127 = vunpack.c.l.b16 %v59
    %v128 = vunpack.c.l.b16 %v60
    %v129 = vunpack.c.l.b16 %v61
    %v130 = vunpack.c.l.b16 %v62
    %v131 = vunpack.c.l.b16 %v63
    %v132 = vunpack.c.l.b16 %v64
    %v133 = vunpack.c.l.b16 %v65
    %v134 = vunpack.c.l.b16 %v66
    %v135 = vunpack.c.l.b16 %v67
    %v136 = vunpack.c.l.b16 %v68
    %v137 = vunpack.c.l.b16 %v69
    %v138 = vunpack.c.l.b16 %v70
    %v139 = vunpack.c.l.b16 %v71
    %v140 = vunpack.c.l.b16 %v72
    %v141 = vunpack.c.l.b16 %v73
    %v142 = vunpack.c.l.b16 %v74
    %v143 = vunpack.c.l.b16 %v75
    %v144 = vunpack.c.l.b16 %v76
    %v145 = vunpack.c.l.b16 %v77
    %v146 = vunpack.c.l.b16 %v78
    %v147 = vunpack.c.l.b16 %v79
    %v148 = vunpack.c.l.b16 %v80
    %v149 = vpack.c.b16 %v118, %v117
    %v150 = vpack.c.b16 %v120, %v119
    %v151 = vpack.c.b16 %v122, %v121
    %v152 = vpack.c.b16 %v124, %v123
    %v153 = vpack.c.b16 %v126, %v125
    %v154 = vpack.c.b16 %v128, %v127
    %v155 = vpack.c.b16 %v130, %v129
    %v156 = vpack.c.b16 %v132, %v131
    %v157 = vpack.c.b16 %v134, %v133
    %v158 = vpack.c.b16 %v136, %v135
    %v159 = vpack.c.b16 %v138, %v137
    %v160 = vpack.c.b16 %v140, %v139
    %v161 = vpack.c.b16 %v142, %v141
    %v162 = vpack.c.b16 %v144, %v143
    %v163 = vpack.c.b16 %v146, %v145
    %v164 = vpack.c.b16 %v148, %v147
    %181 = vmatpush.bf16.msra.mxu0 %v156
    %182 = vmatpush.bf16.msra.mxu0 %v155
    %183 = vmatpush.bf16.msra.mxu0 %v154
    %184 = vmatpush.bf16.msra.mxu0 %v153
    %185 = vmatpush.bf16.msra.mxu0 %v152
    %186 = vmatpush.bf16.msra.mxu0 %v151
    %187 = vmatpush.bf16.msra.mxu0 %v150
    %188 = vmatpush.bf16.msra.mxu0 %v149
    %189 = vmatmul.bf16.gmra.mxu0 %v47
    %v190 = vpop.f32.mrf.mxu0
    %v191 = vadd.f32 %v83, %v190
    %v192 = vpop.f32.mrf.mxu0
    %193 = vdwg.mxu0
    %194 = vmatpush.bf16.msra.mxu0 %v164
    %195 = vmatpush.bf16.msra.mxu0 %v163
    %196 = vmatpush.bf16.msra.mxu0 %v162
    %197 = vmatpush.bf16.msra.mxu0 %v161
    %198 = vmatpush.bf16.msra.mxu0 %v160
    %199 = vmatpush.bf16.msra.mxu0 %v159
    %200 = vmatpush.bf16.msra.mxu0 %v158
    %201 = vmatpush.bf16.msra.mxu0 %v157
    %202 = vmatmul.bf16.gmra.mxu0 %v48
    %v203 = vpop.f32.mrf.mxu0
    %v204 = vadd.f32 %v191, %v203
    %v205 = vpop.f32.mrf.mxu0
    %206 = vdwg.mxu0
    %v207 = vmul.f32 %v204, 0.01
    %v208 = vmax.f32 %v204, %v207
    %v209 = vpack.c.bf16 %v208, %v208
    %v210 = vld [vmem:[%s3] sm:$0xf]
    %v211 = vld [vmem:[%s3 + $0x4] sm:$0xf]
    %v212 = vld [vmem:[%s3 + $0x8] sm:$0xf]
    %v213 = vld [vmem:[%s3 + $0xc] sm:$0xf]
    %v214 = vld [vmem:[%s3 + $0x10] sm:$0xf]
    %v215 = vld [vmem:[%s3 + $0x14] sm:$0xf]
    %v216 = vld [vmem:[%s4] sm:$0x1]
    %v218 = vperm.slane %v216, 0
    %v226 = vunpack.c.l.b16 %v210
    %v227 = vunpack.c.l.b16 %v211
    %v228 = vunpack.c.l.b16 %v212
    %v229 = vunpack.c.l.b16 %v213
    %v230 = vunpack.c.l.b16 %v214
    %v231 = vunpack.c.l.b16 %v215
    %v232 = vpack.c.b16 %v227, %v226
    %v233 = vpack.c.b16 %v229, %v228
    %v234 = vpack.c.b16 %v231, %v230
    %vm238 = vcmask 392192
    %v240 = vsel %vm238, %v209, 0
    %242 = vmatpush.bf16.msra.mxu0 0
    %243 = vmatpush.bf16.msra.mxu0 0
    %244 = vmatpush.bf16.msra.mxu0 0
    %245 = vmatpush.bf16.msra.mxu0 0
    %246 = vmatpush.bf16.msra.mxu0 0
    %247 = vmatpush.bf16.msra.mxu0 %v234
    %248 = vmatpush.bf16.msra.mxu0 %v233
    %249 = vmatpush.bf16.msra.mxu0 %v232
    %250 = vmatmul.bf16.gmra.mxu0 %v240
    %v251 = vpop.f32.mrf.mxu0
    %v252 = vadd.f32 %v218, %v251
    %v253 = vpop.f32.mrf.mxu0
    %254 = vdwg.mxu0
    %v255 = vmul.f32 %v252, 0.5
    %v256 = vtanh.pop %v255
    %v257 = vadd.f32 %v256, 1.0
    %v258 = vmul.f32 %v257, 0.5
    %vm259 = vcmask 17408
    %260 = vst.msk [vmem:[#allocation2] sm:$0x3] %vm259, %v258
    %v261 = vld [vmem:[%s5] sm:$0xff]
    %263 = vst [vmem:[#allocation1] ss:$4 sm:$0xff] %v261
    %v264 = vld.sshfl [vmem:[#allocation1] sm:$0xff pattern:$0x73625140]
    %v265 = vld.sshfl [vmem:[#allocation1 + $0x8] sm:$0xff pattern:$0x73625140]
    %v266 = vld.sshfl [vmem:[#allocation1 + $0x10] sm:$0xff pattern:$0x73625140]
    %v267 = vld.sshfl [vmem:[#allocation1 + $0x18] sm:$0xff pattern:$0x73625140]
    %v272 = vpack.c.bf16 %v264, %v264
    %v273 = vpack.c.bf16 %v265, %v265
    %v274 = vpack.c.bf16 %v266, %v266
    %v275 = vpack.c.bf16 %v267, %v267
    %v276 = vld [vmem:[%s6] sm:$0xf]
    %v277 = vld [vmem:[%s6 + $0x4] sm:$0xf]
    %v278 = vld [vmem:[%s6 + $0x8] sm:$0xf]
    %v279 = vld [vmem:[%s6 + $0xc] sm:$0xf]
    %v280 = vld [vmem:[%s6 + $0x10] sm:$0xf]
    %v281 = vld [vmem:[%s6 + $0x14] sm:$0xf]
    %v282 = vld [vmem:[%s6 + $0x18] sm:$0xf]
    %v283 = vld [vmem:[%s6 + $0x1c] sm:$0xf]
    %v284 = vld [vmem:[%s6 + $0x20] sm:$0xf]
    %v285 = vld [vmem:[%s6 + $0x24] sm:$0xf]
    %v286 = vld [vmem:[%s6 + $0x28] sm:$0xf]
    %v287 = vld [vmem:[%s6 + $0x2c] sm:$0xf]
    %v288 = vld [vmem:[%s6 + $0x30] sm:$0xf]
    %v289 = vld [vmem:[%s6 + $0x34] sm:$0xf]
    %v290 = vld [vmem:[%s6 + $0x38] sm:$0xf]
    %v291 = vld [vmem:[%s6 + $0x3c] sm:$0xf]
    %v292 = vld [vmem:[%s6 + $0x40] sm:$0xf]
    %v293 = vld [vmem:[%s6 + $0x44] sm:$0xf]
    %v294 = vld [vmem:[%s6 + $0x48] sm:$0xf]
    %v295 = vld [vmem:[%s6 + $0x4c] sm:$0xf]
    %v296 = vld [vmem:[%s6 + $0x50] sm:$0xf]
    %v297 = vld [vmem:[%s6 + $0x54] sm:$0xf]
    %v298 = vld [vmem:[%s6 + $0x58] sm:$0xf]
    %v299 = vld [vmem:[%s6 + $0x5c] sm:$0xf]
    %v300 = vld [vmem:[%s6 + $0x60] sm:$0xf]
    %v301 = vld [vmem:[%s6 + $0x64] sm:$0xf]
    %v302 = vld [vmem:[%s6 + $0x68] sm:$0xf]
    %v303 = vld [vmem:[%s6 + $0x6c] sm:$0xf]
    %v304 = vld [vmem:[%s6 + $0x70] sm:$0xf]
    %v305 = vld [vmem:[%s6 + $0x74] sm:$0xf]
    %v306 = vld [vmem:[%s6 + $0x78] sm:$0xf]
    %v307 = vld [vmem:[%s6 + $0x7c] sm:$0xf]
    %v308 = vld [vmem:[%s6 + $0x80] sm:$0xf]
    %v309 = vld [vmem:[%s6 + $0x84] sm:$0xf]
    %v310 = vld [vmem:[%s6 + $0x88] sm:$0xf]
    %v311 = vld [vmem:[%s6 + $0x8c] sm:$0xf]
    %v312 = vld [vmem:[%s6 + $0x90] sm:$0xf]
    %v313 = vld [vmem:[%s6 + $0x94] sm:$0xf]
    %v314 = vld [vmem:[%s6 + $0x98] sm:$0xf]
    %v315 = vld [vmem:[%s6 + $0x9c] sm:$0xf]
    %v316 = vld [vmem:[%s6 + $0xa0] sm:$0xf]
    %v317 = vld [vmem:[%s6 + $0xa4] sm:$0xf]
    %v318 = vld [vmem:[%s6 + $0xa8] sm:$0xf]
    %v319 = vld [vmem:[%s6 + $0xac] sm:$0xf]
    %v320 = vld [vmem:[%s6 + $0xb0] sm:$0xf]
    %v321 = vld [vmem:[%s6 + $0xb4] sm:$0xf]
    %v322 = vld [vmem:[%s6 + $0xb8] sm:$0xf]
    %v323 = vld [vmem:[%s6 + $0xbc] sm:$0xf]
    %v324 = vld [vmem:[%s6 + $0xc0] sm:$0xf]
    %v325 = vld [vmem:[%s6 + $0xc4] sm:$0xf]
    %v326 = vld [vmem:[%s6 + $0xc8] sm:$0xf]
    %v327 = vld [vmem:[%s6 + $0xcc] sm:$0xf]
    %v328 = vld [vmem:[%s6 + $0xd0] sm:$0xf]
    %v329 = vld [vmem:[%s6 + $0xd4] sm:$0xf]
    %v330 = vld [vmem:[%s6 + $0xd8] sm:$0xf]
    %v331 = vld [vmem:[%s6 + $0xdc] sm:$0xf]
    %v332 = vld [vmem:[%s6 + $0xe0] sm:$0xf]
    %v333 = vld [vmem:[%s6 + $0xe4] sm:$0xf]
    %v334 = vld [vmem:[%s6 + $0xe8] sm:$0xf]
    %v335 = vld [vmem:[%s6 + $0xec] sm:$0xf]
    %v336 = vld [vmem:[%s6 + $0xf0] sm:$0xf]
    %v337 = vld [vmem:[%s6 + $0xf4] sm:$0xf]
    %v338 = vld [vmem:[%s6 + $0xf8] sm:$0xf]
    %v339 = vld [vmem:[%s6 + $0xfc] sm:$0xf]
    %v340 = vld [vmem:[%s7] sm:$0x1]
    %v342 = vperm.slane %v340, 0
    %v408 = vunpack.c.l.b16 %v276
    %v409 = vunpack.c.l.b16 %v277
    %v410 = vunpack.c.l.b16 %v278
    %v411 = vunpack.c.l.b16 %v279
    %v412 = vunpack.c.l.b16 %v280
    %v413 = vunpack.c.l.b16 %v281
    %v414 = vunpack.c.l.b16 %v282
    %v415 = vunpack.c.l.b16 %v283
    %v416 = vunpack.c.l.b16 %v284
    %v417 = vunpack.c.l.b16 %v285
    %v418 = vunpack.c.l.b16 %v286
    %v419 = vunpack.c.l.b16 %v287
    %v420 = vunpack.c.l.b16 %v288
    %v421 = vunpack.c.l.b16 %v289
    %v422 = vunpack.c.l.b16 %v290
    %v423 = vunpack.c.l.b16 %v291
    %v424 = vunpack.c.l.b16 %v292
    %v425 = vunpack.c.l.b16 %v293
    %v426 = vunpack.c.l.b16 %v294
    %v427 = vunpack.c.l.b16 %v295
    %v428 = vunpack.c.l.b16 %v296
    %v429 = vunpack.c.l.b16 %v297
    %v430 = vunpack.c.l.b16 %v298
    %v431 = vunpack.c.l.b16 %v299
    %v432 = vunpack.c.l.b16 %v300
    %v433 = vunpack.c.l.b16 %v301
    %v434 = vunpack.c.l.b16 %v302
    %v435 = vunpack.c.l.b16 %v303
    %v436 = vunpack.c.l.b16 %v304
    %v437 = vunpack.c.l.b16 %v305
    %v438 = vunpack.c.l.b16 %v306
    %v439 = vunpack.c.l.b16 %v307
    %v440 = vunpack.c.l.b16 %v308
    %v441 = vunpack.c.l.b16 %v309
    %v442 = vunpack.c.l.b16 %v310
    %v443 = vunpack.c.l.b16 %v311
    %v444 = vunpack.c.l.b16 %v312
    %v445 = vunpack.c.l.b16 %v313
    %v446 = vunpack.c.l.b16 %v314
    %v447 = vunpack.c.l.b16 %v315
    %v448 = vunpack.c.l.b16 %v316
    %v449 = vunpack.c.l.b16 %v317
    %v450 = vunpack.c.l.b16 %v318
    %v451 = vunpack.c.l.b16 %v319
    %v452 = vunpack.c.l.b16 %v320
    %v453 = vunpack.c.l.b16 %v321
    %v454 = vunpack.c.l.b16 %v322
    %v455 = vunpack.c.l.b16 %v323
    %v456 = vunpack.c.l.b16 %v324
    %v457 = vunpack.c.l.b16 %v325
    %v458 = vunpack.c.l.b16 %v326
    %v459 = vunpack.c.l.b16 %v327
    %v460 = vunpack.c.l.b16 %v328
    %v461 = vunpack.c.l.b16 %v329
    %v462 = vunpack.c.l.b16 %v330
    %v463 = vunpack.c.l.b16 %v331
    %v464 = vunpack.c.l.b16 %v332
    %v465 = vunpack.c.l.b16 %v333
    %v466 = vunpack.c.l.b16 %v334
    %v467 = vunpack.c.l.b16 %v335
    %v468 = vunpack.c.l.b16 %v336
    %v469 = vunpack.c.l.b16 %v337
    %v470 = vunpack.c.l.b16 %v338
    %v471 = vunpack.c.l.b16 %v339
    %v472 = vpack.c.b16 %v409, %v408
    %v473 = vpack.c.b16 %v411, %v410
    %v474 = vpack.c.b16 %v413, %v412
    %v475 = vpack.c.b16 %v415, %v414
    %v476 = vpack.c.b16 %v417, %v416
    %v477 = vpack.c.b16 %v419, %v418
    %v478 = vpack.c.b16 %v421, %v420
    %v479 = vpack.c.b16 %v423, %v422
    %v480 = vpack.c.b16 %v425, %v424
    %v481 = vpack.c.b16 %v427, %v426
    %v482 = vpack.c.b16 %v429, %v428
    %v483 = vpack.c.b16 %v431, %v430
    %v484 = vpack.c.b16 %v433, %v432
    %v485 = vpack.c.b16 %v435, %v434
    %v486 = vpack.c.b16 %v437, %v436
    %v487 = vpack.c.b16 %v439, %v438
    %v488 = vpack.c.b16 %v441, %v440
    %v489 = vpack.c.b16 %v443, %v442
    %v490 = vpack.c.b16 %v445, %v444
    %v491 = vpack.c.b16 %v447, %v446
    %v492 = vpack.c.b16 %v449, %v448
    %v493 = vpack.c.b16 %v451, %v450
    %v494 = vpack.c.b16 %v453, %v452
    %v495 = vpack.c.b16 %v455, %v454
    %v496 = vpack.c.b16 %v457, %v456
    %v497 = vpack.c.b16 %v459, %v458
    %v498 = vpack.c.b16 %v461, %v460
    %v499 = vpack.c.b16 %v463, %v462
    %v500 = vpack.c.b16 %v465, %v464
    %v501 = vpack.c.b16 %v467, %v466
    %v502 = vpack.c.b16 %v469, %v468
    %v503 = vpack.c.b16 %v471, %v470
    %536 = vmatpush.bf16.msra.mxu0 %v479
    %537 = vmatpush.bf16.msra.mxu0 %v478
    %538 = vmatpush.bf16.msra.mxu0 %v477
    %539 = vmatpush.bf16.msra.mxu0 %v476
    %540 = vmatpush.bf16.msra.mxu0 %v475
    %541 = vmatpush.bf16.msra.mxu0 %v474
    %542 = vmatpush.bf16.msra.mxu0 %v473
    %543 = vmatpush.bf16.msra.mxu0 %v472
    %544 = vmatmul.bf16.gmra.mxu0 %v272
    %v545 = vpop.f32.mrf.mxu0
    %v546 = vadd.f32 %v342, %v545
    %v547 = vpop.f32.mrf.mxu0
    %548 = vdwg.mxu0
    %549 = vmatpush.bf16.msra.mxu0 %v487
    %550 = vmatpush.bf16.msra.mxu0 %v486
    %551 = vmatpush.bf16.msra.mxu0 %v485
    %552 = vmatpush.bf16.msra.mxu0 %v484
    %553 = vmatpush.bf16.msra.mxu0 %v483
    %554 = vmatpush.bf16.msra.mxu0 %v482
    %555 = vmatpush.bf16.msra.mxu0 %v481
    %556 = vmatpush.bf16.msra.mxu0 %v480
    %557 = vmatmul.bf16.gmra.mxu0 %v273
    %v558 = vpop.f32.mrf.mxu0
    %v559 = vadd.f32 %v546, %v558
    %v560 = vpop.f32.mrf.mxu0
    %561 = vdwg.mxu0
    %562 = vmatpush.bf16.msra.mxu0 %v495
    %563 = vmatpush.bf16.msra.mxu0 %v494
    %564 = vmatpush.bf16.msra.mxu0 %v493
    %565 = vmatpush.bf16.msra.mxu0 %v492
    %566 = vmatpush.bf16.msra.mxu0 %v491
    %567 = vmatpush.bf16.msra.mxu0 %v490
    %568 = vmatpush.bf16.msra.mxu0 %v489
    %569 = vmatpush.bf16.msra.mxu0 %v488
    %570 = vmatmul.bf16.gmra.mxu0 %v274
    %v571 = vpop.f32.mrf.mxu0
    %v572 = vadd.f32 %v559, %v571
    %v573 = vpop.f32.mrf.mxu0
    %574 = vdwg.mxu0
    %575 = vmatpush.bf16.msra.mxu0 %v503
    %576 = vmatpush.bf16.msra.mxu0 %v502
    %577 = vmatpush.bf16.msra.mxu0 %v501
    %578 = vmatpush.bf16.msra.mxu0 %v500
    %579 = vmatpush.bf16.msra.mxu0 %v499
    %580 = vmatpush.bf16.msra.mxu0 %v498
    %581 = vmatpush.bf16.msra.mxu0 %v497
    %582 = vmatpush.bf16.msra.mxu0 %v496
    %583 = vmatmul.bf16.gmra.mxu0 %v275
    %v584 = vpop.f32.mrf.mxu0
    %v585 = vadd.f32 %v572, %v584
    %v586 = vpop.f32.mrf.mxu0
    %587 = vdwg.mxu0
    %v588 = vmul.f32 %v585, 0.01
    %v589 = vmax.f32 %v585, %v588
    %v590 = vpack.c.bf16 %v589, %v589
    %v591 = vld [vmem:[%s8] sm:$0xf]
    %v592 = vld [vmem:[%s8 + $0x4] sm:$0xf]
    %v593 = vld [vmem:[%s8 + $0x8] sm:$0xf]
    %v594 = vld [vmem:[%s8 + $0xc] sm:$0xf]
    %v595 = vld [vmem:[%s8 + $0x10] sm:$0xf]
    %v596 = vld [vmem:[%s8 + $0x14] sm:$0xf]
    %v597 = vld [vmem:[%s8 + $0x18] sm:$0xf]
    %v598 = vld [vmem:[%s8 + $0x1c] sm:$0xf]
    %v599 = vld [vmem:[%s8 + $0x20] sm:$0xf]
    %v600 = vld [vmem:[%s8 + $0x24] sm:$0xf]
    %v601 = vld [vmem:[%s8 + $0x28] sm:$0xf]
    %v602 = vld [vmem:[%s8 + $0x2c] sm:$0xf]
    %v603 = vld [vmem:[%s8 + $0x30] sm:$0xf]
    %v604 = vld [vmem:[%s8 + $0x34] sm:$0xf]
    %v605 = vld [vmem:[%s8 + $0x38] sm:$0xf]
    %v606 = vld [vmem:[%s8 + $0x3c] sm:$0xf]
    %v607 = vld [vmem:[%s9] sm:$0x1]
    %v609 = vperm.slane %v607, 0
    %v627 = vunpack.c.l.b16 %v591
    %v628 = vunpack.c.l.b16 %v592
    %v629 = vunpack.c.l.b16 %v593
    %v630 = vunpack.c.l.b16 %v594
    %v631 = vunpack.c.l.b16 %v595
    %v632 = vunpack.c.l.b16 %v596
    %v633 = vunpack.c.l.b16 %v597
    %v634 = vunpack.c.l.b16 %v598
    %v635 = vunpack.c.l.b16 %v599
    %v636 = vunpack.c.l.b16 %v600
    %v637 = vunpack.c.l.b16 %v601
    %v638 = vunpack.c.l.b16 %v602
    %v639 = vunpack.c.l.b16 %v603
    %v640 = vunpack.c.l.b16 %v604
    %v641 = vunpack.c.l.b16 %v605
    %v642 = vunpack.c.l.b16 %v606
    %v643 = vpack.c.b16 %v628, %v627
    %v644 = vpack.c.b16 %v630, %v629
    %v645 = vpack.c.b16 %v632, %v631
    %v646 = vpack.c.b16 %v634, %v633
    %v647 = vpack.c.b16 %v636, %v635
    %v648 = vpack.c.b16 %v638, %v637
    %v649 = vpack.c.b16 %v640, %v639
    %v650 = vpack.c.b16 %v642, %v641
    %659 = vmatpush.bf16.msra.mxu0 %v650
    %660 = vmatpush.bf16.msra.mxu0 %v649
    %661 = vmatpush.bf16.msra.mxu0 %v648
    %662 = vmatpush.bf16.msra.mxu0 %v647
    %663 = vmatpush.bf16.msra.mxu0 %v646
    %664 = vmatpush.bf16.msra.mxu0 %v645
    %665 = vmatpush.bf16.msra.mxu0 %v644
    %666 = vmatpush.bf16.msra.mxu0 %v643
    %667 = vmatmul.bf16.gmra.mxu0 %v590
    %v668 = vpop.f32.mrf.mxu0
    %v669 = vadd.f32 %v609, %v668
    %v670 = vpop.f32.mrf.mxu0
    %671 = vdwg.mxu0
    %vm672 = vcmask 386048
    %673 = vst.msk [vmem:[#allocation4] sm:$0x3] %vm672, %v669
    // Predicated region
    $region42: #{grasp_model_forward.17} parent=1 // pred_check
      _
    $region43: #{grasp_model_forward.17} parent=1 // pred_check_branch
      %675 = sbr.rel (0) target = $region45
    $region44: #{grasp_model_forward.17} parent=1 // pred_region
      %677 = vsyncadd [#allocation3], 0
      %s679 = sshll.u32 [#allocation2], 4
      %s680 = int_to_ptr.vmem [resolvable:$true] %s679
      %s681 = sshll.u32 %s10, 4
      %s682 = int_to_ptr.hbm [resolvable:$true] %s681
      %684 = dma.vmem_to_hbm [thread:$0]  %s680, 32, %s682, [#allocation3]
    $region45: #{grasp_model_forward.17} parent=1 // pred_fallthru
      _
    // Predicated region
    $region46: #{grasp_model_forward.17} parent=1 // pred_check
      _
    $region47: #{grasp_model_forward.17} parent=1 // pred_check_branch
      %686 = sbr.rel (0) target = $region49
    $region48: #{grasp_model_forward.17} parent=1 // pred_region
      %688 = vsyncadd [#allocation5], 0
      %s690 = sshll.u32 [#allocation4], 4
      %s691 = int_to_ptr.vmem [resolvable:$true] %s690
      %s692 = sshll.u32 %s11, 4
      %s693 = int_to_ptr.hbm [resolvable:$true] %s692
      %695 = dma.vmem_to_hbm [thread:$0]  %s691, 32, %s693, [#allocation5]
    $region49: #{grasp_model_forward.17} parent=1 // pred_fallthru
      _
    // Predicated region
    $region50: #{grasp_model_forward.17} parent=1 // pred_check
      _
    $region51: #{grasp_model_forward.17} parent=1 // pred_check_branch
      %697 = sbr.rel (0) target = $region53
    $region52: #{grasp_model_forward.17} parent=1 // pred_region
      %699 = dma.done [#allocation3], 32
    $region53: #{grasp_model_forward.17} parent=1 // pred_fallthru
      _
    // Predicated region
    $region54: #{grasp_model_forward.17} parent=1 // pred_check
      _
    $region55: #{grasp_model_forward.17} parent=1 // pred_check_branch
      %701 = sbr.rel (0) target = $region57
    $region56: #{grasp_model_forward.17} parent=1 // pred_region
      %703 = dma.done [#allocation5], 32
    $region57: #{grasp_model_forward.17} parent=1 // pred_fallthru
      _
    %704 = vsyncpa [#allocation3], 1
    %705 = vsyncpa [#allocation5], 1

</llo_original>
